<compile_context>
chip_gen: v5e
topology: v5e:2x2
jax: 0.10.0
libtpu: 0.0.40
codegen_flags: <defaults>
</compile_context>

<pallas_src>
import functools

import jax
import jax.numpy as jnp
from jax.experimental import pallas as pl
from jax.experimental.pallas import tpu as pltpu

D_MODEL = 256
NUM_HEADS = 8
D_K = D_MODEL // NUM_HEADS
D_FF = 1024
NUM_ACTIONS = 3
LN_EPS = 1e-5
LOGIT_PAD = 128  # keep the tiny logits lane-dense inside the kernel


# ------------------------------ in-kernel helpers ---------------------------

def _layernorm(z, g, b):
    mu = jnp.mean(z, axis=-1, keepdims=True)
    var = jnp.mean((z - mu) ** 2, axis=-1, keepdims=True)
    return (z - mu) * jax.lax.rsqrt(var + LN_EPS) * g + b


def _stable_sigmoid(y):
    # exact-division sigmoid (approx reciprocal could push values above 1.0)
    e = jnp.exp(-jnp.abs(y))
    pos = 1.0 / (1.0 + e)
    return jnp.where(y >= 0.0, pos, 1.0 - pos)


# ------------------------- tiled matmul (conv im2col) ------------------------

def _matmul_bias_act_kernel(x_ref, w_ref, b_ref, o_ref, *, activation):
    # x: (tm, K) bf16, w: (K, tn) bf16, b: (1, tn) f32 -> o: (tm, tn) f32
    y = jnp.dot(x_ref[...], w_ref[...], preferred_element_type=jnp.float32)
    y = y + b_ref[...]
    if activation == "relu":
        y = jnp.maximum(y, 0.0)
    o_ref[...] = y


def linear_tiled(x, w, b, activation="none", tm=256, tn=256):
    """x:(M,K) @ w:(K,N) + b, bf16 operands / f32 accumulate, M/N grid tiling.
    K is kept whole (all K in this model are <= 1152)."""
    x = x.astype(jnp.bfloat16)
    w = w.astype(jnp.bfloat16)
    b = b.astype(jnp.float32)
    M, K = x.shape
    N = w.shape[1]
    tm = M if M <= tm else tm
    tn = N if N <= tn else tn
    Mp = int(pl.cdiv(M, tm)) * tm
    Np = int(pl.cdiv(N, tn)) * tn
    if Mp != M:
        x = jnp.pad(x, ((0, Mp - M), (0, 0)))
    if Np != N:
        w = jnp.pad(w, ((0, 0), (0, Np - N)))
        b = jnp.pad(b, ((0, 0), (0, Np - N)))
    out = pl.pallas_call(
        functools.partial(_matmul_bias_act_kernel, activation=activation),
        grid=(Mp // tm, Np // tn),
        in_specs=[
            pl.BlockSpec((tm, K), lambda i, j: (i, 0)),
            pl.BlockSpec((K, tn), lambda i, j: (0, j)),
            pl.BlockSpec((1, tn), lambda i, j: (0, j)),
        ],
        out_specs=pl.BlockSpec((tm, tn), lambda i, j: (i, j)),
        out_shape=jax.ShapeDtypeStruct((Mp, Np), jnp.float32),
        compiler_params=pltpu.CompilerParams(
            dimension_semantics=("parallel", "parallel")),
    )(x, w, b)
    if Mp != M or Np != N:
        out = out[:M, :N]
    return out


# --------------------- fused attention half of a block -----------------------

def _attn_block_kernel(x_ref, wqkv_ref, bqkv_ref, wo_ref, bo_ref, g_ref, be_ref,
                       o_ref, *, num_heads, d_k):
    # One batch element per grid step; block = (1, S, D).
    x = x_ref[0]                                              # (S, D) f32
    d = num_heads * d_k
    qkv = jnp.dot(x.astype(jnp.bfloat16), wqkv_ref[...],
                  preferred_element_type=jnp.float32) + bqkv_ref[...]
    q = qkv[:, :d]
    k = qkv[:, d:2 * d]
    v = qkv[:, 2 * d:3 * d]
    scale = 1.0 / jnp.sqrt(jnp.float32(d_k))
    # TODO(synk): for large S switch to flash-style KV tiling instead of the
    # full (S,S) score matrix per head.
    outs = []
    for h in range(num_heads):
        lo = h * d_k
        qh = q[:, lo:lo + d_k].astype(jnp.bfloat16)
        kh = k[:, lo:lo + d_k].astype(jnp.bfloat16)
        vh = v[:, lo:lo + d_k].astype(jnp.bfloat16)
        s = jnp.dot(qh, kh.T, preferred_element_type=jnp.float32) * scale
        s = s - jnp.max(s, axis=-1, keepdims=True)
        p = jnp.exp(s)
        p = p * pl.reciprocal(jnp.sum(p, axis=-1, keepdims=True), approx=True)
        outs.append(jnp.dot(p.astype(jnp.bfloat16), vh,
                            preferred_element_type=jnp.float32))
    ctx = jnp.concatenate(outs, axis=-1)                      # lane-dense (S, D)
    attn = jnp.dot(ctx.astype(jnp.bfloat16), wo_ref[...],
                   preferred_element_type=jnp.float32) + bo_ref[...]
    o_ref[0] = _layernorm(x + attn, g_ref[...], be_ref[...])  # single (S, 256) store


def attention_block(p, x):
    B, S, D = x.shape
    xspec = pl.BlockSpec((1, S, D), lambda b: (b, 0, 0))

    def wspec(arr):
        return pl.BlockSpec(arr.shape, lambda b, _s=arr.shape: tuple(0 for _ in _s))

    return pl.pallas_call(
        functools.partial(_attn_block_kernel, num_heads=NUM_HEADS, d_k=D_K),
        grid=(B,),
        in_specs=[xspec, wspec(p["wqkv"]), wspec(p["bqkv"]), wspec(p["wo"]),
                  wspec(p["bo"]), wspec(p["ln1_g"]), wspec(p["ln1_b"])],
        out_specs=xspec,
        out_shape=jax.ShapeDtypeStruct((B, S, D), jnp.float32),
        compiler_params=pltpu.CompilerParams(dimension_semantics=("parallel",)),
    )(x, p["wqkv"], p["bqkv"], p["wo"], p["bo"], p["ln1_g"], p["ln1_b"])


# ------------------------ fused FFN half of a block ---------------------------

def _ffn_block_kernel(x_ref, w1_ref, b1_ref, w2_ref, b2_ref, g_ref, be_ref, o_ref):
    x = x_ref[0]                                              # (S, D) f32
    h = jnp.dot(x.astype(jnp.bfloat16), w1_ref[...],
                preferred_element_type=jnp.float32) + b1_ref[...]
    h = jnp.maximum(h, 0.0)
    y = jnp.dot(h.astype(jnp.bfloat16), w2_ref[...],
                preferred_element_type=jnp.float32) + b2_ref[...]
    o_ref[0] = _layernorm(x + y, g_ref[...], be_ref[...])


def ffn_block(p, x):
    B, S, D = x.shape
    xspec = pl.BlockSpec((1, S, D), lambda b: (b, 0, 0))

    def wspec(arr):
        return pl.BlockSpec(arr.shape, lambda b, _s=arr.shape: tuple(0 for _ in _s))

    return pl.pallas_call(
        _ffn_block_kernel,
        grid=(B,),
        in_specs=[xspec, wspec(p["w1"]), wspec(p["b1"]), wspec(p["w2"]),
                  wspec(p["b2"]), wspec(p["ln2_g"]), wspec(p["ln2_b"])],
        out_specs=xspec,
        out_shape=jax.ShapeDtypeStruct((B, S, D), jnp.float32),
        compiler_params=pltpu.CompilerParams(dimension_semantics=("parallel",)),
    )(x, p["w1"], p["b1"], p["w2"], p["b2"], p["ln2_g"], p["ln2_b"])


# ----------------------------- fused policy head ------------------------------

def _policy_head_kernel(x_ref, w1_ref, b1_ref, w2_ref, b2_ref, o_ref):
    pooled = jnp.mean(x_ref[...], axis=1)                     # (B, D) f32
    h = jnp.dot(pooled.astype(jnp.bfloat16), w1_ref[...],
                preferred_element_type=jnp.float32) + b1_ref[...]
    h = jnp.maximum(h, 0.0)
    y = jnp.dot(h.astype(jnp.bfloat16), w2_ref[...],
                preferred_element_type=jnp.float32) + b2_ref[...]
    o_ref[...] = _stable_sigmoid(y)                           # (B, 128) lane-dense


def policy_head(p, x):
    B, S, D = x.shape
    n_pad = p["ph2_w"].shape[1]
    out = pl.pallas_call(
        _policy_head_kernel,
        out_shape=jax.ShapeDtypeStruct((B, n_pad), jnp.float32),
    )(x, p["ph1_w"], p["ph1_b"], p["ph2_w"], p["ph2_b"])
    return out[:, :NUM_ACTIONS]


# ------------------------------- conv glue (JAX) ------------------------------

def conv2d_s2_nhwc(x, w2, b, activation="none"):
    """3x3 conv, stride 2, pad 1.  x: NHWC, w2: (9*Cin, Cout) bf16, b: (1, Cout).
    Returns NHWC.  Patch gather (im2col) is JAX glue; the matmul+bias+relu runs
    in the tiled Pallas kernel."""
    # TODO(synk): fold the 3x3/stride-2 patch gather into the Pallas kernel via
    # BlockSpec index_map over output rows to avoid materializing the 9x im2col copy.
    B, H, W, C = x.shape
    k, stride, pad = 3, 2, 1
    Ho = (H + 2 * pad - k) // stride + 1
    Wo = (W + 2 * pad - k) // stride + 1
    xp = jnp.pad(x, ((0, 0), (pad, pad), (pad, pad), (0, 0)))
    cols = []
    for i in range(k):
        for j in range(k):
            cols.append(xp[:, i:i + stride * Ho:stride, j:j + stride * Wo:stride, :])
    patches = jnp.concatenate(cols, axis=-1)                  # (B, Ho, Wo, 9*C)
    patches = patches.reshape(B * Ho * Wo, k * k * C).astype(jnp.bfloat16)
    y = linear_tiled(patches, w2, b, activation)              # (B*Ho*Wo, Cout) f32
    return y.reshape(B, Ho, Wo, -1)


# ------------------------------ forward pass ----------------------------------

def transformer_block(p, x):
    x = attention_block(p, x)
    x = ffn_block(p, x)
    return x


def policy_transformer_forward(kp, x):
    # x: (B, 4, H, W) NCHW (matching PyTorch). Go NHWC once and stay NHWC.
    h = x.transpose(0, 2, 3, 1)
    h = conv2d_s2_nhwc(h, kp["conv1_w"], kp["conv1_b"], "relu")
    h = conv2d_s2_nhwc(h, kp["conv2_w"], kp["conv2_b"], "relu")
    h = conv2d_s2_nhwc(h, kp["conv3_w"], kp["conv3_b"], "none")
    B, Ho, Wo, D = h.shape
    seq = h.reshape(B, Ho * Wo, D)   # == x.flatten(2).transpose(1, 2) in PyTorch
    for blk in kp["blocks"]:
        seq = transformer_block(blk, seq)
    return policy_head(kp, seq)      # (B, NUM_ACTIONS)


# --------------------------- parameter init & prep -----------------------------

def init_params(key):
    """PyTorch-layout fp32 parameters (same init scheme as nn.Linear / nn.Conv2d)."""
    keys = iter(jax.random.split(key, 64))

    def lin(fan_in, fan_out):
        s = 1.0 / float(fan_in) ** 0.5
        w = jax.random.uniform(next(keys), (fan_in, fan_out), jnp.float32, -s, s)
        b = jax.random.uniform(next(keys), (1, fan_out), jnp.float32, -s, s)
        return w, b

    def conv(cin, cout):
        s = 1.0 / float(cin * 9) ** 0.5
        w = jax.random.uniform(next(keys), (cout, cin, 3, 3), jnp.float32, -s, s)
        b = jax.random.uniform(next(keys), (cout,), jnp.float32, -s, s)
        return w, b

    p = {}
    p["conv1_w"], p["conv1_b"] = conv(4, 64)
    p["conv2_w"], p["conv2_b"] = conv(64, 128)
    p["conv3_w"], p["conv3_b"] = conv(128, D_MODEL)

    blocks = []
    for _ in range(3):
        blk = {}
        blk["wq"], blk["bq"] = lin(D_MODEL, D_MODEL)
        blk["wk"], blk["bk"] = lin(D_MODEL, D_MODEL)
        blk["wv"], blk["bv"] = lin(D_MODEL, D_MODEL)
        blk["wo"], blk["bo"] = lin(D_MODEL, D_MODEL)
        blk["w1"], blk["b1"] = lin(D_MODEL, D_FF)
        blk["w2"], blk["b2"] = lin(D_FF, D_MODEL)
        blk["ln1_g"] = jnp.ones((1, D_MODEL), jnp.float32)
        blk["ln1_b"] = jnp.zeros((1, D_MODEL), jnp.float32)
        blk["ln2_g"] = jnp.ones((1, D_MODEL), jnp.float32)
        blk["ln2_b"] = jnp.zeros((1, D_MODEL), jnp.float32)
        blocks.append(blk)
    p["blocks"] = blocks

    p["ph1_w"], p["ph1_b"] = lin(D_MODEL, 512)
    p["ph2_w"], p["ph2_b"] = lin(512, NUM_ACTIONS)
    return p


def prepare_params(p):
    """One-time conversion into kernel-ready parameters:
    bf16 matmul weights, fused QKV, NHWC-ordered conv weights, lane-padded head."""
    def conv_prep(w, b):
        cout, cin, kh, kw = w.shape
        # patch order built in conv2d_s2_nhwc is (ki, kj, cin)
        w2 = w.transpose(2, 3, 1, 0).reshape(kh * kw * cin, cout).astype(jnp.bfloat16)
        return w2, b.reshape(1, cout).astype(jnp.float32)

    q = {}
    q["conv1_w"], q["conv1_b"] = conv_prep(p["conv1_w"], p["conv1_b"])
    q["conv2_w"], q["conv2_b"] = conv_prep(p["conv2_w"], p["conv2_b"])
    q["conv3_w"], q["conv3_b"] = conv_prep(p["conv3_w"], p["conv3_b"])

    blocks = []
    for blk in p["blocks"]:
        nb = {}
        nb["wqkv"] = jnp.concatenate([blk["wq"], blk["wk"], blk["wv"]],
                                     axis=1).astype(jnp.bfloat16)       # (256, 768)
        nb["bqkv"] = jnp.concatenate([blk["bq"], blk["bk"], blk["bv"]], axis=1)
        nb["wo"] = blk["wo"].astype(jnp.bfloat16)
        nb["bo"] = blk["bo"]
        nb["w1"] = blk["w1"].astype(jnp.bfloat16)
        nb["b1"] = blk["b1"]
        nb["w2"] = blk["w2"].astype(jnp.bfloat16)
        nb["b2"] = blk["b2"]
        nb["ln1_g"], nb["ln1_b"] = blk["ln1_g"], blk["ln1_b"]
        nb["ln2_g"], nb["ln2_b"] = blk["ln2_g"], blk["ln2_b"]
        blocks.append(nb)
    q["blocks"] = blocks

    q["ph1_w"] = p["ph1_w"].astype(jnp.bfloat16)
    q["ph1_b"] = p["ph1_b"]
    w2p = jnp.zeros((p["ph2_w"].shape[0], LOGIT_PAD), jnp.float32)
    w2p = w2p.at[:, :NUM_ACTIONS].set(p["ph2_w"])
    b2p = jnp.zeros((1, LOGIT_PAD), jnp.float32).at[:, :NUM_ACTIONS].set(p["ph2_b"])
    q["ph2_w"] = w2p.astype(jnp.bfloat16)
    q["ph2_b"] = b2p
    return q


if __name__ == "__main__":
    key = jax.random.PRNGKey(0)
    pkey, xkey = jax.random.split(key)
    params = init_params(pkey)
    kparams = prepare_params(params)   # one-time bf16 / fused-QKV / NHWC weight prep
    # Small input: batch=2, 4 channels, 16x16 grid  ->  seq = (16/8)^2 = 4 tokens.
    x = jax.random.normal(xkey, (2, 4, 16, 16), jnp.float32)

    fwd = jax.jit(policy_transformer_forward)
    out = jax.block_until_ready(fwd(kparams, x))

    assert out.shape == (2, NUM_ACTIONS), out.shape
    assert bool(jnp.all(jnp.isfinite(out)))
    assert bool(jnp.all((out >= 0.0) & (out <= 1.0)))  # sigmoid output range
    print("KERNEL_OK")
</pallas_src>

<mosaic_0001>
module attributes {stable_mosaic.version = 11 : i64} {
  func.func @_matmul_bias_act_kernel(%arg0: i32, %arg1: i32, %arg2: memref<128x36xbf16, #tpu.memory_space<vmem>>, %arg3: memref<36x64xbf16, #tpu.memory_space<vmem>>, %arg4: memref<1x64xf32, #tpu.memory_space<vmem>>, %arg5: memref<128x64xf32, #tpu.memory_space<vmem>>) attributes {dimension_semantics = [#tpu.dimension_semantics<parallel>, #tpu.dimension_semantics<parallel>], iteration_bounds = array<i64: 1, 1>, scalar_prefetch = 0 : i64, scratch_operands = 0 : i64, tpu.core_type = #tpu.core_type<tc>, window_params = [{transform_indices = @transform_0, window_bounds = array<i64: 128, 36>}, {transform_indices = @transform_1, window_bounds = array<i64: 36, 64>}, {transform_indices = @transform_2, window_bounds = array<i64: 1, 64>}, {transform_indices = @transform_3, window_bounds = array<i64: 128, 64>}]} {
    %c0 = arith.constant 0 : index
    %c0_0 = arith.constant 0 : index
    %0 = vector.load %arg2[%c0, %c0_0] : memref<128x36xbf16, #tpu.memory_space<vmem>>, vector<128x36xbf16>
    %c0_1 = arith.constant 0 : index
    %c0_2 = arith.constant 0 : index
    %1 = vector.load %arg3[%c0_1, %c0_2] : memref<36x64xbf16, #tpu.memory_space<vmem>>, vector<36x64xbf16>
    %cst = arith.constant dense<0.000000e+00> : vector<128x64xf32>
    %2 = tpu.matmul %0, %1, %cst {dimension_numbers = #tpu.dot_dimension_numbers<[1], [0], [0], [1], [0, 0, 1, 1], [], []>} : vector<128x36xbf16>, vector<36x64xbf16>, vector<128x64xf32> -> vector<128x64xf32>
    %c0_3 = arith.constant 0 : index
    %c0_4 = arith.constant 0 : index
    %3 = vector.load %arg4[%c0_3, %c0_4] : memref<1x64xf32, #tpu.memory_space<vmem>>, vector<1x64xf32>
    %4 = vector.broadcast %3 : vector<1x64xf32> to vector<128x64xf32>
    %5 = arith.addf %2, %4 : vector<128x64xf32>
    %cst_5 = arith.constant 0.000000e+00 : f32
    %6 = vector.broadcast %cst_5 : f32 to vector<128x64xf32>
    %7 = arith.maximumf %5, %6 : vector<128x64xf32>
    %c0_6 = arith.constant 0 : index
    %c0_7 = arith.constant 0 : index
    %8 = vector.load %arg5[%c0_6, %c0_7] : memref<128x64xf32, #tpu.memory_space<vmem>>, vector<128x64xf32>
    tpu.vector_store %arg5[%c0_6, %c0_7], %7 {strides = array<i32>} : memref<128x64xf32, #tpu.memory_space<vmem>>, vector<128x64xf32>,
    return
  }
  func.func @transform_0(%arg0: i32, %arg1: i32) -> (i32, i32) {
    %c0_i32 = arith.constant 0 : i32
    %c0_i32_0 = arith.constant 0 : i32
    return %arg0, %c0_i32 : i32, i32
  }
  func.func @transform_1(%arg0: i32, %arg1: i32) -> (i32, i32) {
    %c0_i32 = arith.constant 0 : i32
    %c0_i32_0 = arith.constant 0 : i32
    return %c0_i32, %arg1 : i32, i32
  }
  func.func @transform_2(%arg0: i32, %arg1: i32) -> (i32, i32) {
    %c0_i32 = arith.constant 0 : i32
    %c0_i32_0 = arith.constant 0 : i32
    return %c0_i32, %arg1 : i32, i32
  }
  func.func @transform_3(%arg0: i32, %arg1: i32) -> (i32, i32) {
    %c0_i32 = arith.constant 0 : i32
    return %arg0, %arg1 : i32, i32
  }
}

module attributes {stable_mosaic.version = 11 : i64} {
  func.func @_matmul_bias_act_kernel(%arg0: i32, %arg1: i32, %arg2: memref<32x576xbf16, #tpu.memory_space<vmem>>, %arg3: memref<576x128xbf16, #tpu.memory_space<vmem>>, %arg4: memref<1x128xf32, #tpu.memory_space<vmem>>, %arg5: memref<32x128xf32, #tpu.memory_space<vmem>>) attributes {dimension_semantics = [#tpu.dimension_semantics<parallel>, #tpu.dimension_semantics<parallel>], iteration_bounds = array<i64: 1, 1>, scalar_prefetch = 0 : i64, scratch_operands = 0 : i64, tpu.core_type = #tpu.core_type<tc>, window_params = [{transform_indices = @transform_0, window_bounds = array<i64: 32, 576>}, {transform_indices = @transform_1, window_bounds = array<i64: 576, 128>}, {transform_indices = @transform_2, window_bounds = array<i64: 1, 128>}, {transform_indices = @transform_3, window_bounds = array<i64: 32, 128>}]} {
    %c0 = arith.constant 0 : index
    %c0_0 = arith.constant 0 : index
    %0 = vector.load %arg2[%c0, %c0_0] : memref<32x576xbf16, #tpu.memory_space<vmem>>, vector<32x576xbf16>
    %c0_1 = arith.constant 0 : index
    %c0_2 = arith.constant 0 : index
    %1 = vector.load %arg3[%c0_1, %c0_2] : memref<576x128xbf16, #tpu.memory_space<vmem>>, vector<576x128xbf16>
    %cst = arith.constant dense<0.000000e+00> : vector<32x128xf32>
    %2 = tpu.matmul %0, %1, %cst {dimension_numbers = #tpu.dot_dimension_numbers<[1], [0], [0], [1], [0, 0, 1, 1], [], []>} : vector<32x576xbf16>, vector<576x128xbf16>, vector<32x128xf32> -> vector<32x128xf32>
    %c0_3 = arith.constant 0 : index
    %c0_4 = arith.constant 0 : index
    %3 = vector.load %arg4[%c0_3, %c0_4] : memref<1x128xf32, #tpu.memory_space<vmem>>, vector<1x128xf32>
    %4 = vector.broadcast %3 : vector<1x128xf32> to vector<32x128xf32>
    %5 = arith.addf %2, %4 : vector<32x128xf32>
    %cst_5 = arith.constant 0.000000e+00 : f32
    %6 = vector.broadcast %cst_5 : f32 to vector<32x128xf32>
    %7 = arith.maximumf %5, %6 : vector<32x128xf32>
    %c0_6 = arith.constant 0 : index
    %c0_7 = arith.constant 0 : index
    %8 = vector.load %arg5[%c0_6, %c0_7] : memref<32x128xf32, #tpu.memory_space<vmem>>, vector<32x128xf32>
    tpu.vector_store %arg5[%c0_6, %c0_7], %7 {strides = array<i32>} : memref<32x128xf32, #tpu.memory_space<vmem>>, vector<32x128xf32>,
    return
  }
  func.func @transform_0(%arg0: i32, %arg1: i32) -> (i32, i32) {
    %c0_i32 = arith.constant 0 : i32
    %c0_i32_0 = arith.constant 0 : i32
    return %arg0, %c0_i32 : i32, i32
  }
  func.func @transform_1(%arg0: i32, %arg1: i32) -> (i32, i32) {
    %c0_i32 = arith.constant 0 : i32
    %c0_i32_0 = arith.constant 0 : i32
    return %c0_i32, %arg1 : i32, i32
  }
  func.func @transform_2(%arg0: i32, %arg1: i32) -> (i32, i32) {
    %c0_i32 = arith.constant 0 : i32
    %c0_i32_0 = arith.constant 0 : i32
    return %c0_i32, %arg1 : i32, i32
  }
  func.func @transform_3(%arg0: i32, %arg1: i32) -> (i32, i32) {
    %c0_i32 = arith.constant 0 : i32
    return %arg0, %arg1 : i32, i32
  }
}

module attributes {stable_mosaic.version = 11 : i64} {
  func.func @_attn_block_kernel(%arg0: i32, %arg1: memref<1x4x256xf32, #tpu.memory_space<vmem>>, %arg2: memref<256x768xbf16, #tpu.memory_space<vmem>>, %arg3: memref<1x768xf32, #tpu.memory_space<vmem>>, %arg4: memref<256x256xbf16, #tpu.memory_space<vmem>>, %arg5: memref<1x256xf32, #tpu.memory_space<vmem>>, %arg6: memref<1x256xf32, #tpu.memory_space<vmem>>, %arg7: memref<1x256xf32, #tpu.memory_space<vmem>>, %arg8: memref<1x4x256xf32, #tpu.memory_space<vmem>>) attributes {dimension_semantics = [#tpu.dimension_semantics<parallel>], iteration_bounds = array<i64: 2>, scalar_prefetch = 0 : i64, scratch_operands = 0 : i64, tpu.core_type = #tpu.core_type<tc>, window_params = [{transform_indices = @transform_0, window_bounds = array<i64: 1, 4, 256>}, {pipeline_mode = #tpu.pipeline_mode<synchronous>, transform_indices = @transform_1, window_bounds = array<i64: 256, 768>}, {pipeline_mode = #tpu.pipeline_mode<synchronous>, transform_indices = @transform_2, window_bounds = array<i64: 1, 768>}, {pipeline_mode = #tpu.pipeline_mode<synchronous>, transform_indices = @transform_3, window_bounds = array<i64: 256, 256>}, {pipeline_mode = #tpu.pipeline_mode<synchronous>, transform_indices = @transform_4, window_bounds = array<i64: 1, 256>}, {pipeline_mode = #tpu.pipeline_mode<synchronous>, transform_indices = @transform_5, window_bounds = array<i64: 1, 256>}, {pipeline_mode = #tpu.pipeline_mode<synchronous>, transform_indices = @transform_6, window_bounds = array<i64: 1, 256>}, {transform_indices = @transform_7, window_bounds = array<i64: 1, 4, 256>}]} {
    %c0 = arith.constant 0 : index
    %c0_0 = arith.constant 0 : index
    %c0_1 = arith.constant 0 : index
    %0 = vector.load %arg1[%c0, %c0_0, %c0_1] : memref<1x4x256xf32, #tpu.memory_space<vmem>>, vector<1x4x256xf32>
    %1 = vector.shape_cast %0 : vector<1x4x256xf32> to vector<4x256xf32>
    %2 = arith.truncf %1 : vector<4x256xf32> to vector<4x256xbf16>
    %c0_2 = arith.constant 0 : index
    %c0_3 = arith.constant 0 : index
    %3 = vector.load %arg2[%c0_2, %c0_3] : memref<256x768xbf16, #tpu.memory_space<vmem>>, vector<256x768xbf16>
    %cst = arith.constant dense<0.000000e+00> : vector<4x768xf32>
    %4 = tpu.matmul %2, %3, %cst {dimension_numbers = #tpu.dot_dimension_numbers<[1], [0], [0], [1], [0, 0, 1, 1], [], []>} : vector<4x256xbf16>, vector<256x768xbf16>, vector<4x768xf32> -> vector<4x768xf32>
    %c0_4 = arith.constant 0 : index
    %c0_5 = arith.constant 0 : index
    %5 = vector.load %arg3[%c0_4, %c0_5] : memref<1x768xf32, #tpu.memory_space<vmem>>, vector<1x768xf32>
    %6 = vector.broadcast %5 : vector<1x768xf32> to vector<4x768xf32>
    %7 = arith.addf %4, %6 : vector<4x768xf32>
    %8 = vector.extract_strided_slice %7 {offsets = [0, 0], sizes = [4, 256], strides = [1, 1]} : vector<4x768xf32> to vector<4x256xf32>
    %9 = vector.extract_strided_slice %7 {offsets = [0, 256], sizes = [4, 256], strides = [1, 1]} : vector<4x768xf32> to vector<4x256xf32>
    %10 = vector.extract_strided_slice %7 {offsets = [0, 512], sizes = [4, 256], strides = [1, 1]} : vector<4x768xf32> to vector<4x256xf32>
    %cst_6 = arith.constant 3.200000e+01 : f32
    %11 = math.sqrt %cst_6 : f32
    %cst_7 = arith.constant 1.000000e+00 : f32
    %12 = arith.divf %cst_7, %11 : f32
    %13 = vector.extract_strided_slice %8 {offsets = [0, 0], sizes = [4, 32], strides = [1, 1]} : vector<4x256xf32> to vector<4x32xf32>
    %14 = arith.truncf %13 : vector<4x32xf32> to vector<4x32xbf16>
    %15 = vector.extract_strided_slice %9 {offsets = [0, 0], sizes = [4, 32], strides = [1, 1]} : vector<4x256xf32> to vector<4x32xf32>
    %16 = arith.truncf %15 : vector<4x32xf32> to vector<4x32xbf16>
    %17 = vector.extract_strided_slice %10 {offsets = [0, 0], sizes = [4, 32], strides = [1, 1]} : vector<4x256xf32> to vector<4x32xf32>
    %18 = arith.truncf %17 : vector<4x32xf32> to vector<4x32xbf16>
    %19 = tpu.transpose %16, [1, 0] : vector<4x32xbf16> -> vector<32x4xbf16>
    %cst_8 = arith.constant dense<0.000000e+00> : vector<4x4xf32>
    %20 = tpu.matmul %14, %19, %cst_8 {dimension_numbers = #tpu.dot_dimension_numbers<[1], [0], [0], [1], [0, 0, 1, 1], [], []>} : vector<4x32xbf16>, vector<32x4xbf16>, vector<4x4xf32> -> vector<4x4xf32>
    %21 = vector.broadcast %12 : f32 to vector<4x4xf32>
    %22 = arith.mulf %20, %21 : vector<4x4xf32>
    %cst_9 = arith.constant dense<0xFF800000> : vector<4xf32>
    %23 = vector.multi_reduction <maximumf>, %22, %cst_9 [1] : vector<4x4xf32> to vector<4xf32>
    %24 = vector.shape_cast %23 : vector<4xf32> to vector<4x1xf32>
    %25 = vector.broadcast %24 : vector<4x1xf32> to vector<4x4xf32>
    %26 = arith.subf %22, %25 : vector<4x4xf32>
    %27 = math.exp %26 : vector<4x4xf32>
    %cst_10 = arith.constant dense<0.000000e+00> : vector<4xf32>
    %28 = vector.multi_reduction <add>, %27, %cst_10 [1] : vector<4x4xf32> to vector<4xf32>
    %29 = vector.shape_cast %28 : vector<4xf32> to vector<4x1xf32>
    %30 = tpu.reciprocal %29 {approx = true} : vector<4x1xf32> -> vector<4x1xf32>
    %31 = vector.broadcast %30 : vector<4x1xf32> to vector<4x4xf32>
    %32 = arith.mulf %27, %31 : vector<4x4xf32>
    %33 = arith.truncf %32 : vector<4x4xf32> to vector<4x4xbf16>
    %cst_11 = arith.constant dense<0.000000e+00> : vector<4x32xf32>
    %34 = tpu.matmul %33, %18, %cst_11 {dimension_numbers = #tpu.dot_dimension_numbers<[1], [0], [0], [1], [0, 0, 1, 1], [], []>} : vector<4x4xbf16>, vector<4x32xbf16>, vector<4x32xf32> -> vector<4x32xf32>
    %35 = vector.extract_strided_slice %8 {offsets = [0, 32], sizes = [4, 32], strides = [1, 1]} : vector<4x256xf32> to vector<4x32xf32>
    %36 = arith.truncf %35 : vector<4x32xf32> to vector<4x32xbf16>
    %37 = vector.extract_strided_slice %9 {offsets = [0, 32], sizes = [4, 32], strides = [1, 1]} : vector<4x256xf32> to vector<4x32xf32>
    %38 = arith.truncf %37 : vector<4x32xf32> to vector<4x32xbf16>
    %39 = vector.extract_strided_slice %10 {offsets = [0, 32], sizes = [4, 32], strides = [1, 1]} : vector<4x256xf32> to vector<4x32xf32>
    %40 = arith.truncf %39 : vector<4x32xf32> to vector<4x32xbf16>
    %41 = tpu.transpose %38, [1, 0] : vector<4x32xbf16> -> vector<32x4xbf16>
    %cst_12 = arith.constant dense<0.000000e+00> : vector<4x4xf32>
    %42 = tpu.matmul %36, %41, %cst_12 {dimension_numbers = #tpu.dot_dimension_numbers<[1], [0], [0], [1], [0, 0, 1, 1], [], []>} : vector<4x32xbf16>, vector<32x4xbf16>, vector<4x4xf32> -> vector<4x4xf32>
    %43 = vector.broadcast %12 : f32 to vector<4x4xf32>
    %44 = arith.mulf %42, %43 : vector<4x4xf32>
    %cst_13 = arith.constant dense<0xFF800000> : vector<4xf32>
    %45 = vector.multi_reduction <maximumf>, %44, %cst_13 [1] : vector<4x4xf32> to vector<4xf32>
    %46 = vector.shape_cast %45 : vector<4xf32> to vector<4x1xf32>
    %47 = vector.broadcast %46 : vector<4x1xf32> to vector<4x4xf32>
    %48 = arith.subf %44, %47 : vector<4x4xf32>
    %49 = math.exp %48 : vector<4x4xf32>
    %cst_14 = arith.constant dense<0.000000e+00> : vector<4xf32>
    %50 = vector.multi_reduction <add>, %49, %cst_14 [1] : vector<4x4xf32> to vector<4xf32>
    %51 = vector.shape_cast %50 : vector<4xf32> to vector<4x1xf32>
    %52 = tpu.reciprocal %51 {approx = true} : vector<4x1xf32> -> vector<4x1xf32>
    %53 = vector.broadcast %52 : vector<4x1xf32> to vector<4x4xf32>
    %54 = arith.mulf %49, %53 : vector<4x4xf32>
    %55 = arith.truncf %54 : vector<4x4xf32> to vector<4x4xbf16>
    %cst_15 = arith.constant dense<0.000000e+00> : vector<4x32xf32>
    %56 = tpu.matmul %55, %40, %cst_15 {dimension_numbers = #tpu.dot_dimension_numbers<[1], [0], [0], [1], [0, 0, 1, 1], [], []>} : vector<4x4xbf16>, vector<4x32xbf16>, vector<4x32xf32> -> vector<4x32xf32>
    %57 = vector.extract_strided_slice %8 {offsets = [0, 64], sizes = [4, 32], strides = [1, 1]} : vector<4x256xf32> to vector<4x32xf32>
    %58 = arith.truncf %57 : vector<4x32xf32> to vector<4x32xbf16>
    %59 = vector.extract_strided_slice %9 {offsets = [0, 64], sizes = [4, 32], strides = [1, 1]} : vector<4x256xf32> to vector<4x32xf32>
    %60 = arith.truncf %59 : vector<4x32xf32> to vector<4x32xbf16>
    %61 = vector.extract_strided_slice %10 {offsets = [0, 64], sizes = [4, 32], strides = [1, 1]} : vector<4x256xf32> to vector<4x32xf32>
    %62 = arith.truncf %61 : vector<4x32xf32> to vector<4x32xbf16>
    %63 = tpu.transpose %60, [1, 0] : vector<4x32xbf16> -> vector<32x4xbf16>
    %cst_16 = arith.constant dense<0.000000e+00> : vector<4x4xf32>
    %64 = tpu.matmul %58, %63, %cst_16 {dimension_numbers = #tpu.dot_dimension_numbers<[1], [0], [0], [1], [0, 0, 1, 1], [], []>} : vector<4x32xbf16>, vector<32x4xbf16>, vector<4x4xf32> -> vector<4x4xf32>
    %65 = vector.broadcast %12 : f32 to vector<4x4xf32>
    %66 = arith.mulf %64, %65 : vector<4x4xf32>
    %cst_17 = arith.constant dense<0xFF800000> : vector<4xf32>
    %67 = vector.multi_reduction <maximumf>, %66, %cst_17 [1] : vector<4x4xf32> to vector<4xf32>
    %68 = vector.shape_cast %67 : vector<4xf32> to vector<4x1xf32>
    %69 = vector.broadcast %68 : vector<4x1xf32> to vector<4x4xf32>
    %70 = arith.subf %66, %69 : vector<4x4xf32>
    %71 = math.exp %70 : vector<4x4xf32>
    %cst_18 = arith.constant dense<0.000000e+00> : vector<4xf32>
    %72 = vector.multi_reduction <add>, %71, %cst_18 [1] : vector<4x4xf32> to vector<4xf32>
    %73 = vector.shape_cast %72 : vector<4xf32> to vector<4x1xf32>
    %74 = tpu.reciprocal %73 {approx = true} : vector<4x1xf32> -> vector<4x1xf32>
    %75 = vector.broadcast %74 : vector<4x1xf32> to vector<4x4xf32>
    %76 = arith.mulf %71, %75 : vector<4x4xf32>
    %77 = arith.truncf %76 : vector<4x4xf32> to vector<4x4xbf16>
    %cst_19 = arith.constant dense<0.000000e+00> : vector<4x32xf32>
    %78 = tpu.matmul %77, %62, %cst_19 {dimension_numbers = #tpu.dot_dimension_numbers<[1], [0], [0], [1], [0, 0, 1, 1], [], []>} : vector<4x4xbf16>, vector<4x32xbf16>, vector<4x32xf32> -> vector<4x32xf32>
    %79 = vector.extract_strided_slice %8 {offsets = [0, 96], sizes = [4, 32], strides = [1, 1]} : vector<4x256xf32> to vector<4x32xf32>
    %80 = arith.truncf %79 : vector<4x32xf32> to vector<4x32xbf16>
    %81 = vector.extract_strided_slice %9 {offsets = [0, 96], sizes = [4, 32], strides = [1, 1]} : vector<4x256xf32> to vector<4x32xf32>
    %82 = arith.truncf %81 : vector<4x32xf32> to vector<4x32xbf16>
    %83 = vector.extract_strided_slice %10 {offsets = [0, 96], sizes = [4, 32], strides = [1, 1]} : vector<4x256xf32> to vector<4x32xf32>
    %84 = arith.truncf %83 : vector<4x32xf32> to vector<4x32xbf16>
    %85 = tpu.transpose %82, [1, 0] : vector<4x32xbf16> -> vector<32x4xbf16>
    %cst_20 = arith.constant dense<0.000000e+00> : vector<4x4xf32>
    %86 = tpu.matmul %80, %85, %cst_20 {dimension_numbers = #tpu.dot_dimension_numbers<[1], [0], [0], [1], [0, 0, 1, 1], [], []>} : vector<4x32xbf16>, vector<32x4xbf16>, vector<4x4xf32> -> vector<4x4xf32>
    %87 = vector.broadcast %12 : f32 to vector<4x4xf32>
    %88 = arith.mulf %86, %87 : vector<4x4xf32>
    %cst_21 = arith.constant dense<0xFF800000> : vector<4xf32>
    %89 = vector.multi_reduction <maximumf>, %88, %cst_21 [1] : vector<4x4xf32> to vector<4xf32>
    %90 = vector.shape_cast %89 : vector<4xf32> to vector<4x1xf32>
    %91 = vector.broadcast %90 : vector<4x1xf32> to vector<4x4xf32>
    %92 = arith.subf %88, %91 : vector<4x4xf32>
    %93 = math.exp %92 : vector<4x4xf32>
    %cst_22 = arith.constant dense<0.000000e+00> : vector<4xf32>
    %94 = vector.multi_reduction <add>, %93, %cst_22 [1] : vector<4x4xf32> to vector<4xf32>
    %95 = vector.shape_cast %94 : vector<4xf32> to vector<4x1xf32>
    %96 = tpu.reciprocal %95 {approx = true} : vector<4x1xf32> -> vector<4x1xf32>
    %97 = vector.broadcast %96 : vector<4x1xf32> to vector<4x4xf32>
    %98 = arith.mulf %93, %97 : vector<4x4xf32>
    %99 = arith.truncf %98 : vector<4x4xf32> to vector<4x4xbf16>
    %cst_23 = arith.constant dense<0.000000e+00> : vector<4x32xf32>
    %100 = tpu.matmul %99, %84, %cst_23 {dimension_numbers = #tpu.dot_dimension_numbers<[1], [0], [0], [1], [0, 0, 1, 1], [], []>} : vector<4x4xbf16>, vector<4x32xbf16>, vector<4x32xf32> -> vector<4x32xf32>
    %101 = vector.extract_strided_slice %8 {offsets = [0, 128], sizes = [4, 32], strides = [1, 1]} : vector<4x256xf32> to vector<4x32xf32>
    %102 = arith.truncf %101 : vector<4x32xf32> to vector<4x32xbf16>
    %103 = vector.extract_strided_slice %9 {offsets = [0, 128], sizes = [4, 32], strides = [1, 1]} : vector<4x256xf32> to vector<4x32xf32>
    %104 = arith.truncf %103 : vector<4x32xf32> to vector<4x32xbf16>
    %105 = vector.extract_strided_slice %10 {offsets = [0, 128], sizes = [4, 32], strides = [1, 1]} : vector<4x256xf32> to vector<4x32xf32>
    %106 = arith.truncf %105 : vector<4x32xf32> to vector<4x32xbf16>
    %107 = tpu.transpose %104, [1, 0] : vector<4x32xbf16> -> vector<32x4xbf16>
    %cst_24 = arith.constant dense<0.000000e+00> : vector<4x4xf32>
    %108 = tpu.matmul %102, %107, %cst_24 {dimension_numbers = #tpu.dot_dimension_numbers<[1], [0], [0], [1], [0, 0, 1, 1], [], []>} : vector<4x32xbf16>, vector<32x4xbf16>, vector<4x4xf32> -> vector<4x4xf32>
    %109 = vector.broadcast %12 : f32 to vector<4x4xf32>
    %110 = arith.mulf %108, %109 : vector<4x4xf32>
    %cst_25 = arith.constant dense<0xFF800000> : vector<4xf32>
    %111 = vector.multi_reduction <maximumf>, %110, %cst_25 [1] : vector<4x4xf32> to vector<4xf32>
    %112 = vector.shape_cast %111 : vector<4xf32> to vector<4x1xf32>
    %113 = vector.broadcast %112 : vector<4x1xf32> to vector<4x4xf32>
    %114 = arith.subf %110, %113 : vector<4x4xf32>
    %115 = math.exp %114 : vector<4x4xf32>
    %cst_26 = arith.constant dense<0.000000e+00> : vector<4xf32>
    %116 = vector.multi_reduction <add>, %115, %cst_26 [1] : vector<4x4xf32> to vector<4xf32>
    %117 = vector.shape_cast %116 : vector<4xf32> to vector<4x1xf32>
    %118 = tpu.reciprocal %117 {approx = true} : vector<4x1xf32> -> vector<4x1xf32>
    %119 = vector.broadcast %118 : vector<4x1xf32> to vector<4x4xf32>
    %120 = arith.mulf %115, %119 : vector<4x4xf32>
    %121 = arith.truncf %120 : vector<4x4xf32> to vector<4x4xbf16>
    %cst_27 = arith.constant dense<0.000000e+00> : vector<4x32xf32>
    %122 = tpu.matmul %121, %106, %cst_27 {dimension_numbers = #tpu.dot_dimension_numbers<[1], [0], [0], [1], [0, 0, 1, 1], [], []>} : vector<4x4xbf16>, vector<4x32xbf16>, vector<4x32xf32> -> vector<4x32xf32>
    %123 = vector.extract_strided_slice %8 {offsets = [0, 160], sizes = [4, 32], strides = [1, 1]} : vector<4x256xf32> to vector<4x32xf32>
    %124 = arith.truncf %123 : vector<4x32xf32> to vector<4x32xbf16>
    %125 = vector.extract_strided_slice %9 {offsets = [0, 160], sizes = [4, 32], strides = [1, 1]} : vector<4x256xf32> to vector<4x32xf32>
    %126 = arith.truncf %125 : vector<4x32xf32> to vector<4x32xbf16>
    %127 = vector.extract_strided_slice %10 {offsets = [0, 160], sizes = [4, 32], strides = [1, 1]} : vector<4x256xf32> to vector<4x32xf32>
    %128 = arith.truncf %127 : vector<4x32xf32> to vector<4x32xbf16>
    %129 = tpu.transpose %126, [1, 0] : vector<4x32xbf16> -> vector<32x4xbf16>
    %cst_28 = arith.constant dense<0.000000e+00> : vector<4x4xf32>
    %130 = tpu.matmul %124, %129, %cst_28 {dimension_numbers = #tpu.dot_dimension_numbers<[1], [0], [0], [1], [0, 0, 1, 1], [], []>} : vector<4x32xbf16>, vector<32x4xbf16>, vector<4x4xf32> -> vector<4x4xf32>
    %131 = vector.broadcast %12 : f32 to vector<4x4xf32>
    %132 = arith.mulf %130, %131 : vector<4x4xf32>
    %cst_29 = arith.constant dense<0xFF800000> : vector<4xf32>
    %133 = vector.multi_reduction <maximumf>, %132, %cst_29 [1] : vector<4x4xf32> to vector<4xf32>
    %134 = vector.shape_cast %133 : vector<4xf32> to vector<4x1xf32>
    %135 = vector.broadcast %134 : vector<4x1xf32> to vector<4x4xf32>
    %136 = arith.subf %132, %135 : vector<4x4xf32>
    %137 = math.exp %136 : vector<4x4xf32>
    %cst_30 = arith.constant dense<0.000000e+00> : vector<4xf32>
    %138 = vector.multi_reduction <add>, %137, %cst_30 [1] : vector<4x4xf32> to vector<4xf32>
    %139 = vector.shape_cast %138 : vector<4xf32> to vector<4x1xf32>
    %140 = tpu.reciprocal %139 {approx = true} : vector<4x1xf32> -> vector<4x1xf32>
    %141 = vector.broadcast %140 : vector<4x1xf32> to vector<4x4xf32>
    %142 = arith.mulf %137, %141 : vector<4x4xf32>
    %143 = arith.truncf %142 : vector<4x4xf32> to vector<4x4xbf16>
    %cst_31 = arith.constant dense<0.000000e+00> : vector<4x32xf32>
    %144 = tpu.matmul %143, %128, %cst_31 {dimension_numbers = #tpu.dot_dimension_numbers<[1], [0], [0], [1], [0, 0, 1, 1], [], []>} : vector<4x4xbf16>, vector<4x32xbf16>, vector<4x32xf32> -> vector<4x32xf32>
    %145 = vector.extract_strided_slice %8 {offsets = [0, 192], sizes = [4, 32], strides = [1, 1]} : vector<4x256xf32> to vector<4x32xf32>
    %146 = arith.truncf %145 : vector<4x32xf32> to vector<4x32xbf16>
    %147 = vector.extract_strided_slice %9 {offsets = [0, 192], sizes = [4, 32], strides = [1, 1]} : vector<4x256xf32> to vector<4x32xf32>
    %148 = arith.truncf %147 : vector<4x32xf32> to vector<4x32xbf16>
    %149 = vector.extract_strided_slice %10 {offsets = [0, 192], sizes = [4, 32], strides = [1, 1]} : vector<4x256xf32> to vector<4x32xf32>
    %150 = arith.truncf %149 : vector<4x32xf32> to vector<4x32xbf16>
    %151 = tpu.transpose %148, [1, 0] : vector<4x32xbf16> -> vector<32x4xbf16>
    %cst_32 = arith.constant dense<0.000000e+00> : vector<4x4xf32>
    %152 = tpu.matmul %146, %151, %cst_32 {dimension_numbers = #tpu.dot_dimension_numbers<[1], [0], [0], [1], [0, 0, 1, 1], [], []>} : vector<4x32xbf16>, vector<32x4xbf16>, vector<4x4xf32> -> vector<4x4xf32>
    %153 = vector.broadcast %12 : f32 to vector<4x4xf32>
    %154 = arith.mulf %152, %153 : vector<4x4xf32>
    %cst_33 = arith.constant dense<0xFF800000> : vector<4xf32>
    %155 = vector.multi_reduction <maximumf>, %154, %cst_33 [1] : vector<4x4xf32> to vector<4xf32>
    %156 = vector.shape_cast %155 : vector<4xf32> to vector<4x1xf32>
    %157 = vector.broadcast %156 : vector<4x1xf32> to vector<4x4xf32>
    %158 = arith.subf %154, %157 : vector<4x4xf32>
    %159 = math.exp %158 : vector<4x4xf32>
    %cst_34 = arith.constant dense<0.000000e+00> : vector<4xf32>
    %160 = vector.multi_reduction <add>, %159, %cst_34 [1] : vector<4x4xf32> to vector<4xf32>
    %161 = vector.shape_cast %160 : vector<4xf32> to vector<4x1xf32>
    %162 = tpu.reciprocal %161 {approx = true} : vector<4x1xf32> -> vector<4x1xf32>
    %163 = vector.broadcast %162 : vector<4x1xf32> to vector<4x4xf32>
    %164 = arith.mulf %159, %163 : vector<4x4xf32>
    %165 = arith.truncf %164 : vector<4x4xf32> to vector<4x4xbf16>
    %cst_35 = arith.constant dense<0.000000e+00> : vector<4x32xf32>
    %166 = tpu.matmul %165, %150, %cst_35 {dimension_numbers = #tpu.dot_dimension_numbers<[1], [0], [0], [1], [0, 0, 1, 1], [], []>} : vector<4x4xbf16>, vector<4x32xbf16>, vector<4x32xf32> -> vector<4x32xf32>
    %167 = vector.extract_strided_slice %8 {offsets = [0, 224], sizes = [4, 32], strides = [1, 1]} : vector<4x256xf32> to vector<4x32xf32>
    %168 = arith.truncf %167 : vector<4x32xf32> to vector<4x32xbf16>
    %169 = vector.extract_strided_slice %9 {offsets = [0, 224], sizes = [4, 32], strides = [1, 1]} : vector<4x256xf32> to vector<4x32xf32>
    %170 = arith.truncf %169 : vector<4x32xf32> to vector<4x32xbf16>
    %171 = vector.extract_strided_slice %10 {offsets = [0, 224], sizes = [4, 32], strides = [1, 1]} : vector<4x256xf32> to vector<4x32xf32>
    %172 = arith.truncf %171 : vector<4x32xf32> to vector<4x32xbf16>
    %173 = tpu.transpose %170, [1, 0] : vector<4x32xbf16> -> vector<32x4xbf16>
    %cst_36 = arith.constant dense<0.000000e+00> : vector<4x4xf32>
    %174 = tpu.matmul %168, %173, %cst_36 {dimension_numbers = #tpu.dot_dimension_numbers<[1], [0], [0], [1], [0, 0, 1, 1], [], []>} : vector<4x32xbf16>, vector<32x4xbf16>, vector<4x4xf32> -> vector<4x4xf32>
    %175 = vector.broadcast %12 : f32 to vector<4x4xf32>
    %176 = arith.mulf %174, %175 : vector<4x4xf32>
    %cst_37 = arith.constant dense<0xFF800000> : vector<4xf32>
    %177 = vector.multi_reduction <maximumf>, %176, %cst_37 [1] : vector<4x4xf32> to vector<4xf32>
    %178 = vector.shape_cast %177 : vector<4xf32> to vector<4x1xf32>
    %179 = vector.broadcast %178 : vector<4x1xf32> to vector<4x4xf32>
    %180 = arith.subf %176, %179 : vector<4x4xf32>
    %181 = math.exp %180 : vector<4x4xf32>
    %cst_38 = arith.constant dense<0.000000e+00> : vector<4xf32>
    %182 = vector.multi_reduction <add>, %181, %cst_38 [1] : vector<4x4xf32> to vector<4xf32>
    %183 = vector.shape_cast %182 : vector<4xf32> to vector<4x1xf32>
    %184 = tpu.reciprocal %183 {approx = true} : vector<4x1xf32> -> vector<4x1xf32>
    %185 = vector.broadcast %184 : vector<4x1xf32> to vector<4x4xf32>
    %186 = arith.mulf %181, %185 : vector<4x4xf32>
    %187 = arith.truncf %186 : vector<4x4xf32> to vector<4x4xbf16>
    %cst_39 = arith.constant dense<0.000000e+00> : vector<4x32xf32>
    %188 = tpu.matmul %187, %172, %cst_39 {dimension_numbers = #tpu.dot_dimension_numbers<[1], [0], [0], [1], [0, 0, 1, 1], [], []>} : vector<4x4xbf16>, vector<4x32xbf16>, vector<4x32xf32> -> vector<4x32xf32>
    %189 = tpu.concatenate %34, %56, %78, %100, %122, %144, %166, %188 in 1 : vector<4x32xf32>, vector<4x32xf32>, vector<4x32xf32>, vector<4x32xf32>, vector<4x32xf32>, vector<4x32xf32>, vector<4x32xf32>, vector<4x32xf32> -> vector<4x256xf32>
    %190 = arith.truncf %189 : vector<4x256xf32> to vector<4x256xbf16>
    %c0_40 = arith.constant 0 : index
    %c0_41 = arith.constant 0 : index
    %191 = vector.load %arg4[%c0_40, %c0_41] : memref<256x256xbf16, #tpu.memory_space<vmem>>, vector<256x256xbf16>
    %cst_42 = arith.constant dense<0.000000e+00> : vector<4x256xf32>
    %192 = tpu.matmul %190, %191, %cst_42 {dimension_numbers = #tpu.dot_dimension_numbers<[1], [0], [0], [1], [0, 0, 1, 1], [], []>} : vector<4x256xbf16>, vector<256x256xbf16>, vector<4x256xf32> -> vector<4x256xf32>
    %c0_43 = arith.constant 0 : index
    %c0_44 = arith.constant 0 : index
    %193 = vector.load %arg5[%c0_43, %c0_44] : memref<1x256xf32, #tpu.memory_space<vmem>>, vector<1x256xf32>
    %194 = vector.broadcast %193 : vector<1x256xf32> to vector<4x256xf32>
    %195 = arith.addf %192, %194 : vector<4x256xf32>
    %196 = arith.addf %1, %195 : vector<4x256xf32>
    %c0_45 = arith.constant 0 : index
    %c0_46 = arith.constant 0 : index
    %197 = vector.load %arg6[%c0_45, %c0_46] : memref<1x256xf32, #tpu.memory_space<vmem>>, vector<1x256xf32>
    %c0_47 = arith.constant 0 : index
    %c0_48 = arith.constant 0 : index
    %198 = vector.load %arg7[%c0_47, %c0_48] : memref<1x256xf32, #tpu.memory_space<vmem>>, vector<1x256xf32>
    %cst_49 = arith.constant dense<0.000000e+00> : vector<4xf32>
    %199 = vector.multi_reduction <add>, %196, %cst_49 [1] : vector<4x256xf32> to vector<4xf32>
    %200 = vector.shape_cast %199 : vector<4xf32> to vector<4x1xf32>
    %cst_50 = arith.constant 2.560000e+02 : f32
    %201 = vector.broadcast %cst_50 : f32 to vector<4x1xf32>
    %202 = arith.divf %200, %201 : vector<4x1xf32>
    %203 = vector.broadcast %202 : vector<4x1xf32> to vector<4x256xf32>
    %204 = arith.subf %196, %203 : vector<4x256xf32>
    %205 = arith.mulf %204, %204 : vector<4x256xf32>
    %cst_51 = arith.constant dense<0.000000e+00> : vector<4xf32>
    %206 = vector.multi_reduction <add>, %205, %cst_51 [1] : vector<4x256xf32> to vector<4xf32>
    %207 = vector.shape_cast %206 : vector<4xf32> to vector<4x1xf32>
    %cst_52 = arith.constant 2.560000e+02 : f32
    %208 = vector.broadcast %cst_52 : f32 to vector<4x1xf32>
    %209 = arith.divf %207, %208 : vector<4x1xf32>
    %210 = vector.broadcast %202 : vector<4x1xf32> to vector<4x256xf32>
    %211 = arith.subf %196, %210 : vector<4x256xf32>
    %cst_53 = arith.constant 9.99999974E-6 : f32
    %212 = vector.broadcast %cst_53 : f32 to vector<4x1xf32>
    %213 = arith.addf %209, %212 : vector<4x1xf32>
    %214 = math.rsqrt %213 : vector<4x1xf32>
    %215 = vector.broadcast %214 : vector<4x1xf32> to vector<4x256xf32>
    %216 = arith.mulf %211, %215 : vector<4x256xf32>
    %217 = vector.broadcast %197 : vector<1x256xf32> to vector<4x256xf32>
    %218 = arith.mulf %216, %217 : vector<4x256xf32>
    %219 = vector.broadcast %198 : vector<1x256xf32> to vector<4x256xf32>
    %220 = arith.addf %218, %219 : vector<4x256xf32>
    %c0_54 = arith.constant 0 : index
    %c0_55 = arith.constant 0 : index
    %c0_56 = arith.constant 0 : index
    %221 = vector.load %arg8[%c0_54, %c0_55, %c0_56] : memref<1x4x256xf32, #tpu.memory_space<vmem>>, vector<1x4x256xf32>
    %222 = vector.shape_cast %221 : vector<1x4x256xf32> to vector<4x256xf32>
    %223 = vector.shape_cast %220 : vector<4x256xf32> to vector<1x4x256xf32>
    tpu.vector_store %arg8[%c0_54, %c0_55, %c0_56], %223 {strides = array<i32>} : memref<1x4x256xf32, #tpu.memory_space<vmem>>, vector<1x4x256xf32>,
    return
  }
  func.func @transform_0(%arg0: i32) -> (i32, i32, i32) {
    %c0_i32 = arith.constant 0 : i32
    %c0_i32_0 = arith.constant 0 : i32
    %c0_i32_1 = arith.constant 0 : i32
    return %arg0, %c0_i32, %c0_i32_0 : i32, i32, i32
  }
  func.func @transform_1(%arg0: i32) -> (i32, i32) {
    %c0_i32 = arith.constant 0 : i32
    %c0_i32_0 = arith.constant 0 : i32
    %c0_i32_1 = arith.constant 0 : i32
    return %c0_i32, %c0_i32_0 : i32, i32
  }
  func.func @transform_2(%arg0: i32) -> (i32, i32) {
    %c0_i32 = arith.constant 0 : i32
    %c0_i32_0 = arith.constant 0 : i32
    %c0_i32_1 = arith.constant 0 : i32
    return %c0_i32, %c0_i32_0 : i32, i32
  }
  func.func @transform_3(%arg0: i32) -> (i32, i32) {
    %c0_i32 = arith.constant 0 : i32
    %c0_i32_0 = arith.constant 0 : i32
    %c0_i32_1 = arith.constant 0 : i32
    return %c0_i32, %c0_i32_0 : i32, i32
  }
  func.func @transform_4(%arg0: i32) -> (i32, i32) {
    %c0_i32 = arith.constant 0 : i32
    %c0_i32_0 = arith.constant 0 : i32
    %c0_i32_1 = arith.constant 0 : i32
    return %c0_i32, %c0_i32_0 : i32, i32
  }
  func.func @transform_5(%arg0: i32) -> (i32, i32) {
    %c0_i32 = arith.constant 0 : i32
    %c0_i32_0 = arith.constant 0 : i32
    %c0_i32_1 = arith.constant 0 : i32
    return %c0_i32, %c0_i32_0 : i32, i32
  }
  func.func @transform_6(%arg0: i32) -> (i32, i32) {
    %c0_i32 = arith.constant 0 : i32
    %c0_i32_0 = arith.constant 0 : i32
    %c0_i32_1 = arith.constant 0 : i32
    return %c0_i32, %c0_i32_0 : i32, i32
  }
  func.func @transform_7(%arg0: i32) -> (i32, i32, i32) {
    %c0_i32 = arith.constant 0 : i32
    %c0_i32_0 = arith.constant 0 : i32
    %c0_i32_1 = arith.constant 0 : i32
    return %arg0, %c0_i32, %c0_i32_0 : i32, i32, i32
  }
}

module attributes {stable_mosaic.version = 11 : i64} {
  func.func @_matmul_bias_act_kernel(%arg0: i32, %arg1: i32, %arg2: memref<8x1152xbf16, #tpu.memory_space<vmem>>, %arg3: memref<1152x256xbf16, #tpu.memory_space<vmem>>, %arg4: memref<1x256xf32, #tpu.memory_space<vmem>>, %arg5: memref<8x256xf32, #tpu.memory_space<vmem>>) attributes {dimension_semantics = [#tpu.dimension_semantics<parallel>, #tpu.dimension_semantics<parallel>], iteration_bounds = array<i64: 1, 1>, scalar_prefetch = 0 : i64, scratch_operands = 0 : i64, tpu.core_type = #tpu.core_type<tc>, window_params = [{transform_indices = @transform_0, window_bounds = array<i64: 8, 1152>}, {transform_indices = @transform_1, window_bounds = array<i64: 1152, 256>}, {transform_indices = @transform_2, window_bounds = array<i64: 1, 256>}, {transform_indices = @transform_3, window_bounds = array<i64: 8, 256>}]} {
    %c0 = arith.constant 0 : index
    %c0_0 = arith.constant 0 : index
    %0 = vector.load %arg2[%c0, %c0_0] : memref<8x1152xbf16, #tpu.memory_space<vmem>>, vector<8x1152xbf16>
    %c0_1 = arith.constant 0 : index
    %c0_2 = arith.constant 0 : index
    %1 = vector.load %arg3[%c0_1, %c0_2] : memref<1152x256xbf16, #tpu.memory_space<vmem>>, vector<1152x256xbf16>
    %cst = arith.constant dense<0.000000e+00> : vector<8x256xf32>
    %2 = tpu.matmul %0, %1, %cst {dimension_numbers = #tpu.dot_dimension_numbers<[1], [0], [0], [1], [0, 0, 1, 1], [], []>} : vector<8x1152xbf16>, vector<1152x256xbf16>, vector<8x256xf32> -> vector<8x256xf32>
    %c0_3 = arith.constant 0 : index
    %c0_4 = arith.constant 0 : index
    %3 = vector.load %arg4[%c0_3, %c0_4] : memref<1x256xf32, #tpu.memory_space<vmem>>, vector<1x256xf32>
    %4 = vector.broadcast %3 : vector<1x256xf32> to vector<8x256xf32>
    %5 = arith.addf %2, %4 : vector<8x256xf32>
    %c0_5 = arith.constant 0 : index
    %c0_6 = arith.constant 0 : index
    %6 = vector.load %arg5[%c0_5, %c0_6] : memref<8x256xf32, #tpu.memory_space<vmem>>, vector<8x256xf32>
    tpu.vector_store %arg5[%c0_5, %c0_6], %5 {strides = array<i32>} : memref<8x256xf32, #tpu.memory_space<vmem>>, vector<8x256xf32>,
    return
  }
  func.func @transform_0(%arg0: i32, %arg1: i32) -> (i32, i32) {
    %c0_i32 = arith.constant 0 : i32
    %c0_i32_0 = arith.constant 0 : i32
    return %arg0, %c0_i32 : i32, i32
  }
  func.func @transform_1(%arg0: i32, %arg1: i32) -> (i32, i32) {
    %c0_i32 = arith.constant 0 : i32
    %c0_i32_0 = arith.constant 0 : i32
    return %c0_i32, %arg1 : i32, i32
  }
  func.func @transform_2(%arg0: i32, %arg1: i32) -> (i32, i32) {
    %c0_i32 = arith.constant 0 : i32
    %c0_i32_0 = arith.constant 0 : i32
    return %c0_i32, %arg1 : i32, i32
  }
  func.func @transform_3(%arg0: i32, %arg1: i32) -> (i32, i32) {
    %c0_i32 = arith.constant 0 : i32
    return %arg0, %arg1 : i32, i32
  }
}

module attributes {stable_mosaic.version = 11 : i64} {
  func.func @_ffn_block_kernel(%arg0: i32, %arg1: memref<1x4x256xf32, #tpu.memory_space<vmem>>, %arg2: memref<256x1024xbf16, #tpu.memory_space<vmem>>, %arg3: memref<1x1024xf32, #tpu.memory_space<vmem>>, %arg4: memref<1024x256xbf16, #tpu.memory_space<vmem>>, %arg5: memref<1x256xf32, #tpu.memory_space<vmem>>, %arg6: memref<1x256xf32, #tpu.memory_space<vmem>>, %arg7: memref<1x256xf32, #tpu.memory_space<vmem>>, %arg8: memref<1x4x256xf32, #tpu.memory_space<vmem>>) attributes {dimension_semantics = [#tpu.dimension_semantics<parallel>], iteration_bounds = array<i64: 2>, scalar_prefetch = 0 : i64, scratch_operands = 0 : i64, tpu.core_type = #tpu.core_type<tc>, window_params = [{transform_indices = @transform_0, window_bounds = array<i64: 1, 4, 256>}, {pipeline_mode = #tpu.pipeline_mode<synchronous>, transform_indices = @transform_1, window_bounds = array<i64: 256, 1024>}, {pipeline_mode = #tpu.pipeline_mode<synchronous>, transform_indices = @transform_2, window_bounds = array<i64: 1, 1024>}, {pipeline_mode = #tpu.pipeline_mode<synchronous>, transform_indices = @transform_3, window_bounds = array<i64: 1024, 256>}, {pipeline_mode = #tpu.pipeline_mode<synchronous>, transform_indices = @transform_4, window_bounds = array<i64: 1, 256>}, {pipeline_mode = #tpu.pipeline_mode<synchronous>, transform_indices = @transform_5, window_bounds = array<i64: 1, 256>}, {pipeline_mode = #tpu.pipeline_mode<synchronous>, transform_indices = @transform_6, window_bounds = array<i64: 1, 256>}, {transform_indices = @transform_7, window_bounds = array<i64: 1, 4, 256>}]} {
    %c0 = arith.constant 0 : index
    %c0_0 = arith.constant 0 : index
    %c0_1 = arith.constant 0 : index
    %0 = vector.load %arg1[%c0, %c0_0, %c0_1] : memref<1x4x256xf32, #tpu.memory_space<vmem>>, vector<1x4x256xf32>
    %1 = vector.shape_cast %0 : vector<1x4x256xf32> to vector<4x256xf32>
    %2 = arith.truncf %1 : vector<4x256xf32> to vector<4x256xbf16>
    %c0_2 = arith.constant 0 : index
    %c0_3 = arith.constant 0 : index
    %3 = vector.load %arg2[%c0_2, %c0_3] : memref<256x1024xbf16, #tpu.memory_space<vmem>>, vector<256x1024xbf16>
    %cst = arith.constant dense<0.000000e+00> : vector<4x1024xf32>
    %4 = tpu.matmul %2, %3, %cst {dimension_numbers = #tpu.dot_dimension_numbers<[1], [0], [0], [1], [0, 0, 1, 1], [], []>} : vector<4x256xbf16>, vector<256x1024xbf16>, vector<4x1024xf32> -> vector<4x1024xf32>
    %c0_4 = arith.constant 0 : index
    %c0_5 = arith.constant 0 : index
    %5 = vector.load %arg3[%c0_4, %c0_5] : memref<1x1024xf32, #tpu.memory_space<vmem>>, vector<1x1024xf32>
    %6 = vector.broadcast %5 : vector<1x1024xf32> to vector<4x1024xf32>
    %7 = arith.addf %4, %6 : vector<4x1024xf32>
    %cst_6 = arith.constant 0.000000e+00 : f32
    %8 = vector.broadcast %cst_6 : f32 to vector<4x1024xf32>
    %9 = arith.maximumf %7, %8 : vector<4x1024xf32>
    %10 = arith.truncf %9 : vector<4x1024xf32> to vector<4x1024xbf16>
    %c0_7 = arith.constant 0 : index
    %c0_8 = arith.constant 0 : index
    %11 = vector.load %arg4[%c0_7, %c0_8] : memref<1024x256xbf16, #tpu.memory_space<vmem>>, vector<1024x256xbf16>
    %cst_9 = arith.constant dense<0.000000e+00> : vector<4x256xf32>
    %12 = tpu.matmul %10, %11, %cst_9 {dimension_numbers = #tpu.dot_dimension_numbers<[1], [0], [0], [1], [0, 0, 1, 1], [], []>} : vector<4x1024xbf16>, vector<1024x256xbf16>, vector<4x256xf32> -> vector<4x256xf32>
    %c0_10 = arith.constant 0 : index
    %c0_11 = arith.constant 0 : index
    %13 = vector.load %arg5[%c0_10, %c0_11] : memref<1x256xf32, #tpu.memory_space<vmem>>, vector<1x256xf32>
    %14 = vector.broadcast %13 : vector<1x256xf32> to vector<4x256xf32>
    %15 = arith.addf %12, %14 : vector<4x256xf32>
    %16 = arith.addf %1, %15 : vector<4x256xf32>
    %c0_12 = arith.constant 0 : index
    %c0_13 = arith.constant 0 : index
    %17 = vector.load %arg6[%c0_12, %c0_13] : memref<1x256xf32, #tpu.memory_space<vmem>>, vector<1x256xf32>
    %c0_14 = arith.constant 0 : index
    %c0_15 = arith.constant 0 : index
    %18 = vector.load %arg7[%c0_14, %c0_15] : memref<1x256xf32, #tpu.memory_space<vmem>>, vector<1x256xf32>
    %cst_16 = arith.constant dense<0.000000e+00> : vector<4xf32>
    %19 = vector.multi_reduction <add>, %16, %cst_16 [1] : vector<4x256xf32> to vector<4xf32>
    %20 = vector.shape_cast %19 : vector<4xf32> to vector<4x1xf32>
    %cst_17 = arith.constant 2.560000e+02 : f32
    %21 = vector.broadcast %cst_17 : f32 to vector<4x1xf32>
    %22 = arith.divf %20, %21 : vector<4x1xf32>
    %23 = vector.broadcast %22 : vector<4x1xf32> to vector<4x256xf32>
    %24 = arith.subf %16, %23 : vector<4x256xf32>
    %25 = arith.mulf %24, %24 : vector<4x256xf32>
    %cst_18 = arith.constant dense<0.000000e+00> : vector<4xf32>
    %26 = vector.multi_reduction <add>, %25, %cst_18 [1] : vector<4x256xf32> to vector<4xf32>
    %27 = vector.shape_cast %26 : vector<4xf32> to vector<4x1xf32>
    %cst_19 = arith.constant 2.560000e+02 : f32
    %28 = vector.broadcast %cst_19 : f32 to vector<4x1xf32>
    %29 = arith.divf %27, %28 : vector<4x1xf32>
    %30 = vector.broadcast %22 : vector<4x1xf32> to vector<4x256xf32>
    %31 = arith.subf %16, %30 : vector<4x256xf32>
    %cst_20 = arith.constant 9.99999974E-6 : f32
    %32 = vector.broadcast %cst_20 : f32 to vector<4x1xf32>
    %33 = arith.addf %29, %32 : vector<4x1xf32>
    %34 = math.rsqrt %33 : vector<4x1xf32>
    %35 = vector.broadcast %34 : vector<4x1xf32> to vector<4x256xf32>
    %36 = arith.mulf %31, %35 : vector<4x256xf32>
    %37 = vector.broadcast %17 : vector<1x256xf32> to vector<4x256xf32>
    %38 = arith.mulf %36, %37 : vector<4x256xf32>
    %39 = vector.broadcast %18 : vector<1x256xf32> to vector<4x256xf32>
    %40 = arith.addf %38, %39 : vector<4x256xf32>
    %c0_21 = arith.constant 0 : index
    %c0_22 = arith.constant 0 : index
    %c0_23 = arith.constant 0 : index
    %41 = vector.load %arg8[%c0_21, %c0_22, %c0_23] : memref<1x4x256xf32, #tpu.memory_space<vmem>>, vector<1x4x256xf32>
    %42 = vector.shape_cast %41 : vector<1x4x256xf32> to vector<4x256xf32>
    %43 = vector.shape_cast %40 : vector<4x256xf32> to vector<1x4x256xf32>
    tpu.vector_store %arg8[%c0_21, %c0_22, %c0_23], %43 {strides = array<i32>} : memref<1x4x256xf32, #tpu.memory_space<vmem>>, vector<1x4x256xf32>,
    return
  }
  func.func @transform_0(%arg0: i32) -> (i32, i32, i32) {
    %c0_i32 = arith.constant 0 : i32
    %c0_i32_0 = arith.constant 0 : i32
    %c0_i32_1 = arith.constant 0 : i32
    return %arg0, %c0_i32, %c0_i32_0 : i32, i32, i32
  }
  func.func @transform_1(%arg0: i32) -> (i32, i32) {
    %c0_i32 = arith.constant 0 : i32
    %c0_i32_0 = arith.constant 0 : i32
    %c0_i32_1 = arith.constant 0 : i32
    return %c0_i32, %c0_i32_0 : i32, i32
  }
  func.func @transform_2(%arg0: i32) -> (i32, i32) {
    %c0_i32 = arith.constant 0 : i32
    %c0_i32_0 = arith.constant 0 : i32
    %c0_i32_1 = arith.constant 0 : i32
    return %c0_i32, %c0_i32_0 : i32, i32
  }
  func.func @transform_3(%arg0: i32) -> (i32, i32) {
    %c0_i32 = arith.constant 0 : i32
    %c0_i32_0 = arith.constant 0 : i32
    %c0_i32_1 = arith.constant 0 : i32
    return %c0_i32, %c0_i32_0 : i32, i32
  }
  func.func @transform_4(%arg0: i32) -> (i32, i32) {
    %c0_i32 = arith.constant 0 : i32
    %c0_i32_0 = arith.constant 0 : i32
    %c0_i32_1 = arith.constant 0 : i32
    return %c0_i32, %c0_i32_0 : i32, i32
  }
  func.func @transform_5(%arg0: i32) -> (i32, i32) {
    %c0_i32 = arith.constant 0 : i32
    %c0_i32_0 = arith.constant 0 : i32
    %c0_i32_1 = arith.constant 0 : i32
    return %c0_i32, %c0_i32_0 : i32, i32
  }
  func.func @transform_6(%arg0: i32) -> (i32, i32) {
    %c0_i32 = arith.constant 0 : i32
    %c0_i32_0 = arith.constant 0 : i32
    %c0_i32_1 = arith.constant 0 : i32
    return %c0_i32, %c0_i32_0 : i32, i32
  }
  func.func @transform_7(%arg0: i32) -> (i32, i32, i32) {
    %c0_i32 = arith.constant 0 : i32
    %c0_i32_0 = arith.constant 0 : i32
    %c0_i32_1 = arith.constant 0 : i32
    return %arg0, %c0_i32, %c0_i32_0 : i32, i32, i32
  }
}

module attributes {stable_mosaic.version = 11 : i64} {
  func.func @_attn_block_kernel(%arg0: i32, %arg1: memref<1x4x256xf32, #tpu.memory_space<vmem>>, %arg2: memref<256x768xbf16, #tpu.memory_space<vmem>>, %arg3: memref<1x768xf32, #tpu.memory_space<vmem>>, %arg4: memref<256x256xbf16, #tpu.memory_space<vmem>>, %arg5: memref<1x256xf32, #tpu.memory_space<vmem>>, %arg6: memref<1x256xf32, #tpu.memory_space<vmem>>, %arg7: memref<1x256xf32, #tpu.memory_space<vmem>>, %arg8: memref<1x4x256xf32, #tpu.memory_space<vmem>>) attributes {dimension_semantics = [#tpu.dimension_semantics<parallel>], iteration_bounds = array<i64: 2>, scalar_prefetch = 0 : i64, scratch_operands = 0 : i64, tpu.core_type = #tpu.core_type<tc>, window_params = [{transform_indices = @transform_0, window_bounds = array<i64: 1, 4, 256>}, {pipeline_mode = #tpu.pipeline_mode<synchronous>, transform_indices = @transform_1, window_bounds = array<i64: 256, 768>}, {pipeline_mode = #tpu.pipeline_mode<synchronous>, transform_indices = @transform_2, window_bounds = array<i64: 1, 768>}, {pipeline_mode = #tpu.pipeline_mode<synchronous>, transform_indices = @transform_3, window_bounds = array<i64: 256, 256>}, {pipeline_mode = #tpu.pipeline_mode<synchronous>, transform_indices = @transform_4, window_bounds = array<i64: 1, 256>}, {pipeline_mode = #tpu.pipeline_mode<synchronous>, transform_indices = @transform_5, window_bounds = array<i64: 1, 256>}, {pipeline_mode = #tpu.pipeline_mode<synchronous>, transform_indices = @transform_6, window_bounds = array<i64: 1, 256>}, {transform_indices = @transform_7, window_bounds = array<i64: 1, 4, 256>}]} {
    %c0 = arith.constant 0 : index
    %c0_0 = arith.constant 0 : index
    %c0_1 = arith.constant 0 : index
    %0 = vector.load %arg1[%c0, %c0_0, %c0_1] : memref<1x4x256xf32, #tpu.memory_space<vmem>>, vector<1x4x256xf32>
    %1 = vector.shape_cast %0 : vector<1x4x256xf32> to vector<4x256xf32>
    %2 = arith.truncf %1 : vector<4x256xf32> to vector<4x256xbf16>
    %c0_2 = arith.constant 0 : index
    %c0_3 = arith.constant 0 : index
    %3 = vector.load %arg2[%c0_2, %c0_3] : memref<256x768xbf16, #tpu.memory_space<vmem>>, vector<256x768xbf16>
    %cst = arith.constant dense<0.000000e+00> : vector<4x768xf32>
    %4 = tpu.matmul %2, %3, %cst {dimension_numbers = #tpu.dot_dimension_numbers<[1], [0], [0], [1], [0, 0, 1, 1], [], []>} : vector<4x256xbf16>, vector<256x768xbf16>, vector<4x768xf32> -> vector<4x768xf32>
    %c0_4 = arith.constant 0 : index
    %c0_5 = arith.constant 0 : index
    %5 = vector.load %arg3[%c0_4, %c0_5] : memref<1x768xf32, #tpu.memory_space<vmem>>, vector<1x768xf32>
    %6 = vector.broadcast %5 : vector<1x768xf32> to vector<4x768xf32>
    %7 = arith.addf %4, %6 : vector<4x768xf32>
    %8 = vector.extract_strided_slice %7 {offsets = [0, 0], sizes = [4, 256], strides = [1, 1]} : vector<4x768xf32> to vector<4x256xf32>
    %9 = vector.extract_strided_slice %7 {offsets = [0, 256], sizes = [4, 256], strides = [1, 1]} : vector<4x768xf32> to vector<4x256xf32>
    %10 = vector.extract_strided_slice %7 {offsets = [0, 512], sizes = [4, 256], strides = [1, 1]} : vector<4x768xf32> to vector<4x256xf32>
    %cst_6 = arith.constant 3.200000e+01 : f32
    %11 = math.sqrt %cst_6 : f32
    %cst_7 = arith.constant 1.000000e+00 : f32
    %12 = arith.divf %cst_7, %11 : f32
    %13 = vector.extract_strided_slice %8 {offsets = [0, 0], sizes = [4, 32], strides = [1, 1]} : vector<4x256xf32> to vector<4x32xf32>
    %14 = arith.truncf %13 : vector<4x32xf32> to vector<4x32xbf16>
    %15 = vector.extract_strided_slice %9 {offsets = [0, 0], sizes = [4, 32], strides = [1, 1]} : vector<4x256xf32> to vector<4x32xf32>
    %16 = arith.truncf %15 : vector<4x32xf32> to vector<4x32xbf16>
    %17 = vector.extract_strided_slice %10 {offsets = [0, 0], sizes = [4, 32], strides = [1, 1]} : vector<4x256xf32> to vector<4x32xf32>
    %18 = arith.truncf %17 : vector<4x32xf32> to vector<4x32xbf16>
    %19 = tpu.transpose %16, [1, 0] : vector<4x32xbf16> -> vector<32x4xbf16>
    %cst_8 = arith.constant dense<0.000000e+00> : vector<4x4xf32>
    %20 = tpu.matmul %14, %19, %cst_8 {dimension_numbers = #tpu.dot_dimension_numbers<[1], [0], [0], [1], [0, 0, 1, 1], [], []>} : vector<4x32xbf16>, vector<32x4xbf16>, vector<4x4xf32> -> vector<4x4xf32>
    %21 = vector.broadcast %12 : f32 to vector<4x4xf32>
    %22 = arith.mulf %20, %21 : vector<4x4xf32>
    %cst_9 = arith.constant dense<0xFF800000> : vector<4xf32>
    %23 = vector.multi_reduction <maximumf>, %22, %cst_9 [1] : vector<4x4xf32> to vector<4xf32>
    %24 = vector.shape_cast %23 : vector<4xf32> to vector<4x1xf32>
    %25 = vector.broadcast %24 : vector<4x1xf32> to vector<4x4xf32>
    %26 = arith.subf %22, %25 : vector<4x4xf32>
    %27 = math.exp %26 : vector<4x4xf32>
    %cst_10 = arith.constant dense<0.000000e+00> : vector<4xf32>
    %28 = vector.multi_reduction <add>, %27, %cst_10 [1] : vector<4x4xf32> to vector<4xf32>
    %29 = vector.shape_cast %28 : vector<4xf32> to vector<4x1xf32>
    %30 = tpu.reciprocal %29 {approx = true} : vector<4x1xf32> -> vector<4x1xf32>
    %31 = vector.broadcast %30 : vector<4x1xf32> to vector<4x4xf32>
    %32 = arith.mulf %27, %31 : vector<4x4xf32>
    %33 = arith.truncf %32 : vector<4x4xf32> to vector<4x4xbf16>
    %cst_11 = arith.constant dense<0.000000e+00> : vector<4x32xf32>
    %34 = tpu.matmul %33, %18, %cst_11 {dimension_numbers = #tpu.dot_dimension_numbers<[1], [0], [0], [1], [0, 0, 1, 1], [], []>} : vector<4x4xbf16>, vector<4x32xbf16>, vector<4x32xf32> -> vector<4x32xf32>
    %35 = vector.extract_strided_slice %8 {offsets = [0, 32], sizes = [4, 32], strides = [1, 1]} : vector<4x256xf32> to vector<4x32xf32>
    %36 = arith.truncf %35 : vector<4x32xf32> to vector<4x32xbf16>
    %37 = vector.extract_strided_slice %9 {offsets = [0, 32], sizes = [4, 32], strides = [1, 1]} : vector<4x256xf32> to vector<4x32xf32>
    %38 = arith.truncf %37 : vector<4x32xf32> to vector<4x32xbf16>
    %39 = vector.extract_strided_slice %10 {offsets = [0, 32], sizes = [4, 32], strides = [1, 1]} : vector<4x256xf32> to vector<4x32xf32>
    %40 = arith.truncf %39 : vector<4x32xf32> to vector<4x32xbf16>
    %41 = tpu.transpose %38, [1, 0] : vector<4x32xbf16> -> vector<32x4xbf16>
    %cst_12 = arith.constant dense<0.000000e+00> : vector<4x4xf32>
    %42 = tpu.matmul %36, %41, %cst_12 {dimension_numbers = #tpu.dot_dimension_numbers<[1], [0], [0], [1], [0, 0, 1, 1], [], []>} : vector<4x32xbf16>, vector<32x4xbf16>, vector<4x4xf32> -> vector<4x4xf32>
    %43 = vector.broadcast %12 : f32 to vector<4x4xf32>
    %44 = arith.mulf %42, %43 : vector<4x4xf32>
    %cst_13 = arith.constant dense<0xFF800000> : vector<4xf32>
    %45 = vector.multi_reduction <maximumf>, %44, %cst_13 [1] : vector<4x4xf32> to vector<4xf32>
    %46 = vector.shape_cast %45 : vector<4xf32> to vector<4x1xf32>
    %47 = vector.broadcast %46 : vector<4x1xf32> to vector<4x4xf32>
    %48 = arith.subf %44, %47 : vector<4x4xf32>
    %49 = math.exp %48 : vector<4x4xf32>
    %cst_14 = arith.constant dense<0.000000e+00> : vector<4xf32>
    %50 = vector.multi_reduction <add>, %49, %cst_14 [1] : vector<4x4xf32> to vector<4xf32>
    %51 = vector.shape_cast %50 : vector<4xf32> to vector<4x1xf32>
    %52 = tpu.reciprocal %51 {approx = true} : vector<4x1xf32> -> vector<4x1xf32>
    %53 = vector.broadcast %52 : vector<4x1xf32> to vector<4x4xf32>
    %54 = arith.mulf %49, %53 : vector<4x4xf32>
    %55 = arith.truncf %54 : vector<4x4xf32> to vector<4x4xbf16>
    %cst_15 = arith.constant dense<0.000000e+00> : vector<4x32xf32>
    %56 = tpu.matmul %55, %40, %cst_15 {dimension_numbers = #tpu.dot_dimension_numbers<[1], [0], [0], [1], [0, 0, 1, 1], [], []>} : vector<4x4xbf16>, vector<4x32xbf16>, vector<4x32xf32> -> vector<4x32xf32>
    %57 = vector.extract_strided_slice %8 {offsets = [0, 64], sizes = [4, 32], strides = [1, 1]} : vector<4x256xf32> to vector<4x32xf32>
    %58 = arith.truncf %57 : vector<4x32xf32> to vector<4x32xbf16>
    %59 = vector.extract_strided_slice %9 {offsets = [0, 64], sizes = [4, 32], strides = [1, 1]} : vector<4x256xf32> to vector<4x32xf32>
    %60 = arith.truncf %59 : vector<4x32xf32> to vector<4x32xbf16>
    %61 = vector.extract_strided_slice %10 {offsets = [0, 64], sizes = [4, 32], strides = [1, 1]} : vector<4x256xf32> to vector<4x32xf32>
    %62 = arith.truncf %61 : vector<4x32xf32> to vector<4x32xbf16>
    %63 = tpu.transpose %60, [1, 0] : vector<4x32xbf16> -> vector<32x4xbf16>
    %cst_16 = arith.constant dense<0.000000e+00> : vector<4x4xf32>
    %64 = tpu.matmul %58, %63, %cst_16 {dimension_numbers = #tpu.dot_dimension_numbers<[1], [0], [0], [1], [0, 0, 1, 1], [], []>} : vector<4x32xbf16>, vector<32x4xbf16>, vector<4x4xf32> -> vector<4x4xf32>
    %65 = vector.broadcast %12 : f32 to vector<4x4xf32>
    %66 = arith.mulf %64, %65 : vector<4x4xf32>
    %cst_17 = arith.constant dense<0xFF800000> : vector<4xf32>
    %67 = vector.multi_reduction <maximumf>, %66, %cst_17 [1] : vector<4x4xf32> to vector<4xf32>
    %68 = vector.shape_cast %67 : vector<4xf32> to vector<4x1xf32>
    %69 = vector.broadcast %68 : vector<4x1xf32> to vector<4x4xf32>
    %70 = arith.subf %66, %69 : vector<4x4xf32>
    %71 = math.exp %70 : vector<4x4xf32>
    %cst_18 = arith.constant dense<0.000000e+00> : vector<4xf32>
    %72 = vector.multi_reduction <add>, %71, %cst_18 [1] : vector<4x4xf32> to vector<4xf32>
    %73 = vector.shape_cast %72 : vector<4xf32> to vector<4x1xf32>
    %74 = tpu.reciprocal %73 {approx = true} : vector<4x1xf32> -> vector<4x1xf32>
    %75 = vector.broadcast %74 : vector<4x1xf32> to vector<4x4xf32>
    %76 = arith.mulf %71, %75 : vector<4x4xf32>
    %77 = arith.truncf %76 : vector<4x4xf32> to vector<4x4xbf16>
    %cst_19 = arith.constant dense<0.000000e+00> : vector<4x32xf32>
    %78 = tpu.matmul %77, %62, %cst_19 {dimension_numbers = #tpu.dot_dimension_numbers<[1], [0], [0], [1], [0, 0, 1, 1], [], []>} : vector<4x4xbf16>, vector<4x32xbf16>, vector<4x32xf32> -> vector<4x32xf32>
    %79 = vector.extract_strided_slice %8 {offsets = [0, 96], sizes = [4, 32], strides = [1, 1]} : vector<4x256xf32> to vector<4x32xf32>
    %80 = arith.truncf %79 : vector<4x32xf32> to vector<4x32xbf16>
    %81 = vector.extract_strided_slice %9 {offsets = [0, 96], sizes = [4, 32], strides = [1, 1]} : vector<4x256xf32> to vector<4x32xf32>
    %82 = arith.truncf %81 : vector<4x32xf32> to vector<4x32xbf16>
    %83 = vector.extract_strided_slice %10 {offsets = [0, 96], sizes = [4, 32], strides = [1, 1]} : vector<4x256xf32> to vector<4x32xf32>
    %84 = arith.truncf %83 : vector<4x32xf32> to vector<4x32xbf16>
    %85 = tpu.transpose %82, [1, 0] : vector<4x32xbf16> -> vector<32x4xbf16>
    %cst_20 = arith.constant dense<0.000000e+00> : vector<4x4xf32>
    %86 = tpu.matmul %80, %85, %cst_20 {dimension_numbers = #tpu.dot_dimension_numbers<[1], [0], [0], [1], [0, 0, 1, 1], [], []>} : vector<4x32xbf16>, vector<32x4xbf16>, vector<4x4xf32> -> vector<4x4xf32>
    %87 = vector.broadcast %12 : f32 to vector<4x4xf32>
    %88 = arith.mulf %86, %87 : vector<4x4xf32>
    %cst_21 = arith.constant dense<0xFF800000> : vector<4xf32>
    %89 = vector.multi_reduction <maximumf>, %88, %cst_21 [1] : vector<4x4xf32> to vector<4xf32>
    %90 = vector.shape_cast %89 : vector<4xf32> to vector<4x1xf32>
    %91 = vector.broadcast %90 : vector<4x1xf32> to vector<4x4xf32>
    %92 = arith.subf %88, %91 : vector<4x4xf32>
    %93 = math.exp %92 : vector<4x4xf32>
    %cst_22 = arith.constant dense<0.000000e+00> : vector<4xf32>
    %94 = vector.multi_reduction <add>, %93, %cst_22 [1] : vector<4x4xf32> to vector<4xf32>
    %95 = vector.shape_cast %94 : vector<4xf32> to vector<4x1xf32>
    %96 = tpu.reciprocal %95 {approx = true} : vector<4x1xf32> -> vector<4x1xf32>
    %97 = vector.broadcast %96 : vector<4x1xf32> to vector<4x4xf32>
    %98 = arith.mulf %93, %97 : vector<4x4xf32>
    %99 = arith.truncf %98 : vector<4x4xf32> to vector<4x4xbf16>
    %cst_23 = arith.constant dense<0.000000e+00> : vector<4x32xf32>
    %100 = tpu.matmul %99, %84, %cst_23 {dimension_numbers = #tpu.dot_dimension_numbers<[1], [0], [0], [1], [0, 0, 1, 1], [], []>} : vector<4x4xbf16>, vector<4x32xbf16>, vector<4x32xf32> -> vector<4x32xf32>
    %101 = vector.extract_strided_slice %8 {offsets = [0, 128], sizes = [4, 32], strides = [1, 1]} : vector<4x256xf32> to vector<4x32xf32>
    %102 = arith.truncf %101 : vector<4x32xf32> to vector<4x32xbf16>
    %103 = vector.extract_strided_slice %9 {offsets = [0, 128], sizes = [4, 32], strides = [1, 1]} : vector<4x256xf32> to vector<4x32xf32>
    %104 = arith.truncf %103 : vector<4x32xf32> to vector<4x32xbf16>
    %105 = vector.extract_strided_slice %10 {offsets = [0, 128], sizes = [4, 32], strides = [1, 1]} : vector<4x256xf32> to vector<4x32xf32>
    %106 = arith.truncf %105 : vector<4x32xf32> to vector<4x32xbf16>
    %107 = tpu.transpose %104, [1, 0] : vector<4x32xbf16> -> vector<32x4xbf16>
    %cst_24 = arith.constant dense<0.000000e+00> : vector<4x4xf32>
    %108 = tpu.matmul %102, %107, %cst_24 {dimension_numbers = #tpu.dot_dimension_numbers<[1], [0], [0], [1], [0, 0, 1, 1], [], []>} : vector<4x32xbf16>, vector<32x4xbf16>, vector<4x4xf32> -> vector<4x4xf32>
    %109 = vector.broadcast %12 : f32 to vector<4x4xf32>
    %110 = arith.mulf %108, %109 : vector<4x4xf32>
    %cst_25 = arith.constant dense<0xFF800000> : vector<4xf32>
    %111 = vector.multi_reduction <maximumf>, %110, %cst_25 [1] : vector<4x4xf32> to vector<4xf32>
    %112 = vector.shape_cast %111 : vector<4xf32> to vector<4x1xf32>
    %113 = vector.broadcast %112 : vector<4x1xf32> to vector<4x4xf32>
    %114 = arith.subf %110, %113 : vector<4x4xf32>
    %115 = math.exp %114 : vector<4x4xf32>
    %cst_26 = arith.constant dense<0.000000e+00> : vector<4xf32>
    %116 = vector.multi_reduction <add>, %115, %cst_26 [1] : vector<4x4xf32> to vector<4xf32>
    %117 = vector.shape_cast %116 : vector<4xf32> to vector<4x1xf32>
    %118 = tpu.reciprocal %117 {approx = true} : vector<4x1xf32> -> vector<4x1xf32>
    %119 = vector.broadcast %118 : vector<4x1xf32> to vector<4x4xf32>
    %120 = arith.mulf %115, %119 : vector<4x4xf32>
    %121 = arith.truncf %120 : vector<4x4xf32> to vector<4x4xbf16>
    %cst_27 = arith.constant dense<0.000000e+00> : vector<4x32xf32>
    %122 = tpu.matmul %121, %106, %cst_27 {dimension_numbers = #tpu.dot_dimension_numbers<[1], [0], [0], [1], [0, 0, 1, 1], [], []>} : vector<4x4xbf16>, vector<4x32xbf16>, vector<4x32xf32> -> vector<4x32xf32>
    %123 = vector.extract_strided_slice %8 {offsets = [0, 160], sizes = [4, 32], strides = [1, 1]} : vector<4x256xf32> to vector<4x32xf32>
    %124 = arith.truncf %123 : vector<4x32xf32> to vector<4x32xbf16>
    %125 = vector.extract_strided_slice %9 {offsets = [0, 160], sizes = [4, 32], strides = [1, 1]} : vector<4x256xf32> to vector<4x32xf32>
    %126 = arith.truncf %125 : vector<4x32xf32> to vector<4x32xbf16>
    %127 = vector.extract_strided_slice %10 {offsets = [0, 160], sizes = [4, 32], strides = [1, 1]} : vector<4x256xf32> to vector<4x32xf32>
    %128 = arith.truncf %127 : vector<4x32xf32> to vector<4x32xbf16>
    %129 = tpu.transpose %126, [1, 0] : vector<4x32xbf16> -> vector<32x4xbf16>
    %cst_28 = arith.constant dense<0.000000e+00> : vector<4x4xf32>
    %130 = tpu.matmul %124, %129, %cst_28 {dimension_numbers = #tpu.dot_dimension_numbers<[1], [0], [0], [1], [0, 0, 1, 1], [], []>} : vector<4x32xbf16>, vector<32x4xbf16>, vector<4x4xf32> -> vector<4x4xf32>
    %131 = vector.broadcast %12 : f32 to vector<4x4xf32>
    %132 = arith.mulf %130, %131 : vector<4x4xf32>
    %cst_29 = arith.constant dense<0xFF800000> : vector<4xf32>
    %133 = vector.multi_reduction <maximumf>, %132, %cst_29 [1] : vector<4x4xf32> to vector<4xf32>
    %134 = vector.shape_cast %133 : vector<4xf32> to vector<4x1xf32>
    %135 = vector.broadcast %134 : vector<4x1xf32> to vector<4x4xf32>
    %136 = arith.subf %132, %135 : vector<4x4xf32>
    %137 = math.exp %136 : vector<4x4xf32>
    %cst_30 = arith.constant dense<0.000000e+00> : vector<4xf32>
    %138 = vector.multi_reduction <add>, %137, %cst_30 [1] : vector<4x4xf32> to vector<4xf32>
    %139 = vector.shape_cast %138 : vector<4xf32> to vector<4x1xf32>
    %140 = tpu.reciprocal %139 {approx = true} : vector<4x1xf32> -> vector<4x1xf32>
    %141 = vector.broadcast %140 : vector<4x1xf32> to vector<4x4xf32>
    %142 = arith.mulf %137, %141 : vector<4x4xf32>
    %143 = arith.truncf %142 : vector<4x4xf32> to vector<4x4xbf16>
    %cst_31 = arith.constant dense<0.000000e+00> : vector<4x32xf32>
    %144 = tpu.matmul %143, %128, %cst_31 {dimension_numbers = #tpu.dot_dimension_numbers<[1], [0], [0], [1], [0, 0, 1, 1], [], []>} : vector<4x4xbf16>, vector<4x32xbf16>, vector<4x32xf32> -> vector<4x32xf32>
    %145 = vector.extract_strided_slice %8 {offsets = [0, 192], sizes = [4, 32], strides = [1, 1]} : vector<4x256xf32> to vector<4x32xf32>
    %146 = arith.truncf %145 : vector<4x32xf32> to vector<4x32xbf16>
    %147 = vector.extract_strided_slice %9 {offsets = [0, 192], sizes = [4, 32], strides = [1, 1]} : vector<4x256xf32> to vector<4x32xf32>
    %148 = arith.truncf %147 : vector<4x32xf32> to vector<4x32xbf16>
    %149 = vector.extract_strided_slice %10 {offsets = [0, 192], sizes = [4, 32], strides = [1, 1]} : vector<4x256xf32> to vector<4x32xf32>
    %150 = arith.truncf %149 : vector<4x32xf32> to vector<4x32xbf16>
    %151 = tpu.transpose %148, [1, 0] : vector<4x32xbf16> -> vector<32x4xbf16>
    %cst_32 = arith.constant dense<0.000000e+00> : vector<4x4xf32>
    %152 = tpu.matmul %146, %151, %cst_32 {dimension_numbers = #tpu.dot_dimension_numbers<[1], [0], [0], [1], [0, 0, 1, 1], [], []>} : vector<4x32xbf16>, vector<32x4xbf16>, vector<4x4xf32> -> vector<4x4xf32>
    %153 = vector.broadcast %12 : f32 to vector<4x4xf32>
    %154 = arith.mulf %152, %153 : vector<4x4xf32>
    %cst_33 = arith.constant dense<0xFF800000> : vector<4xf32>
    %155 = vector.multi_reduction <maximumf>, %154, %cst_33 [1] : vector<4x4xf32> to vector<4xf32>
    %156 = vector.shape_cast %155 : vector<4xf32> to vector<4x1xf32>
    %157 = vector.broadcast %156 : vector<4x1xf32> to vector<4x4xf32>
    %158 = arith.subf %154, %157 : vector<4x4xf32>
    %159 = math.exp %158 : vector<4x4xf32>
    %cst_34 = arith.constant dense<0.000000e+00> : vector<4xf32>
    %160 = vector.multi_reduction <add>, %159, %cst_34 [1] : vector<4x4xf32> to vector<4xf32>
    %161 = vector.shape_cast %160 : vector<4xf32> to vector<4x1xf32>
    %162 = tpu.reciprocal %161 {approx = true} : vector<4x1xf32> -> vector<4x1xf32>
    %163 = vector.broadcast %162 : vector<4x1xf32> to vector<4x4xf32>
    %164 = arith.mulf %159, %163 : vector<4x4xf32>
    %165 = arith.truncf %164 : vector<4x4xf32> to vector<4x4xbf16>
    %cst_35 = arith.constant dense<0.000000e+00> : vector<4x32xf32>
    %166 = tpu.matmul %165, %150, %cst_35 {dimension_numbers = #tpu.dot_dimension_numbers<[1], [0], [0], [1], [0, 0, 1, 1], [], []>} : vector<4x4xbf16>, vector<4x32xbf16>, vector<4x32xf32> -> vector<4x32xf32>
    %167 = vector.extract_strided_slice %8 {offsets = [0, 224], sizes = [4, 32], strides = [1, 1]} : vector<4x256xf32> to vector<4x32xf32>
    %168 = arith.truncf %167 : vector<4x32xf32> to vector<4x32xbf16>
    %169 = vector.extract_strided_slice %9 {offsets = [0, 224], sizes = [4, 32], strides = [1, 1]} : vector<4x256xf32> to vector<4x32xf32>
    %170 = arith.truncf %169 : vector<4x32xf32> to vector<4x32xbf16>
    %171 = vector.extract_strided_slice %10 {offsets = [0, 224], sizes = [4, 32], strides = [1, 1]} : vector<4x256xf32> to vector<4x32xf32>
    %172 = arith.truncf %171 : vector<4x32xf32> to vector<4x32xbf16>
    %173 = tpu.transpose %170, [1, 0] : vector<4x32xbf16> -> vector<32x4xbf16>
    %cst_36 = arith.constant dense<0.000000e+00> : vector<4x4xf32>
    %174 = tpu.matmul %168, %173, %cst_36 {dimension_numbers = #tpu.dot_dimension_numbers<[1], [0], [0], [1], [0, 0, 1, 1], [], []>} : vector<4x32xbf16>, vector<32x4xbf16>, vector<4x4xf32> -> vector<4x4xf32>
    %175 = vector.broadcast %12 : f32 to vector<4x4xf32>
    %176 = arith.mulf %174, %175 : vector<4x4xf32>
    %cst_37 = arith.constant dense<0xFF800000> : vector<4xf32>
    %177 = vector.multi_reduction <maximumf>, %176, %cst_37 [1] : vector<4x4xf32> to vector<4xf32>
    %178 = vector.shape_cast %177 : vector<4xf32> to vector<4x1xf32>
    %179 = vector.broadcast %178 : vector<4x1xf32> to vector<4x4xf32>
    %180 = arith.subf %176, %179 : vector<4x4xf32>
    %181 = math.exp %180 : vector<4x4xf32>
    %cst_38 = arith.constant dense<0.000000e+00> : vector<4xf32>
    %182 = vector.multi_reduction <add>, %181, %cst_38 [1] : vector<4x4xf32> to vector<4xf32>
    %183 = vector.shape_cast %182 : vector<4xf32> to vector<4x1xf32>
    %184 = tpu.reciprocal %183 {approx = true} : vector<4x1xf32> -> vector<4x1xf32>
    %185 = vector.broadcast %184 : vector<4x1xf32> to vector<4x4xf32>
    %186 = arith.mulf %181, %185 : vector<4x4xf32>
    %187 = arith.truncf %186 : vector<4x4xf32> to vector<4x4xbf16>
    %cst_39 = arith.constant dense<0.000000e+00> : vector<4x32xf32>
    %188 = tpu.matmul %187, %172, %cst_39 {dimension_numbers = #tpu.dot_dimension_numbers<[1], [0], [0], [1], [0, 0, 1, 1], [], []>} : vector<4x4xbf16>, vector<4x32xbf16>, vector<4x32xf32> -> vector<4x32xf32>
    %189 = tpu.concatenate %34, %56, %78, %100, %122, %144, %166, %188 in 1 : vector<4x32xf32>, vector<4x32xf32>, vector<4x32xf32>, vector<4x32xf32>, vector<4x32xf32>, vector<4x32xf32>, vector<4x32xf32>, vector<4x32xf32> -> vector<4x256xf32>
    %190 = arith.truncf %189 : vector<4x256xf32> to vector<4x256xbf16>
    %c0_40 = arith.constant 0 : index
    %c0_41 = arith.constant 0 : index
    %191 = vector.load %arg4[%c0_40, %c0_41] : memref<256x256xbf16, #tpu.memory_space<vmem>>, vector<256x256xbf16>
    %cst_42 = arith.constant dense<0.000000e+00> : vector<4x256xf32>
    %192 = tpu.matmul %190, %191, %cst_42 {dimension_numbers = #tpu.dot_dimension_numbers<[1], [0], [0], [1], [0, 0, 1, 1], [], []>} : vector<4x256xbf16>, vector<256x256xbf16>, vector<4x256xf32> -> vector<4x256xf32>
    %c0_43 = arith.constant 0 : index
    %c0_44 = arith.constant 0 : index
    %193 = vector.load %arg5[%c0_43, %c0_44] : memref<1x256xf32, #tpu.memory_space<vmem>>, vector<1x256xf32>
    %194 = vector.broadcast %193 : vector<1x256xf32> to vector<4x256xf32>
    %195 = arith.addf %192, %194 : vector<4x256xf32>
    %196 = arith.addf %1, %195 : vector<4x256xf32>
    %c0_45 = arith.constant 0 : index
    %c0_46 = arith.constant 0 : index
    %197 = vector.load %arg6[%c0_45, %c0_46] : memref<1x256xf32, #tpu.memory_space<vmem>>, vector<1x256xf32>
    %c0_47 = arith.constant 0 : index
    %c0_48 = arith.constant 0 : index
    %198 = vector.load %arg7[%c0_47, %c0_48] : memref<1x256xf32, #tpu.memory_space<vmem>>, vector<1x256xf32>
    %cst_49 = arith.constant dense<0.000000e+00> : vector<4xf32>
    %199 = vector.multi_reduction <add>, %196, %cst_49 [1] : vector<4x256xf32> to vector<4xf32>
    %200 = vector.shape_cast %199 : vector<4xf32> to vector<4x1xf32>
    %cst_50 = arith.constant 2.560000e+02 : f32
    %201 = vector.broadcast %cst_50 : f32 to vector<4x1xf32>
    %202 = arith.divf %200, %201 : vector<4x1xf32>
    %203 = vector.broadcast %202 : vector<4x1xf32> to vector<4x256xf32>
    %204 = arith.subf %196, %203 : vector<4x256xf32>
    %205 = arith.mulf %204, %204 : vector<4x256xf32>
    %cst_51 = arith.constant dense<0.000000e+00> : vector<4xf32>
    %206 = vector.multi_reduction <add>, %205, %cst_51 [1] : vector<4x256xf32> to vector<4xf32>
    %207 = vector.shape_cast %206 : vector<4xf32> to vector<4x1xf32>
    %cst_52 = arith.constant 2.560000e+02 : f32
    %208 = vector.broadcast %cst_52 : f32 to vector<4x1xf32>
    %209 = arith.divf %207, %208 : vector<4x1xf32>
    %210 = vector.broadcast %202 : vector<4x1xf32> to vector<4x256xf32>
    %211 = arith.subf %196, %210 : vector<4x256xf32>
    %cst_53 = arith.constant 9.99999974E-6 : f32
    %212 = vector.broadcast %cst_53 : f32 to vector<4x1xf32>
    %213 = arith.addf %209, %212 : vector<4x1xf32>
    %214 = math.rsqrt %213 : vector<4x1xf32>
    %215 = vector.broadcast %214 : vector<4x1xf32> to vector<4x256xf32>
    %216 = arith.mulf %211, %215 : vector<4x256xf32>
    %217 = vector.broadcast %197 : vector<1x256xf32> to vector<4x256xf32>
    %218 = arith.mulf %216, %217 : vector<4x256xf32>
    %219 = vector.broadcast %198 : vector<1x256xf32> to vector<4x256xf32>
    %220 = arith.addf %218, %219 : vector<4x256xf32>
    %c0_54 = arith.constant 0 : index
    %c0_55 = arith.constant 0 : index
    %c0_56 = arith.constant 0 : index
    %221 = vector.load %arg8[%c0_54, %c0_55, %c0_56] : memref<1x4x256xf32, #tpu.memory_space<vmem>>, vector<1x4x256xf32>
    %222 = vector.shape_cast %221 : vector<1x4x256xf32> to vector<4x256xf32>
    %223 = vector.shape_cast %220 : vector<4x256xf32> to vector<1x4x256xf32>
    tpu.vector_store %arg8[%c0_54, %c0_55, %c0_56], %223 {strides = array<i32>} : memref<1x4x256xf32, #tpu.memory_space<vmem>>, vector<1x4x256xf32>,
    return
  }
  func.func @transform_0(%arg0: i32) -> (i32, i32, i32) {
    %c0_i32 = arith.constant 0 : i32
    %c0_i32_0 = arith.constant 0 : i32
    %c0_i32_1 = arith.constant 0 : i32
    return %arg0, %c0_i32, %c0_i32_0 : i32, i32, i32
  }
  func.func @transform_1(%arg0: i32) -> (i32, i32) {
    %c0_i32 = arith.constant 0 : i32
    %c0_i32_0 = arith.constant 0 : i32
    %c0_i32_1 = arith.constant 0 : i32
    return %c0_i32, %c0_i32_0 : i32, i32
  }
  func.func @transform_2(%arg0: i32) -> (i32, i32) {
    %c0_i32 = arith.constant 0 : i32
    %c0_i32_0 = arith.constant 0 : i32
    %c0_i32_1 = arith.constant 0 : i32
    return %c0_i32, %c0_i32_0 : i32, i32
  }
  func.func @transform_3(%arg0: i32) -> (i32, i32) {
    %c0_i32 = arith.constant 0 : i32
    %c0_i32_0 = arith.constant 0 : i32
    %c0_i32_1 = arith.constant 0 : i32
    return %c0_i32, %c0_i32_0 : i32, i32
  }
  func.func @transform_4(%arg0: i32) -> (i32, i32) {
    %c0_i32 = arith.constant 0 : i32
    %c0_i32_0 = arith.constant 0 : i32
    %c0_i32_1 = arith.constant 0 : i32
    return %c0_i32, %c0_i32_0 : i32, i32
  }
  func.func @transform_5(%arg0: i32) -> (i32, i32) {
    %c0_i32 = arith.constant 0 : i32
    %c0_i32_0 = arith.constant 0 : i32
    %c0_i32_1 = arith.constant 0 : i32
    return %c0_i32, %c0_i32_0 : i32, i32
  }
  func.func @transform_6(%arg0: i32) -> (i32, i32) {
    %c0_i32 = arith.constant 0 : i32
    %c0_i32_0 = arith.constant 0 : i32
    %c0_i32_1 = arith.constant 0 : i32
    return %c0_i32, %c0_i32_0 : i32, i32
  }
  func.func @transform_7(%arg0: i32) -> (i32, i32, i32) {
    %c0_i32 = arith.constant 0 : i32
    %c0_i32_0 = arith.constant 0 : i32
    %c0_i32_1 = arith.constant 0 : i32
    return %arg0, %c0_i32, %c0_i32_0 : i32, i32, i32
  }
}

module attributes {stable_mosaic.version = 11 : i64} {
  func.func @_ffn_block_kernel(%arg0: i32, %arg1: memref<1x4x256xf32, #tpu.memory_space<vmem>>, %arg2: memref<256x1024xbf16, #tpu.memory_space<vmem>>, %arg3: memref<1x1024xf32, #tpu.memory_space<vmem>>, %arg4: memref<1024x256xbf16, #tpu.memory_space<vmem>>, %arg5: memref<1x256xf32, #tpu.memory_space<vmem>>, %arg6: memref<1x256xf32, #tpu.memory_space<vmem>>, %arg7: memref<1x256xf32, #tpu.memory_space<vmem>>, %arg8: memref<1x4x256xf32, #tpu.memory_space<vmem>>) attributes {dimension_semantics = [#tpu.dimension_semantics<parallel>], iteration_bounds = array<i64: 2>, scalar_prefetch = 0 : i64, scratch_operands = 0 : i64, tpu.core_type = #tpu.core_type<tc>, window_params = [{transform_indices = @transform_0, window_bounds = array<i64: 1, 4, 256>}, {pipeline_mode = #tpu.pipeline_mode<synchronous>, transform_indices = @transform_1, window_bounds = array<i64: 256, 1024>}, {pipeline_mode = #tpu.pipeline_mode<synchronous>, transform_indices = @transform_2, window_bounds = array<i64: 1, 1024>}, {pipeline_mode = #tpu.pipeline_mode<synchronous>, transform_indices = @transform_3, window_bounds = array<i64: 1024, 256>}, {pipeline_mode = #tpu.pipeline_mode<synchronous>, transform_indices = @transform_4, window_bounds = array<i64: 1, 256>}, {pipeline_mode = #tpu.pipeline_mode<synchronous>, transform_indices = @transform_5, window_bounds = array<i64: 1, 256>}, {pipeline_mode = #tpu.pipeline_mode<synchronous>, transform_indices = @transform_6, window_bounds = array<i64: 1, 256>}, {transform_indices = @transform_7, window_bounds = array<i64: 1, 4, 256>}]} {
    %c0 = arith.constant 0 : index
    %c0_0 = arith.constant 0 : index
    %c0_1 = arith.constant 0 : index
    %0 = vector.load %arg1[%c0, %c0_0, %c0_1] : memref<1x4x256xf32, #tpu.memory_space<vmem>>, vector<1x4x256xf32>
    %1 = vector.shape_cast %0 : vector<1x4x256xf32> to vector<4x256xf32>
    %2 = arith.truncf %1 : vector<4x256xf32> to vector<4x256xbf16>
    %c0_2 = arith.constant 0 : index
    %c0_3 = arith.constant 0 : index
    %3 = vector.load %arg2[%c0_2, %c0_3] : memref<256x1024xbf16, #tpu.memory_space<vmem>>, vector<256x1024xbf16>
    %cst = arith.constant dense<0.000000e+00> : vector<4x1024xf32>
    %4 = tpu.matmul %2, %3, %cst {dimension_numbers = #tpu.dot_dimension_numbers<[1], [0], [0], [1], [0, 0, 1, 1], [], []>} : vector<4x256xbf16>, vector<256x1024xbf16>, vector<4x1024xf32> -> vector<4x1024xf32>
    %c0_4 = arith.constant 0 : index
    %c0_5 = arith.constant 0 : index
    %5 = vector.load %arg3[%c0_4, %c0_5] : memref<1x1024xf32, #tpu.memory_space<vmem>>, vector<1x1024xf32>
    %6 = vector.broadcast %5 : vector<1x1024xf32> to vector<4x1024xf32>
    %7 = arith.addf %4, %6 : vector<4x1024xf32>
    %cst_6 = arith.constant 0.000000e+00 : f32
    %8 = vector.broadcast %cst_6 : f32 to vector<4x1024xf32>
    %9 = arith.maximumf %7, %8 : vector<4x1024xf32>
    %10 = arith.truncf %9 : vector<4x1024xf32> to vector<4x1024xbf16>
    %c0_7 = arith.constant 0 : index
    %c0_8 = arith.constant 0 : index
    %11 = vector.load %arg4[%c0_7, %c0_8] : memref<1024x256xbf16, #tpu.memory_space<vmem>>, vector<1024x256xbf16>
    %cst_9 = arith.constant dense<0.000000e+00> : vector<4x256xf32>
    %12 = tpu.matmul %10, %11, %cst_9 {dimension_numbers = #tpu.dot_dimension_numbers<[1], [0], [0], [1], [0, 0, 1, 1], [], []>} : vector<4x1024xbf16>, vector<1024x256xbf16>, vector<4x256xf32> -> vector<4x256xf32>
    %c0_10 = arith.constant 0 : index
    %c0_11 = arith.constant 0 : index
    %13 = vector.load %arg5[%c0_10, %c0_11] : memref<1x256xf32, #tpu.memory_space<vmem>>, vector<1x256xf32>
    %14 = vector.broadcast %13 : vector<1x256xf32> to vector<4x256xf32>
    %15 = arith.addf %12, %14 : vector<4x256xf32>
    %16 = arith.addf %1, %15 : vector<4x256xf32>
    %c0_12 = arith.constant 0 : index
    %c0_13 = arith.constant 0 : index
    %17 = vector.load %arg6[%c0_12, %c0_13] : memref<1x256xf32, #tpu.memory_space<vmem>>, vector<1x256xf32>
    %c0_14 = arith.constant 0 : index
    %c0_15 = arith.constant 0 : index
    %18 = vector.load %arg7[%c0_14, %c0_15] : memref<1x256xf32, #tpu.memory_space<vmem>>, vector<1x256xf32>
    %cst_16 = arith.constant dense<0.000000e+00> : vector<4xf32>
    %19 = vector.multi_reduction <add>, %16, %cst_16 [1] : vector<4x256xf32> to vector<4xf32>
    %20 = vector.shape_cast %19 : vector<4xf32> to vector<4x1xf32>
    %cst_17 = arith.constant 2.560000e+02 : f32
    %21 = vector.broadcast %cst_17 : f32 to vector<4x1xf32>
    %22 = arith.divf %20, %21 : vector<4x1xf32>
    %23 = vector.broadcast %22 : vector<4x1xf32> to vector<4x256xf32>
    %24 = arith.subf %16, %23 : vector<4x256xf32>
    %25 = arith.mulf %24, %24 : vector<4x256xf32>
    %cst_18 = arith.constant dense<0.000000e+00> : vector<4xf32>
    %26 = vector.multi_reduction <add>, %25, %cst_18 [1] : vector<4x256xf32> to vector<4xf32>
    %27 = vector.shape_cast %26 : vector<4xf32> to vector<4x1xf32>
    %cst_19 = arith.constant 2.560000e+02 : f32
    %28 = vector.broadcast %cst_19 : f32 to vector<4x1xf32>
    %29 = arith.divf %27, %28 : vector<4x1xf32>
    %30 = vector.broadcast %22 : vector<4x1xf32> to vector<4x256xf32>
    %31 = arith.subf %16, %30 : vector<4x256xf32>
    %cst_20 = arith.constant 9.99999974E-6 : f32
    %32 = vector.broadcast %cst_20 : f32 to vector<4x1xf32>
    %33 = arith.addf %29, %32 : vector<4x1xf32>
    %34 = math.rsqrt %33 : vector<4x1xf32>
    %35 = vector.broadcast %34 : vector<4x1xf32> to vector<4x256xf32>
    %36 = arith.mulf %31, %35 : vector<4x256xf32>
    %37 = vector.broadcast %17 : vector<1x256xf32> to vector<4x256xf32>
    %38 = arith.mulf %36, %37 : vector<4x256xf32>
    %39 = vector.broadcast %18 : vector<1x256xf32> to vector<4x256xf32>
    %40 = arith.addf %38, %39 : vector<4x256xf32>
    %c0_21 = arith.constant 0 : index
    %c0_22 = arith.constant 0 : index
    %c0_23 = arith.constant 0 : index
    %41 = vector.load %arg8[%c0_21, %c0_22, %c0_23] : memref<1x4x256xf32, #tpu.memory_space<vmem>>, vector<1x4x256xf32>
    %42 = vector.shape_cast %41 : vector<1x4x256xf32> to vector<4x256xf32>
    %43 = vector.shape_cast %40 : vector<4x256xf32> to vector<1x4x256xf32>
    tpu.vector_store %arg8[%c0_21, %c0_22, %c0_23], %43 {strides = array<i32>} : memref<1x4x256xf32, #tpu.memory_space<vmem>>, vector<1x4x256xf32>,
    return
  }
  func.func @transform_0(%arg0: i32) -> (i32, i32, i32) {
    %c0_i32 = arith.constant 0 : i32
    %c0_i32_0 = arith.constant 0 : i32
    %c0_i32_1 = arith.constant 0 : i32
    return %arg0, %c0_i32, %c0_i32_0 : i32, i32, i32
  }
  func.func @transform_1(%arg0: i32) -> (i32, i32) {
    %c0_i32 = arith.constant 0 : i32
    %c0_i32_0 = arith.constant 0 : i32
    %c0_i32_1 = arith.constant 0 : i32
    return %c0_i32, %c0_i32_0 : i32, i32
  }
  func.func @transform_2(%arg0: i32) -> (i32, i32) {
    %c0_i32 = arith.constant 0 : i32
    %c0_i32_0 = arith.constant 0 : i32
    %c0_i32_1 = arith.constant 0 : i32
    return %c0_i32, %c0_i32_0 : i32, i32
  }
  func.func @transform_3(%arg0: i32) -> (i32, i32) {
    %c0_i32 = arith.constant 0 : i32
    %c0_i32_0 = arith.constant 0 : i32
    %c0_i32_1 = arith.constant 0 : i32
    return %c0_i32, %c0_i32_0 : i32, i32
  }
  func.func @transform_4(%arg0: i32) -> (i32, i32) {
    %c0_i32 = arith.constant 0 : i32
    %c0_i32_0 = arith.constant 0 : i32
    %c0_i32_1 = arith.constant 0 : i32
    return %c0_i32, %c0_i32_0 : i32, i32
  }
  func.func @transform_5(%arg0: i32) -> (i32, i32) {
    %c0_i32 = arith.constant 0 : i32
    %c0_i32_0 = arith.constant 0 : i32
    %c0_i32_1 = arith.constant 0 : i32
    return %c0_i32, %c0_i32_0 : i32, i32
  }
  func.func @transform_6(%arg0: i32) -> (i32, i32) {
    %c0_i32 = arith.constant 0 : i32
    %c0_i32_0 = arith.constant 0 : i32
    %c0_i32_1 = arith.constant 0 : i32
    return %c0_i32, %c0_i32_0 : i32, i32
  }
  func.func @transform_7(%arg0: i32) -> (i32, i32, i32) {
    %c0_i32 = arith.constant 0 : i32
    %c0_i32_0 = arith.constant 0 : i32
    %c0_i32_1 = arith.constant 0 : i32
    return %arg0, %c0_i32, %c0_i32_0 : i32, i32, i32
  }
}

module attributes {stable_mosaic.version = 11 : i64} {
  func.func @_policy_head_kernel(%arg0: memref<2x4x256xf32, #tpu.memory_space<vmem>>, %arg1: memref<256x512xbf16, #tpu.memory_space<vmem>>, %arg2: memref<1x512xf32, #tpu.memory_space<vmem>>, %arg3: memref<512x128xbf16, #tpu.memory_space<vmem>>, %arg4: memref<1x128xf32, #tpu.memory_space<vmem>>, %arg5: memref<2x128xf32, #tpu.memory_space<vmem>>) attributes {dimension_semantics = [], scalar_prefetch = 0 : i64, scratch_operands = 0 : i64, tpu.core_type = #tpu.core_type<tc>} {
    %c0 = arith.constant 0 : index
    %c0_0 = arith.constant 0 : index
    %c0_1 = arith.constant 0 : index
    %0 = vector.load %arg0[%c0, %c0_0, %c0_1] : memref<2x4x256xf32, #tpu.memory_space<vmem>>, vector<2x4x256xf32>
    %cst = arith.constant dense<0.000000e+00> : vector<2x256xf32>
    %1 = vector.multi_reduction <add>, %0, %cst [1] : vector<2x4x256xf32> to vector<2x256xf32>
    %cst_2 = arith.constant 4.000000e+00 : f32
    %2 = vector.broadcast %cst_2 : f32 to vector<2x256xf32>
    %3 = arith.divf %1, %2 : vector<2x256xf32>
    %4 = arith.truncf %3 : vector<2x256xf32> to vector<2x256xbf16>
    %c0_3 = arith.constant 0 : index
    %c0_4 = arith.constant 0 : index
    %5 = vector.load %arg1[%c0_3, %c0_4] : memref<256x512xbf16, #tpu.memory_space<vmem>>, vector<256x512xbf16>
    %cst_5 = arith.constant dense<0.000000e+00> : vector<2x512xf32>
    %6 = tpu.matmul %4, %5, %cst_5 {dimension_numbers = #tpu.dot_dimension_numbers<[1], [0], [0], [1], [0, 0, 1, 1], [], []>} : vector<2x256xbf16>, vector<256x512xbf16>, vector<2x512xf32> -> vector<2x512xf32>
    %c0_6 = arith.constant 0 : index
    %c0_7 = arith.constant 0 : index
    %7 = vector.load %arg2[%c0_6, %c0_7] : memref<1x512xf32, #tpu.memory_space<vmem>>, vector<1x512xf32>
    %8 = vector.broadcast %7 : vector<1x512xf32> to vector<2x512xf32>
    %9 = arith.addf %6, %8 : vector<2x512xf32>
    %cst_8 = arith.constant 0.000000e+00 : f32
    %10 = vector.broadcast %cst_8 : f32 to vector<2x512xf32>
    %11 = arith.maximumf %9, %10 : vector<2x512xf32>
    %12 = arith.truncf %11 : vector<2x512xf32> to vector<2x512xbf16>
    %c0_9 = arith.constant 0 : index
    %c0_10 = arith.constant 0 : index
    %13 = vector.load %arg3[%c0_9, %c0_10] : memref<512x128xbf16, #tpu.memory_space<vmem>>, vector<512x128xbf16>
    %cst_11 = arith.constant dense<0.000000e+00> : vector<2x128xf32>
    %14 = tpu.matmul %12, %13, %cst_11 {dimension_numbers = #tpu.dot_dimension_numbers<[1], [0], [0], [1], [0, 0, 1, 1], [], []>} : vector<2x512xbf16>, vector<512x128xbf16>, vector<2x128xf32> -> vector<2x128xf32>
    %c0_12 = arith.constant 0 : index
    %c0_13 = arith.constant 0 : index
    %15 = vector.load %arg4[%c0_12, %c0_13] : memref<1x128xf32, #tpu.memory_space<vmem>>, vector<1x128xf32>
    %16 = vector.broadcast %15 : vector<1x128xf32> to vector<2x128xf32>
    %17 = arith.addf %14, %16 : vector<2x128xf32>
    %18 = math.absf %17 : vector<2x128xf32>
    %cst_14 = arith.constant 0.000000e+00 : f32
    %19 = vector.broadcast %cst_14 : f32 to vector<2x128xf32>
    %20 = arith.subf %19, %18 : vector<2x128xf32>
    %21 = math.exp %20 : vector<2x128xf32>
    %cst_15 = arith.constant 1.000000e+00 : f32
    %22 = vector.broadcast %cst_15 : f32 to vector<2x128xf32>
    %23 = arith.addf %22, %21 : vector<2x128xf32>
    %cst_16 = arith.constant 1.000000e+00 : f32
    %24 = vector.broadcast %cst_16 : f32 to vector<2x128xf32>
    %25 = arith.divf %24, %23 : vector<2x128xf32>
    %cst_17 = arith.constant 0.000000e+00 : f32
    %26 = vector.broadcast %cst_17 : f32 to vector<2x128xf32>
    %27 = arith.cmpf oge, %17, %26 : vector<2x128xf32>
    %cst_18 = arith.constant 1.000000e+00 : f32
    %28 = vector.broadcast %cst_18 : f32 to vector<2x128xf32>
    %29 = arith.subf %28, %25 : vector<2x128xf32>
    %30 = arith.select %27, %25, %29 : vector<2x128xi1>, vector<2x128xf32>
    %c0_19 = arith.constant 0 : index
    %c0_20 = arith.constant 0 : index
    %31 = vector.load %arg5[%c0_19, %c0_20] : memref<2x128xf32, #tpu.memory_space<vmem>>, vector<2x128xf32>
    tpu.vector_store %arg5[%c0_19, %c0_20], %30 {strides = array<i32>} : memref<2x128xf32, #tpu.memory_space<vmem>>, vector<2x128xf32>,
    return
  }
}

</mosaic_0001>

<llo_original>
// kernel: policy_transformer_forward.10
$region0: #{policy_transformer_forward.10}
  #allocation0 [shape = 'u32[]', space=smem, size = 0x4, offset = 0x4, fixed_abs, tag = 'smem constant byte address 0x4 - core index']
  #allocation1 [shape = 'u32[72,128]{1,0:T(1,128)}', space=vmem, size = 0x9000, scoped, tag = 'internal scratch']
  %s0 = inlined_call_operand.vmem [shape: bf16[128,36], index: 0, kind: input, shape index: {}]
  %s1 = inlined_call_operand.vmem [shape: bf16[36,64], index: 1, kind: input, shape index: {}]
  %s2 = inlined_call_operand.vmem [shape: f32[1,64], index: 2, kind: input, shape index: {}]
  %s3 = inlined_call_operand.vmem [shape: f32[128,64], index: 3, kind: output, shape index: {}]
  %s4 = sld [smem:[#allocation0]]
  $region22: #{policy_transformer_forward.10} parent=0
    _
  %s6 = ssub.s32 1, %s4
  %s7 = scalar_select 0, %s6, %s4
  // Predicated region
  $region2: #{policy_transformer_forward.10} parent=0 // pred_check
    _
  $region3: #{policy_transformer_forward.10} parent=0 // pred_check_branch
    %9 = sbr.rel (0) target = $region5
  $region4: #{policy_transformer_forward.10} parent=0 // pred_region
    _
  $region5: #{policy_transformer_forward.10} parent=0 // pred_fallthru
    _
  // Predicated region
  $region6: #{policy_transformer_forward.10} parent=0 // pred_check
    _
  $region7: #{policy_transformer_forward.10} parent=0 // pred_check_branch
    %11 = sbr.rel (0) target = $region9
  $region8: #{policy_transformer_forward.10} parent=0 // pred_region
    _
  $region9: #{policy_transformer_forward.10} parent=0 // pred_fallthru
    _
  // Predicated region
  $region10: #{policy_transformer_forward.10} parent=0 // pred_check
    _
  $region11: #{policy_transformer_forward.10} parent=0 // pred_check_branch
    %13 = sbr.rel (0) target = $region13
  $region12: #{policy_transformer_forward.10} parent=0 // pred_region
    _
  $region13: #{policy_transformer_forward.10} parent=0 // pred_fallthru
    _
  %v15 = vld [vmem:[%s0] sm:$0xf]
  %v16 = vld [vmem:[%s0 + $0x4] sm:$0xf]
  %v17 = vld [vmem:[%s0 + $0x8] sm:$0xf]
  %v18 = vld [vmem:[%s0 + $0xc] sm:$0xf]
  %v19 = vld [vmem:[%s0 + $0x10] sm:$0xf]
  %v20 = vld [vmem:[%s0 + $0x14] sm:$0xf]
  %v21 = vld [vmem:[%s0 + $0x18] sm:$0xf]
  %v22 = vld [vmem:[%s0 + $0x1c] sm:$0xf]
  %v23 = vld [vmem:[%s0 + $0x20] sm:$0xf]
  %v24 = vld [vmem:[%s0 + $0x24] sm:$0xf]
  %v25 = vld [vmem:[%s0 + $0x28] sm:$0xf]
  %v26 = vld [vmem:[%s0 + $0x2c] sm:$0xf]
  %v27 = vld [vmem:[%s0 + $0x30] sm:$0xf]
  %v28 = vld [vmem:[%s0 + $0x34] sm:$0xf]
  %v29 = vld [vmem:[%s0 + $0x38] sm:$0xf]
  %v30 = vld [vmem:[%s0 + $0x3c] sm:$0xf]
  %v31 = vld [vmem:[%s1] sm:$0xf]
  %v32 = vld [vmem:[%s1 + $0x4] sm:$0xf]
  %v33 = vld [vmem:[%s1 + $0x8] sm:$0xf]
  %v34 = vld [vmem:[%s1 + $0xc] sm:$0xf]
  %v35 = vld [vmem:[%s1 + $0x10] sm:$0x3]
  %v36 = vld [vmem:[%s2] sm:$0x1]
  %v38 = vperm.slane %v36, 0
  %v56 = vunpack.c.l.b16 %v15
  %v57 = vunpack.c.l.b16 %v16
  %v58 = vunpack.c.l.b16 %v17
  %v59 = vunpack.c.l.b16 %v18
  %v60 = vunpack.c.l.b16 %v19
  %v61 = vunpack.c.l.b16 %v20
  %v62 = vunpack.c.l.b16 %v21
  %v63 = vunpack.c.l.b16 %v22
  %v64 = vunpack.c.l.b16 %v23
  %v65 = vunpack.c.l.b16 %v24
  %v66 = vunpack.c.l.b16 %v25
  %v67 = vunpack.c.l.b16 %v26
  %v68 = vunpack.c.l.b16 %v27
  %v69 = vunpack.c.l.b16 %v28
  %v70 = vunpack.c.l.b16 %v29
  %v71 = vunpack.c.l.b16 %v30
  %v72 = vpack.c.b16 %v57, %v56
  %v73 = vpack.c.b16 %v59, %v58
  %v74 = vpack.c.b16 %v61, %v60
  %v75 = vpack.c.b16 %v63, %v62
  %v76 = vpack.c.b16 %v65, %v64
  %v77 = vpack.c.b16 %v67, %v66
  %v78 = vpack.c.b16 %v69, %v68
  %v79 = vpack.c.b16 %v71, %v70
  %v85 = vunpack.c.l.b16 %v31
  %v86 = vunpack.c.l.b16 %v32
  %v87 = vunpack.c.l.b16 %v33
  %v88 = vunpack.c.l.b16 %v34
  %v89 = vunpack.c.l.b16 %v35
  %v90 = vpack.c.b16 %v86, %v85
  %v91 = vpack.c.b16 %v88, %v87
  %v92 = vpack.c.b16 %v89, %v89
  %vm95 = vcmask 293888
  %v97 = vsel %vm95, %v72, 0
  %v100 = vsel %vm95, %v73, 0
  %v103 = vsel %vm95, %v74, 0
  %v106 = vsel %vm95, %v75, 0
  %v109 = vsel %vm95, %v76, 0
  %v112 = vsel %vm95, %v77, 0
  %v115 = vsel %vm95, %v78, 0
  %v118 = vsel %vm95, %v79, 0
  %vm120 = vcmask 1041408
  %v122 = vsel %vm120, %v92, 0
  %124 = vmatpush.bf16.msra.mxu0 0
  %125 = vmatpush.bf16.msra.mxu0 0
  %126 = vmatpush.bf16.msra.mxu0 0
  %127 = vmatpush.bf16.msra.mxu0 0
  %128 = vmatpush.bf16.msra.mxu0 0
  %129 = vmatpush.bf16.msra.mxu0 %v122
  %130 = vmatpush.bf16.msra.mxu0 %v91
  %131 = vmatpush.bf16.msra.mxu0 %v90
  %132 = vmatmul.bf16.gmra.mxu0 %v97
  %v133 = vpop.f32.mrf.mxu0
  %v134 = vadd.f32 %v38, %v133
  %v135 = vpop.f32.mrf.mxu0
  %v136 = vadd.f32 %v38, %v135
  %137 = vmatmul.bf16.gmra.mxu0 %v100
  %v138 = vpop.f32.mrf.mxu0
  %v139 = vadd.f32 %v38, %v138
  %v140 = vpop.f32.mrf.mxu0
  %v141 = vadd.f32 %v38, %v140
  %142 = vmatmul.bf16.gmra.mxu0 %v103
  %v143 = vpop.f32.mrf.mxu0
  %v144 = vadd.f32 %v38, %v143
  %v145 = vpop.f32.mrf.mxu0
  %v146 = vadd.f32 %v38, %v145
  %147 = vmatmul.bf16.gmra.mxu0 %v106
  %v148 = vpop.f32.mrf.mxu0
  %v149 = vadd.f32 %v38, %v148
  %v150 = vpop.f32.mrf.mxu0
  %v151 = vadd.f32 %v38, %v150
  %152 = vmatmul.bf16.gmra.mxu0 %v109
  %v153 = vpop.f32.mrf.mxu0
  %v154 = vadd.f32 %v38, %v153
  %v155 = vpop.f32.mrf.mxu0
  %v156 = vadd.f32 %v38, %v155
  %157 = vmatmul.bf16.gmra.mxu0 %v112
  %v158 = vpop.f32.mrf.mxu0
  %v159 = vadd.f32 %v38, %v158
  %v160 = vpop.f32.mrf.mxu0
  %v161 = vadd.f32 %v38, %v160
  %162 = vmatmul.bf16.gmra.mxu0 %v115
  %v163 = vpop.f32.mrf.mxu0
  %v164 = vadd.f32 %v38, %v163
  %v165 = vpop.f32.mrf.mxu0
  %v166 = vadd.f32 %v38, %v165
  %167 = vmatmul.bf16.gmra.mxu0 %v118
  %v168 = vpop.f32.mrf.mxu0
  %v169 = vadd.f32 %v38, %v168
  %v170 = vpop.f32.mrf.mxu0
  %v171 = vadd.f32 %v38, %v170
  %172 = vdwg.mxu0
  %v173 = vmax.f32 %v134, 0.0
  %v174 = vmax.f32 %v136, 0.0
  %v175 = vmax.f32 %v139, 0.0
  %v176 = vmax.f32 %v141, 0.0
  %v177 = vmax.f32 %v144, 0.0
  %v178 = vmax.f32 %v146, 0.0
  %v179 = vmax.f32 %v149, 0.0
  %v180 = vmax.f32 %v151, 0.0
  %v181 = vmax.f32 %v154, 0.0
  %v182 = vmax.f32 %v156, 0.0
  %v183 = vmax.f32 %v159, 0.0
  %v184 = vmax.f32 %v161, 0.0
  %v185 = vmax.f32 %v164, 0.0
  %v186 = vmax.f32 %v166, 0.0
  %v187 = vmax.f32 %v169, 0.0
  %v188 = vmax.f32 %v171, 0.0
  %vm189 = vcmask 523264
  %190 = vst.msk [vmem:[%s3] sm:$0xff] %vm189, %v173
  %191 = vst.msk [vmem:[%s3 + $0x8] sm:$0xff] %vm189, %v174
  %192 = vst.msk [vmem:[%s3 + $0x10] sm:$0xff] %vm189, %v175
  %193 = vst.msk [vmem:[%s3 + $0x18] sm:$0xff] %vm189, %v176
  %194 = vst.msk [vmem:[%s3 + $0x20] sm:$0xff] %vm189, %v177
  %195 = vst.msk [vmem:[%s3 + $0x28] sm:$0xff] %vm189, %v178
  %196 = vst.msk [vmem:[%s3 + $0x30] sm:$0xff] %vm189, %v179
  %197 = vst.msk [vmem:[%s3 + $0x38] sm:$0xff] %vm189, %v180
  %198 = vst.msk [vmem:[%s3 + $0x40] sm:$0xff] %vm189, %v181
  %199 = vst.msk [vmem:[%s3 + $0x48] sm:$0xff] %vm189, %v182
  %200 = vst.msk [vmem:[%s3 + $0x50] sm:$0xff] %vm189, %v183
  %201 = vst.msk [vmem:[%s3 + $0x58] sm:$0xff] %vm189, %v184
  %202 = vst.msk [vmem:[%s3 + $0x60] sm:$0xff] %vm189, %v185
  %203 = vst.msk [vmem:[%s3 + $0x68] sm:$0xff] %vm189, %v186
  %204 = vst.msk [vmem:[%s3 + $0x70] sm:$0xff] %vm189, %v187
  %205 = vst.msk [vmem:[%s3 + $0x78] sm:$0xff] %vm189, %v188
  // Predicated region
  $region14: #{policy_transformer_forward.10} parent=0 // pred_check
    _
  $region15: #{policy_transformer_forward.10} parent=0 // pred_check_branch
    %207 = sbr.rel (0) target = $region17
  $region16: #{policy_transformer_forward.10} parent=0 // pred_region
    _
  $region17: #{policy_transformer_forward.10} parent=0 // pred_fallthru
    _
  // Predicated region
  $region18: #{policy_transformer_forward.10} parent=0 // pred_check
    _
  $region19: #{policy_transformer_forward.10} parent=0 // pred_check_branch
    %209 = sbr.rel (0) target = $region21
  $region20: #{policy_transformer_forward.10} parent=0 // pred_region
    _
  $region21: #{policy_transformer_forward.10} parent=0 // pred_fallthru
    _

// kernel: policy_transformer_forward.11
$region0: #{policy_transformer_forward.11}
  #allocation0 [shape = 'u32[]', space=smem, size = 0x4, offset = 0x4, fixed_abs, tag = 'smem constant byte address 0x4 - core index']
  #allocation1 [shape = 'u32[72,128]{1,0:T(1,128)}', space=vmem, size = 0x9000, scoped, tag = 'internal scratch']
  %s0 = inlined_call_operand.vmem [shape: bf16[32,576], index: 0, kind: input, shape index: {}]
  %s1 = inlined_call_operand.hbm [shape: bf16[576,128], index: 1, kind: input, shape index: {}]
  %s2 = inlined_call_operand.vmem [shape: f32[1,128], index: 2, kind: input, shape index: {}]
  %s3 = inlined_call_operand.vmem [shape: f32[32,128], index: 3, kind: output, shape index: {}]
  %s4 = sld [smem:[#allocation0]]
  $region26: #{policy_transformer_forward.11} parent=0
    _
  %s6 = ssub.s32 1, %s4
  %s7 = scalar_select 0, %s6, %s4
  $region1: #{policy_transformer_forward.11} parent=0
    #allocation2 [shape = 'u8[147456]{0}', space=vmem, size = 0x24000, scoped, tag = 'input window, operand 1, single buffered']
    #allocation3 [shape = 's32[1]{0}', space=sflag, size = 0x4, scoped, tag = 'scoped memory for policy_transformer_forward.11']
    %8 = vsyncpa [#allocation3], 0
    // Predicated region
    $region2: #{policy_transformer_forward.11} parent=1 // pred_check
      _
    $region3: #{policy_transformer_forward.11} parent=1 // pred_check_branch
      %10 = sbr.rel (0) target = $region5
    $region4: #{policy_transformer_forward.11} parent=1 // pred_region
      _
    $region5: #{policy_transformer_forward.11} parent=1 // pred_fallthru
      _
    // Predicated region
    $region6: #{policy_transformer_forward.11} parent=1 // pred_check
      _
    $region7: #{policy_transformer_forward.11} parent=1 // pred_check_branch
      %12 = sbr.rel (0) target = $region9
    $region8: #{policy_transformer_forward.11} parent=1 // pred_region
      %14 = vsyncadd [#allocation3], 0
      %s15 = sshll.u32 %s1, 4
      %s16 = int_to_ptr.hbm [resolvable:$true] %s15
      %s17 = sshll.u32 [#allocation2], 4
      %s18 = int_to_ptr.vmem [resolvable:$true] %s17
      %23 = dma.hbm_to_vmem [thread:$0]  %s16, 4608, %s18, [#allocation3], 64, 64, 4
    $region9: #{policy_transformer_forward.11} parent=1 // pred_fallthru
      _
    // Predicated region
    $region10: #{policy_transformer_forward.11} parent=1 // pred_check
      _
    $region11: #{policy_transformer_forward.11} parent=1 // pred_check_branch
      %25 = sbr.rel (0) target = $region13
    $region12: #{policy_transformer_forward.11} parent=1 // pred_region
      _
    $region13: #{policy_transformer_forward.11} parent=1 // pred_fallthru
      _
    // Predicated region
    $region14: #{policy_transformer_forward.11} parent=1 // pred_check
      _
    $region15: #{policy_transformer_forward.11} parent=1 // pred_check_branch
      %27 = sbr.rel (0) target = $region17
    $region16: #{policy_transformer_forward.11} parent=1 // pred_region
      %29 = dma.done [#allocation3], 4608
    $region17: #{policy_transformer_forward.11} parent=1 // pred_fallthru
      _
    %v31 = vld [vmem:[%s0] sm:$0xff]
    %v32 = vld [vmem:[%s0 + $0x8] sm:$0xff]
    %v33 = vld [vmem:[%s0 + $0x10] sm:$0xf]
    %v34 = vld [vmem:[%s0 + $0x14] sm:$0xff]
    %v35 = vld [vmem:[%s0 + $0x1c] sm:$0xff]
    %v36 = vld [vmem:[%s0 + $0x24] sm:$0xf]
    %v37 = vld [vmem:[%s0 + $0x28] sm:$0xff]
    %v38 = vld [vmem:[%s0 + $0x30] sm:$0xff]
    %v39 = vld [vmem:[%s0 + $0x38] sm:$0xf]
    %v40 = vld [vmem:[%s0 + $0x3c] sm:$0xff]
    %v41 = vld [vmem:[%s0 + $0x44] sm:$0xff]
    %v42 = vld [vmem:[%s0 + $0x4c] sm:$0xf]
    %v43 = vld [vmem:[#allocation2] sm:$0xf]
    %v44 = vld [vmem:[#allocation2 + $0x4] sm:$0xf]
    %v45 = vld [vmem:[#allocation2 + $0x8] sm:$0xf]
    %v46 = vld [vmem:[#allocation2 + $0xc] sm:$0xf]
    %v47 = vld [vmem:[#allocation2 + $0x10] sm:$0xf]
    %v48 = vld [vmem:[#allocation2 + $0x14] sm:$0xf]
    %v49 = vld [vmem:[#allocation2 + $0x18] sm:$0xf]
    %v50 = vld [vmem:[#allocation2 + $0x1c] sm:$0xf]
    %v51 = vld [vmem:[#allocation2 + $0x20] sm:$0xf]
    %v52 = vld [vmem:[#allocation2 + $0x24] sm:$0xf]
    %v53 = vld [vmem:[#allocation2 + $0x28] sm:$0xf]
    %v54 = vld [vmem:[#allocation2 + $0x2c] sm:$0xf]
    %v55 = vld [vmem:[#allocation2 + $0x30] sm:$0xf]
    %v56 = vld [vmem:[#allocation2 + $0x34] sm:$0xf]
    %v57 = vld [vmem:[#allocation2 + $0x38] sm:$0xf]
    %v58 = vld [vmem:[#allocation2 + $0x3c] sm:$0xf]
    %v59 = vld [vmem:[#allocation2 + $0x40] sm:$0xf]
    %v60 = vld [vmem:[#allocation2 + $0x44] sm:$0xf]
    %v61 = vld [vmem:[#allocation2 + $0x48] sm:$0xf]
    %v62 = vld [vmem:[#allocation2 + $0x4c] sm:$0xf]
    %v63 = vld [vmem:[#allocation2 + $0x50] sm:$0xf]
    %v64 = vld [vmem:[#allocation2 + $0x54] sm:$0xf]
    %v65 = vld [vmem:[#allocation2 + $0x58] sm:$0xf]
    %v66 = vld [vmem:[#allocation2 + $0x5c] sm:$0xf]
    %v67 = vld [vmem:[#allocation2 + $0x60] sm:$0xf]
    %v68 = vld [vmem:[#allocation2 + $0x64] sm:$0xf]
    %v69 = vld [vmem:[#allocation2 + $0x68] sm:$0xf]
    %v70 = vld [vmem:[#allocation2 + $0x6c] sm:$0xf]
    %v71 = vld [vmem:[#allocation2 + $0x70] sm:$0xf]
    %v72 = vld [vmem:[#allocation2 + $0x74] sm:$0xf]
    %v73 = vld [vmem:[#allocation2 + $0x78] sm:$0xf]
    %v74 = vld [vmem:[#allocation2 + $0x7c] sm:$0xf]
    %v75 = vld [vmem:[#allocation2 + $0x80] sm:$0xf]
    %v76 = vld [vmem:[#allocation2 + $0x84] sm:$0xf]
    %v77 = vld [vmem:[#allocation2 + $0x88] sm:$0xf]
    %v78 = vld [vmem:[#allocation2 + $0x8c] sm:$0xf]
    %v79 = vld [vmem:[#allocation2 + $0x90] sm:$0xf]
    %v80 = vld [vmem:[#allocation2 + $0x94] sm:$0xf]
    %v81 = vld [vmem:[#allocation2 + $0x98] sm:$0xf]
    %v82 = vld [vmem:[#allocation2 + $0x9c] sm:$0xf]
    %v83 = vld [vmem:[#allocation2 + $0xa0] sm:$0xf]
    %v84 = vld [vmem:[#allocation2 + $0xa4] sm:$0xf]
    %v85 = vld [vmem:[#allocation2 + $0xa8] sm:$0xf]
    %v86 = vld [vmem:[#allocation2 + $0xac] sm:$0xf]
    %v87 = vld [vmem:[#allocation2 + $0xb0] sm:$0xf]
    %v88 = vld [vmem:[#allocation2 + $0xb4] sm:$0xf]
    %v89 = vld [vmem:[#allocation2 + $0xb8] sm:$0xf]
    %v90 = vld [vmem:[#allocation2 + $0xbc] sm:$0xf]
    %v91 = vld [vmem:[#allocation2 + $0xc0] sm:$0xf]
    %v92 = vld [vmem:[#allocation2 + $0xc4] sm:$0xf]
    %v93 = vld [vmem:[#allocation2 + $0xc8] sm:$0xf]
    %v94 = vld [vmem:[#allocation2 + $0xcc] sm:$0xf]
    %v95 = vld [vmem:[#allocation2 + $0xd0] sm:$0xf]
    %v96 = vld [vmem:[#allocation2 + $0xd4] sm:$0xf]
    %v97 = vld [vmem:[#allocation2 + $0xd8] sm:$0xf]
    %v98 = vld [vmem:[#allocation2 + $0xdc] sm:$0xf]
    %v99 = vld [vmem:[#allocation2 + $0xe0] sm:$0xf]
    %v100 = vld [vmem:[#allocation2 + $0xe4] sm:$0xf]
    %v101 = vld [vmem:[#allocation2 + $0xe8] sm:$0xf]
    %v102 = vld [vmem:[#allocation2 + $0xec] sm:$0xf]
    %v103 = vld [vmem:[#allocation2 + $0xf0] sm:$0xf]
    %v104 = vld [vmem:[#allocation2 + $0xf4] sm:$0xf]
    %v105 = vld [vmem:[#allocation2 + $0xf8] sm:$0xf]
    %v106 = vld [vmem:[#allocation2 + $0xfc] sm:$0xf]
    %v107 = vld [vmem:[#allocation2 + $0x100] sm:$0xf]
    %v108 = vld [vmem:[#allocation2 + $0x104] sm:$0xf]
    %v109 = vld [vmem:[#allocation2 + $0x108] sm:$0xf]
    %v110 = vld [vmem:[#allocation2 + $0x10c] sm:$0xf]
    %v111 = vld [vmem:[#allocation2 + $0x110] sm:$0xf]
    %v112 = vld [vmem:[#allocation2 + $0x114] sm:$0xf]
    %v113 = vld [vmem:[#allocation2 + $0x118] sm:$0xf]
    %v114 = vld [vmem:[#allocation2 + $0x11c] sm:$0xf]
    %v115 = vld [vmem:[%s2] sm:$0x1]
    %v117 = vperm.slane %v115, 0
    %v131 = vunpack.c.l.b16 %v31
    %v132 = vunpack.c.h.b16 %v31
    %v133 = vunpack.c.l.b16 %v32
    %v134 = vunpack.c.h.b16 %v32
    %v135 = vunpack.c.l.b16 %v33
    %v136 = vunpack.c.l.b16 %v34
    %v137 = vunpack.c.h.b16 %v34
    %v138 = vunpack.c.l.b16 %v35
    %v139 = vunpack.c.h.b16 %v35
    %v140 = vunpack.c.l.b16 %v36
    %v141 = vunpack.c.l.b16 %v37
    %v142 = vunpack.c.h.b16 %v37
    %v143 = vunpack.c.l.b16 %v38
    %v144 = vunpack.c.h.b16 %v38
    %v145 = vunpack.c.l.b16 %v39
    %v146 = vunpack.c.l.b16 %v40
    %v147 = vunpack.c.h.b16 %v40
    %v148 = vunpack.c.l.b16 %v41
    %v149 = vunpack.c.h.b16 %v41
    %v150 = vunpack.c.l.b16 %v42
    %v151 = vpack.c.b16 %v136, %v131
    %v152 = vpack.c.b16 %v137, %v132
    %v153 = vpack.c.b16 %v138, %v133
    %v154 = vpack.c.b16 %v139, %v134
    %v155 = vpack.c.b16 %v140, %v135
    %v156 = vpack.c.b16 %v146, %v141
    %v157 = vpack.c.b16 %v147, %v142
    %v158 = vpack.c.b16 %v148, %v143
    %v159 = vpack.c.b16 %v149, %v144
    %v160 = vpack.c.b16 %v150, %v145
    %v241 = vunpack.c.l.b16 %v43
    %v242 = vunpack.c.l.b16 %v44
    %v243 = vunpack.c.l.b16 %v45
    %v244 = vunpack.c.l.b16 %v46
    %v245 = vunpack.c.l.b16 %v47
    %v246 = vunpack.c.l.b16 %v48
    %v247 = vunpack.c.l.b16 %v49
    %v248 = vunpack.c.l.b16 %v50
    %v249 = vunpack.c.l.b16 %v51
    %v250 = vunpack.c.l.b16 %v52
    %v251 = vunpack.c.l.b16 %v53
    %v252 = vunpack.c.l.b16 %v54
    %v253 = vunpack.c.l.b16 %v55
    %v254 = vunpack.c.l.b16 %v56
    %v255 = vunpack.c.l.b16 %v57
    %v256 = vunpack.c.l.b16 %v58
    %v257 = vunpack.c.l.b16 %v59
    %v258 = vunpack.c.l.b16 %v60
    %v259 = vunpack.c.l.b16 %v61
    %v260 = vunpack.c.l.b16 %v62
    %v261 = vunpack.c.l.b16 %v63
    %v262 = vunpack.c.l.b16 %v64
    %v263 = vunpack.c.l.b16 %v65
    %v264 = vunpack.c.l.b16 %v66
    %v265 = vunpack.c.l.b16 %v67
    %v266 = vunpack.c.l.b16 %v68
    %v267 = vunpack.c.l.b16 %v69
    %v268 = vunpack.c.l.b16 %v70
    %v269 = vunpack.c.l.b16 %v71
    %v270 = vunpack.c.l.b16 %v72
    %v271 = vunpack.c.l.b16 %v73
    %v272 = vunpack.c.l.b16 %v74
    %v273 = vunpack.c.l.b16 %v75
    %v274 = vunpack.c.l.b16 %v76
    %v275 = vunpack.c.l.b16 %v77
    %v276 = vunpack.c.l.b16 %v78
    %v277 = vunpack.c.l.b16 %v79
    %v278 = vunpack.c.l.b16 %v80
    %v279 = vunpack.c.l.b16 %v81
    %v280 = vunpack.c.l.b16 %v82
    %v281 = vunpack.c.l.b16 %v83
    %v282 = vunpack.c.l.b16 %v84
    %v283 = vunpack.c.l.b16 %v85
    %v284 = vunpack.c.l.b16 %v86
    %v285 = vunpack.c.l.b16 %v87
    %v286 = vunpack.c.l.b16 %v88
    %v287 = vunpack.c.l.b16 %v89
    %v288 = vunpack.c.l.b16 %v90
    %v289 = vunpack.c.l.b16 %v91
    %v290 = vunpack.c.l.b16 %v92
    %v291 = vunpack.c.l.b16 %v93
    %v292 = vunpack.c.l.b16 %v94
    %v293 = vunpack.c.l.b16 %v95
    %v294 = vunpack.c.l.b16 %v96
    %v295 = vunpack.c.l.b16 %v97
    %v296 = vunpack.c.l.b16 %v98
    %v297 = vunpack.c.l.b16 %v99
    %v298 = vunpack.c.l.b16 %v100
    %v299 = vunpack.c.l.b16 %v101
    %v300 = vunpack.c.l.b16 %v102
    %v301 = vunpack.c.l.b16 %v103
    %v302 = vunpack.c.l.b16 %v104
    %v303 = vunpack.c.l.b16 %v105
    %v304 = vunpack.c.l.b16 %v106
    %v305 = vunpack.c.l.b16 %v107
    %v306 = vunpack.c.l.b16 %v108
    %v307 = vunpack.c.l.b16 %v109
    %v308 = vunpack.c.l.b16 %v110
    %v309 = vunpack.c.l.b16 %v111
    %v310 = vunpack.c.l.b16 %v112
    %v311 = vunpack.c.l.b16 %v113
    %v312 = vunpack.c.l.b16 %v114
    %v313 = vpack.c.b16 %v242, %v241
    %v314 = vpack.c.b16 %v244, %v243
    %v315 = vpack.c.b16 %v246, %v245
    %v316 = vpack.c.b16 %v248, %v247
    %v317 = vpack.c.b16 %v250, %v249
    %v318 = vpack.c.b16 %v252, %v251
    %v319 = vpack.c.b16 %v254, %v253
    %v320 = vpack.c.b16 %v256, %v255
    %v321 = vpack.c.b16 %v258, %v257
    %v322 = vpack.c.b16 %v260, %v259
    %v323 = vpack.c.b16 %v262, %v261
    %v324 = vpack.c.b16 %v264, %v263
    %v325 = vpack.c.b16 %v266, %v265
    %v326 = vpack.c.b16 %v268, %v267
    %v327 = vpack.c.b16 %v270, %v269
    %v328 = vpack.c.b16 %v272, %v271
    %v329 = vpack.c.b16 %v274, %v273
    %v330 = vpack.c.b16 %v276, %v275
    %v331 = vpack.c.b16 %v278, %v277
    %v332 = vpack.c.b16 %v280, %v279
    %v333 = vpack.c.b16 %v282, %v281
    %v334 = vpack.c.b16 %v284, %v283
    %v335 = vpack.c.b16 %v286, %v285
    %v336 = vpack.c.b16 %v288, %v287
    %v337 = vpack.c.b16 %v290, %v289
    %v338 = vpack.c.b16 %v292, %v291
    %v339 = vpack.c.b16 %v294, %v293
    %v340 = vpack.c.b16 %v296, %v295
    %v341 = vpack.c.b16 %v298, %v297
    %v342 = vpack.c.b16 %v300, %v299
    %v343 = vpack.c.b16 %v302, %v301
    %v344 = vpack.c.b16 %v304, %v303
    %v345 = vpack.c.b16 %v306, %v305
    %v346 = vpack.c.b16 %v308, %v307
    %v347 = vpack.c.b16 %v310, %v309
    %v348 = vpack.c.b16 %v312, %v311
    %vm385 = vcmask 523264
    %v387 = vsel %vm385, %v155, 0
    %v390 = vsel %vm385, %v160, 0
    %392 = vmatpush.bf16.msra.mxu0 %v320
    %393 = vmatpush.bf16.msra.mxu0 %v319
    %394 = vmatpush.bf16.msra.mxu0 %v318
    %395 = vmatpush.bf16.msra.mxu0 %v317
    %396 = vmatpush.bf16.msra.mxu0 %v316
    %397 = vmatpush.bf16.msra.mxu0 %v315
    %398 = vmatpush.bf16.msra.mxu0 %v314
    %399 = vmatpush.bf16.msra.mxu0 %v313
    %400 = vmatmul.bf16.gmra.mxu0 %v151
    %v401 = vpop.f32.mrf.mxu0
    %v402 = vadd.f32 %v117, %v401
    %v403 = vpop.f32.mrf.mxu0
    %v404 = vadd.f32 %v117, %v403
    %405 = vmatmul.bf16.gmra.mxu0 %v156
    %v406 = vpop.f32.mrf.mxu0
    %v407 = vadd.f32 %v117, %v406
    %v408 = vpop.f32.mrf.mxu0
    %v409 = vadd.f32 %v117, %v408
    %410 = vdwg.mxu0
    %411 = vmatpush.bf16.msra.mxu0 %v328
    %412 = vmatpush.bf16.msra.mxu0 %v327
    %413 = vmatpush.bf16.msra.mxu0 %v326
    %414 = vmatpush.bf16.msra.mxu0 %v325
    %415 = vmatpush.bf16.msra.mxu0 %v324
    %416 = vmatpush.bf16.msra.mxu0 %v323
    %417 = vmatpush.bf16.msra.mxu0 %v322
    %418 = vmatpush.bf16.msra.mxu0 %v321
    %419 = vmatmul.bf16.gmra.mxu0 %v152
    %v420 = vpop.f32.mrf.mxu0
    %v421 = vadd.f32 %v402, %v420
    %v422 = vpop.f32.mrf.mxu0
    %v423 = vadd.f32 %v404, %v422
    %424 = vmatmul.bf16.gmra.mxu0 %v157
    %v425 = vpop.f32.mrf.mxu0
    %v426 = vadd.f32 %v407, %v425
    %v427 = vpop.f32.mrf.mxu0
    %v428 = vadd.f32 %v409, %v427
    %429 = vdwg.mxu0
    %430 = vmatpush.bf16.msra.mxu0 %v336
    %431 = vmatpush.bf16.msra.mxu0 %v335
    %432 = vmatpush.bf16.msra.mxu0 %v334
    %433 = vmatpush.bf16.msra.mxu0 %v333
    %434 = vmatpush.bf16.msra.mxu0 %v332
    %435 = vmatpush.bf16.msra.mxu0 %v331
    %436 = vmatpush.bf16.msra.mxu0 %v330
    %437 = vmatpush.bf16.msra.mxu0 %v329
    %438 = vmatmul.bf16.gmra.mxu0 %v153
    %v439 = vpop.f32.mrf.mxu0
    %v440 = vadd.f32 %v421, %v439
    %v441 = vpop.f32.mrf.mxu0
    %v442 = vadd.f32 %v423, %v441
    %443 = vmatmul.bf16.gmra.mxu0 %v158
    %v444 = vpop.f32.mrf.mxu0
    %v445 = vadd.f32 %v426, %v444
    %v446 = vpop.f32.mrf.mxu0
    %v447 = vadd.f32 %v428, %v446
    %448 = vdwg.mxu0
    %449 = vmatpush.bf16.msra.mxu0 %v344
    %450 = vmatpush.bf16.msra.mxu0 %v343
    %451 = vmatpush.bf16.msra.mxu0 %v342
    %452 = vmatpush.bf16.msra.mxu0 %v341
    %453 = vmatpush.bf16.msra.mxu0 %v340
    %454 = vmatpush.bf16.msra.mxu0 %v339
    %455 = vmatpush.bf16.msra.mxu0 %v338
    %456 = vmatpush.bf16.msra.mxu0 %v337
    %457 = vmatmul.bf16.gmra.mxu0 %v154
    %v458 = vpop.f32.mrf.mxu0
    %v459 = vadd.f32 %v440, %v458
    %v460 = vpop.f32.mrf.mxu0
    %v461 = vadd.f32 %v442, %v460
    %462 = vmatmul.bf16.gmra.mxu0 %v159
    %v463 = vpop.f32.mrf.mxu0
    %v464 = vadd.f32 %v445, %v463
    %v465 = vpop.f32.mrf.mxu0
    %v466 = vadd.f32 %v447, %v465
    %467 = vdwg.mxu0
    %468 = vmatpush.bf16.msra.mxu0 0
    %469 = vmatpush.bf16.msra.mxu0 0
    %470 = vmatpush.bf16.msra.mxu0 0
    %471 = vmatpush.bf16.msra.mxu0 0
    %472 = vmatpush.bf16.msra.mxu0 %v348
    %473 = vmatpush.bf16.msra.mxu0 %v347
    %474 = vmatpush.bf16.msra.mxu0 %v346
    %475 = vmatpush.bf16.msra.mxu0 %v345
    %476 = vmatmul.bf16.gmra.mxu0 %v387
    %v477 = vpop.f32.mrf.mxu0
    %v478 = vadd.f32 %v459, %v477
    %v479 = vpop.f32.mrf.mxu0
    %v480 = vadd.f32 %v461, %v479
    %481 = vmatmul.bf16.gmra.mxu0 %v390
    %v482 = vpop.f32.mrf.mxu0
    %v483 = vadd.f32 %v464, %v482
    %v484 = vpop.f32.mrf.mxu0
    %v485 = vadd.f32 %v466, %v484
    %486 = vdwg.mxu0
    %v487 = vmax.f32 %v478, 0.0
    %v488 = vmax.f32 %v480, 0.0
    %v489 = vmax.f32 %v483, 0.0
    %v490 = vmax.f32 %v485, 0.0
    %491 = vst [vmem:[%s3] sm:$0xff] %v487
    %492 = vst [vmem:[%s3 + $0x8] sm:$0xff] %v488
    %493 = vst [vmem:[%s3 + $0x10] sm:$0xff] %v489
    %494 = vst [vmem:[%s3 + $0x18] sm:$0xff] %v490
    // Predicated region
    $region18: #{policy_transformer_forward.11} parent=1 // pred_check
      _
    $region19: #{policy_transformer_forward.11} parent=1 // pred_check_branch
      %496 = sbr.rel (0) target = $region21
    $region20: #{policy_transformer_forward.11} parent=1 // pred_region
      _
    $region21: #{policy_transformer_forward.11} parent=1 // pred_fallthru
      _
    // Predicated region
    $region22: #{policy_transformer_forward.11} parent=1 // pred_check
      _
    $region23: #{policy_transformer_forward.11} parent=1 // pred_check_branch
      %498 = sbr.rel (0) target = $region25
    $region24: #{policy_transformer_forward.11} parent=1 // pred_region
      _
    $region25: #{policy_transformer_forward.11} parent=1 // pred_fallthru
      _
    %499 = vsyncpa [#allocation3], 1

// kernel: policy_transformer_forward.12
$region0: #{policy_transformer_forward.12}
  #allocation0 [shape = 'u32[]', space=smem, size = 0x4, offset = 0x4, fixed_abs, tag = 'smem constant byte address 0x4 - core index']
  #allocation1 [shape = 'u32[72,128]{1,0:T(1,128)}', space=vmem, size = 0x9000, scoped, tag = 'internal scratch']
  %s0 = inlined_call_operand.vmem [shape: bf16[8,1152], index: 0, kind: input, shape index: {}]
  %s1 = inlined_call_operand.vmem [shape: bf16[1152,256], index: 1, kind: input, shape index: {}]
  %s2 = inlined_call_operand.vmem [shape: f32[1,256], index: 2, kind: input, shape index: {}]
  %s3 = inlined_call_operand.vmem [shape: f32[8,256], index: 3, kind: output, shape index: {}]
  %s4 = sld [smem:[#allocation0]]
  $region22: #{policy_transformer_forward.12} parent=0
    _
  %s6 = ssub.s32 1, %s4
  %s7 = scalar_select 0, %s6, %s4
  // Predicated region
  $region2: #{policy_transformer_forward.12} parent=0 // pred_check
    _
  $region3: #{policy_transformer_forward.12} parent=0 // pred_check_branch
    %9 = sbr.rel (0) target = $region5
  $region4: #{policy_transformer_forward.12} parent=0 // pred_region
    _
  $region5: #{policy_transformer_forward.12} parent=0 // pred_fallthru
    _
  // Predicated region
  $region6: #{policy_transformer_forward.12} parent=0 // pred_check
    _
  $region7: #{policy_transformer_forward.12} parent=0 // pred_check_branch
    %11 = sbr.rel (0) target = $region9
  $region8: #{policy_transformer_forward.12} parent=0 // pred_region
    _
  $region9: #{policy_transformer_forward.12} parent=0 // pred_fallthru
    _
  // Predicated region
  $region10: #{policy_transformer_forward.12} parent=0 // pred_check
    _
  $region11: #{policy_transformer_forward.12} parent=0 // pred_check_branch
    %13 = sbr.rel (0) target = $region13
  $region12: #{policy_transformer_forward.12} parent=0 // pred_region
    _
  $region13: #{policy_transformer_forward.12} parent=0 // pred_fallthru
    _
  %v14 = vld [vmem:[%s0] sm:$0xff]
  %v15 = vld [vmem:[%s0 + $0x8] sm:$0xff]
  %v16 = vld [vmem:[%s0 + $0x10] sm:$0xff]
  %v17 = vld [vmem:[%s0 + $0x18] sm:$0xff]
  %v18 = vld [vmem:[%s0 + $0x20] sm:$0xf]
  %v19 = vld [vmem:[%s1] sm:$0xff]
  %v20 = vld [vmem:[%s1 + $0x8] sm:$0xff]
  %v21 = vld [vmem:[%s1 + $0x10] sm:$0xff]
  %v22 = vld [vmem:[%s1 + $0x18] sm:$0xff]
  %v23 = vld [vmem:[%s1 + $0x20] sm:$0xff]
  %v24 = vld [vmem:[%s1 + $0x28] sm:$0xff]
  %v25 = vld [vmem:[%s1 + $0x30] sm:$0xff]
  %v26 = vld [vmem:[%s1 + $0x38] sm:$0xff]
  %v27 = vld [vmem:[%s1 + $0x40] sm:$0xff]
  %v28 = vld [vmem:[%s1 + $0x48] sm:$0xff]
  %v29 = vld [vmem:[%s1 + $0x50] sm:$0xff]
  %v30 = vld [vmem:[%s1 + $0x58] sm:$0xff]
  %v31 = vld [vmem:[%s1 + $0x60] sm:$0xff]
  %v32 = vld [vmem:[%s1 + $0x68] sm:$0xff]
  %v33 = vld [vmem:[%s1 + $0x70] sm:$0xff]
  %v34 = vld [vmem:[%s1 + $0x78] sm:$0xff]
  %v35 = vld [vmem:[%s1 + $0x80] sm:$0xff]
  %v36 = vld [vmem:[%s1 + $0x88] sm:$0xff]
  %v37 = vld [vmem:[%s1 + $0x90] sm:$0xff]
  %v38 = vld [vmem:[%s1 + $0x98] sm:$0xff]
  %v39 = vld [vmem:[%s1 + $0xa0] sm:$0xff]
  %v40 = vld [vmem:[%s1 + $0xa8] sm:$0xff]
  %v41 = vld [vmem:[%s1 + $0xb0] sm:$0xff]
  %v42 = vld [vmem:[%s1 + $0xb8] sm:$0xff]
  %v43 = vld [vmem:[%s1 + $0xc0] sm:$0xff]
  %v44 = vld [vmem:[%s1 + $0xc8] sm:$0xff]
  %v45 = vld [vmem:[%s1 + $0xd0] sm:$0xff]
  %v46 = vld [vmem:[%s1 + $0xd8] sm:$0xff]
  %v47 = vld [vmem:[%s1 + $0xe0] sm:$0xff]
  %v48 = vld [vmem:[%s1 + $0xe8] sm:$0xff]
  %v49 = vld [vmem:[%s1 + $0xf0] sm:$0xff]
  %v50 = vld [vmem:[%s1 + $0xf8] sm:$0xff]
  %v51 = vld [vmem:[%s1 + $0x100] sm:$0xff]
  %v52 = vld [vmem:[%s1 + $0x108] sm:$0xff]
  %v53 = vld [vmem:[%s1 + $0x110] sm:$0xff]
  %v54 = vld [vmem:[%s1 + $0x118] sm:$0xff]
  %v55 = vld [vmem:[%s1 + $0x120] sm:$0xff]
  %v56 = vld [vmem:[%s1 + $0x128] sm:$0xff]
  %v57 = vld [vmem:[%s1 + $0x130] sm:$0xff]
  %v58 = vld [vmem:[%s1 + $0x138] sm:$0xff]
  %v59 = vld [vmem:[%s1 + $0x140] sm:$0xff]
  %v60 = vld [vmem:[%s1 + $0x148] sm:$0xff]
  %v61 = vld [vmem:[%s1 + $0x150] sm:$0xff]
  %v62 = vld [vmem:[%s1 + $0x158] sm:$0xff]
  %v63 = vld [vmem:[%s1 + $0x160] sm:$0xff]
  %v64 = vld [vmem:[%s1 + $0x168] sm:$0xff]
  %v65 = vld [vmem:[%s1 + $0x170] sm:$0xff]
  %v66 = vld [vmem:[%s1 + $0x178] sm:$0xff]
  %v67 = vld [vmem:[%s1 + $0x180] sm:$0xff]
  %v68 = vld [vmem:[%s1 + $0x188] sm:$0xff]
  %v69 = vld [vmem:[%s1 + $0x190] sm:$0xff]
  %v70 = vld [vmem:[%s1 + $0x198] sm:$0xff]
  %v71 = vld [vmem:[%s1 + $0x1a0] sm:$0xff]
  %v72 = vld [vmem:[%s1 + $0x1a8] sm:$0xff]
  %v73 = vld [vmem:[%s1 + $0x1b0] sm:$0xff]
  %v74 = vld [vmem:[%s1 + $0x1b8] sm:$0xff]
  %v75 = vld [vmem:[%s1 + $0x1c0] sm:$0xff]
  %v76 = vld [vmem:[%s1 + $0x1c8] sm:$0xff]
  %v77 = vld [vmem:[%s1 + $0x1d0] sm:$0xff]
  %v78 = vld [vmem:[%s1 + $0x1d8] sm:$0xff]
  %v79 = vld [vmem:[%s1 + $0x1e0] sm:$0xff]
  %v80 = vld [vmem:[%s1 + $0x1e8] sm:$0xff]
  %v81 = vld [vmem:[%s1 + $0x1f0] sm:$0xff]
  %v82 = vld [vmem:[%s1 + $0x1f8] sm:$0xff]
  %v83 = vld [vmem:[%s1 + $0x200] sm:$0xff]
  %v84 = vld [vmem:[%s1 + $0x208] sm:$0xff]
  %v85 = vld [vmem:[%s1 + $0x210] sm:$0xff]
  %v86 = vld [vmem:[%s1 + $0x218] sm:$0xff]
  %v87 = vld [vmem:[%s1 + $0x220] sm:$0xff]
  %v88 = vld [vmem:[%s1 + $0x228] sm:$0xff]
  %v89 = vld [vmem:[%s1 + $0x230] sm:$0xff]
  %v90 = vld [vmem:[%s1 + $0x238] sm:$0xff]
  %v91 = vld [vmem:[%s1 + $0x240] sm:$0xff]
  %v92 = vld [vmem:[%s1 + $0x248] sm:$0xff]
  %v93 = vld [vmem:[%s1 + $0x250] sm:$0xff]
  %v94 = vld [vmem:[%s1 + $0x258] sm:$0xff]
  %v95 = vld [vmem:[%s1 + $0x260] sm:$0xff]
  %v96 = vld [vmem:[%s1 + $0x268] sm:$0xff]
  %v97 = vld [vmem:[%s1 + $0x270] sm:$0xff]
  %v98 = vld [vmem:[%s1 + $0x278] sm:$0xff]
  %v99 = vld [vmem:[%s1 + $0x280] sm:$0xff]
  %v100 = vld [vmem:[%s1 + $0x288] sm:$0xff]
  %v101 = vld [vmem:[%s1 + $0x290] sm:$0xff]
  %v102 = vld [vmem:[%s1 + $0x298] sm:$0xff]
  %v103 = vld [vmem:[%s1 + $0x2a0] sm:$0xff]
  %v104 = vld [vmem:[%s1 + $0x2a8] sm:$0xff]
  %v105 = vld [vmem:[%s1 + $0x2b0] sm:$0xff]
  %v106 = vld [vmem:[%s1 + $0x2b8] sm:$0xff]
  %v107 = vld [vmem:[%s1 + $0x2c0] sm:$0xff]
  %v108 = vld [vmem:[%s1 + $0x2c8] sm:$0xff]
  %v109 = vld [vmem:[%s1 + $0x2d0] sm:$0xff]
  %v110 = vld [vmem:[%s1 + $0x2d8] sm:$0xff]
  %v111 = vld [vmem:[%s1 + $0x2e0] sm:$0xff]
  %v112 = vld [vmem:[%s1 + $0x2e8] sm:$0xff]
  %v113 = vld [vmem:[%s1 + $0x2f0] sm:$0xff]
  %v114 = vld [vmem:[%s1 + $0x2f8] sm:$0xff]
  %v115 = vld [vmem:[%s1 + $0x300] sm:$0xff]
  %v116 = vld [vmem:[%s1 + $0x308] sm:$0xff]
  %v117 = vld [vmem:[%s1 + $0x310] sm:$0xff]
  %v118 = vld [vmem:[%s1 + $0x318] sm:$0xff]
  %v119 = vld [vmem:[%s1 + $0x320] sm:$0xff]
  %v120 = vld [vmem:[%s1 + $0x328] sm:$0xff]
  %v121 = vld [vmem:[%s1 + $0x330] sm:$0xff]
  %v122 = vld [vmem:[%s1 + $0x338] sm:$0xff]
  %v123 = vld [vmem:[%s1 + $0x340] sm:$0xff]
  %v124 = vld [vmem:[%s1 + $0x348] sm:$0xff]
  %v125 = vld [vmem:[%s1 + $0x350] sm:$0xff]
  %v126 = vld [vmem:[%s1 + $0x358] sm:$0xff]
  %v127 = vld [vmem:[%s1 + $0x360] sm:$0xff]
  %v128 = vld [vmem:[%s1 + $0x368] sm:$0xff]
  %v129 = vld [vmem:[%s1 + $0x370] sm:$0xff]
  %v130 = vld [vmem:[%s1 + $0x378] sm:$0xff]
  %v131 = vld [vmem:[%s1 + $0x380] sm:$0xff]
  %v132 = vld [vmem:[%s1 + $0x388] sm:$0xff]
  %v133 = vld [vmem:[%s1 + $0x390] sm:$0xff]
  %v134 = vld [vmem:[%s1 + $0x398] sm:$0xff]
  %v135 = vld [vmem:[%s1 + $0x3a0] sm:$0xff]
  %v136 = vld [vmem:[%s1 + $0x3a8] sm:$0xff]
  %v137 = vld [vmem:[%s1 + $0x3b0] sm:$0xff]
  %v138 = vld [vmem:[%s1 + $0x3b8] sm:$0xff]
  %v139 = vld [vmem:[%s1 + $0x3c0] sm:$0xff]
  %v140 = vld [vmem:[%s1 + $0x3c8] sm:$0xff]
  %v141 = vld [vmem:[%s1 + $0x3d0] sm:$0xff]
  %v142 = vld [vmem:[%s1 + $0x3d8] sm:$0xff]
  %v143 = vld [vmem:[%s1 + $0x3e0] sm:$0xff]
  %v144 = vld [vmem:[%s1 + $0x3e8] sm:$0xff]
  %v145 = vld [vmem:[%s1 + $0x3f0] sm:$0xff]
  %v146 = vld [vmem:[%s1 + $0x3f8] sm:$0xff]
  %v147 = vld [vmem:[%s1 + $0x400] sm:$0xff]
  %v148 = vld [vmem:[%s1 + $0x408] sm:$0xff]
  %v149 = vld [vmem:[%s1 + $0x410] sm:$0xff]
  %v150 = vld [vmem:[%s1 + $0x418] sm:$0xff]
  %v151 = vld [vmem:[%s1 + $0x420] sm:$0xff]
  %v152 = vld [vmem:[%s1 + $0x428] sm:$0xff]
  %v153 = vld [vmem:[%s1 + $0x430] sm:$0xff]
  %v154 = vld [vmem:[%s1 + $0x438] sm:$0xff]
  %v155 = vld [vmem:[%s1 + $0x440] sm:$0xff]
  %v156 = vld [vmem:[%s1 + $0x448] sm:$0xff]
  %v157 = vld [vmem:[%s1 + $0x450] sm:$0xff]
  %v158 = vld [vmem:[%s1 + $0x458] sm:$0xff]
  %v159 = vld [vmem:[%s1 + $0x460] sm:$0xff]
  %v160 = vld [vmem:[%s1 + $0x468] sm:$0xff]
  %v161 = vld [vmem:[%s1 + $0x470] sm:$0xff]
  %v162 = vld [vmem:[%s1 + $0x478] sm:$0xff]
  %v163 = vld [vmem:[%s2] sm:$0x3]
  %v165 = vperm.slane %v163, 0
  %v166 = vperm.slane %v163, 1
  %v174 = vunpack.c.l.b16 %v14
  %v175 = vunpack.c.h.b16 %v14
  %v176 = vunpack.c.l.b16 %v15
  %v177 = vunpack.c.h.b16 %v15
  %v178 = vunpack.c.l.b16 %v16
  %v179 = vunpack.c.h.b16 %v16
  %v180 = vunpack.c.l.b16 %v17
  %v181 = vunpack.c.h.b16 %v17
  %v182 = vunpack.c.l.b16 %v18
  %v183 = vpack.c.b16 %v174, %v174
  %v184 = vpack.c.b16 %v175, %v175
  %v185 = vpack.c.b16 %v176, %v176
  %v186 = vpack.c.b16 %v177, %v177
  %v187 = vpack.c.b16 %v178, %v178
  %v188 = vpack.c.b16 %v179, %v179
  %v189 = vpack.c.b16 %v180, %v180
  %v190 = vpack.c.b16 %v181, %v181
  %v191 = vpack.c.b16 %v182, %v182
  %v345 = vunpack.c.l.b16 %v19
  %v346 = vunpack.c.h.b16 %v19
  %v347 = vunpack.c.l.b16 %v20
  %v348 = vunpack.c.h.b16 %v20
  %v349 = vunpack.c.l.b16 %v21
  %v350 = vunpack.c.h.b16 %v21
  %v351 = vunpack.c.l.b16 %v22
  %v352 = vunpack.c.h.b16 %v22
  %v353 = vunpack.c.l.b16 %v23
  %v354 = vunpack.c.h.b16 %v23
  %v355 = vunpack.c.l.b16 %v24
  %v356 = vunpack.c.h.b16 %v24
  %v357 = vunpack.c.l.b16 %v25
  %v358 = vunpack.c.h.b16 %v25
  %v359 = vunpack.c.l.b16 %v26
  %v360 = vunpack.c.h.b16 %v26
  %v361 = vunpack.c.l.b16 %v27
  %v362 = vunpack.c.h.b16 %v27
  %v363 = vunpack.c.l.b16 %v28
  %v364 = vunpack.c.h.b16 %v28
  %v365 = vunpack.c.l.b16 %v29
  %v366 = vunpack.c.h.b16 %v29
  %v367 = vunpack.c.l.b16 %v30
  %v368 = vunpack.c.h.b16 %v30
  %v369 = vunpack.c.l.b16 %v31
  %v370 = vunpack.c.h.b16 %v31
  %v371 = vunpack.c.l.b16 %v32
  %v372 = vunpack.c.h.b16 %v32
  %v373 = vunpack.c.l.b16 %v33
  %v374 = vunpack.c.h.b16 %v33
  %v375 = vunpack.c.l.b16 %v34
  %v376 = vunpack.c.h.b16 %v34
  %v377 = vunpack.c.l.b16 %v35
  %v378 = vunpack.c.h.b16 %v35
  %v379 = vunpack.c.l.b16 %v36
  %v380 = vunpack.c.h.b16 %v36
  %v381 = vunpack.c.l.b16 %v37
  %v382 = vunpack.c.h.b16 %v37
  %v383 = vunpack.c.l.b16 %v38
  %v384 = vunpack.c.h.b16 %v38
  %v385 = vunpack.c.l.b16 %v39
  %v386 = vunpack.c.h.b16 %v39
  %v387 = vunpack.c.l.b16 %v40
  %v388 = vunpack.c.h.b16 %v40
  %v389 = vunpack.c.l.b16 %v41
  %v390 = vunpack.c.h.b16 %v41
  %v391 = vunpack.c.l.b16 %v42
  %v392 = vunpack.c.h.b16 %v42
  %v393 = vunpack.c.l.b16 %v43
  %v394 = vunpack.c.h.b16 %v43
  %v395 = vunpack.c.l.b16 %v44
  %v396 = vunpack.c.h.b16 %v44
  %v397 = vunpack.c.l.b16 %v45
  %v398 = vunpack.c.h.b16 %v45
  %v399 = vunpack.c.l.b16 %v46
  %v400 = vunpack.c.h.b16 %v46
  %v401 = vunpack.c.l.b16 %v47
  %v402 = vunpack.c.h.b16 %v47
  %v403 = vunpack.c.l.b16 %v48
  %v404 = vunpack.c.h.b16 %v48
  %v405 = vunpack.c.l.b16 %v49
  %v406 = vunpack.c.h.b16 %v49
  %v407 = vunpack.c.l.b16 %v50
  %v408 = vunpack.c.h.b16 %v50
  %v409 = vunpack.c.l.b16 %v51
  %v410 = vunpack.c.h.b16 %v51
  %v411 = vunpack.c.l.b16 %v52
  %v412 = vunpack.c.h.b16 %v52
  %v413 = vunpack.c.l.b16 %v53
  %v414 = vunpack.c.h.b16 %v53
  %v415 = vunpack.c.l.b16 %v54
  %v416 = vunpack.c.h.b16 %v54
  %v417 = vunpack.c.l.b16 %v55
  %v418 = vunpack.c.h.b16 %v55
  %v419 = vunpack.c.l.b16 %v56
  %v420 = vunpack.c.h.b16 %v56
  %v421 = vunpack.c.l.b16 %v57
  %v422 = vunpack.c.h.b16 %v57
  %v423 = vunpack.c.l.b16 %v58
  %v424 = vunpack.c.h.b16 %v58
  %v425 = vunpack.c.l.b16 %v59
  %v426 = vunpack.c.h.b16 %v59
  %v427 = vunpack.c.l.b16 %v60
  %v428 = vunpack.c.h.b16 %v60
  %v429 = vunpack.c.l.b16 %v61
  %v430 = vunpack.c.h.b16 %v61
  %v431 = vunpack.c.l.b16 %v62
  %v432 = vunpack.c.h.b16 %v62
  %v433 = vunpack.c.l.b16 %v63
  %v434 = vunpack.c.h.b16 %v63
  %v435 = vunpack.c.l.b16 %v64
  %v436 = vunpack.c.h.b16 %v64
  %v437 = vunpack.c.l.b16 %v65
  %v438 = vunpack.c.h.b16 %v65
  %v439 = vunpack.c.l.b16 %v66
  %v440 = vunpack.c.h.b16 %v66
  %v441 = vunpack.c.l.b16 %v67
  %v442 = vunpack.c.h.b16 %v67
  %v443 = vunpack.c.l.b16 %v68
  %v444 = vunpack.c.h.b16 %v68
  %v445 = vunpack.c.l.b16 %v69
  %v446 = vunpack.c.h.b16 %v69
  %v447 = vunpack.c.l.b16 %v70
  %v448 = vunpack.c.h.b16 %v70
  %v449 = vunpack.c.l.b16 %v71
  %v450 = vunpack.c.h.b16 %v71
  %v451 = vunpack.c.l.b16 %v72
  %v452 = vunpack.c.h.b16 %v72
  %v453 = vunpack.c.l.b16 %v73
  %v454 = vunpack.c.h.b16 %v73
  %v455 = vunpack.c.l.b16 %v74
  %v456 = vunpack.c.h.b16 %v74
  %v457 = vunpack.c.l.b16 %v75
  %v458 = vunpack.c.h.b16 %v75
  %v459 = vunpack.c.l.b16 %v76
  %v460 = vunpack.c.h.b16 %v76
  %v461 = vunpack.c.l.b16 %v77
  %v462 = vunpack.c.h.b16 %v77
  %v463 = vunpack.c.l.b16 %v78
  %v464 = vunpack.c.h.b16 %v78
  %v465 = vunpack.c.l.b16 %v79
  %v466 = vunpack.c.h.b16 %v79
  %v467 = vunpack.c.l.b16 %v80
  %v468 = vunpack.c.h.b16 %v80
  %v469 = vunpack.c.l.b16 %v81
  %v470 = vunpack.c.h.b16 %v81
  %v471 = vunpack.c.l.b16 %v82
  %v472 = vunpack.c.h.b16 %v82
  %v473 = vunpack.c.l.b16 %v83
  %v474 = vunpack.c.h.b16 %v83
  %v475 = vunpack.c.l.b16 %v84
  %v476 = vunpack.c.h.b16 %v84
  %v477 = vunpack.c.l.b16 %v85
  %v478 = vunpack.c.h.b16 %v85
  %v479 = vunpack.c.l.b16 %v86
  %v480 = vunpack.c.h.b16 %v86
  %v481 = vunpack.c.l.b16 %v87
  %v482 = vunpack.c.h.b16 %v87
  %v483 = vunpack.c.l.b16 %v88
  %v484 = vunpack.c.h.b16 %v88
  %v485 = vunpack.c.l.b16 %v89
  %v486 = vunpack.c.h.b16 %v89
  %v487 = vunpack.c.l.b16 %v90
  %v488 = vunpack.c.h.b16 %v90
  %v489 = vunpack.c.l.b16 %v91
  %v490 = vunpack.c.h.b16 %v91
  %v491 = vunpack.c.l.b16 %v92
  %v492 = vunpack.c.h.b16 %v92
  %v493 = vunpack.c.l.b16 %v93
  %v494 = vunpack.c.h.b16 %v93
  %v495 = vunpack.c.l.b16 %v94
  %v496 = vunpack.c.h.b16 %v94
  %v497 = vunpack.c.l.b16 %v95
  %v498 = vunpack.c.h.b16 %v95
  %v499 = vunpack.c.l.b16 %v96
  %v500 = vunpack.c.h.b16 %v96
  %v501 = vunpack.c.l.b16 %v97
  %v502 = vunpack.c.h.b16 %v97
  %v503 = vunpack.c.l.b16 %v98
  %v504 = vunpack.c.h.b16 %v98
  %v505 = vunpack.c.l.b16 %v99
  %v506 = vunpack.c.h.b16 %v99
  %v507 = vunpack.c.l.b16 %v100
  %v508 = vunpack.c.h.b16 %v100
  %v509 = vunpack.c.l.b16 %v101
  %v510 = vunpack.c.h.b16 %v101
  %v511 = vunpack.c.l.b16 %v102
  %v512 = vunpack.c.h.b16 %v102
  %v513 = vunpack.c.l.b16 %v103
  %v514 = vunpack.c.h.b16 %v103
  %v515 = vunpack.c.l.b16 %v104
  %v516 = vunpack.c.h.b16 %v104
  %v517 = vunpack.c.l.b16 %v105
  %v518 = vunpack.c.h.b16 %v105
  %v519 = vunpack.c.l.b16 %v106
  %v520 = vunpack.c.h.b16 %v106
  %v521 = vunpack.c.l.b16 %v107
  %v522 = vunpack.c.h.b16 %v107
  %v523 = vunpack.c.l.b16 %v108
  %v524 = vunpack.c.h.b16 %v108
  %v525 = vunpack.c.l.b16 %v109
  %v526 = vunpack.c.h.b16 %v109
  %v527 = vunpack.c.l.b16 %v110
  %v528 = vunpack.c.h.b16 %v110
  %v529 = vunpack.c.l.b16 %v111
  %v530 = vunpack.c.h.b16 %v111
  %v531 = vunpack.c.l.b16 %v112
  %v532 = vunpack.c.h.b16 %v112
  %v533 = vunpack.c.l.b16 %v113
  %v534 = vunpack.c.h.b16 %v113
  %v535 = vunpack.c.l.b16 %v114
  %v536 = vunpack.c.h.b16 %v114
  %v537 = vunpack.c.l.b16 %v115
  %v538 = vunpack.c.h.b16 %v115
  %v539 = vunpack.c.l.b16 %v116
  %v540 = vunpack.c.h.b16 %v116
  %v541 = vunpack.c.l.b16 %v117
  %v542 = vunpack.c.h.b16 %v117
  %v543 = vunpack.c.l.b16 %v118
  %v544 = vunpack.c.h.b16 %v118
  %v545 = vunpack.c.l.b16 %v119
  %v546 = vunpack.c.h.b16 %v119
  %v547 = vunpack.c.l.b16 %v120
  %v548 = vunpack.c.h.b16 %v120
  %v549 = vunpack.c.l.b16 %v121
  %v550 = vunpack.c.h.b16 %v121
  %v551 = vunpack.c.l.b16 %v122
  %v552 = vunpack.c.h.b16 %v122
  %v553 = vunpack.c.l.b16 %v123
  %v554 = vunpack.c.h.b16 %v123
  %v555 = vunpack.c.l.b16 %v124
  %v556 = vunpack.c.h.b16 %v124
  %v557 = vunpack.c.l.b16 %v125
  %v558 = vunpack.c.h.b16 %v125
  %v559 = vunpack.c.l.b16 %v126
  %v560 = vunpack.c.h.b16 %v126
  %v561 = vunpack.c.l.b16 %v127
  %v562 = vunpack.c.h.b16 %v127
  %v563 = vunpack.c.l.b16 %v128
  %v564 = vunpack.c.h.b16 %v128
  %v565 = vunpack.c.l.b16 %v129
  %v566 = vunpack.c.h.b16 %v129
  %v567 = vunpack.c.l.b16 %v130
  %v568 = vunpack.c.h.b16 %v130
  %v569 = vunpack.c.l.b16 %v131
  %v570 = vunpack.c.h.b16 %v131
  %v571 = vunpack.c.l.b16 %v132
  %v572 = vunpack.c.h.b16 %v132
  %v573 = vunpack.c.l.b16 %v133
  %v574 = vunpack.c.h.b16 %v133
  %v575 = vunpack.c.l.b16 %v134
  %v576 = vunpack.c.h.b16 %v134
  %v577 = vunpack.c.l.b16 %v135
  %v578 = vunpack.c.h.b16 %v135
  %v579 = vunpack.c.l.b16 %v136
  %v580 = vunpack.c.h.b16 %v136
  %v581 = vunpack.c.l.b16 %v137
  %v582 = vunpack.c.h.b16 %v137
  %v583 = vunpack.c.l.b16 %v138
  %v584 = vunpack.c.h.b16 %v138
  %v585 = vunpack.c.l.b16 %v139
  %v586 = vunpack.c.h.b16 %v139
  %v587 = vunpack.c.l.b16 %v140
  %v588 = vunpack.c.h.b16 %v140
  %v589 = vunpack.c.l.b16 %v141
  %v590 = vunpack.c.h.b16 %v141
  %v591 = vunpack.c.l.b16 %v142
  %v592 = vunpack.c.h.b16 %v142
  %v593 = vunpack.c.l.b16 %v143
  %v594 = vunpack.c.h.b16 %v143
  %v595 = vunpack.c.l.b16 %v144
  %v596 = vunpack.c.h.b16 %v144
  %v597 = vunpack.c.l.b16 %v145
  %v598 = vunpack.c.h.b16 %v145
  %v599 = vunpack.c.l.b16 %v146
  %v600 = vunpack.c.h.b16 %v146
  %v601 = vunpack.c.l.b16 %v147
  %v602 = vunpack.c.h.b16 %v147
  %v603 = vunpack.c.l.b16 %v148
  %v604 = vunpack.c.h.b16 %v148
  %v605 = vunpack.c.l.b16 %v149
  %v606 = vunpack.c.h.b16 %v149
  %v607 = vunpack.c.l.b16 %v150
  %v608 = vunpack.c.h.b16 %v150
  %v609 = vunpack.c.l.b16 %v151
  %v610 = vunpack.c.h.b16 %v151
  %v611 = vunpack.c.l.b16 %v152
  %v612 = vunpack.c.h.b16 %v152
  %v613 = vunpack.c.l.b16 %v153
  %v614 = vunpack.c.h.b16 %v153
  %v615 = vunpack.c.l.b16 %v154
  %v616 = vunpack.c.h.b16 %v154
  %v617 = vunpack.c.l.b16 %v155
  %v618 = vunpack.c.h.b16 %v155
  %v619 = vunpack.c.l.b16 %v156
  %v620 = vunpack.c.h.b16 %v156
  %v621 = vunpack.c.l.b16 %v157
  %v622 = vunpack.c.h.b16 %v157
  %v623 = vunpack.c.l.b16 %v158
  %v624 = vunpack.c.h.b16 %v158
  %v625 = vunpack.c.l.b16 %v159
  %v626 = vunpack.c.h.b16 %v159
  %v627 = vunpack.c.l.b16 %v160
  %v628 = vunpack.c.h.b16 %v160
  %v629 = vunpack.c.l.b16 %v161
  %v630 = vunpack.c.h.b16 %v161
  %v631 = vunpack.c.l.b16 %v162
  %v632 = vunpack.c.h.b16 %v162
  %v633 = vpack.c.b16 %v347, %v345
  %v634 = vpack.c.b16 %v348, %v346
  %v635 = vpack.c.b16 %v351, %v349
  %v636 = vpack.c.b16 %v352, %v350
  %v637 = vpack.c.b16 %v355, %v353
  %v638 = vpack.c.b16 %v356, %v354
  %v639 = vpack.c.b16 %v359, %v357
  %v640 = vpack.c.b16 %v360, %v358
  %v641 = vpack.c.b16 %v363, %v361
  %v642 = vpack.c.b16 %v364, %v362
  %v643 = vpack.c.b16 %v367, %v365
  %v644 = vpack.c.b16 %v368, %v366
  %v645 = vpack.c.b16 %v371, %v369
  %v646 = vpack.c.b16 %v372, %v370
  %v647 = vpack.c.b16 %v375, %v373
  %v648 = vpack.c.b16 %v376, %v374
  %v649 = vpack.c.b16 %v379, %v377
  %v650 = vpack.c.b16 %v380, %v378
  %v651 = vpack.c.b16 %v383, %v381
  %v652 = vpack.c.b16 %v384, %v382
  %v653 = vpack.c.b16 %v387, %v385
  %v654 = vpack.c.b16 %v388, %v386
  %v655 = vpack.c.b16 %v391, %v389
  %v656 = vpack.c.b16 %v392, %v390
  %v657 = vpack.c.b16 %v395, %v393
  %v658 = vpack.c.b16 %v396, %v394
  %v659 = vpack.c.b16 %v399, %v397
  %v660 = vpack.c.b16 %v400, %v398
  %v661 = vpack.c.b16 %v403, %v401
  %v662 = vpack.c.b16 %v404, %v402
  %v663 = vpack.c.b16 %v407, %v405
  %v664 = vpack.c.b16 %v408, %v406
  %v665 = vpack.c.b16 %v411, %v409
  %v666 = vpack.c.b16 %v412, %v410
  %v667 = vpack.c.b16 %v415, %v413
  %v668 = vpack.c.b16 %v416, %v414
  %v669 = vpack.c.b16 %v419, %v417
  %v670 = vpack.c.b16 %v420, %v418
  %v671 = vpack.c.b16 %v423, %v421
  %v672 = vpack.c.b16 %v424, %v422
  %v673 = vpack.c.b16 %v427, %v425
  %v674 = vpack.c.b16 %v428, %v426
  %v675 = vpack.c.b16 %v431, %v429
  %v676 = vpack.c.b16 %v432, %v430
  %v677 = vpack.c.b16 %v435, %v433
  %v678 = vpack.c.b16 %v436, %v434
  %v679 = vpack.c.b16 %v439, %v437
  %v680 = vpack.c.b16 %v440, %v438
  %v681 = vpack.c.b16 %v443, %v441
  %v682 = vpack.c.b16 %v444, %v442
  %v683 = vpack.c.b16 %v447, %v445
  %v684 = vpack.c.b16 %v448, %v446
  %v685 = vpack.c.b16 %v451, %v449
  %v686 = vpack.c.b16 %v452, %v450
  %v687 = vpack.c.b16 %v455, %v453
  %v688 = vpack.c.b16 %v456, %v454
  %v689 = vpack.c.b16 %v459, %v457
  %v690 = vpack.c.b16 %v460, %v458
  %v691 = vpack.c.b16 %v463, %v461
  %v692 = vpack.c.b16 %v464, %v462
  %v693 = vpack.c.b16 %v467, %v465
  %v694 = vpack.c.b16 %v468, %v466
  %v695 = vpack.c.b16 %v471, %v469
  %v696 = vpack.c.b16 %v472, %v470
  %v697 = vpack.c.b16 %v475, %v473
  %v698 = vpack.c.b16 %v476, %v474
  %v699 = vpack.c.b16 %v479, %v477
  %v700 = vpack.c.b16 %v480, %v478
  %v701 = vpack.c.b16 %v483, %v481
  %v702 = vpack.c.b16 %v484, %v482
  %v703 = vpack.c.b16 %v487, %v485
  %v704 = vpack.c.b16 %v488, %v486
  %v705 = vpack.c.b16 %v491, %v489
  %v706 = vpack.c.b16 %v492, %v490
  %v707 = vpack.c.b16 %v495, %v493
  %v708 = vpack.c.b16 %v496, %v494
  %v709 = vpack.c.b16 %v499, %v497
  %v710 = vpack.c.b16 %v500, %v498
  %v711 = vpack.c.b16 %v503, %v501
  %v712 = vpack.c.b16 %v504, %v502
  %v713 = vpack.c.b16 %v507, %v505
  %v714 = vpack.c.b16 %v508, %v506
  %v715 = vpack.c.b16 %v511, %v509
  %v716 = vpack.c.b16 %v512, %v510
  %v717 = vpack.c.b16 %v515, %v513
  %v718 = vpack.c.b16 %v516, %v514
  %v719 = vpack.c.b16 %v519, %v517
  %v720 = vpack.c.b16 %v520, %v518
  %v721 = vpack.c.b16 %v523, %v521
  %v722 = vpack.c.b16 %v524, %v522
  %v723 = vpack.c.b16 %v527, %v525
  %v724 = vpack.c.b16 %v528, %v526
  %v725 = vpack.c.b16 %v531, %v529
  %v726 = vpack.c.b16 %v532, %v530
  %v727 = vpack.c.b16 %v535, %v533
  %v728 = vpack.c.b16 %v536, %v534
  %v729 = vpack.c.b16 %v539, %v537
  %v730 = vpack.c.b16 %v540, %v538
  %v731 = vpack.c.b16 %v543, %v541
  %v732 = vpack.c.b16 %v544, %v542
  %v733 = vpack.c.b16 %v547, %v545
  %v734 = vpack.c.b16 %v548, %v546
  %v735 = vpack.c.b16 %v551, %v549
  %v736 = vpack.c.b16 %v552, %v550
  %v737 = vpack.c.b16 %v555, %v553
  %v738 = vpack.c.b16 %v556, %v554
  %v739 = vpack.c.b16 %v559, %v557
  %v740 = vpack.c.b16 %v560, %v558
  %v741 = vpack.c.b16 %v563, %v561
  %v742 = vpack.c.b16 %v564, %v562
  %v743 = vpack.c.b16 %v567, %v565
  %v744 = vpack.c.b16 %v568, %v566
  %v745 = vpack.c.b16 %v571, %v569
  %v746 = vpack.c.b16 %v572, %v570
  %v747 = vpack.c.b16 %v575, %v573
  %v748 = vpack.c.b16 %v576, %v574
  %v749 = vpack.c.b16 %v579, %v577
  %v750 = vpack.c.b16 %v580, %v578
  %v751 = vpack.c.b16 %v583, %v581
  %v752 = vpack.c.b16 %v584, %v582
  %v753 = vpack.c.b16 %v587, %v585
  %v754 = vpack.c.b16 %v588, %v586
  %v755 = vpack.c.b16 %v591, %v589
  %v756 = vpack.c.b16 %v592, %v590
  %v757 = vpack.c.b16 %v595, %v593
  %v758 = vpack.c.b16 %v596, %v594
  %v759 = vpack.c.b16 %v599, %v597
  %v760 = vpack.c.b16 %v600, %v598
  %v761 = vpack.c.b16 %v603, %v601
  %v762 = vpack.c.b16 %v604, %v602
  %v763 = vpack.c.b16 %v607, %v605
  %v764 = vpack.c.b16 %v608, %v606
  %v765 = vpack.c.b16 %v611, %v609
  %v766 = vpack.c.b16 %v612, %v610
  %v767 = vpack.c.b16 %v615, %v613
  %v768 = vpack.c.b16 %v616, %v614
  %v769 = vpack.c.b16 %v619, %v617
  %v770 = vpack.c.b16 %v620, %v618
  %v771 = vpack.c.b16 %v623, %v621
  %v772 = vpack.c.b16 %v624, %v622
  %v773 = vpack.c.b16 %v627, %v625
  %v774 = vpack.c.b16 %v628, %v626
  %v775 = vpack.c.b16 %v631, %v629
  %v776 = vpack.c.b16 %v632, %v630
  %921 = vmatpush.bf16.msra.mxu0 %v647
  %922 = vmatpush.bf16.msra.mxu0 %v645
  %923 = vmatpush.bf16.msra.mxu0 %v643
  %924 = vmatpush.bf16.msra.mxu0 %v641
  %925 = vmatpush.bf16.msra.mxu0 %v639
  %926 = vmatpush.bf16.msra.mxu0 %v637
  %927 = vmatpush.bf16.msra.mxu0 %v635
  %928 = vmatpush.bf16.msra.mxu0 %v633
  %929 = vmatmul.bf16.gmra.mxu0 %v183
  %v930 = vpop.f32.mrf.mxu0
  %v931 = vadd.f32 %v165, %v930
  %v932 = vpop.f32.mrf.mxu0
  %933 = vdwg.mxu0
  %934 = vmatpush.bf16.msra.mxu0 %v663
  %935 = vmatpush.bf16.msra.mxu0 %v661
  %936 = vmatpush.bf16.msra.mxu0 %v659
  %937 = vmatpush.bf16.msra.mxu0 %v657
  %938 = vmatpush.bf16.msra.mxu0 %v655
  %939 = vmatpush.bf16.msra.mxu0 %v653
  %940 = vmatpush.bf16.msra.mxu0 %v651
  %941 = vmatpush.bf16.msra.mxu0 %v649
  %942 = vmatmul.bf16.gmra.mxu0 %v184
  %v943 = vpop.f32.mrf.mxu0
  %v944 = vadd.f32 %v931, %v943
  %v945 = vpop.f32.mrf.mxu0
  %946 = vdwg.mxu0
  %947 = vmatpush.bf16.msra.mxu0 %v679
  %948 = vmatpush.bf16.msra.mxu0 %v677
  %949 = vmatpush.bf16.msra.mxu0 %v675
  %950 = vmatpush.bf16.msra.mxu0 %v673
  %951 = vmatpush.bf16.msra.mxu0 %v671
  %952 = vmatpush.bf16.msra.mxu0 %v669
  %953 = vmatpush.bf16.msra.mxu0 %v667
  %954 = vmatpush.bf16.msra.mxu0 %v665
  %955 = vmatmul.bf16.gmra.mxu0 %v185
  %v956 = vpop.f32.mrf.mxu0
  %v957 = vadd.f32 %v944, %v956
  %v958 = vpop.f32.mrf.mxu0
  %959 = vdwg.mxu0
  %960 = vmatpush.bf16.msra.mxu0 %v695
  %961 = vmatpush.bf16.msra.mxu0 %v693
  %962 = vmatpush.bf16.msra.mxu0 %v691
  %963 = vmatpush.bf16.msra.mxu0 %v689
  %964 = vmatpush.bf16.msra.mxu0 %v687
  %965 = vmatpush.bf16.msra.mxu0 %v685
  %966 = vmatpush.bf16.msra.mxu0 %v683
  %967 = vmatpush.bf16.msra.mxu0 %v681
  %968 = vmatmul.bf16.gmra.mxu0 %v186
  %v969 = vpop.f32.mrf.mxu0
  %v970 = vadd.f32 %v957, %v969
  %v971 = vpop.f32.mrf.mxu0
  %972 = vdwg.mxu0
  %973 = vmatpush.bf16.msra.mxu0 %v711
  %974 = vmatpush.bf16.msra.mxu0 %v709
  %975 = vmatpush.bf16.msra.mxu0 %v707
  %976 = vmatpush.bf16.msra.mxu0 %v705
  %977 = vmatpush.bf16.msra.mxu0 %v703
  %978 = vmatpush.bf16.msra.mxu0 %v701
  %979 = vmatpush.bf16.msra.mxu0 %v699
  %980 = vmatpush.bf16.msra.mxu0 %v697
  %981 = vmatmul.bf16.gmra.mxu0 %v187
  %v982 = vpop.f32.mrf.mxu0
  %v983 = vadd.f32 %v970, %v982
  %v984 = vpop.f32.mrf.mxu0
  %985 = vdwg.mxu0
  %986 = vmatpush.bf16.msra.mxu0 %v727
  %987 = vmatpush.bf16.msra.mxu0 %v725
  %988 = vmatpush.bf16.msra.mxu0 %v723
  %989 = vmatpush.bf16.msra.mxu0 %v721
  %990 = vmatpush.bf16.msra.mxu0 %v719
  %991 = vmatpush.bf16.msra.mxu0 %v717
  %992 = vmatpush.bf16.msra.mxu0 %v715
  %993 = vmatpush.bf16.msra.mxu0 %v713
  %994 = vmatmul.bf16.gmra.mxu0 %v188
  %v995 = vpop.f32.mrf.mxu0
  %v996 = vadd.f32 %v983, %v995
  %v997 = vpop.f32.mrf.mxu0
  %998 = vdwg.mxu0
  %999 = vmatpush.bf16.msra.mxu0 %v743
  %1000 = vmatpush.bf16.msra.mxu0 %v741
  %1001 = vmatpush.bf16.msra.mxu0 %v739
  %1002 = vmatpush.bf16.msra.mxu0 %v737
  %1003 = vmatpush.bf16.msra.mxu0 %v735
  %1004 = vmatpush.bf16.msra.mxu0 %v733
  %1005 = vmatpush.bf16.msra.mxu0 %v731
  %1006 = vmatpush.bf16.msra.mxu0 %v729
  %1007 = vmatmul.bf16.gmra.mxu0 %v189
  %v1008 = vpop.f32.mrf.mxu0
  %v1009 = vadd.f32 %v996, %v1008
  %v1010 = vpop.f32.mrf.mxu0
  %1011 = vdwg.mxu0
  %1012 = vmatpush.bf16.msra.mxu0 %v759
  %1013 = vmatpush.bf16.msra.mxu0 %v757
  %1014 = vmatpush.bf16.msra.mxu0 %v755
  %1015 = vmatpush.bf16.msra.mxu0 %v753
  %1016 = vmatpush.bf16.msra.mxu0 %v751
  %1017 = vmatpush.bf16.msra.mxu0 %v749
  %1018 = vmatpush.bf16.msra.mxu0 %v747
  %1019 = vmatpush.bf16.msra.mxu0 %v745
  %1020 = vmatmul.bf16.gmra.mxu0 %v190
  %v1021 = vpop.f32.mrf.mxu0
  %v1022 = vadd.f32 %v1009, %v1021
  %v1023 = vpop.f32.mrf.mxu0
  %1024 = vdwg.mxu0
  %1025 = vmatpush.bf16.msra.mxu0 %v775
  %1026 = vmatpush.bf16.msra.mxu0 %v773
  %1027 = vmatpush.bf16.msra.mxu0 %v771
  %1028 = vmatpush.bf16.msra.mxu0 %v769
  %1029 = vmatpush.bf16.msra.mxu0 %v767
  %1030 = vmatpush.bf16.msra.mxu0 %v765
  %1031 = vmatpush.bf16.msra.mxu0 %v763
  %1032 = vmatpush.bf16.msra.mxu0 %v761
  %1033 = vmatmul.bf16.gmra.mxu0 %v191
  %v1034 = vpop.f32.mrf.mxu0
  %v1035 = vadd.f32 %v1022, %v1034
  %v1036 = vpop.f32.mrf.mxu0
  %1037 = vdwg.mxu0
  %1038 = vmatpush.bf16.msra.mxu0 %v648
  %1039 = vmatpush.bf16.msra.mxu0 %v646
  %1040 = vmatpush.bf16.msra.mxu0 %v644
  %1041 = vmatpush.bf16.msra.mxu0 %v642
  %1042 = vmatpush.bf16.msra.mxu0 %v640
  %1043 = vmatpush.bf16.msra.mxu0 %v638
  %1044 = vmatpush.bf16.msra.mxu0 %v636
  %1045 = vmatpush.bf16.msra.mxu0 %v634
  %1046 = vmatmul.bf16.gmra.mxu0 %v183
  %v1047 = vpop.f32.mrf.mxu0
  %v1048 = vadd.f32 %v166, %v1047
  %v1049 = vpop.f32.mrf.mxu0
  %1050 = vdwg.mxu0
  %1051 = vmatpush.bf16.msra.mxu0 %v664
  %1052 = vmatpush.bf16.msra.mxu0 %v662
  %1053 = vmatpush.bf16.msra.mxu0 %v660
  %1054 = vmatpush.bf16.msra.mxu0 %v658
  %1055 = vmatpush.bf16.msra.mxu0 %v656
  %1056 = vmatpush.bf16.msra.mxu0 %v654
  %1057 = vmatpush.bf16.msra.mxu0 %v652
  %1058 = vmatpush.bf16.msra.mxu0 %v650
  %1059 = vmatmul.bf16.gmra.mxu0 %v184
  %v1060 = vpop.f32.mrf.mxu0
  %v1061 = vadd.f32 %v1048, %v1060
  %v1062 = vpop.f32.mrf.mxu0
  %1063 = vdwg.mxu0
  %1064 = vmatpush.bf16.msra.mxu0 %v680
  %1065 = vmatpush.bf16.msra.mxu0 %v678
  %1066 = vmatpush.bf16.msra.mxu0 %v676
  %1067 = vmatpush.bf16.msra.mxu0 %v674
  %1068 = vmatpush.bf16.msra.mxu0 %v672
  %1069 = vmatpush.bf16.msra.mxu0 %v670
  %1070 = vmatpush.bf16.msra.mxu0 %v668
  %1071 = vmatpush.bf16.msra.mxu0 %v666
  %1072 = vmatmul.bf16.gmra.mxu0 %v185
  %v1073 = vpop.f32.mrf.mxu0
  %v1074 = vadd.f32 %v1061, %v1073
  %v1075 = vpop.f32.mrf.mxu0
  %1076 = vdwg.mxu0
  %1077 = vmatpush.bf16.msra.mxu0 %v696
  %1078 = vmatpush.bf16.msra.mxu0 %v694
  %1079 = vmatpush.bf16.msra.mxu0 %v692
  %1080 = vmatpush.bf16.msra.mxu0 %v690
  %1081 = vmatpush.bf16.msra.mxu0 %v688
  %1082 = vmatpush.bf16.msra.mxu0 %v686
  %1083 = vmatpush.bf16.msra.mxu0 %v684
  %1084 = vmatpush.bf16.msra.mxu0 %v682
  %1085 = vmatmul.bf16.gmra.mxu0 %v186
  %v1086 = vpop.f32.mrf.mxu0
  %v1087 = vadd.f32 %v1074, %v1086
  %v1088 = vpop.f32.mrf.mxu0
  %1089 = vdwg.mxu0
  %1090 = vmatpush.bf16.msra.mxu0 %v712
  %1091 = vmatpush.bf16.msra.mxu0 %v710
  %1092 = vmatpush.bf16.msra.mxu0 %v708
  %1093 = vmatpush.bf16.msra.mxu0 %v706
  %1094 = vmatpush.bf16.msra.mxu0 %v704
  %1095 = vmatpush.bf16.msra.mxu0 %v702
  %1096 = vmatpush.bf16.msra.mxu0 %v700
  %1097 = vmatpush.bf16.msra.mxu0 %v698
  %1098 = vmatmul.bf16.gmra.mxu0 %v187
  %v1099 = vpop.f32.mrf.mxu0
  %v1100 = vadd.f32 %v1087, %v1099
  %v1101 = vpop.f32.mrf.mxu0
  %1102 = vdwg.mxu0
  %1103 = vmatpush.bf16.msra.mxu0 %v728
  %1104 = vmatpush.bf16.msra.mxu0 %v726
  %1105 = vmatpush.bf16.msra.mxu0 %v724
  %1106 = vmatpush.bf16.msra.mxu0 %v722
  %1107 = vmatpush.bf16.msra.mxu0 %v720
  %1108 = vmatpush.bf16.msra.mxu0 %v718
  %1109 = vmatpush.bf16.msra.mxu0 %v716
  %1110 = vmatpush.bf16.msra.mxu0 %v714
  %1111 = vmatmul.bf16.gmra.mxu0 %v188
  %v1112 = vpop.f32.mrf.mxu0
  %v1113 = vadd.f32 %v1100, %v1112
  %v1114 = vpop.f32.mrf.mxu0
  %1115 = vdwg.mxu0
  %1116 = vmatpush.bf16.msra.mxu0 %v744
  %1117 = vmatpush.bf16.msra.mxu0 %v742
  %1118 = vmatpush.bf16.msra.mxu0 %v740
  %1119 = vmatpush.bf16.msra.mxu0 %v738
  %1120 = vmatpush.bf16.msra.mxu0 %v736
  %1121 = vmatpush.bf16.msra.mxu0 %v734
  %1122 = vmatpush.bf16.msra.mxu0 %v732
  %1123 = vmatpush.bf16.msra.mxu0 %v730
  %1124 = vmatmul.bf16.gmra.mxu0 %v189
  %v1125 = vpop.f32.mrf.mxu0
  %v1126 = vadd.f32 %v1113, %v1125
  %v1127 = vpop.f32.mrf.mxu0
  %1128 = vdwg.mxu0
  %1129 = vmatpush.bf16.msra.mxu0 %v760
  %1130 = vmatpush.bf16.msra.mxu0 %v758
  %1131 = vmatpush.bf16.msra.mxu0 %v756
  %1132 = vmatpush.bf16.msra.mxu0 %v754
  %1133 = vmatpush.bf16.msra.mxu0 %v752
  %1134 = vmatpush.bf16.msra.mxu0 %v750
  %1135 = vmatpush.bf16.msra.mxu0 %v748
  %1136 = vmatpush.bf16.msra.mxu0 %v746
  %1137 = vmatmul.bf16.gmra.mxu0 %v190
  %v1138 = vpop.f32.mrf.mxu0
  %v1139 = vadd.f32 %v1126, %v1138
  %v1140 = vpop.f32.mrf.mxu0
  %1141 = vdwg.mxu0
  %1142 = vmatpush.bf16.msra.mxu0 %v776
  %1143 = vmatpush.bf16.msra.mxu0 %v774
  %1144 = vmatpush.bf16.msra.mxu0 %v772
  %1145 = vmatpush.bf16.msra.mxu0 %v770
  %1146 = vmatpush.bf16.msra.mxu0 %v768
  %1147 = vmatpush.bf16.msra.mxu0 %v766
  %1148 = vmatpush.bf16.msra.mxu0 %v764
  %1149 = vmatpush.bf16.msra.mxu0 %v762
  %1150 = vmatmul.bf16.gmra.mxu0 %v191
  %v1151 = vpop.f32.mrf.mxu0
  %v1152 = vadd.f32 %v1139, %v1151
  %v1153 = vpop.f32.mrf.mxu0
  %1154 = vdwg.mxu0
  %1155 = vst [vmem:[%s3] sm:$0xff] %v1035
  %1156 = vst [vmem:[%s3 + $0x8] sm:$0xff] %v1152
  // Predicated region
  $region14: #{policy_transformer_forward.12} parent=0 // pred_check
    _
  $region15: #{policy_transformer_forward.12} parent=0 // pred_check_branch
    %1158 = sbr.rel (0) target = $region17
  $region16: #{policy_transformer_forward.12} parent=0 // pred_region
    _
  $region17: #{policy_transformer_forward.12} parent=0 // pred_fallthru
    _
  // Predicated region
  $region18: #{policy_transformer_forward.12} parent=0 // pred_check
    _
  $region19: #{policy_transformer_forward.12} parent=0 // pred_check_branch
    %1160 = sbr.rel (0) target = $region21
  $region20: #{policy_transformer_forward.12} parent=0 // pred_region
    _
  $region21: #{policy_transformer_forward.12} parent=0 // pred_fallthru
    _

// kernel: policy_transformer_forward.13
$region0: #{policy_transformer_forward.13}
  #allocation0 [shape = 'u32[]', space=smem, size = 0x4, offset = 0x4, fixed_abs, tag = 'smem constant byte address 0x4 - core index']
  #allocation1 [shape = 'u32[72,128]{1,0:T(1,128)}', space=vmem, size = 0x9000, scoped, tag = 'internal scratch']
  %s0 = inlined_call_operand.vmem [shape: f32[2,4,256], index: 0, kind: input, shape index: {}]
  %s1 = inlined_call_operand.vmem [shape: bf16[256,768], index: 1, kind: input, shape index: {}]
  %s2 = inlined_call_operand.vmem [shape: f32[1,768], index: 2, kind: input, shape index: {}]
  %s3 = inlined_call_operand.hbm [shape: bf16[256,256], index: 3, kind: input, shape index: {}]
  %s4 = inlined_call_operand.vmem [shape: f32[1,256], index: 4, kind: input, shape index: {}]
  %s5 = inlined_call_operand.vmem [shape: f32[1,256], index: 5, kind: input, shape index: {}]
  %s6 = inlined_call_operand.vmem [shape: f32[1,256], index: 6, kind: input, shape index: {}]
  %s7 = inlined_call_operand.vmem [shape: f32[2,4,256], index: 7, kind: output, shape index: {}]
  %s8 = sld [smem:[#allocation0]]
  $region65: #{policy_transformer_forward.13} parent=0
    _
  %s10 = ssub.s32 1, %s8
  %s11 = scalar_select 0, %s10, %s8
  $region1: #{policy_transformer_forward.13} parent=0
    #allocation2 [shape = 'u8[131072]{0}', space=vmem, size = 0x20000, scoped, tag = 'input window, operand 3, single buffered']
    #allocation3 [shape = 's32[2]{0}', space=sflag, size = 0x8, scoped, tag = 'scoped memory for policy_transformer_forward.13']
    %12 = vsyncpa [#allocation3], 0
    loop: start=0, step=1, limit=4
    $region2: #{policy_transformer_forward.13} parent=1 // loop_pre_header
      _
    $region3: #{policy_transformer_forward.13} parent=1 // loop_header
      %s14 = sphi 0, %s18
      %p15 = scmp.ge.s32.totalorder %s14, 4
      %s24 = sphi 0, %s26
      %s27 = sphi 0, %s24
      %s28 = sphi 0, %s27
      %s44 = sphi 0, %s28
      %s48 = sphi 0, %s48
      %s50 = sphi 0, %s48
      %s51 = sphi 0, %s50
      %s65 = sphi 0, %s51
      %s69 = sphi 0, %s69
      %s71 = sphi 0, %s69
      %s72 = sphi 0, %s71
      %s86 = sphi 0, %s72
      %s90 = sphi 0, %s90
      %s92 = sphi 0, %s90
      %s93 = sphi 0, %s92
      %s107 = sphi 0, %s93
      %s111 = sphi 0, %s111
      %s113 = sphi 0, %s111
      %s114 = sphi 0, %s113
      %s128 = sphi 0, %s114
      %s132 = sphi 0, %s132
      %s134 = sphi 0, %s132
      %s135 = sphi 0, %s134
      %s149 = sphi 0, %s135
      %s153 = sphi 0, %s153
      %s155 = sphi 0, %s153
      %s156 = sphi 0, %s155
      %s170 = sphi 0, %s156
      %s176 = sphi 0, %s178
      %s179 = sphi 0, %s176
      %s180 = sphi 0, %s179
      %s196 = sphi 0, %s180
    $region4: #{policy_transformer_forward.13} parent=1 // loop_header_branch
      %17 = sbr.rel (%p15) target = $region8
    $region5: #{policy_transformer_forward.13} parent=1 // loop_body
      %s19 = ssub.s32 %s14, 1
      %s20 = ssub.s32 %s14, 2
      %s21 = sadd.s32 %s14, 1
      %s22 = ssub.s32 %s14, %s21
      %p23 = scmp.eq.s32.totalorder %s22, 0
      %s25 = sadd.s32 %s24, 1
      %s26 = scalar_select %p23, %s24, %s25
      %p29 = pneg %p23
      %p30 = scmp.eq.s32.totalorder %s14, 1
      %p31 = por %p29, %p30
      %p32 = scmp.ne.s32.totalorder %s24, %s27
      %p33 = scmp.eq.s32.totalorder %s14, 0
      %p34 = por %p32, %p33
      %p35 = scmp.ne.s32.totalorder %s24, %s27
      %p36 = scmp.eq.s32.totalorder %s19, 1
      %p37 = por %p35, %p36
      %p38 = scmp.ne.s32.totalorder %s27, %s28
      %p39 = scmp.eq.s32.totalorder %s19, 0
      %p40 = por %p38, %p39
      %p41 = scmp.ne.s32.totalorder %s27, %s28
      %p42 = scmp.eq.s32.totalorder %s20, 1
      %p43 = por %p41, %p42
      %p45 = scmp.ne.s32.totalorder %s28, %s44
      %p46 = scmp.eq.s32.totalorder %s20, 0
      %p47 = por %p45, %p46
      %s49 = sadd.s32 %s48, 1
      %p52 = scmp.eq.s32.totalorder %s14, 1
      %p53 = scmp.ne.s32.totalorder %s48, %s50
      %p54 = scmp.eq.s32.totalorder %s14, 0
      %p55 = por %p53, %p54
      %p56 = scmp.ne.s32.totalorder %s48, %s50
      %p57 = scmp.eq.s32.totalorder %s19, 1
      %p58 = por %p56, %p57
      %p59 = scmp.ne.s32.totalorder %s50, %s51
      %p60 = scmp.eq.s32.totalorder %s19, 0
      %p61 = por %p59, %p60
      %p62 = scmp.ne.s32.totalorder %s50, %s51
      %p63 = scmp.eq.s32.totalorder %s20, 1
      %p64 = por %p62, %p63
      %p66 = scmp.ne.s32.totalorder %s51, %s65
      %p67 = scmp.eq.s32.totalorder %s20, 0
      %p68 = por %p66, %p67
      %s70 = sadd.s32 %s69, 1
      %p73 = scmp.eq.s32.totalorder %s14, 1
      %p74 = scmp.ne.s32.totalorder %s69, %s71
      %p75 = scmp.eq.s32.totalorder %s14, 0
      %p76 = por %p74, %p75
      %p77 = scmp.ne.s32.totalorder %s69, %s71
      %p78 = scmp.eq.s32.totalorder %s19, 1
      %p79 = por %p77, %p78
      %p80 = scmp.ne.s32.totalorder %s71, %s72
      %p81 = scmp.eq.s32.totalorder %s19, 0
      %p82 = por %p80, %p81
      %p83 = scmp.ne.s32.totalorder %s71, %s72
      %p84 = scmp.eq.s32.totalorder %s20, 1
      %p85 = por %p83, %p84
      %p87 = scmp.ne.s32.totalorder %s72, %s86
      %p88 = scmp.eq.s32.totalorder %s20, 0
      %p89 = por %p87, %p88
      %s91 = sadd.s32 %s90, 1
      %p94 = scmp.eq.s32.totalorder %s14, 1
      %p95 = scmp.ne.s32.totalorder %s90, %s92
      %p96 = scmp.eq.s32.totalorder %s14, 0
      %p97 = por %p95, %p96
      %p98 = scmp.ne.s32.totalorder %s90, %s92
      %p99 = scmp.eq.s32.totalorder %s19, 1
      %p100 = por %p98, %p99
      %p101 = scmp.ne.s32.totalorder %s92, %s93
      %p102 = scmp.eq.s32.totalorder %s19, 0
      %p103 = por %p101, %p102
      %p104 = scmp.ne.s32.totalorder %s92, %s93
      %p105 = scmp.eq.s32.totalorder %s20, 1
      %p106 = por %p104, %p105
      %p108 = scmp.ne.s32.totalorder %s93, %s107
      %p109 = scmp.eq.s32.totalorder %s20, 0
      %p110 = por %p108, %p109
      %s112 = sadd.s32 %s111, 1
      %p115 = scmp.eq.s32.totalorder %s14, 1
      %p116 = scmp.ne.s32.totalorder %s111, %s113
      %p117 = scmp.eq.s32.totalorder %s14, 0
      %p118 = por %p116, %p117
      %p119 = scmp.ne.s32.totalorder %s111, %s113
      %p120 = scmp.eq.s32.totalorder %s19, 1
      %p121 = por %p119, %p120
      %p122 = scmp.ne.s32.totalorder %s113, %s114
      %p123 = scmp.eq.s32.totalorder %s19, 0
      %p124 = por %p122, %p123
      %p125 = scmp.ne.s32.totalorder %s113, %s114
      %p126 = scmp.eq.s32.totalorder %s20, 1
      %p127 = por %p125, %p126
      %p129 = scmp.ne.s32.totalorder %s114, %s128
      %p130 = scmp.eq.s32.totalorder %s20, 0
      %p131 = por %p129, %p130
      %s133 = sadd.s32 %s132, 1
      %p136 = scmp.eq.s32.totalorder %s14, 1
      %p137 = scmp.ne.s32.totalorder %s132, %s134
      %p138 = scmp.eq.s32.totalorder %s14, 0
      %p139 = por %p137, %p138
      %p140 = scmp.ne.s32.totalorder %s132, %s134
      %p141 = scmp.eq.s32.totalorder %s19, 1
      %p142 = por %p140, %p141
      %p143 = scmp.ne.s32.totalorder %s134, %s135
      %p144 = scmp.eq.s32.totalorder %s19, 0
      %p145 = por %p143, %p144
      %p146 = scmp.ne.s32.totalorder %s134, %s135
      %p147 = scmp.eq.s32.totalorder %s20, 1
      %p148 = por %p146, %p147
      %p150 = scmp.ne.s32.totalorder %s135, %s149
      %p151 = scmp.eq.s32.totalorder %s20, 0
      %p152 = por %p150, %p151
      %s154 = sadd.s32 %s153, 1
      %p157 = scmp.eq.s32.totalorder %s14, 1
      %p158 = scmp.ne.s32.totalorder %s153, %s155
      %p159 = scmp.eq.s32.totalorder %s14, 0
      %p160 = por %p158, %p159
      %p161 = scmp.ne.s32.totalorder %s153, %s155
      %p162 = scmp.eq.s32.totalorder %s19, 1
      %p163 = por %p161, %p162
      %p164 = scmp.ne.s32.totalorder %s155, %s156
      %p165 = scmp.eq.s32.totalorder %s19, 0
      %p166 = por %p164, %p165
      %p167 = scmp.ne.s32.totalorder %s155, %s156
      %p168 = scmp.eq.s32.totalorder %s20, 1
      %p169 = por %p167, %p168
      %p171 = scmp.ne.s32.totalorder %s156, %s170
      %p172 = scmp.eq.s32.totalorder %s20, 0
      %p173 = por %p171, %p172
      %s174 = ssub.s32 %s14, %s21
      %p175 = scmp.eq.s32.totalorder %s174, 0
      %s177 = sadd.s32 %s176, 1
      %s178 = scalar_select %p175, %s176, %s177
      %p181 = pneg %p175
      %p182 = scmp.eq.s32.totalorder %s14, 1
      %p183 = por %p181, %p182
      %p184 = scmp.ne.s32.totalorder %s176, %s179
      %p185 = scmp.eq.s32.totalorder %s14, 0
      %p186 = por %p184, %p185
      %p187 = scmp.ne.s32.totalorder %s176, %s179
      %p188 = scmp.eq.s32.totalorder %s19, 1
      %p189 = por %p187, %p188
      %p190 = scmp.ne.s32.totalorder %s179, %s180
      %p191 = scmp.eq.s32.totalorder %s19, 0
      %p192 = por %p190, %p191
      %p193 = scmp.ne.s32.totalorder %s179, %s180
      %p194 = scmp.eq.s32.totalorder %s20, 1
      %p195 = por %p193, %p194
      %p197 = scmp.ne.s32.totalorder %s180, %s196
      %p198 = scmp.eq.s32.totalorder %s20, 0
      %p199 = por %p197, %p198
      %p200 = scmp.le.s32.totalorder 1, %s14
      %p201 = scmp.lt.s32.totalorder %s14, 3
      %p202 = pnand %p200, %p201
      %p203 = pneg %p202
      // Predicated region
      $region9: #{policy_transformer_forward.13} parent=5 // pred_check
        _
      $region10: #{policy_transformer_forward.13} parent=5 // pred_check_branch
        %205 = sbr.rel (%p202) target = $region12
      $region11: #{policy_transformer_forward.13} parent=5 // pred_region
        %s206 = ssub.s32 %s14, 1
        // Predicated region
        $region13: #{policy_transformer_forward.13} parent=11 // pred_check
          %p207 = pneg %p61
        $region14: #{policy_transformer_forward.13} parent=11 // pred_check_branch
          %209 = sbr.rel (%p207) target = $region16
        $region15: #{policy_transformer_forward.13} parent=11 // pred_region
          _
        $region16: #{policy_transformer_forward.13} parent=11 // pred_fallthru
          _
        // Predicated region
        $region17: #{policy_transformer_forward.13} parent=11 // pred_check
          %p210 = pneg %p82
        $region18: #{policy_transformer_forward.13} parent=11 // pred_check_branch
          %212 = sbr.rel (%p210) target = $region20
        $region19: #{policy_transformer_forward.13} parent=11 // pred_region
          _
        $region20: #{policy_transformer_forward.13} parent=11 // pred_fallthru
          _
        // Predicated region
        $region21: #{policy_transformer_forward.13} parent=11 // pred_check
          %p213 = pneg %p103
        $region22: #{policy_transformer_forward.13} parent=11 // pred_check_branch
          %215 = sbr.rel (%p213) target = $region24
        $region23: #{policy_transformer_forward.13} parent=11 // pred_region
          %217 = vsyncadd [#allocation3], 0
          %s218 = sshll.u32 %s3, 4
          %s219 = int_to_ptr.hbm [resolvable:$true] %s218
          %s220 = sshll.u32 [#allocation2], 4
          %s221 = int_to_ptr.vmem [resolvable:$true] %s220
          %226 = dma.hbm_to_vmem [thread:$0]  %s219, 4096, %s221, [#allocation3], 128, 128, 8
        $region24: #{policy_transformer_forward.13} parent=11 // pred_fallthru
          _
        // Predicated region
        $region25: #{policy_transformer_forward.13} parent=11 // pred_check
          %p227 = pneg %p124
        $region26: #{policy_transformer_forward.13} parent=11 // pred_check_branch
          %229 = sbr.rel (%p227) target = $region28
        $region27: #{policy_transformer_forward.13} parent=11 // pred_region
          _
        $region28: #{policy_transformer_forward.13} parent=11 // pred_fallthru
          _
        // Predicated region
        $region29: #{policy_transformer_forward.13} parent=11 // pred_check
          %p230 = pneg %p145
        $region30: #{policy_transformer_forward.13} parent=11 // pred_check_branch
          %232 = sbr.rel (%p230) target = $region32
        $region31: #{policy_transformer_forward.13} parent=11 // pred_region
          _
        $region32: #{policy_transformer_forward.13} parent=11 // pred_fallthru
          _
        // Predicated region
        $region33: #{policy_transformer_forward.13} parent=11 // pred_check
          %p233 = pneg %p166
        $region34: #{policy_transformer_forward.13} parent=11 // pred_check_branch
          %235 = sbr.rel (%p233) target = $region36
        $region35: #{policy_transformer_forward.13} parent=11 // pred_region
          _
        $region36: #{policy_transformer_forward.13} parent=11 // pred_fallthru
          _
      $region12: #{policy_transformer_forward.13} parent=5 // pred_fallthru
        _
      %p236 = scmp.lt.s32.totalorder %s14, 2
      // Predicated region
      $region37: #{policy_transformer_forward.13} parent=5 // pred_check
        %p237 = pneg %p236
      $region38: #{policy_transformer_forward.13} parent=5 // pred_check_branch
        %239 = sbr.rel (%p237) target = $region40
      $region39: #{policy_transformer_forward.13} parent=5 // pred_region
        // Predicated region
        $region41: #{policy_transformer_forward.13} parent=39 // pred_check
          %p240 = pneg %p34
        $region42: #{policy_transformer_forward.13} parent=39 // pred_check_branch
          %242 = sbr.rel (%p240) target = $region44
        $region43: #{policy_transformer_forward.13} parent=39 // pred_region
          %p243 = scmp.lt.s32.totalorder %s14, 1
          %s244 = scalar_select %p243, %s14, 1
          %s245 = smul.addr %s244, 2
          %s246 = smul.addr %s245, 4
          %s247 = scalar_lea.vmem %s0, %s246
        $region44: #{policy_transformer_forward.13} parent=39 // pred_fallthru
          _
      $region40: #{policy_transformer_forward.13} parent=5 // pred_fallthru
        _
      %p248 = scmp.le.s32.totalorder 1, %s14
      %p249 = scmp.lt.s32.totalorder %s14, 3
      %p250 = pnand %p248, %p249
      %p251 = pneg %p250
      // Predicated region
      $region45: #{policy_transformer_forward.13} parent=5 // pred_check
        _
      $region46: #{policy_transformer_forward.13} parent=5 // pred_check_branch
        %253 = sbr.rel (%p250) target = $region48
      $region47: #{policy_transformer_forward.13} parent=5 // pred_region
        %s254 = ssub.s32 %s14, 1
        // Predicated region
        $region49: #{policy_transformer_forward.13} parent=47 // pred_check
          %p255 = pneg %p103
        $region50: #{policy_transformer_forward.13} parent=47 // pred_check_branch
          %257 = sbr.rel (%p255) target = $region52
        $region51: #{policy_transformer_forward.13} parent=47 // pred_region
          %259 = dma.done [#allocation3], 4096
        $region52: #{policy_transformer_forward.13} parent=47 // pred_fallthru
          _
        %p260 = scmp.lt.s32.totalorder %s19, 1
        %s261 = scalar_select %p260, %s19, 1
        %s262 = smul.addr %s261, 2
        %s263 = smul.addr %s262, 4
        %s264 = scalar_lea.vmem %s0, %s263
        %p265 = pneg %p40
        %p266 = pneg %p37
        %p267 = pneg %p61
        %p268 = pneg %p58
        %p269 = pneg %p82
        %p270 = pneg %p79
        %p271 = pneg %p103
        %p272 = pneg %p100
        %p273 = pneg %p124
        %p274 = pneg %p121
        %p275 = pneg %p145
        %p276 = pneg %p142
        %p277 = pneg %p166
        %p278 = pneg %p163
        %p279 = pneg %p192
        %p280 = pneg %p189
        %p281 = scmp.lt.s32.totalorder %s19, 1
        %s282 = scalar_select %p281, %s19, 1
        %s283 = smul.addr %s282, 2
        %s284 = smul.addr %s283, 4
        %s285 = scalar_lea.vmem %s7, %s284
        %p286 = scmp.lt.s32.totalorder %s19, 1
        %s287 = scalar_select %p286, %s19, 1
        %s288 = smul.addr %s287, 2
        %s289 = smul.addr %s288, 4
        %s290 = scalar_lea.vmem %s0, %s289
        %p291 = scmp.lt.s32.totalorder %s19, 1
        %s292 = scalar_select %p291, %s19, 1
        %s293 = smul.addr %s292, 2
        %s294 = smul.addr %s293, 4
        %s295 = scalar_lea.vmem %s7, %s294
        %v297 = vld [vmem:[%s290] sm:$0xff]
        %299 = vst [vmem:[#allocation1] ss:$2 sm:$0xff] %v297
        %v300 = vld.sshfl [vmem:[#allocation1] sm:$0xff pattern:$0x75316420]
        %v301 = vld.sshfl [vmem:[#allocation1 + $0x8] sm:$0xff pattern:$0x75316420]
        %v304 = vpack.c.bf16 %v300, %v300
        %v305 = vpack.c.bf16 %v301, %v301
        %v306 = vld [vmem:[%s1] sm:$0xff]
        %v307 = vld [vmem:[%s1 + $0x8] sm:$0xff]
        %v308 = vld [vmem:[%s1 + $0x10] sm:$0xff]
        %v309 = vld [vmem:[%s1 + $0x18] sm:$0xff]
        %v310 = vld [vmem:[%s1 + $0x20] sm:$0xff]
        %v311 = vld [vmem:[%s1 + $0x28] sm:$0xff]
        %v312 = vld [vmem:[%s1 + $0x30] sm:$0xff]
        %v313 = vld [vmem:[%s1 + $0x38] sm:$0xff]
        %v314 = vld [vmem:[%s1 + $0x40] sm:$0xff]
        %v315 = vld [vmem:[%s1 + $0x48] sm:$0xff]
        %v316 = vld [vmem:[%s1 + $0x50] sm:$0xff]
        %v317 = vld [vmem:[%s1 + $0x58] sm:$0xff]
        %v318 = vld [vmem:[%s1 + $0x60] sm:$0xff]
        %v319 = vld [vmem:[%s1 + $0x68] sm:$0xff]
        %v320 = vld [vmem:[%s1 + $0x70] sm:$0xff]
        %v321 = vld [vmem:[%s1 + $0x78] sm:$0xff]
        %v322 = vld [vmem:[%s1 + $0x80] sm:$0xff]
        %v323 = vld [vmem:[%s1 + $0x88] sm:$0xff]
        %v324 = vld [vmem:[%s1 + $0x90] sm:$0xff]
        %v325 = vld [vmem:[%s1 + $0x98] sm:$0xff]
        %v326 = vld [vmem:[%s1 + $0xa0] sm:$0xff]
        %v327 = vld [vmem:[%s1 + $0xa8] sm:$0xff]
        %v328 = vld [vmem:[%s1 + $0xb0] sm:$0xff]
        %v329 = vld [vmem:[%s1 + $0xb8] sm:$0xff]
        %v330 = vld [vmem:[%s1 + $0xc0] sm:$0xff]
        %v331 = vld [vmem:[%s1 + $0xc8] sm:$0xff]
        %v332 = vld [vmem:[%s1 + $0xd0] sm:$0xff]
        %v333 = vld [vmem:[%s1 + $0xd8] sm:$0xff]
        %v334 = vld [vmem:[%s1 + $0xe0] sm:$0xff]
        %v335 = vld [vmem:[%s1 + $0xe8] sm:$0xff]
        %v336 = vld [vmem:[%s1 + $0xf0] sm:$0xff]
        %v337 = vld [vmem:[%s1 + $0xf8] sm:$0xff]
        %v338 = vld [vmem:[%s1 + $0x100] sm:$0xff]
        %v339 = vld [vmem:[%s1 + $0x108] sm:$0xff]
        %v340 = vld [vmem:[%s1 + $0x110] sm:$0xff]
        %v341 = vld [vmem:[%s1 + $0x118] sm:$0xff]
        %v342 = vld [vmem:[%s1 + $0x120] sm:$0xff]
        %v343 = vld [vmem:[%s1 + $0x128] sm:$0xff]
        %v344 = vld [vmem:[%s1 + $0x130] sm:$0xff]
        %v345 = vld [vmem:[%s1 + $0x138] sm:$0xff]
        %v346 = vld [vmem:[%s1 + $0x140] sm:$0xff]
        %v347 = vld [vmem:[%s1 + $0x148] sm:$0xff]
        %v348 = vld [vmem:[%s1 + $0x150] sm:$0xff]
        %v349 = vld [vmem:[%s1 + $0x158] sm:$0xff]
        %v350 = vld [vmem:[%s1 + $0x160] sm:$0xff]
        %v351 = vld [vmem:[%s1 + $0x168] sm:$0xff]
        %v352 = vld [vmem:[%s1 + $0x170] sm:$0xff]
        %v353 = vld [vmem:[%s1 + $0x178] sm:$0xff]
        %v354 = vld [vmem:[%s1 + $0x180] sm:$0xff]
        %v355 = vld [vmem:[%s1 + $0x188] sm:$0xff]
        %v356 = vld [vmem:[%s1 + $0x190] sm:$0xff]
        %v357 = vld [vmem:[%s1 + $0x198] sm:$0xff]
        %v358 = vld [vmem:[%s1 + $0x1a0] sm:$0xff]
        %v359 = vld [vmem:[%s1 + $0x1a8] sm:$0xff]
        %v360 = vld [vmem:[%s1 + $0x1b0] sm:$0xff]
        %v361 = vld [vmem:[%s1 + $0x1b8] sm:$0xff]
        %v362 = vld [vmem:[%s1 + $0x1c0] sm:$0xff]
        %v363 = vld [vmem:[%s1 + $0x1c8] sm:$0xff]
        %v364 = vld [vmem:[%s1 + $0x1d0] sm:$0xff]
        %v365 = vld [vmem:[%s1 + $0x1d8] sm:$0xff]
        %v366 = vld [vmem:[%s1 + $0x1e0] sm:$0xff]
        %v367 = vld [vmem:[%s1 + $0x1e8] sm:$0xff]
        %v368 = vld [vmem:[%s1 + $0x1f0] sm:$0xff]
        %v369 = vld [vmem:[%s1 + $0x1f8] sm:$0xff]
        %v370 = vld [vmem:[%s1 + $0x200] sm:$0xff]
        %v371 = vld [vmem:[%s1 + $0x208] sm:$0xff]
        %v372 = vld [vmem:[%s1 + $0x210] sm:$0xff]
        %v373 = vld [vmem:[%s1 + $0x218] sm:$0xff]
        %v374 = vld [vmem:[%s1 + $0x220] sm:$0xff]
        %v375 = vld [vmem:[%s1 + $0x228] sm:$0xff]
        %v376 = vld [vmem:[%s1 + $0x230] sm:$0xff]
        %v377 = vld [vmem:[%s1 + $0x238] sm:$0xff]
        %v378 = vld [vmem:[%s1 + $0x240] sm:$0xff]
        %v379 = vld [vmem:[%s1 + $0x248] sm:$0xff]
        %v380 = vld [vmem:[%s1 + $0x250] sm:$0xff]
        %v381 = vld [vmem:[%s1 + $0x258] sm:$0xff]
        %v382 = vld [vmem:[%s1 + $0x260] sm:$0xff]
        %v383 = vld [vmem:[%s1 + $0x268] sm:$0xff]
        %v384 = vld [vmem:[%s1 + $0x270] sm:$0xff]
        %v385 = vld [vmem:[%s1 + $0x278] sm:$0xff]
        %v386 = vld [vmem:[%s1 + $0x280] sm:$0xff]
        %v387 = vld [vmem:[%s1 + $0x288] sm:$0xff]
        %v388 = vld [vmem:[%s1 + $0x290] sm:$0xff]
        %v389 = vld [vmem:[%s1 + $0x298] sm:$0xff]
        %v390 = vld [vmem:[%s1 + $0x2a0] sm:$0xff]
        %v391 = vld [vmem:[%s1 + $0x2a8] sm:$0xff]
        %v392 = vld [vmem:[%s1 + $0x2b0] sm:$0xff]
        %v393 = vld [vmem:[%s1 + $0x2b8] sm:$0xff]
        %v394 = vld [vmem:[%s1 + $0x2c0] sm:$0xff]
        %v395 = vld [vmem:[%s1 + $0x2c8] sm:$0xff]
        %v396 = vld [vmem:[%s1 + $0x2d0] sm:$0xff]
        %v397 = vld [vmem:[%s1 + $0x2d8] sm:$0xff]
        %v398 = vld [vmem:[%s1 + $0x2e0] sm:$0xff]
        %v399 = vld [vmem:[%s1 + $0x2e8] sm:$0xff]
        %v400 = vld [vmem:[%s1 + $0x2f0] sm:$0xff]
        %v401 = vld [vmem:[%s1 + $0x2f8] sm:$0xff]
        %v402 = vld [vmem:[%s2] sm:$0x3f]
        %v404 = vperm.slane %v402, 0
        %v405 = vperm.slane %v402, 1
        %v406 = vperm.slane %v402, 2
        %v407 = vperm.slane %v402, 3
        %v408 = vperm.slane %v402, 4
        %v409 = vperm.slane %v402, 5
        %v512 = vunpack.c.l.b16 %v306
        %v513 = vunpack.c.h.b16 %v306
        %v514 = vunpack.c.l.b16 %v307
        %v515 = vunpack.c.h.b16 %v307
        %v516 = vunpack.c.l.b16 %v308
        %v517 = vunpack.c.h.b16 %v308
        %v518 = vunpack.c.l.b16 %v309
        %v519 = vunpack.c.h.b16 %v309
        %v520 = vunpack.c.l.b16 %v310
        %v521 = vunpack.c.h.b16 %v310
        %v522 = vunpack.c.l.b16 %v311
        %v523 = vunpack.c.h.b16 %v311
        %v524 = vunpack.c.l.b16 %v312
        %v525 = vunpack.c.h.b16 %v312
        %v526 = vunpack.c.l.b16 %v313
        %v527 = vunpack.c.h.b16 %v313
        %v528 = vunpack.c.l.b16 %v314
        %v529 = vunpack.c.h.b16 %v314
        %v530 = vunpack.c.l.b16 %v315
        %v531 = vunpack.c.h.b16 %v315
        %v532 = vunpack.c.l.b16 %v316
        %v533 = vunpack.c.h.b16 %v316
        %v534 = vunpack.c.l.b16 %v317
        %v535 = vunpack.c.h.b16 %v317
        %v536 = vunpack.c.l.b16 %v318
        %v537 = vunpack.c.h.b16 %v318
        %v538 = vunpack.c.l.b16 %v319
        %v539 = vunpack.c.h.b16 %v319
        %v540 = vunpack.c.l.b16 %v320
        %v541 = vunpack.c.h.b16 %v320
        %v542 = vunpack.c.l.b16 %v321
        %v543 = vunpack.c.h.b16 %v321
        %v544 = vunpack.c.l.b16 %v322
        %v545 = vunpack.c.h.b16 %v322
        %v546 = vunpack.c.l.b16 %v323
        %v547 = vunpack.c.h.b16 %v323
        %v548 = vunpack.c.l.b16 %v324
        %v549 = vunpack.c.h.b16 %v324
        %v550 = vunpack.c.l.b16 %v325
        %v551 = vunpack.c.h.b16 %v325
        %v552 = vunpack.c.l.b16 %v326
        %v553 = vunpack.c.h.b16 %v326
        %v554 = vunpack.c.l.b16 %v327
        %v555 = vunpack.c.h.b16 %v327
        %v556 = vunpack.c.l.b16 %v328
        %v557 = vunpack.c.h.b16 %v328
        %v558 = vunpack.c.l.b16 %v329
        %v559 = vunpack.c.h.b16 %v329
        %v560 = vunpack.c.l.b16 %v330
        %v561 = vunpack.c.h.b16 %v330
        %v562 = vunpack.c.l.b16 %v331
        %v563 = vunpack.c.h.b16 %v331
        %v564 = vunpack.c.l.b16 %v332
        %v565 = vunpack.c.h.b16 %v332
        %v566 = vunpack.c.l.b16 %v333
        %v567 = vunpack.c.h.b16 %v333
        %v568 = vunpack.c.l.b16 %v334
        %v569 = vunpack.c.h.b16 %v334
        %v570 = vunpack.c.l.b16 %v335
        %v571 = vunpack.c.h.b16 %v335
        %v572 = vunpack.c.l.b16 %v336
        %v573 = vunpack.c.h.b16 %v336
        %v574 = vunpack.c.l.b16 %v337
        %v575 = vunpack.c.h.b16 %v337
        %v576 = vunpack.c.l.b16 %v338
        %v577 = vunpack.c.h.b16 %v338
        %v578 = vunpack.c.l.b16 %v339
        %v579 = vunpack.c.h.b16 %v339
        %v580 = vunpack.c.l.b16 %v340
        %v581 = vunpack.c.h.b16 %v340
        %v582 = vunpack.c.l.b16 %v341
        %v583 = vunpack.c.h.b16 %v341
        %v584 = vunpack.c.l.b16 %v342
        %v585 = vunpack.c.h.b16 %v342
        %v586 = vunpack.c.l.b16 %v343
        %v587 = vunpack.c.h.b16 %v343
        %v588 = vunpack.c.l.b16 %v344
        %v589 = vunpack.c.h.b16 %v344
        %v590 = vunpack.c.l.b16 %v345
        %v591 = vunpack.c.h.b16 %v345
        %v592 = vunpack.c.l.b16 %v346
        %v593 = vunpack.c.h.b16 %v346
        %v594 = vunpack.c.l.b16 %v347
        %v595 = vunpack.c.h.b16 %v347
        %v596 = vunpack.c.l.b16 %v348
        %v597 = vunpack.c.h.b16 %v348
        %v598 = vunpack.c.l.b16 %v349
        %v599 = vunpack.c.h.b16 %v349
        %v600 = vunpack.c.l.b16 %v350
        %v601 = vunpack.c.h.b16 %v350
        %v602 = vunpack.c.l.b16 %v351
        %v603 = vunpack.c.h.b16 %v351
        %v604 = vunpack.c.l.b16 %v352
        %v605 = vunpack.c.h.b16 %v352
        %v606 = vunpack.c.l.b16 %v353
        %v607 = vunpack.c.h.b16 %v353
        %v608 = vunpack.c.l.b16 %v354
        %v609 = vunpack.c.h.b16 %v354
        %v610 = vunpack.c.l.b16 %v355
        %v611 = vunpack.c.h.b16 %v355
        %v612 = vunpack.c.l.b16 %v356
        %v613 = vunpack.c.h.b16 %v356
        %v614 = vunpack.c.l.b16 %v357
        %v615 = vunpack.c.h.b16 %v357
        %v616 = vunpack.c.l.b16 %v358
        %v617 = vunpack.c.h.b16 %v358
        %v618 = vunpack.c.l.b16 %v359
        %v619 = vunpack.c.h.b16 %v359
        %v620 = vunpack.c.l.b16 %v360
        %v621 = vunpack.c.h.b16 %v360
        %v622 = vunpack.c.l.b16 %v361
        %v623 = vunpack.c.h.b16 %v361
        %v624 = vunpack.c.l.b16 %v362
        %v625 = vunpack.c.h.b16 %v362
        %v626 = vunpack.c.l.b16 %v363
        %v627 = vunpack.c.h.b16 %v363
        %v628 = vunpack.c.l.b16 %v364
        %v629 = vunpack.c.h.b16 %v364
        %v630 = vunpack.c.l.b16 %v365
        %v631 = vunpack.c.h.b16 %v365
        %v632 = vunpack.c.l.b16 %v366
        %v633 = vunpack.c.h.b16 %v366
        %v634 = vunpack.c.l.b16 %v367
        %v635 = vunpack.c.h.b16 %v367
        %v636 = vunpack.c.l.b16 %v368
        %v637 = vunpack.c.h.b16 %v368
        %v638 = vunpack.c.l.b16 %v369
        %v639 = vunpack.c.h.b16 %v369
        %v640 = vunpack.c.l.b16 %v370
        %v641 = vunpack.c.h.b16 %v370
        %v642 = vunpack.c.l.b16 %v371
        %v643 = vunpack.c.h.b16 %v371
        %v644 = vunpack.c.l.b16 %v372
        %v645 = vunpack.c.h.b16 %v372
        %v646 = vunpack.c.l.b16 %v373
        %v647 = vunpack.c.h.b16 %v373
        %v648 = vunpack.c.l.b16 %v374
        %v649 = vunpack.c.h.b16 %v374
        %v650 = vunpack.c.l.b16 %v375
        %v651 = vunpack.c.h.b16 %v375
        %v652 = vunpack.c.l.b16 %v376
        %v653 = vunpack.c.h.b16 %v376
        %v654 = vunpack.c.l.b16 %v377
        %v655 = vunpack.c.h.b16 %v377
        %v656 = vunpack.c.l.b16 %v378
        %v657 = vunpack.c.h.b16 %v378
        %v658 = vunpack.c.l.b16 %v379
        %v659 = vunpack.c.h.b16 %v379
        %v660 = vunpack.c.l.b16 %v380
        %v661 = vunpack.c.h.b16 %v380
        %v662 = vunpack.c.l.b16 %v381
        %v663 = vunpack.c.h.b16 %v381
        %v664 = vunpack.c.l.b16 %v382
        %v665 = vunpack.c.h.b16 %v382
        %v666 = vunpack.c.l.b16 %v383
        %v667 = vunpack.c.h.b16 %v383
        %v668 = vunpack.c.l.b16 %v384
        %v669 = vunpack.c.h.b16 %v384
        %v670 = vunpack.c.l.b16 %v385
        %v671 = vunpack.c.h.b16 %v385
        %v672 = vunpack.c.l.b16 %v386
        %v673 = vunpack.c.h.b16 %v386
        %v674 = vunpack.c.l.b16 %v387
        %v675 = vunpack.c.h.b16 %v387
        %v676 = vunpack.c.l.b16 %v388
        %v677 = vunpack.c.h.b16 %v388
        %v678 = vunpack.c.l.b16 %v389
        %v679 = vunpack.c.h.b16 %v389
        %v680 = vunpack.c.l.b16 %v390
        %v681 = vunpack.c.h.b16 %v390
        %v682 = vunpack.c.l.b16 %v391
        %v683 = vunpack.c.h.b16 %v391
        %v684 = vunpack.c.l.b16 %v392
        %v685 = vunpack.c.h.b16 %v392
        %v686 = vunpack.c.l.b16 %v393
        %v687 = vunpack.c.h.b16 %v393
        %v688 = vunpack.c.l.b16 %v394
        %v689 = vunpack.c.h.b16 %v394
        %v690 = vunpack.c.l.b16 %v395
        %v691 = vunpack.c.h.b16 %v395
        %v692 = vunpack.c.l.b16 %v396
        %v693 = vunpack.c.h.b16 %v396
        %v694 = vunpack.c.l.b16 %v397
        %v695 = vunpack.c.h.b16 %v397
        %v696 = vunpack.c.l.b16 %v398
        %v697 = vunpack.c.h.b16 %v398
        %v698 = vunpack.c.l.b16 %v399
        %v699 = vunpack.c.h.b16 %v399
        %v700 = vunpack.c.l.b16 %v400
        %v701 = vunpack.c.h.b16 %v400
        %v702 = vunpack.c.l.b16 %v401
        %v703 = vunpack.c.h.b16 %v401
        %v704 = vpack.c.b16 %v518, %v512
        %v705 = vpack.c.b16 %v519, %v513
        %v706 = vpack.c.b16 %v520, %v514
        %v707 = vpack.c.b16 %v521, %v515
        %v708 = vpack.c.b16 %v522, %v516
        %v709 = vpack.c.b16 %v523, %v517
        %v710 = vpack.c.b16 %v530, %v524
        %v711 = vpack.c.b16 %v531, %v525
        %v712 = vpack.c.b16 %v532, %v526
        %v713 = vpack.c.b16 %v533, %v527
        %v714 = vpack.c.b16 %v534, %v528
        %v715 = vpack.c.b16 %v535, %v529
        %v716 = vpack.c.b16 %v542, %v536
        %v717 = vpack.c.b16 %v543, %v537
        %v718 = vpack.c.b16 %v544, %v538
        %v719 = vpack.c.b16 %v545, %v539
        %v720 = vpack.c.b16 %v546, %v540
        %v721 = vpack.c.b16 %v547, %v541
        %v722 = vpack.c.b16 %v554, %v548
        %v723 = vpack.c.b16 %v555, %v549
        %v724 = vpack.c.b16 %v556, %v550
        %v725 = vpack.c.b16 %v557, %v551
        %v726 = vpack.c.b16 %v558, %v552
        %v727 = vpack.c.b16 %v559, %v553
        %v728 = vpack.c.b16 %v566, %v560
        %v729 = vpack.c.b16 %v567, %v561
        %v730 = vpack.c.b16 %v568, %v562
        %v731 = vpack.c.b16 %v569, %v563
        %v732 = vpack.c.b16 %v570, %v564
        %v733 = vpack.c.b16 %v571, %v565
        %v734 = vpack.c.b16 %v578, %v572
        %v735 = vpack.c.b16 %v579, %v573
        %v736 = vpack.c.b16 %v580, %v574
        %v737 = vpack.c.b16 %v581, %v575
        %v738 = vpack.c.b16 %v582, %v576
        %v739 = vpack.c.b16 %v583, %v577
        %v740 = vpack.c.b16 %v590, %v584
        %v741 = vpack.c.b16 %v591, %v585
        %v742 = vpack.c.b16 %v592, %v586
        %v743 = vpack.c.b16 %v593, %v587
        %v744 = vpack.c.b16 %v594, %v588
        %v745 = vpack.c.b16 %v595, %v589
        %v746 = vpack.c.b16 %v602, %v596
        %v747 = vpack.c.b16 %v603, %v597
        %v748 = vpack.c.b16 %v604, %v598
        %v749 = vpack.c.b16 %v605, %v599
        %v750 = vpack.c.b16 %v606, %v600
        %v751 = vpack.c.b16 %v607, %v601
        %v752 = vpack.c.b16 %v614, %v608
        %v753 = vpack.c.b16 %v615, %v609
        %v754 = vpack.c.b16 %v616, %v610
        %v755 = vpack.c.b16 %v617, %v611
        %v756 = vpack.c.b16 %v618, %v612
        %v757 = vpack.c.b16 %v619, %v613
        %v758 = vpack.c.b16 %v626, %v620
        %v759 = vpack.c.b16 %v627, %v621
        %v760 = vpack.c.b16 %v628, %v622
        %v761 = vpack.c.b16 %v629, %v623
        %v762 = vpack.c.b16 %v630, %v624
        %v763 = vpack.c.b16 %v631, %v625
        %v764 = vpack.c.b16 %v638, %v632
        %v765 = vpack.c.b16 %v639, %v633
        %v766 = vpack.c.b16 %v640, %v634
        %v767 = vpack.c.b16 %v641, %v635
        %v768 = vpack.c.b16 %v642, %v636
        %v769 = vpack.c.b16 %v643, %v637
        %v770 = vpack.c.b16 %v650, %v644
        %v771 = vpack.c.b16 %v651, %v645
        %v772 = vpack.c.b16 %v652, %v646
        %v773 = vpack.c.b16 %v653, %v647
        %v774 = vpack.c.b16 %v654, %v648
        %v775 = vpack.c.b16 %v655, %v649
        %v776 = vpack.c.b16 %v662, %v656
        %v777 = vpack.c.b16 %v663, %v657
        %v778 = vpack.c.b16 %v664, %v658
        %v779 = vpack.c.b16 %v665, %v659
        %v780 = vpack.c.b16 %v666, %v660
        %v781 = vpack.c.b16 %v667, %v661
        %v782 = vpack.c.b16 %v674, %v668
        %v783 = vpack.c.b16 %v675, %v669
        %v784 = vpack.c.b16 %v676, %v670
        %v785 = vpack.c.b16 %v677, %v671
        %v786 = vpack.c.b16 %v678, %v672
        %v787 = vpack.c.b16 %v679, %v673
        %v788 = vpack.c.b16 %v686, %v680
        %v789 = vpack.c.b16 %v687, %v681
        %v790 = vpack.c.b16 %v688, %v682
        %v791 = vpack.c.b16 %v689, %v683
        %v792 = vpack.c.b16 %v690, %v684
        %v793 = vpack.c.b16 %v691, %v685
        %v794 = vpack.c.b16 %v698, %v692
        %v795 = vpack.c.b16 %v699, %v693
        %v796 = vpack.c.b16 %v700, %v694
        %v797 = vpack.c.b16 %v701, %v695
        %v798 = vpack.c.b16 %v702, %v696
        %v799 = vpack.c.b16 %v703, %v697
        %896 = vmatpush.bf16.msra.mxu0 %v746
        %897 = vmatpush.bf16.msra.mxu0 %v740
        %898 = vmatpush.bf16.msra.mxu0 %v734
        %899 = vmatpush.bf16.msra.mxu0 %v728
        %900 = vmatpush.bf16.msra.mxu0 %v722
        %901 = vmatpush.bf16.msra.mxu0 %v716
        %902 = vmatpush.bf16.msra.mxu0 %v710
        %903 = vmatpush.bf16.msra.mxu0 %v704
        %904 = vmatmul.bf16.gmra.mxu0 %v304
        %v905 = vpop.f32.mrf.mxu0
        %v906 = vadd.f32 %v404, %v905
        %v907 = vpop.f32.mrf.mxu0
        %908 = vdwg.mxu0
        %909 = vmatpush.bf16.msra.mxu0 %v794
        %910 = vmatpush.bf16.msra.mxu0 %v788
        %911 = vmatpush.bf16.msra.mxu0 %v782
        %912 = vmatpush.bf16.msra.mxu0 %v776
        %913 = vmatpush.bf16.msra.mxu0 %v770
        %914 = vmatpush.bf16.msra.mxu0 %v764
        %915 = vmatpush.bf16.msra.mxu0 %v758
        %916 = vmatpush.bf16.msra.mxu0 %v752
        %917 = vmatmul.bf16.gmra.mxu0 %v305
        %v918 = vpop.f32.mrf.mxu0
        %v919 = vadd.f32 %v906, %v918
        %v920 = vpop.f32.mrf.mxu0
        %921 = vdwg.mxu0
        %922 = vmatpush.bf16.msra.mxu0 %v747
        %923 = vmatpush.bf16.msra.mxu0 %v741
        %924 = vmatpush.bf16.msra.mxu0 %v735
        %925 = vmatpush.bf16.msra.mxu0 %v729
        %926 = vmatpush.bf16.msra.mxu0 %v723
        %927 = vmatpush.bf16.msra.mxu0 %v717
        %928 = vmatpush.bf16.msra.mxu0 %v711
        %929 = vmatpush.bf16.msra.mxu0 %v705
        %930 = vmatmul.bf16.gmra.mxu0 %v304
        %v931 = vpop.f32.mrf.mxu0
        %v932 = vadd.f32 %v405, %v931
        %v933 = vpop.f32.mrf.mxu0
        %934 = vdwg.mxu0
        %935 = vmatpush.bf16.msra.mxu0 %v795
        %936 = vmatpush.bf16.msra.mxu0 %v789
        %937 = vmatpush.bf16.msra.mxu0 %v783
        %938 = vmatpush.bf16.msra.mxu0 %v777
        %939 = vmatpush.bf16.msra.mxu0 %v771
        %940 = vmatpush.bf16.msra.mxu0 %v765
        %941 = vmatpush.bf16.msra.mxu0 %v759
        %942 = vmatpush.bf16.msra.mxu0 %v753
        %943 = vmatmul.bf16.gmra.mxu0 %v305
        %v944 = vpop.f32.mrf.mxu0
        %v945 = vadd.f32 %v932, %v944
        %v946 = vpop.f32.mrf.mxu0
        %947 = vdwg.mxu0
        %948 = vmatpush.bf16.msra.mxu0 %v748
        %949 = vmatpush.bf16.msra.mxu0 %v742
        %950 = vmatpush.bf16.msra.mxu0 %v736
        %951 = vmatpush.bf16.msra.mxu0 %v730
        %952 = vmatpush.bf16.msra.mxu0 %v724
        %953 = vmatpush.bf16.msra.mxu0 %v718
        %954 = vmatpush.bf16.msra.mxu0 %v712
        %955 = vmatpush.bf16.msra.mxu0 %v706
        %956 = vmatmul.bf16.gmra.mxu0 %v304
        %v957 = vpop.f32.mrf.mxu0
        %v958 = vadd.f32 %v406, %v957
        %v959 = vpop.f32.mrf.mxu0
        %960 = vdwg.mxu0
        %961 = vmatpush.bf16.msra.mxu0 %v796
        %962 = vmatpush.bf16.msra.mxu0 %v790
        %963 = vmatpush.bf16.msra.mxu0 %v784
        %964 = vmatpush.bf16.msra.mxu0 %v778
        %965 = vmatpush.bf16.msra.mxu0 %v772
        %966 = vmatpush.bf16.msra.mxu0 %v766
        %967 = vmatpush.bf16.msra.mxu0 %v760
        %968 = vmatpush.bf16.msra.mxu0 %v754
        %969 = vmatmul.bf16.gmra.mxu0 %v305
        %v970 = vpop.f32.mrf.mxu0
        %v971 = vadd.f32 %v958, %v970
        %v972 = vpop.f32.mrf.mxu0
        %973 = vdwg.mxu0
        %974 = vmatpush.bf16.msra.mxu0 %v749
        %975 = vmatpush.bf16.msra.mxu0 %v743
        %976 = vmatpush.bf16.msra.mxu0 %v737
        %977 = vmatpush.bf16.msra.mxu0 %v731
        %978 = vmatpush.bf16.msra.mxu0 %v725
        %979 = vmatpush.bf16.msra.mxu0 %v719
        %980 = vmatpush.bf16.msra.mxu0 %v713
        %981 = vmatpush.bf16.msra.mxu0 %v707
        %982 = vmatmul.bf16.gmra.mxu0 %v304
        %v983 = vpop.f32.mrf.mxu0
        %v984 = vadd.f32 %v407, %v983
        %v985 = vpop.f32.mrf.mxu0
        %986 = vdwg.mxu0
        %987 = vmatpush.bf16.msra.mxu0 %v797
        %988 = vmatpush.bf16.msra.mxu0 %v791
        %989 = vmatpush.bf16.msra.mxu0 %v785
        %990 = vmatpush.bf16.msra.mxu0 %v779
        %991 = vmatpush.bf16.msra.mxu0 %v773
        %992 = vmatpush.bf16.msra.mxu0 %v767
        %993 = vmatpush.bf16.msra.mxu0 %v761
        %994 = vmatpush.bf16.msra.mxu0 %v755
        %995 = vmatmul.bf16.gmra.mxu0 %v305
        %v996 = vpop.f32.mrf.mxu0
        %v997 = vadd.f32 %v984, %v996
        %v998 = vpop.f32.mrf.mxu0
        %999 = vdwg.mxu0
        %1000 = vmatpush.bf16.msra.mxu0 %v750
        %1001 = vmatpush.bf16.msra.mxu0 %v744
        %1002 = vmatpush.bf16.msra.mxu0 %v738
        %1003 = vmatpush.bf16.msra.mxu0 %v732
        %1004 = vmatpush.bf16.msra.mxu0 %v726
        %1005 = vmatpush.bf16.msra.mxu0 %v720
        %1006 = vmatpush.bf16.msra.mxu0 %v714
        %1007 = vmatpush.bf16.msra.mxu0 %v708
        %1008 = vmatmul.bf16.gmra.mxu0 %v304
        %v1009 = vpop.f32.mrf.mxu0
        %v1010 = vadd.f32 %v408, %v1009
        %v1011 = vpop.f32.mrf.mxu0
        %1012 = vdwg.mxu0
        %1013 = vmatpush.bf16.msra.mxu0 %v798
        %1014 = vmatpush.bf16.msra.mxu0 %v792
        %1015 = vmatpush.bf16.msra.mxu0 %v786
        %1016 = vmatpush.bf16.msra.mxu0 %v780
        %1017 = vmatpush.bf16.msra.mxu0 %v774
        %1018 = vmatpush.bf16.msra.mxu0 %v768
        %1019 = vmatpush.bf16.msra.mxu0 %v762
        %1020 = vmatpush.bf16.msra.mxu0 %v756
        %1021 = vmatmul.bf16.gmra.mxu0 %v305
        %v1022 = vpop.f32.mrf.mxu0
        %v1023 = vadd.f32 %v1010, %v1022
        %v1024 = vpop.f32.mrf.mxu0
        %1025 = vdwg.mxu0
        %1026 = vmatpush.bf16.msra.mxu0 %v751
        %1027 = vmatpush.bf16.msra.mxu0 %v745
        %1028 = vmatpush.bf16.msra.mxu0 %v739
        %1029 = vmatpush.bf16.msra.mxu0 %v733
        %1030 = vmatpush.bf16.msra.mxu0 %v727
        %1031 = vmatpush.bf16.msra.mxu0 %v721
        %1032 = vmatpush.bf16.msra.mxu0 %v715
        %1033 = vmatpush.bf16.msra.mxu0 %v709
        %1034 = vmatmul.bf16.gmra.mxu0 %v304
        %v1035 = vpop.f32.mrf.mxu0
        %v1036 = vadd.f32 %v409, %v1035
        %v1037 = vpop.f32.mrf.mxu0
        %1038 = vdwg.mxu0
        %1039 = vmatpush.bf16.msra.mxu0 %v799
        %1040 = vmatpush.bf16.msra.mxu0 %v793
        %1041 = vmatpush.bf16.msra.mxu0 %v787
        %1042 = vmatpush.bf16.msra.mxu0 %v781
        %1043 = vmatpush.bf16.msra.mxu0 %v775
        %1044 = vmatpush.bf16.msra.mxu0 %v769
        %1045 = vmatpush.bf16.msra.mxu0 %v763
        %1046 = vmatpush.bf16.msra.mxu0 %v757
        %1047 = vmatmul.bf16.gmra.mxu0 %v305
        %v1048 = vpop.f32.mrf.mxu0
        %v1049 = vadd.f32 %v1036, %v1048
        %v1050 = vpop.f32.mrf.mxu0
        %1051 = vdwg.mxu0
        %v1052 = vpack.c.bf16 %v919, %v919
        %v1053 = vpack.c.bf16 %v971, %v971
        %v1054 = vpack.c.bf16 %v1023, %v1023
        %vm1055 = vcmask 261120
        %v1057 = vsel %vm1055, %v1052, 0
        %v1060 = vsel %vm1055, %v1053, 0
        %1062 = vmatpush.bf16.xpose.msra.mxu0 0
        %1063 = vmatpush.bf16.xpose.msra.mxu0 0
        %1064 = vmatpush.bf16.xpose.msra.mxu0 0
        %1065 = vmatpush.bf16.xpose.msra.mxu0 0
        %1066 = vmatpush.bf16.xpose.msra.mxu0 0
        %1067 = vmatpush.bf16.xpose.msra.mxu0 0
        %1068 = vmatpush.bf16.xpose.msra.mxu0 0
        %1069 = vmatpush.bf16.xpose.msra.mxu0 %v1060
        %1070 = vmatmul.bf16.gmra.mxu0 %v1057
        %v1071 = vpop.f32.mrf.mxu0
        %v1072 = vadd.f32 0.0, %v1071
        %v1073 = vpop.f32.mrf.mxu0
        %1074 = vdwg.mxu0
        %v1075 = vmul.f32 %v1072, 0.17677669
        %vm1076 = vcmask 27648
        %v1077 = vsel %vm1076, %v1075, -inf
        %1078 = vmax.xlane.f32.xlu0 %v1077
        %v1079 = vpop.xlane.xlu0 %1078
        %v1080 = vsub.f32 %v1075, %v1079
        %v1081 = vmul.f32 %v1080, 1.442695
        %v1082 = vpow.pop %v1081
        %v1083 = vsel %vm1076, %v1082, 0.0
        %1084 = vadd.xlane.f32.xlu0 %v1083
        %v1085 = vpop.xlane.xlu0 %1084
        %v1086 = vrcp.pop %v1085
        %v1087 = vmul.f32 %v1082, %v1086
        %v1088 = vpack.c.bf16 %v1087, %v1087
        %vm1089 = vcmask 31744
        %v1091 = vsel %vm1089, %v1088, 0
        %vm1093 = vcmask 1041408
        %v1095 = vsel %vm1093, %v1054, 0
        %1097 = vmatpush.bf16.msra.mxu0 0
        %1098 = vmatpush.bf16.msra.mxu0 0
        %1099 = vmatpush.bf16.msra.mxu0 0
        %1100 = vmatpush.bf16.msra.mxu0 0
        %1101 = vmatpush.bf16.msra.mxu0 0
        %1102 = vmatpush.bf16.msra.mxu0 0
        %1103 = vmatpush.bf16.msra.mxu0 0
        %1104 = vmatpush.bf16.msra.mxu0 %v1095
        %1105 = vmatmul.bf16.gmra.mxu0 %v1091
        %v1106 = vpop.f32.mrf.mxu0
        %v1107 = vadd.f32 0.0, %v1106
        %v1108 = vpop.f32.mrf.mxu0
        %1109 = vdwg.mxu0
        %1111 = vrot.lane.b32.xlu0 %v1052, 96
        %v1112 = vpop.permute.xlu0 %1111
        %1114 = vrot.lane.b32.xlu0 %v1053, 96
        %v1115 = vpop.permute.xlu0 %1114
        %v1117 = vsel %vm1055, %v1112, 0
        %v1120 = vsel %vm1055, %v1115, 0
        %1122 = vmatpush.bf16.xpose.msra.mxu0 0
        %1123 = vmatpush.bf16.xpose.msra.mxu0 0
        %1124 = vmatpush.bf16.xpose.msra.mxu0 0
        %1125 = vmatpush.bf16.xpose.msra.mxu0 0
        %1126 = vmatpush.bf16.xpose.msra.mxu0 0
        %1127 = vmatpush.bf16.xpose.msra.mxu0 0
        %1128 = vmatpush.bf16.xpose.msra.mxu0 0
        %1129 = vmatpush.bf16.xpose.msra.mxu0 %v1120
        %1130 = vmatmul.bf16.gmra.mxu0 %v1117
        %v1131 = vpop.f32.mrf.mxu0
        %v1132 = vadd.f32 0.0, %v1131
        %v1133 = vpop.f32.mrf.mxu0
        %1134 = vdwg.mxu0
        %v1135 = vmul.f32 %v1132, 0.17677669
        %v1136 = vsel %vm1076, %v1135, -inf
        %1137 = vmax.xlane.f32.xlu0 %v1136
        %v1138 = vpop.xlane.xlu0 %1137
        %v1139 = vsub.f32 %v1135, %v1138
        %v1140 = vmul.f32 %v1139, 1.442695
        %v1141 = vpow.pop %v1140
        %v1142 = vsel %vm1076, %v1141, 0.0
        %1143 = vadd.xlane.f32.xlu0 %v1142
        %v1144 = vpop.xlane.xlu0 %1143
        %v1145 = vrcp.pop %v1144
        %v1146 = vmul.f32 %v1141, %v1145
        %v1147 = vpack.c.bf16 %v1146, %v1146
        %1149 = vrot.lane.b32.xlu0 %v1054, 96
        %v1150 = vpop.permute.xlu0 %1149
        %v1152 = vsel %vm1089, %v1147, 0
        %v1155 = vsel %vm1093, %v1150, 0
        %1157 = vmatpush.bf16.msra.mxu0 0
        %1158 = vmatpush.bf16.msra.mxu0 0
        %1159 = vmatpush.bf16.msra.mxu0 0
        %1160 = vmatpush.bf16.msra.mxu0 0
        %1161 = vmatpush.bf16.msra.mxu0 0
        %1162 = vmatpush.bf16.msra.mxu0 0
        %1163 = vmatpush.bf16.msra.mxu0 0
        %1164 = vmatpush.bf16.msra.mxu0 %v1155
        %1165 = vmatmul.bf16.gmra.mxu0 %v1152
        %v1166 = vpop.f32.mrf.mxu0
        %v1167 = vadd.f32 0.0, %v1166
        %v1168 = vpop.f32.mrf.mxu0
        %1169 = vdwg.mxu0
        %1170 = vrot.lane.b32.xlu0 %v1052, 64
        %v1171 = vpop.permute.xlu0 %1170
        %1172 = vrot.lane.b32.xlu0 %v1053, 64
        %v1173 = vpop.permute.xlu0 %1172
        %v1175 = vsel %vm1055, %v1171, 0
        %v1178 = vsel %vm1055, %v1173, 0
        %1180 = vmatpush.bf16.xpose.msra.mxu0 0
        %1181 = vmatpush.bf16.xpose.msra.mxu0 0
        %1182 = vmatpush.bf16.xpose.msra.mxu0 0
        %1183 = vmatpush.bf16.xpose.msra.mxu0 0
        %1184 = vmatpush.bf16.xpose.msra.mxu0 0
        %1185 = vmatpush.bf16.xpose.msra.mxu0 0
        %1186 = vmatpush.bf16.xpose.msra.mxu0 0
        %1187 = vmatpush.bf16.xpose.msra.mxu0 %v1178
        %1188 = vmatmul.bf16.gmra.mxu0 %v1175
        %v1189 = vpop.f32.mrf.mxu0
        %v1190 = vadd.f32 0.0, %v1189
        %v1191 = vpop.f32.mrf.mxu0
        %1192 = vdwg.mxu0
        %v1193 = vmul.f32 %v1190, 0.17677669
        %v1194 = vsel %vm1076, %v1193, -inf
        %1195 = vmax.xlane.f32.xlu0 %v1194
        %v1196 = vpop.xlane.xlu0 %1195
        %v1197 = vsub.f32 %v1193, %v1196
        %v1198 = vmul.f32 %v1197, 1.442695
        %v1199 = vpow.pop %v1198
        %v1200 = vsel %vm1076, %v1199, 0.0
        %1201 = vadd.xlane.f32.xlu0 %v1200
        %v1202 = vpop.xlane.xlu0 %1201
        %v1203 = vrcp.pop %v1202
        %v1204 = vmul.f32 %v1199, %v1203
        %v1205 = vpack.c.bf16 %v1204, %v1204
        %1206 = vrot.lane.b32.xlu0 %v1054, 64
        %v1207 = vpop.permute.xlu0 %1206
        %v1209 = vsel %vm1089, %v1205, 0
        %v1212 = vsel %vm1093, %v1207, 0
        %1214 = vmatpush.bf16.msra.mxu0 0
        %1215 = vmatpush.bf16.msra.mxu0 0
        %1216 = vmatpush.bf16.msra.mxu0 0
        %1217 = vmatpush.bf16.msra.mxu0 0
        %1218 = vmatpush.bf16.msra.mxu0 0
        %1219 = vmatpush.bf16.msra.mxu0 0
        %1220 = vmatpush.bf16.msra.mxu0 0
        %1221 = vmatpush.bf16.msra.mxu0 %v1212
        %1222 = vmatmul.bf16.gmra.mxu0 %v1209
        %v1223 = vpop.f32.mrf.mxu0
        %v1224 = vadd.f32 0.0, %v1223
        %v1225 = vpop.f32.mrf.mxu0
        %1226 = vdwg.mxu0
        %1227 = vrot.lane.b32.xlu0 %v1052, 32
        %v1228 = vpop.permute.xlu0 %1227
        %1229 = vrot.lane.b32.xlu0 %v1053, 32
        %v1230 = vpop.permute.xlu0 %1229
        %v1232 = vsel %vm1055, %v1228, 0
        %v1235 = vsel %vm1055, %v1230, 0
        %1237 = vmatpush.bf16.xpose.msra.mxu0 0
        %1238 = vmatpush.bf16.xpose.msra.mxu0 0
        %1239 = vmatpush.bf16.xpose.msra.mxu0 0
        %1240 = vmatpush.bf16.xpose.msra.mxu0 0
        %1241 = vmatpush.bf16.xpose.msra.mxu0 0
        %1242 = vmatpush.bf16.xpose.msra.mxu0 0
        %1243 = vmatpush.bf16.xpose.msra.mxu0 0
        %1244 = vmatpush.bf16.xpose.msra.mxu0 %v1235
        %1245 = vmatmul.bf16.gmra.mxu0 %v1232
        %v1246 = vpop.f32.mrf.mxu0
        %v1247 = vadd.f32 0.0, %v1246
        %v1248 = vpop.f32.mrf.mxu0
        %1249 = vdwg.mxu0
        %v1250 = vmul.f32 %v1247, 0.17677669
        %v1251 = vsel %vm1076, %v1250, -inf
        %1252 = vmax.xlane.f32.xlu0 %v1251
        %v1253 = vpop.xlane.xlu0 %1252
        %v1254 = vsub.f32 %v1250, %v1253
        %v1255 = vmul.f32 %v1254, 1.442695
        %v1256 = vpow.pop %v1255
        %v1257 = vsel %vm1076, %v1256, 0.0
        %1258 = vadd.xlane.f32.xlu0 %v1257
        %v1259 = vpop.xlane.xlu0 %1258
        %v1260 = vrcp.pop %v1259
        %v1261 = vmul.f32 %v1256, %v1260
        %v1262 = vpack.c.bf16 %v1261, %v1261
        %1263 = vrot.lane.b32.xlu0 %v1054, 32
        %v1264 = vpop.permute.xlu0 %1263
        %v1266 = vsel %vm1089, %v1262, 0
        %v1269 = vsel %vm1093, %v1264, 0
        %1271 = vmatpush.bf16.msra.mxu0 0
        %1272 = vmatpush.bf16.msra.mxu0 0
        %1273 = vmatpush.bf16.msra.mxu0 0
        %1274 = vmatpush.bf16.msra.mxu0 0
        %1275 = vmatpush.bf16.msra.mxu0 0
        %1276 = vmatpush.bf16.msra.mxu0 0
        %1277 = vmatpush.bf16.msra.mxu0 0
        %1278 = vmatpush.bf16.msra.mxu0 %v1269
        %1279 = vmatmul.bf16.gmra.mxu0 %v1266
        %v1280 = vpop.f32.mrf.mxu0
        %v1281 = vadd.f32 0.0, %v1280
        %v1282 = vpop.f32.mrf.mxu0
        %1283 = vdwg.mxu0
        %v1284 = vpack.c.bf16 %v945, %v945
        %v1285 = vpack.c.bf16 %v997, %v997
        %v1286 = vpack.c.bf16 %v1049, %v1049
        %v1288 = vsel %vm1055, %v1284, 0
        %v1291 = vsel %vm1055, %v1285, 0
        %1293 = vmatpush.bf16.xpose.msra.mxu0 0
        %1294 = vmatpush.bf16.xpose.msra.mxu0 0
        %1295 = vmatpush.bf16.xpose.msra.mxu0 0
        %1296 = vmatpush.bf16.xpose.msra.mxu0 0
        %1297 = vmatpush.bf16.xpose.msra.mxu0 0
        %1298 = vmatpush.bf16.xpose.msra.mxu0 0
        %1299 = vmatpush.bf16.xpose.msra.mxu0 0
        %1300 = vmatpush.bf16.xpose.msra.mxu0 %v1291
        %1301 = vmatmul.bf16.gmra.mxu0 %v1288
        %v1302 = vpop.f32.mrf.mxu0
        %v1303 = vadd.f32 0.0, %v1302
        %v1304 = vpop.f32.mrf.mxu0
        %1305 = vdwg.mxu0
        %v1306 = vmul.f32 %v1303, 0.17677669
        %v1307 = vsel %vm1076, %v1306, -inf
        %1308 = vmax.xlane.f32.xlu0 %v1307
        %v1309 = vpop.xlane.xlu0 %1308
        %v1310 = vsub.f32 %v1306, %v1309
        %v1311 = vmul.f32 %v1310, 1.442695
        %v1312 = vpow.pop %v1311
        %v1313 = vsel %vm1076, %v1312, 0.0
        %1314 = vadd.xlane.f32.xlu0 %v1313
        %v1315 = vpop.xlane.xlu0 %1314
        %v1316 = vrcp.pop %v1315
        %v1317 = vmul.f32 %v1312, %v1316
        %v1318 = vpack.c.bf16 %v1317, %v1317
        %v1320 = vsel %vm1089, %v1318, 0
        %v1323 = vsel %vm1093, %v1286, 0
        %1325 = vmatpush.bf16.msra.mxu0 0
        %1326 = vmatpush.bf16.msra.mxu0 0
        %1327 = vmatpush.bf16.msra.mxu0 0
        %1328 = vmatpush.bf16.msra.mxu0 0
        %1329 = vmatpush.bf16.msra.mxu0 0
        %1330 = vmatpush.bf16.msra.mxu0 0
        %1331 = vmatpush.bf16.msra.mxu0 0
        %1332 = vmatpush.bf16.msra.mxu0 %v1323
        %1333 = vmatmul.bf16.gmra.mxu0 %v1320
        %v1334 = vpop.f32.mrf.mxu0
        %v1335 = vadd.f32 0.0, %v1334
        %v1336 = vpop.f32.mrf.mxu0
        %1337 = vdwg.mxu0
        %1339 = vrot.lane.b32.xlu0 %v1284, 96
        %v1340 = vpop.permute.xlu0 %1339
        %1342 = vrot.lane.b32.xlu0 %v1285, 96
        %v1343 = vpop.permute.xlu0 %1342
        %v1345 = vsel %vm1055, %v1340, 0
        %v1348 = vsel %vm1055, %v1343, 0
        %1350 = vmatpush.bf16.xpose.msra.mxu0 0
        %1351 = vmatpush.bf16.xpose.msra.mxu0 0
        %1352 = vmatpush.bf16.xpose.msra.mxu0 0
        %1353 = vmatpush.bf16.xpose.msra.mxu0 0
        %1354 = vmatpush.bf16.xpose.msra.mxu0 0
        %1355 = vmatpush.bf16.xpose.msra.mxu0 0
        %1356 = vmatpush.bf16.xpose.msra.mxu0 0
        %1357 = vmatpush.bf16.xpose.msra.mxu0 %v1348
        %1358 = vmatmul.bf16.gmra.mxu0 %v1345
        %v1359 = vpop.f32.mrf.mxu0
        %v1360 = vadd.f32 0.0, %v1359
        %v1361 = vpop.f32.mrf.mxu0
        %1362 = vdwg.mxu0
        %v1363 = vmul.f32 %v1360, 0.17677669
        %v1364 = vsel %vm1076, %v1363, -inf
        %1365 = vmax.xlane.f32.xlu0 %v1364
        %v1366 = vpop.xlane.xlu0 %1365
        %v1367 = vsub.f32 %v1363, %v1366
        %v1368 = vmul.f32 %v1367, 1.442695
        %v1369 = vpow.pop %v1368
        %v1370 = vsel %vm1076, %v1369, 0.0
        %1371 = vadd.xlane.f32.xlu0 %v1370
        %v1372 = vpop.xlane.xlu0 %1371
        %v1373 = vrcp.pop %v1372
        %v1374 = vmul.f32 %v1369, %v1373
        %v1375 = vpack.c.bf16 %v1374, %v1374
        %1377 = vrot.lane.b32.xlu0 %v1286, 96
        %v1378 = vpop.permute.xlu0 %1377
        %v1380 = vsel %vm1089, %v1375, 0
        %v1383 = vsel %vm1093, %v1378, 0
        %1385 = vmatpush.bf16.msra.mxu0 0
        %1386 = vmatpush.bf16.msra.mxu0 0
        %1387 = vmatpush.bf16.msra.mxu0 0
        %1388 = vmatpush.bf16.msra.mxu0 0
        %1389 = vmatpush.bf16.msra.mxu0 0
        %1390 = vmatpush.bf16.msra.mxu0 0
        %1391 = vmatpush.bf16.msra.mxu0 0
        %1392 = vmatpush.bf16.msra.mxu0 %v1383
        %1393 = vmatmul.bf16.gmra.mxu0 %v1380
        %v1394 = vpop.f32.mrf.mxu0
        %v1395 = vadd.f32 0.0, %v1394
        %v1396 = vpop.f32.mrf.mxu0
        %1397 = vdwg.mxu0
        %1398 = vrot.lane.b32.xlu0 %v1284, 64
        %v1399 = vpop.permute.xlu0 %1398
        %1400 = vrot.lane.b32.xlu0 %v1285, 64
        %v1401 = vpop.permute.xlu0 %1400
        %v1403 = vsel %vm1055, %v1399, 0
        %v1406 = vsel %vm1055, %v1401, 0
        %1408 = vmatpush.bf16.xpose.msra.mxu0 0
        %1409 = vmatpush.bf16.xpose.msra.mxu0 0
        %1410 = vmatpush.bf16.xpose.msra.mxu0 0
        %1411 = vmatpush.bf16.xpose.msra.mxu0 0
        %1412 = vmatpush.bf16.xpose.msra.mxu0 0
        %1413 = vmatpush.bf16.xpose.msra.mxu0 0
        %1414 = vmatpush.bf16.xpose.msra.mxu0 0
        %1415 = vmatpush.bf16.xpose.msra.mxu0 %v1406
        %1416 = vmatmul.bf16.gmra.mxu0 %v1403
        %v1417 = vpop.f32.mrf.mxu0
        %v1418 = vadd.f32 0.0, %v1417
        %v1419 = vpop.f32.mrf.mxu0
        %1420 = vdwg.mxu0
        %v1421 = vmul.f32 %v1418, 0.17677669
        %v1422 = vsel %vm1076, %v1421, -inf
        %1423 = vmax.xlane.f32.xlu0 %v1422
        %v1424 = vpop.xlane.xlu0 %1423
        %v1425 = vsub.f32 %v1421, %v1424
        %v1426 = vmul.f32 %v1425, 1.442695
        %v1427 = vpow.pop %v1426
        %v1428 = vsel %vm1076, %v1427, 0.0
        %1429 = vadd.xlane.f32.xlu0 %v1428
        %v1430 = vpop.xlane.xlu0 %1429
        %v1431 = vrcp.pop %v1430
        %v1432 = vmul.f32 %v1427, %v1431
        %v1433 = vpack.c.bf16 %v1432, %v1432
        %1434 = vrot.lane.b32.xlu0 %v1286, 64
        %v1435 = vpop.permute.xlu0 %1434
        %v1437 = vsel %vm1089, %v1433, 0
        %v1440 = vsel %vm1093, %v1435, 0
        %1442 = vmatpush.bf16.msra.mxu0 0
        %1443 = vmatpush.bf16.msra.mxu0 0
        %1444 = vmatpush.bf16.msra.mxu0 0
        %1445 = vmatpush.bf16.msra.mxu0 0
        %1446 = vmatpush.bf16.msra.mxu0 0
        %1447 = vmatpush.bf16.msra.mxu0 0
        %1448 = vmatpush.bf16.msra.mxu0 0
        %1449 = vmatpush.bf16.msra.mxu0 %v1440
        %1450 = vmatmul.bf16.gmra.mxu0 %v1437
        %v1451 = vpop.f32.mrf.mxu0
        %v1452 = vadd.f32 0.0, %v1451
        %v1453 = vpop.f32.mrf.mxu0
        %1454 = vdwg.mxu0
        %1455 = vrot.lane.b32.xlu0 %v1284, 32
        %v1456 = vpop.permute.xlu0 %1455
        %1457 = vrot.lane.b32.xlu0 %v1285, 32
        %v1458 = vpop.permute.xlu0 %1457
        %v1460 = vsel %vm1055, %v1456, 0
        %v1463 = vsel %vm1055, %v1458, 0
        %1465 = vmatpush.bf16.xpose.msra.mxu0 0
        %1466 = vmatpush.bf16.xpose.msra.mxu0 0
        %1467 = vmatpush.bf16.xpose.msra.mxu0 0
        %1468 = vmatpush.bf16.xpose.msra.mxu0 0
        %1469 = vmatpush.bf16.xpose.msra.mxu0 0
        %1470 = vmatpush.bf16.xpose.msra.mxu0 0
        %1471 = vmatpush.bf16.xpose.msra.mxu0 0
        %1472 = vmatpush.bf16.xpose.msra.mxu0 %v1463
        %1473 = vmatmul.bf16.gmra.mxu0 %v1460
        %v1474 = vpop.f32.mrf.mxu0
        %v1475 = vadd.f32 0.0, %v1474
        %v1476 = vpop.f32.mrf.mxu0
        %1477 = vdwg.mxu0
        %v1478 = vmul.f32 %v1475, 0.17677669
        %v1479 = vsel %vm1076, %v1478, -inf
        %1480 = vmax.xlane.f32.xlu0 %v1479
        %v1481 = vpop.xlane.xlu0 %1480
        %v1482 = vsub.f32 %v1478, %v1481
        %v1483 = vmul.f32 %v1482, 1.442695
        %v1484 = vpow.pop %v1483
        %v1485 = vsel %vm1076, %v1484, 0.0
        %1486 = vadd.xlane.f32.xlu0 %v1485
        %v1487 = vpop.xlane.xlu0 %1486
        %v1488 = vrcp.pop %v1487
        %v1489 = vmul.f32 %v1484, %v1488
        %v1490 = vpack.c.bf16 %v1489, %v1489
        %1491 = vrot.lane.b32.xlu0 %v1286, 32
        %v1492 = vpop.permute.xlu0 %1491
        %v1494 = vsel %vm1089, %v1490, 0
        %v1497 = vsel %vm1093, %v1492, 0
        %1499 = vmatpush.bf16.msra.mxu0 0
        %1500 = vmatpush.bf16.msra.mxu0 0
        %1501 = vmatpush.bf16.msra.mxu0 0
        %1502 = vmatpush.bf16.msra.mxu0 0
        %1503 = vmatpush.bf16.msra.mxu0 0
        %1504 = vmatpush.bf16.msra.mxu0 0
        %1505 = vmatpush.bf16.msra.mxu0 0
        %1506 = vmatpush.bf16.msra.mxu0 %v1497
        %1507 = vmatmul.bf16.gmra.mxu0 %v1494
        %v1508 = vpop.f32.mrf.mxu0
        %v1509 = vadd.f32 0.0, %v1508
        %v1510 = vpop.f32.mrf.mxu0
        %1511 = vdwg.mxu0
        %1513 = vrot.lane.b32.xlu0 %v1167, 32
        %v1514 = vpop.permute.xlu0 %1513
        %1517 = vrot.lane.b32.xlu0 %v1224, 64
        %v1518 = vpop.permute.xlu0 %1517
        %1521 = vrot.lane.b32.xlu0 %v1281, 96
        %v1522 = vpop.permute.xlu0 %1521
        %1525 = vrot.lane.b32.xlu0 %v1395, 32
        %v1526 = vpop.permute.xlu0 %1525
        %1529 = vrot.lane.b32.xlu0 %v1452, 64
        %v1530 = vpop.permute.xlu0 %1529
        %1533 = vrot.lane.b32.xlu0 %v1509, 96
        %v1534 = vpop.permute.xlu0 %1533
        %v1536 = vsel %vm1055, %v1107, %v1514
        %vm1537 = vcmask 523264
        %v1538 = vsel %vm1537, %v1536, %v1518
        %vm1539 = vcmask 785408
        %v1540 = vsel %vm1539, %v1538, %v1522
        %v1541 = vsel %vm1055, %v1335, %v1526
        %v1542 = vsel %vm1537, %v1541, %v1530
        %v1543 = vsel %vm1539, %v1542, %v1534
        %v1544 = vpack.c.bf16 %v1540, %v1540
        %v1545 = vpack.c.bf16 %v1543, %v1543
        %v1546 = vld [vmem:[#allocation2] sm:$0xff]
        %v1547 = vld [vmem:[#allocation2 + $0x8] sm:$0xff]
        %v1548 = vld [vmem:[#allocation2 + $0x10] sm:$0xff]
        %v1549 = vld [vmem:[#allocation2 + $0x18] sm:$0xff]
        %v1550 = vld [vmem:[#allocation2 + $0x20] sm:$0xff]
        %v1551 = vld [vmem:[#allocation2 + $0x28] sm:$0xff]
        %v1552 = vld [vmem:[#allocation2 + $0x30] sm:$0xff]
        %v1553 = vld [vmem:[#allocation2 + $0x38] sm:$0xff]
        %v1554 = vld [vmem:[#allocation2 + $0x40] sm:$0xff]
        %v1555 = vld [vmem:[#allocation2 + $0x48] sm:$0xff]
        %v1556 = vld [vmem:[#allocation2 + $0x50] sm:$0xff]
        %v1557 = vld [vmem:[#allocation2 + $0x58] sm:$0xff]
        %v1558 = vld [vmem:[#allocation2 + $0x60] sm:$0xff]
        %v1559 = vld [vmem:[#allocation2 + $0x68] sm:$0xff]
        %v1560 = vld [vmem:[#allocation2 + $0x70] sm:$0xff]
        %v1561 = vld [vmem:[#allocation2 + $0x78] sm:$0xff]
        %v1562 = vld [vmem:[#allocation2 + $0x80] sm:$0xff]
        %v1563 = vld [vmem:[#allocation2 + $0x88] sm:$0xff]
        %v1564 = vld [vmem:[#allocation2 + $0x90] sm:$0xff]
        %v1565 = vld [vmem:[#allocation2 + $0x98] sm:$0xff]
        %v1566 = vld [vmem:[#allocation2 + $0xa0] sm:$0xff]
        %v1567 = vld [vmem:[#allocation2 + $0xa8] sm:$0xff]
        %v1568 = vld [vmem:[#allocation2 + $0xb0] sm:$0xff]
        %v1569 = vld [vmem:[#allocation2 + $0xb8] sm:$0xff]
        %v1570 = vld [vmem:[#allocation2 + $0xc0] sm:$0xff]
        %v1571 = vld [vmem:[#allocation2 + $0xc8] sm:$0xff]
        %v1572 = vld [vmem:[#allocation2 + $0xd0] sm:$0xff]
        %v1573 = vld [vmem:[#allocation2 + $0xd8] sm:$0xff]
        %v1574 = vld [vmem:[#allocation2 + $0xe0] sm:$0xff]
        %v1575 = vld [vmem:[#allocation2 + $0xe8] sm:$0xff]
        %v1576 = vld [vmem:[#allocation2 + $0xf0] sm:$0xff]
        %v1577 = vld [vmem:[#allocation2 + $0xf8] sm:$0xff]
        %v1578 = vld [vmem:[%s4] sm:$0x3]
        %v1580 = vperm.slane %v1578, 0
        %v1581 = vperm.slane %v1578, 1
        %v1616 = vunpack.c.l.b16 %v1546
        %v1617 = vunpack.c.h.b16 %v1546
        %v1618 = vunpack.c.l.b16 %v1547
        %v1619 = vunpack.c.h.b16 %v1547
        %v1620 = vunpack.c.l.b16 %v1548
        %v1621 = vunpack.c.h.b16 %v1548
        %v1622 = vunpack.c.l.b16 %v1549
        %v1623 = vunpack.c.h.b16 %v1549
        %v1624 = vunpack.c.l.b16 %v1550
        %v1625 = vunpack.c.h.b16 %v1550
        %v1626 = vunpack.c.l.b16 %v1551
        %v1627 = vunpack.c.h.b16 %v1551
        %v1628 = vunpack.c.l.b16 %v1552
        %v1629 = vunpack.c.h.b16 %v1552
        %v1630 = vunpack.c.l.b16 %v1553
        %v1631 = vunpack.c.h.b16 %v1553
        %v1632 = vunpack.c.l.b16 %v1554
        %v1633 = vunpack.c.h.b16 %v1554
        %v1634 = vunpack.c.l.b16 %v1555
        %v1635 = vunpack.c.h.b16 %v1555
        %v1636 = vunpack.c.l.b16 %v1556
        %v1637 = vunpack.c.h.b16 %v1556
        %v1638 = vunpack.c.l.b16 %v1557
        %v1639 = vunpack.c.h.b16 %v1557
        %v1640 = vunpack.c.l.b16 %v1558
        %v1641 = vunpack.c.h.b16 %v1558
        %v1642 = vunpack.c.l.b16 %v1559
        %v1643 = vunpack.c.h.b16 %v1559
        %v1644 = vunpack.c.l.b16 %v1560
        %v1645 = vunpack.c.h.b16 %v1560
        %v1646 = vunpack.c.l.b16 %v1561
        %v1647 = vunpack.c.h.b16 %v1561
        %v1648 = vunpack.c.l.b16 %v1562
        %v1649 = vunpack.c.h.b16 %v1562
        %v1650 = vunpack.c.l.b16 %v1563
        %v1651 = vunpack.c.h.b16 %v1563
        %v1652 = vunpack.c.l.b16 %v1564
        %v1653 = vunpack.c.h.b16 %v1564
        %v1654 = vunpack.c.l.b16 %v1565
        %v1655 = vunpack.c.h.b16 %v1565
        %v1656 = vunpack.c.l.b16 %v1566
        %v1657 = vunpack.c.h.b16 %v1566
        %v1658 = vunpack.c.l.b16 %v1567
        %v1659 = vunpack.c.h.b16 %v1567
        %v1660 = vunpack.c.l.b16 %v1568
        %v1661 = vunpack.c.h.b16 %v1568
        %v1662 = vunpack.c.l.b16 %v1569
        %v1663 = vunpack.c.h.b16 %v1569
        %v1664 = vunpack.c.l.b16 %v1570
        %v1665 = vunpack.c.h.b16 %v1570
        %v1666 = vunpack.c.l.b16 %v1571
        %v1667 = vunpack.c.h.b16 %v1571
        %v1668 = vunpack.c.l.b16 %v1572
        %v1669 = vunpack.c.h.b16 %v1572
        %v1670 = vunpack.c.l.b16 %v1573
        %v1671 = vunpack.c.h.b16 %v1573
        %v1672 = vunpack.c.l.b16 %v1574
        %v1673 = vunpack.c.h.b16 %v1574
        %v1674 = vunpack.c.l.b16 %v1575
        %v1675 = vunpack.c.h.b16 %v1575
        %v1676 = vunpack.c.l.b16 %v1576
        %v1677 = vunpack.c.h.b16 %v1576
        %v1678 = vunpack.c.l.b16 %v1577
        %v1679 = vunpack.c.h.b16 %v1577
        %v1680 = vpack.c.b16 %v1618, %v1616
        %v1681 = vpack.c.b16 %v1619, %v1617
        %v1682 = vpack.c.b16 %v1622, %v1620
        %v1683 = vpack.c.b16 %v1623, %v1621
        %v1684 = vpack.c.b16 %v1626, %v1624
        %v1685 = vpack.c.b16 %v1627, %v1625
        %v1686 = vpack.c.b16 %v1630, %v1628
        %v1687 = vpack.c.b16 %v1631, %v1629
        %v1688 = vpack.c.b16 %v1634, %v1632
        %v1689 = vpack.c.b16 %v1635, %v1633
        %v1690 = vpack.c.b16 %v1638, %v1636
        %v1691 = vpack.c.b16 %v1639, %v1637
        %v1692 = vpack.c.b16 %v1642, %v1640
        %v1693 = vpack.c.b16 %v1643, %v1641
        %v1694 = vpack.c.b16 %v1646, %v1644
        %v1695 = vpack.c.b16 %v1647, %v1645
        %v1696 = vpack.c.b16 %v1650, %v1648
        %v1697 = vpack.c.b16 %v1651, %v1649
        %v1698 = vpack.c.b16 %v1654, %v1652
        %v1699 = vpack.c.b16 %v1655, %v1653
        %v1700 = vpack.c.b16 %v1658, %v1656
        %v1701 = vpack.c.b16 %v1659, %v1657
        %v1702 = vpack.c.b16 %v1662, %v1660
        %v1703 = vpack.c.b16 %v1663, %v1661
        %v1704 = vpack.c.b16 %v1666, %v1664
        %v1705 = vpack.c.b16 %v1667, %v1665
        %v1706 = vpack.c.b16 %v1670, %v1668
        %v1707 = vpack.c.b16 %v1671, %v1669
        %v1708 = vpack.c.b16 %v1674, %v1672
        %v1709 = vpack.c.b16 %v1675, %v1673
        %v1710 = vpack.c.b16 %v1678, %v1676
        %v1711 = vpack.c.b16 %v1679, %v1677
        %1744 = vmatpush.bf16.msra.mxu0 %v1694
        %1745 = vmatpush.bf16.msra.mxu0 %v1692
        %1746 = vmatpush.bf16.msra.mxu0 %v1690
        %1747 = vmatpush.bf16.msra.mxu0 %v1688
        %1748 = vmatpush.bf16.msra.mxu0 %v1686
        %1749 = vmatpush.bf16.msra.mxu0 %v1684
        %1750 = vmatpush.bf16.msra.mxu0 %v1682
        %1751 = vmatpush.bf16.msra.mxu0 %v1680
        %1752 = vmatmul.bf16.gmra.mxu0 %v1544
        %v1753 = vpop.f32.mrf.mxu0
        %v1754 = vadd.f32 %v1580, %v1753
        %v1755 = vpop.f32.mrf.mxu0
        %1756 = vdwg.mxu0
        %1757 = vmatpush.bf16.msra.mxu0 %v1710
        %1758 = vmatpush.bf16.msra.mxu0 %v1708
        %1759 = vmatpush.bf16.msra.mxu0 %v1706
        %1760 = vmatpush.bf16.msra.mxu0 %v1704
        %1761 = vmatpush.bf16.msra.mxu0 %v1702
        %1762 = vmatpush.bf16.msra.mxu0 %v1700
        %1763 = vmatpush.bf16.msra.mxu0 %v1698
        %1764 = vmatpush.bf16.msra.mxu0 %v1696
        %1765 = vmatmul.bf16.gmra.mxu0 %v1545
        %v1766 = vpop.f32.mrf.mxu0
        %v1767 = vadd.f32 %v1754, %v1766
        %v1768 = vpop.f32.mrf.mxu0
        %1769 = vdwg.mxu0
        %1770 = vmatpush.bf16.msra.mxu0 %v1695
        %1771 = vmatpush.bf16.msra.mxu0 %v1693
        %1772 = vmatpush.bf16.msra.mxu0 %v1691
        %1773 = vmatpush.bf16.msra.mxu0 %v1689
        %1774 = vmatpush.bf16.msra.mxu0 %v1687
        %1775 = vmatpush.bf16.msra.mxu0 %v1685
        %1776 = vmatpush.bf16.msra.mxu0 %v1683
        %1777 = vmatpush.bf16.msra.mxu0 %v1681
        %1778 = vmatmul.bf16.gmra.mxu0 %v1544
        %v1779 = vpop.f32.mrf.mxu0
        %v1780 = vadd.f32 %v1581, %v1779
        %v1781 = vpop.f32.mrf.mxu0
        %1782 = vdwg.mxu0
        %1783 = vmatpush.bf16.msra.mxu0 %v1711
        %1784 = vmatpush.bf16.msra.mxu0 %v1709
        %1785 = vmatpush.bf16.msra.mxu0 %v1707
        %1786 = vmatpush.bf16.msra.mxu0 %v1705
        %1787 = vmatpush.bf16.msra.mxu0 %v1703
        %1788 = vmatpush.bf16.msra.mxu0 %v1701
        %1789 = vmatpush.bf16.msra.mxu0 %v1699
        %1790 = vmatpush.bf16.msra.mxu0 %v1697
        %1791 = vmatmul.bf16.gmra.mxu0 %v1545
        %v1792 = vpop.f32.mrf.mxu0
        %v1793 = vadd.f32 %v1780, %v1792
        %v1794 = vpop.f32.mrf.mxu0
        %1795 = vdwg.mxu0
        %v1798 = vrot.slane %v1793, 4
        %vm1799 = vcmask 1043456
        %v1800 = vsel %vm1799, %v1767, %v1798
        %v1802 = vadd.f32 %v297, %v1800
        %v1803 = vld [vmem:[%s5] sm:$0x3]
        %v1804 = vld [vmem:[%s6] sm:$0x3]
        %1806 = vst [vmem:[#allocation1] ss:$2 sm:$0xff] %v1802
        %v1807 = vld.sshfl [vmem:[#allocation1] sm:$0xff pattern:$0x75316420]
        %v1808 = vld.sshfl [vmem:[#allocation1 + $0x8] sm:$0xff pattern:$0x75316420]
        %v1811 = vsel %vm1799, %v1807, 0.0
        %v1812 = vsel %vm1799, %v1808, 0.0
        %v1813 = vadd.f32 %v1811, %v1812
        %1814 = vadd.xlane.f32.xlu0 %v1813
        %v1815 = vpop.xlane.xlu0 %1814
        %v1816 = vrcp.pop 256.0
        %v1817 = vmul.f32 256.0, %v1816
        %v1818 = vsub.f32 1.0, %v1817
        %v1819 = vmul.f32 %v1816, %v1818
        %v1820 = vadd.f32 %v1816, %v1819
        %vm1821 = vweird.f32 %v1816
        %v1822 = vsel %vm1821, %v1816, %v1820
        %v1823 = vmul.f32 %v1815, %v1822
        %v1826 = vunpack.c.l.s4 839922192
        %v1827 = vunpack.c.0.s8 %v1826
        %v1828 = vperm.slane %v1823, %v1827
        %v1830 = vsub.f32 %v1802, %v1828
        %v1831 = vmul.f32 %v1830, %v1830
        %1833 = vst [vmem:[#allocation1] ss:$2 sm:$0xff] %v1831
        %v1834 = vld.sshfl [vmem:[#allocation1] sm:$0xff pattern:$0x75316420]
        %v1835 = vld.sshfl [vmem:[#allocation1 + $0x8] sm:$0xff pattern:$0x75316420]
        %v1838 = vsel %vm1799, %v1834, 0.0
        %v1839 = vsel %vm1799, %v1835, 0.0
        %v1840 = vadd.f32 %v1838, %v1839
        %1841 = vadd.xlane.f32.xlu0 %v1840
        %v1842 = vpop.xlane.xlu0 %1841
        %v1843 = vmul.f32 %v1842, %v1822
        %v1844 = vadd.f32 %v1843, 1e-05
        %v1845 = vrsqrt.pop %v1844
        %v1846 = vmul.f32 %v1845, %v1844
        %v1847 = vmul.f32 %v1846, %v1845
        %v1848 = vmul.f32 0.5, %v1847
        %v1849 = vsub.f32 1.5, %v1848
        %v1850 = vmul.f32 %v1845, %v1849
        %vm1851 = vweird.f32 %v1844
        %vm1852 = vweird.f32 %v1845
        %vm1853 = vmor %vm1851, %vm1852
        %v1854 = vsel %vm1853, %v1845, %v1850
        %v1857 = vunpack.c.l.s4 839922192
        %v1858 = vunpack.c.0.s8 %v1857
        %v1859 = vperm.slane %v1854, %v1858
        %v1861 = vmul.f32 %v1830, %v1859
        %v1863 = vperm.slane %v1803, 0
        %v1864 = vperm.slane %v1803, 1
        %v1865 = vrot.slane %v1864, 4
        %v1866 = vsel %vm1799, %v1863, %v1865
        %v1868 = vmul.f32 %v1861, %v1866
        %v1870 = vperm.slane %v1804, 0
        %v1871 = vperm.slane %v1804, 1
        %v1872 = vrot.slane %v1871, 4
        %v1873 = vsel %vm1799, %v1870, %v1872
        %v1875 = vadd.f32 %v1868, %v1873
        %1876 = vst [vmem:[%s295] sm:$0xff] %v1875
        %p1877 = scmp.lt.s32.totalorder %s19, 1
        %s1878 = scalar_select %p1877, %s19, 1
        %s1879 = smul.addr %s1878, 2
        %s1880 = smul.addr %s1879, 4
        %s1881 = scalar_lea.vmem %s7, %s1880
        // Predicated region
        $region53: #{policy_transformer_forward.13} parent=47 // pred_check
          %p1882 = pneg %p189
        $region54: #{policy_transformer_forward.13} parent=47 // pred_check_branch
          %1884 = sbr.rel (%p1882) target = $region56
        $region55: #{policy_transformer_forward.13} parent=47 // pred_region
          _
        $region56: #{policy_transformer_forward.13} parent=47 // pred_fallthru
          _
      $region48: #{policy_transformer_forward.13} parent=5 // pred_fallthru
        _
      %p1885 = scmp.le.s32.totalorder 2, %s14
      // Predicated region
      $region57: #{policy_transformer_forward.13} parent=5 // pred_check
        %p1886 = pneg %p1885
      $region58: #{policy_transformer_forward.13} parent=5 // pred_check_branch
        %1888 = sbr.rel (%p1886) target = $region60
      $region59: #{policy_transformer_forward.13} parent=5 // pred_region
        %s1889 = ssub.s32 %s14, 2
        // Predicated region
        $region61: #{policy_transformer_forward.13} parent=59 // pred_check
          %p1890 = pneg %p195
        $region62: #{policy_transformer_forward.13} parent=59 // pred_check_branch
          %1892 = sbr.rel (%p1890) target = $region64
        $region63: #{policy_transformer_forward.13} parent=59 // pred_region
          %p1893 = scmp.lt.s32.totalorder %s20, 1
          %s1894 = scalar_select %p1893, %s20, 1
          %s1895 = smul.addr %s1894, 2
          %s1896 = smul.addr %s1895, 4
          %s1897 = scalar_lea.vmem %s7, %s1896
        $region64: #{policy_transformer_forward.13} parent=59 // pred_fallthru
          _
      $region60: #{policy_transformer_forward.13} parent=5 // pred_fallthru
        _
    $region6: #{policy_transformer_forward.13} parent=1 // loop_footer
      %s18 = sadd.s32 1, %s14
    $region7: #{policy_transformer_forward.13} parent=1 // loop_footer_branch
      %13 = sbr.rel target = $region3
    $region8: #{policy_transformer_forward.13} parent=1 // loop_exit
      _
    %1898 = vsyncpa [#allocation3], 1
    %s1899 = scalar_lea.sflag [#allocation3], 1
    %1900 = vsyncpa %s1899, 1

// kernel: policy_transformer_forward.15
$region0: #{policy_transformer_forward.15}
  #allocation0 [shape = 'u32[]', space=smem, size = 0x4, offset = 0x4, fixed_abs, tag = 'smem constant byte address 0x4 - core index']
  #allocation1 [shape = 'u32[72,128]{1,0:T(1,128)}', space=vmem, size = 0x9000, scoped, tag = 'internal scratch']
  %s0 = inlined_call_operand.vmem [shape: f32[2,4,256], index: 0, kind: input, shape index: {}]
  %s1 = inlined_call_operand.hbm [shape: bf16[256,768], index: 1, kind: input, shape index: {}]
  %s2 = inlined_call_operand.vmem [shape: f32[1,768], index: 2, kind: input, shape index: {}]
  %s3 = inlined_call_operand.hbm [shape: bf16[256,256], index: 3, kind: input, shape index: {}]
  %s4 = inlined_call_operand.vmem [shape: f32[1,256], index: 4, kind: input, shape index: {}]
  %s5 = inlined_call_operand.vmem [shape: f32[1,256], index: 5, kind: input, shape index: {}]
  %s6 = inlined_call_operand.vmem [shape: f32[1,256], index: 6, kind: input, shape index: {}]
  %s7 = inlined_call_operand.vmem [shape: f32[2,4,256], index: 7, kind: output, shape index: {}]
  %s8 = sld [smem:[#allocation0]]
  $region69: #{policy_transformer_forward.15} parent=0
    _
  %s10 = ssub.s32 1, %s8
  %s11 = scalar_select 0, %s10, %s8
  $region1: #{policy_transformer_forward.15} parent=0
    #allocation2 [shape = 'u8[393216]{0}', space=vmem, size = 0x60000, scoped, tag = 'input window, operand 1, single buffered']
    #allocation3 [shape = 's32[2]{0}', space=sflag, size = 0x8, scoped, tag = 'scoped memory for policy_transformer_forward.15']
    #allocation4 [shape = 'u8[131072]{0}', space=vmem, size = 0x20000, scoped, tag = 'input window, operand 3, single buffered']
    #allocation5 [shape = 's32[1]{0}', space=sflag, size = 0x4, scoped, tag = 'scoped memory for policy_transformer_forward.15']
    %12 = vsyncpa [#allocation3], 0
    %13 = vsyncpa [#allocation5], 0
    loop: start=0, step=1, limit=4
    $region2: #{policy_transformer_forward.15} parent=1 // loop_pre_header
      _
    $region3: #{policy_transformer_forward.15} parent=1 // loop_header
      %s15 = sphi 0, %s19
      %p16 = scmp.ge.s32.totalorder %s15, 4
      %s25 = sphi 0, %s27
      %s28 = sphi 0, %s25
      %s29 = sphi 0, %s28
      %s45 = sphi 0, %s29
      %s49 = sphi 0, %s49
      %s51 = sphi 0, %s49
      %s52 = sphi 0, %s51
      %s66 = sphi 0, %s52
      %s70 = sphi 0, %s70
      %s72 = sphi 0, %s70
      %s73 = sphi 0, %s72
      %s87 = sphi 0, %s73
      %s91 = sphi 0, %s91
      %s93 = sphi 0, %s91
      %s94 = sphi 0, %s93
      %s108 = sphi 0, %s94
      %s112 = sphi 0, %s112
      %s114 = sphi 0, %s112
      %s115 = sphi 0, %s114
      %s129 = sphi 0, %s115
      %s133 = sphi 0, %s133
      %s135 = sphi 0, %s133
      %s136 = sphi 0, %s135
      %s150 = sphi 0, %s136
      %s154 = sphi 0, %s154
      %s156 = sphi 0, %s154
      %s157 = sphi 0, %s156
      %s171 = sphi 0, %s157
      %s177 = sphi 0, %s179
      %s180 = sphi 0, %s177
      %s181 = sphi 0, %s180
      %s197 = sphi 0, %s181
    $region4: #{policy_transformer_forward.15} parent=1 // loop_header_branch
      %18 = sbr.rel (%p16) target = $region8
    $region5: #{policy_transformer_forward.15} parent=1 // loop_body
      %s20 = ssub.s32 %s15, 1
      %s21 = ssub.s32 %s15, 2
      %s22 = sadd.s32 %s15, 1
      %s23 = ssub.s32 %s15, %s22
      %p24 = scmp.eq.s32.totalorder %s23, 0
      %s26 = sadd.s32 %s25, 1
      %s27 = scalar_select %p24, %s25, %s26
      %p30 = pneg %p24
      %p31 = scmp.eq.s32.totalorder %s15, 1
      %p32 = por %p30, %p31
      %p33 = scmp.ne.s32.totalorder %s25, %s28
      %p34 = scmp.eq.s32.totalorder %s15, 0
      %p35 = por %p33, %p34
      %p36 = scmp.ne.s32.totalorder %s25, %s28
      %p37 = scmp.eq.s32.totalorder %s20, 1
      %p38 = por %p36, %p37
      %p39 = scmp.ne.s32.totalorder %s28, %s29
      %p40 = scmp.eq.s32.totalorder %s20, 0
      %p41 = por %p39, %p40
      %p42 = scmp.ne.s32.totalorder %s28, %s29
      %p43 = scmp.eq.s32.totalorder %s21, 1
      %p44 = por %p42, %p43
      %p46 = scmp.ne.s32.totalorder %s29, %s45
      %p47 = scmp.eq.s32.totalorder %s21, 0
      %p48 = por %p46, %p47
      %s50 = sadd.s32 %s49, 1
      %p53 = scmp.eq.s32.totalorder %s15, 1
      %p54 = scmp.ne.s32.totalorder %s49, %s51
      %p55 = scmp.eq.s32.totalorder %s15, 0
      %p56 = por %p54, %p55
      %p57 = scmp.ne.s32.totalorder %s49, %s51
      %p58 = scmp.eq.s32.totalorder %s20, 1
      %p59 = por %p57, %p58
      %p60 = scmp.ne.s32.totalorder %s51, %s52
      %p61 = scmp.eq.s32.totalorder %s20, 0
      %p62 = por %p60, %p61
      %p63 = scmp.ne.s32.totalorder %s51, %s52
      %p64 = scmp.eq.s32.totalorder %s21, 1
      %p65 = por %p63, %p64
      %p67 = scmp.ne.s32.totalorder %s52, %s66
      %p68 = scmp.eq.s32.totalorder %s21, 0
      %p69 = por %p67, %p68
      %s71 = sadd.s32 %s70, 1
      %p74 = scmp.eq.s32.totalorder %s15, 1
      %p75 = scmp.ne.s32.totalorder %s70, %s72
      %p76 = scmp.eq.s32.totalorder %s15, 0
      %p77 = por %p75, %p76
      %p78 = scmp.ne.s32.totalorder %s70, %s72
      %p79 = scmp.eq.s32.totalorder %s20, 1
      %p80 = por %p78, %p79
      %p81 = scmp.ne.s32.totalorder %s72, %s73
      %p82 = scmp.eq.s32.totalorder %s20, 0
      %p83 = por %p81, %p82
      %p84 = scmp.ne.s32.totalorder %s72, %s73
      %p85 = scmp.eq.s32.totalorder %s21, 1
      %p86 = por %p84, %p85
      %p88 = scmp.ne.s32.totalorder %s73, %s87
      %p89 = scmp.eq.s32.totalorder %s21, 0
      %p90 = por %p88, %p89
      %s92 = sadd.s32 %s91, 1
      %p95 = scmp.eq.s32.totalorder %s15, 1
      %p96 = scmp.ne.s32.totalorder %s91, %s93
      %p97 = scmp.eq.s32.totalorder %s15, 0
      %p98 = por %p96, %p97
      %p99 = scmp.ne.s32.totalorder %s91, %s93
      %p100 = scmp.eq.s32.totalorder %s20, 1
      %p101 = por %p99, %p100
      %p102 = scmp.ne.s32.totalorder %s93, %s94
      %p103 = scmp.eq.s32.totalorder %s20, 0
      %p104 = por %p102, %p103
      %p105 = scmp.ne.s32.totalorder %s93, %s94
      %p106 = scmp.eq.s32.totalorder %s21, 1
      %p107 = por %p105, %p106
      %p109 = scmp.ne.s32.totalorder %s94, %s108
      %p110 = scmp.eq.s32.totalorder %s21, 0
      %p111 = por %p109, %p110
      %s113 = sadd.s32 %s112, 1
      %p116 = scmp.eq.s32.totalorder %s15, 1
      %p117 = scmp.ne.s32.totalorder %s112, %s114
      %p118 = scmp.eq.s32.totalorder %s15, 0
      %p119 = por %p117, %p118
      %p120 = scmp.ne.s32.totalorder %s112, %s114
      %p121 = scmp.eq.s32.totalorder %s20, 1
      %p122 = por %p120, %p121
      %p123 = scmp.ne.s32.totalorder %s114, %s115
      %p124 = scmp.eq.s32.totalorder %s20, 0
      %p125 = por %p123, %p124
      %p126 = scmp.ne.s32.totalorder %s114, %s115
      %p127 = scmp.eq.s32.totalorder %s21, 1
      %p128 = por %p126, %p127
      %p130 = scmp.ne.s32.totalorder %s115, %s129
      %p131 = scmp.eq.s32.totalorder %s21, 0
      %p132 = por %p130, %p131
      %s134 = sadd.s32 %s133, 1
      %p137 = scmp.eq.s32.totalorder %s15, 1
      %p138 = scmp.ne.s32.totalorder %s133, %s135
      %p139 = scmp.eq.s32.totalorder %s15, 0
      %p140 = por %p138, %p139
      %p141 = scmp.ne.s32.totalorder %s133, %s135
      %p142 = scmp.eq.s32.totalorder %s20, 1
      %p143 = por %p141, %p142
      %p144 = scmp.ne.s32.totalorder %s135, %s136
      %p145 = scmp.eq.s32.totalorder %s20, 0
      %p146 = por %p144, %p145
      %p147 = scmp.ne.s32.totalorder %s135, %s136
      %p148 = scmp.eq.s32.totalorder %s21, 1
      %p149 = por %p147, %p148
      %p151 = scmp.ne.s32.totalorder %s136, %s150
      %p152 = scmp.eq.s32.totalorder %s21, 0
      %p153 = por %p151, %p152
      %s155 = sadd.s32 %s154, 1
      %p158 = scmp.eq.s32.totalorder %s15, 1
      %p159 = scmp.ne.s32.totalorder %s154, %s156
      %p160 = scmp.eq.s32.totalorder %s15, 0
      %p161 = por %p159, %p160
      %p162 = scmp.ne.s32.totalorder %s154, %s156
      %p163 = scmp.eq.s32.totalorder %s20, 1
      %p164 = por %p162, %p163
      %p165 = scmp.ne.s32.totalorder %s156, %s157
      %p166 = scmp.eq.s32.totalorder %s20, 0
      %p167 = por %p165, %p166
      %p168 = scmp.ne.s32.totalorder %s156, %s157
      %p169 = scmp.eq.s32.totalorder %s21, 1
      %p170 = por %p168, %p169
      %p172 = scmp.ne.s32.totalorder %s157, %s171
      %p173 = scmp.eq.s32.totalorder %s21, 0
      %p174 = por %p172, %p173
      %s175 = ssub.s32 %s15, %s22
      %p176 = scmp.eq.s32.totalorder %s175, 0
      %s178 = sadd.s32 %s177, 1
      %s179 = scalar_select %p176, %s177, %s178
      %p182 = pneg %p176
      %p183 = scmp.eq.s32.totalorder %s15, 1
      %p184 = por %p182, %p183
      %p185 = scmp.ne.s32.totalorder %s177, %s180
      %p186 = scmp.eq.s32.totalorder %s15, 0
      %p187 = por %p185, %p186
      %p188 = scmp.ne.s32.totalorder %s177, %s180
      %p189 = scmp.eq.s32.totalorder %s20, 1
      %p190 = por %p188, %p189
      %p191 = scmp.ne.s32.totalorder %s180, %s181
      %p192 = scmp.eq.s32.totalorder %s20, 0
      %p193 = por %p191, %p192
      %p194 = scmp.ne.s32.totalorder %s180, %s181
      %p195 = scmp.eq.s32.totalorder %s21, 1
      %p196 = por %p194, %p195
      %p198 = scmp.ne.s32.totalorder %s181, %s197
      %p199 = scmp.eq.s32.totalorder %s21, 0
      %p200 = por %p198, %p199
      %p201 = scmp.le.s32.totalorder 1, %s15
      %p202 = scmp.lt.s32.totalorder %s15, 3
      %p203 = pnand %p201, %p202
      %p204 = pneg %p203
      // Predicated region
      $region9: #{policy_transformer_forward.15} parent=5 // pred_check
        _
      $region10: #{policy_transformer_forward.15} parent=5 // pred_check_branch
        %206 = sbr.rel (%p203) target = $region12
      $region11: #{policy_transformer_forward.15} parent=5 // pred_region
        %s207 = ssub.s32 %s15, 1
        // Predicated region
        $region13: #{policy_transformer_forward.15} parent=11 // pred_check
          %p208 = pneg %p62
        $region14: #{policy_transformer_forward.15} parent=11 // pred_check_branch
          %210 = sbr.rel (%p208) target = $region16
        $region15: #{policy_transformer_forward.15} parent=11 // pred_region
          %212 = vsyncadd [#allocation3], 0
          %s213 = sshll.u32 %s1, 4
          %s214 = int_to_ptr.hbm [resolvable:$true] %s213
          %s215 = sshll.u32 [#allocation2], 4
          %s216 = int_to_ptr.vmem [resolvable:$true] %s215
          %221 = dma.hbm_to_vmem [thread:$0]  %s214, 12288, %s216, [#allocation3], 384, 384, 24
        $region16: #{policy_transformer_forward.15} parent=11 // pred_fallthru
          _
        // Predicated region
        $region17: #{policy_transformer_forward.15} parent=11 // pred_check
          %p222 = pneg %p83
        $region18: #{policy_transformer_forward.15} parent=11 // pred_check_branch
          %224 = sbr.rel (%p222) target = $region20
        $region19: #{policy_transformer_forward.15} parent=11 // pred_region
          _
        $region20: #{policy_transformer_forward.15} parent=11 // pred_fallthru
          _
        // Predicated region
        $region21: #{policy_transformer_forward.15} parent=11 // pred_check
          %p225 = pneg %p104
        $region22: #{policy_transformer_forward.15} parent=11 // pred_check_branch
          %227 = sbr.rel (%p225) target = $region24
        $region23: #{policy_transformer_forward.15} parent=11 // pred_region
          %229 = vsyncadd [#allocation5], 0
          %s230 = sshll.u32 %s3, 4
          %s231 = int_to_ptr.hbm [resolvable:$true] %s230
          %s232 = sshll.u32 [#allocation4], 4
          %s233 = int_to_ptr.vmem [resolvable:$true] %s232
          %238 = dma.hbm_to_vmem [thread:$0]  %s231, 4096, %s233, [#allocation5], 128, 128, 8
        $region24: #{policy_transformer_forward.15} parent=11 // pred_fallthru
          _
        // Predicated region
        $region25: #{policy_transformer_forward.15} parent=11 // pred_check
          %p239 = pneg %p125
        $region26: #{policy_transformer_forward.15} parent=11 // pred_check_branch
          %241 = sbr.rel (%p239) target = $region28
        $region27: #{policy_transformer_forward.15} parent=11 // pred_region
          _
        $region28: #{policy_transformer_forward.15} parent=11 // pred_fallthru
          _
        // Predicated region
        $region29: #{policy_transformer_forward.15} parent=11 // pred_check
          %p242 = pneg %p146
        $region30: #{policy_transformer_forward.15} parent=11 // pred_check_branch
          %244 = sbr.rel (%p242) target = $region32
        $region31: #{policy_transformer_forward.15} parent=11 // pred_region
          _
        $region32: #{policy_transformer_forward.15} parent=11 // pred_fallthru
          _
        // Predicated region
        $region33: #{policy_transformer_forward.15} parent=11 // pred_check
          %p245 = pneg %p167
        $region34: #{policy_transformer_forward.15} parent=11 // pred_check_branch
          %247 = sbr.rel (%p245) target = $region36
        $region35: #{policy_transformer_forward.15} parent=11 // pred_region
          _
        $region36: #{policy_transformer_forward.15} parent=11 // pred_fallthru
          _
      $region12: #{policy_transformer_forward.15} parent=5 // pred_fallthru
        _
      %p248 = scmp.lt.s32.totalorder %s15, 2
      // Predicated region
      $region37: #{policy_transformer_forward.15} parent=5 // pred_check
        %p249 = pneg %p248
      $region38: #{policy_transformer_forward.15} parent=5 // pred_check_branch
        %251 = sbr.rel (%p249) target = $region40
      $region39: #{policy_transformer_forward.15} parent=5 // pred_region
        // Predicated region
        $region41: #{policy_transformer_forward.15} parent=39 // pred_check
          %p252 = pneg %p35
        $region42: #{policy_transformer_forward.15} parent=39 // pred_check_branch
          %254 = sbr.rel (%p252) target = $region44
        $region43: #{policy_transformer_forward.15} parent=39 // pred_region
          %p255 = scmp.lt.s32.totalorder %s15, 1
          %s256 = scalar_select %p255, %s15, 1
          %s257 = smul.addr %s256, 2
          %s258 = smul.addr %s257, 4
          %s259 = scalar_lea.vmem %s0, %s258
        $region44: #{policy_transformer_forward.15} parent=39 // pred_fallthru
          _
      $region40: #{policy_transformer_forward.15} parent=5 // pred_fallthru
        _
      %p260 = scmp.le.s32.totalorder 1, %s15
      %p261 = scmp.lt.s32.totalorder %s15, 3
      %p262 = pnand %p260, %p261
      %p263 = pneg %p262
      // Predicated region
      $region45: #{policy_transformer_forward.15} parent=5 // pred_check
        _
      $region46: #{policy_transformer_forward.15} parent=5 // pred_check_branch
        %265 = sbr.rel (%p262) target = $region48
      $region47: #{policy_transformer_forward.15} parent=5 // pred_region
        %s266 = ssub.s32 %s15, 1
        // Predicated region
        $region49: #{policy_transformer_forward.15} parent=47 // pred_check
          %p267 = pneg %p62
        $region50: #{policy_transformer_forward.15} parent=47 // pred_check_branch
          %269 = sbr.rel (%p267) target = $region52
        $region51: #{policy_transformer_forward.15} parent=47 // pred_region
          %271 = dma.done [#allocation3], 12288
        $region52: #{policy_transformer_forward.15} parent=47 // pred_fallthru
          _
        // Predicated region
        $region53: #{policy_transformer_forward.15} parent=47 // pred_check
          %p272 = pneg %p104
        $region54: #{policy_transformer_forward.15} parent=47 // pred_check_branch
          %274 = sbr.rel (%p272) target = $region56
        $region55: #{policy_transformer_forward.15} parent=47 // pred_region
          %276 = dma.done [#allocation5], 4096
        $region56: #{policy_transformer_forward.15} parent=47 // pred_fallthru
          _
        %p277 = scmp.lt.s32.totalorder %s20, 1
        %s278 = scalar_select %p277, %s20, 1
        %s279 = smul.addr %s278, 2
        %s280 = smul.addr %s279, 4
        %s281 = scalar_lea.vmem %s0, %s280
        %p282 = pneg %p41
        %p283 = pneg %p38
        %p284 = pneg %p62
        %p285 = pneg %p59
        %p286 = pneg %p83
        %p287 = pneg %p80
        %p288 = pneg %p104
        %p289 = pneg %p101
        %p290 = pneg %p125
        %p291 = pneg %p122
        %p292 = pneg %p146
        %p293 = pneg %p143
        %p294 = pneg %p167
        %p295 = pneg %p164
        %p296 = pneg %p193
        %p297 = pneg %p190
        %p298 = scmp.lt.s32.totalorder %s20, 1
        %s299 = scalar_select %p298, %s20, 1
        %s300 = smul.addr %s299, 2
        %s301 = smul.addr %s300, 4
        %s302 = scalar_lea.vmem %s7, %s301
        %p303 = scmp.lt.s32.totalorder %s20, 1
        %s304 = scalar_select %p303, %s20, 1
        %s305 = smul.addr %s304, 2
        %s306 = smul.addr %s305, 4
        %s307 = scalar_lea.vmem %s0, %s306
        %p308 = scmp.lt.s32.totalorder %s20, 1
        %s309 = scalar_select %p308, %s20, 1
        %s310 = smul.addr %s309, 2
        %s311 = smul.addr %s310, 4
        %s312 = scalar_lea.vmem %s7, %s311
        %v314 = vld [vmem:[%s307] sm:$0xff]
        %316 = vst [vmem:[#allocation1] ss:$2 sm:$0xff] %v314
        %v317 = vld.sshfl [vmem:[#allocation1] sm:$0xff pattern:$0x75316420]
        %v318 = vld.sshfl [vmem:[#allocation1 + $0x8] sm:$0xff pattern:$0x75316420]
        %v321 = vpack.c.bf16 %v317, %v317
        %v322 = vpack.c.bf16 %v318, %v318
        %v323 = vld [vmem:[#allocation2] sm:$0xff]
        %v324 = vld [vmem:[#allocation2 + $0x8] sm:$0xff]
        %v325 = vld [vmem:[#allocation2 + $0x10] sm:$0xff]
        %v326 = vld [vmem:[#allocation2 + $0x18] sm:$0xff]
        %v327 = vld [vmem:[#allocation2 + $0x20] sm:$0xff]
        %v328 = vld [vmem:[#allocation2 + $0x28] sm:$0xff]
        %v329 = vld [vmem:[#allocation2 + $0x30] sm:$0xff]
        %v330 = vld [vmem:[#allocation2 + $0x38] sm:$0xff]
        %v331 = vld [vmem:[#allocation2 + $0x40] sm:$0xff]
        %v332 = vld [vmem:[#allocation2 + $0x48] sm:$0xff]
        %v333 = vld [vmem:[#allocation2 + $0x50] sm:$0xff]
        %v334 = vld [vmem:[#allocation2 + $0x58] sm:$0xff]
        %v335 = vld [vmem:[#allocation2 + $0x60] sm:$0xff]
        %v336 = vld [vmem:[#allocation2 + $0x68] sm:$0xff]
        %v337 = vld [vmem:[#allocation2 + $0x70] sm:$0xff]
        %v338 = vld [vmem:[#allocation2 + $0x78] sm:$0xff]
        %v339 = vld [vmem:[#allocation2 + $0x80] sm:$0xff]
        %v340 = vld [vmem:[#allocation2 + $0x88] sm:$0xff]
        %v341 = vld [vmem:[#allocation2 + $0x90] sm:$0xff]
        %v342 = vld [vmem:[#allocation2 + $0x98] sm:$0xff]
        %v343 = vld [vmem:[#allocation2 + $0xa0] sm:$0xff]
        %v344 = vld [vmem:[#allocation2 + $0xa8] sm:$0xff]
        %v345 = vld [vmem:[#allocation2 + $0xb0] sm:$0xff]
        %v346 = vld [vmem:[#allocation2 + $0xb8] sm:$0xff]
        %v347 = vld [vmem:[#allocation2 + $0xc0] sm:$0xff]
        %v348 = vld [vmem:[#allocation2 + $0xc8] sm:$0xff]
        %v349 = vld [vmem:[#allocation2 + $0xd0] sm:$0xff]
        %v350 = vld [vmem:[#allocation2 + $0xd8] sm:$0xff]
        %v351 = vld [vmem:[#allocation2 + $0xe0] sm:$0xff]
        %v352 = vld [vmem:[#allocation2 + $0xe8] sm:$0xff]
        %v353 = vld [vmem:[#allocation2 + $0xf0] sm:$0xff]
        %v354 = vld [vmem:[#allocation2 + $0xf8] sm:$0xff]
        %v355 = vld [vmem:[#allocation2 + $0x100] sm:$0xff]
        %v356 = vld [vmem:[#allocation2 + $0x108] sm:$0xff]
        %v357 = vld [vmem:[#allocation2 + $0x110] sm:$0xff]
        %v358 = vld [vmem:[#allocation2 + $0x118] sm:$0xff]
        %v359 = vld [vmem:[#allocation2 + $0x120] sm:$0xff]
        %v360 = vld [vmem:[#allocation2 + $0x128] sm:$0xff]
        %v361 = vld [vmem:[#allocation2 + $0x130] sm:$0xff]
        %v362 = vld [vmem:[#allocation2 + $0x138] sm:$0xff]
        %v363 = vld [vmem:[#allocation2 + $0x140] sm:$0xff]
        %v364 = vld [vmem:[#allocation2 + $0x148] sm:$0xff]
        %v365 = vld [vmem:[#allocation2 + $0x150] sm:$0xff]
        %v366 = vld [vmem:[#allocation2 + $0x158] sm:$0xff]
        %v367 = vld [vmem:[#allocation2 + $0x160] sm:$0xff]
        %v368 = vld [vmem:[#allocation2 + $0x168] sm:$0xff]
        %v369 = vld [vmem:[#allocation2 + $0x170] sm:$0xff]
        %v370 = vld [vmem:[#allocation2 + $0x178] sm:$0xff]
        %v371 = vld [vmem:[#allocation2 + $0x180] sm:$0xff]
        %v372 = vld [vmem:[#allocation2 + $0x188] sm:$0xff]
        %v373 = vld [vmem:[#allocation2 + $0x190] sm:$0xff]
        %v374 = vld [vmem:[#allocation2 + $0x198] sm:$0xff]
        %v375 = vld [vmem:[#allocation2 + $0x1a0] sm:$0xff]
        %v376 = vld [vmem:[#allocation2 + $0x1a8] sm:$0xff]
        %v377 = vld [vmem:[#allocation2 + $0x1b0] sm:$0xff]
        %v378 = vld [vmem:[#allocation2 + $0x1b8] sm:$0xff]
        %v379 = vld [vmem:[#allocation2 + $0x1c0] sm:$0xff]
        %v380 = vld [vmem:[#allocation2 + $0x1c8] sm:$0xff]
        %v381 = vld [vmem:[#allocation2 + $0x1d0] sm:$0xff]
        %v382 = vld [vmem:[#allocation2 + $0x1d8] sm:$0xff]
        %v383 = vld [vmem:[#allocation2 + $0x1e0] sm:$0xff]
        %v384 = vld [vmem:[#allocation2 + $0x1e8] sm:$0xff]
        %v385 = vld [vmem:[#allocation2 + $0x1f0] sm:$0xff]
        %v386 = vld [vmem:[#allocation2 + $0x1f8] sm:$0xff]
        %v387 = vld [vmem:[#allocation2 + $0x200] sm:$0xff]
        %v388 = vld [vmem:[#allocation2 + $0x208] sm:$0xff]
        %v389 = vld [vmem:[#allocation2 + $0x210] sm:$0xff]
        %v390 = vld [vmem:[#allocation2 + $0x218] sm:$0xff]
        %v391 = vld [vmem:[#allocation2 + $0x220] sm:$0xff]
        %v392 = vld [vmem:[#allocation2 + $0x228] sm:$0xff]
        %v393 = vld [vmem:[#allocation2 + $0x230] sm:$0xff]
        %v394 = vld [vmem:[#allocation2 + $0x238] sm:$0xff]
        %v395 = vld [vmem:[#allocation2 + $0x240] sm:$0xff]
        %v396 = vld [vmem:[#allocation2 + $0x248] sm:$0xff]
        %v397 = vld [vmem:[#allocation2 + $0x250] sm:$0xff]
        %v398 = vld [vmem:[#allocation2 + $0x258] sm:$0xff]
        %v399 = vld [vmem:[#allocation2 + $0x260] sm:$0xff]
        %v400 = vld [vmem:[#allocation2 + $0x268] sm:$0xff]
        %v401 = vld [vmem:[#allocation2 + $0x270] sm:$0xff]
        %v402 = vld [vmem:[#allocation2 + $0x278] sm:$0xff]
        %v403 = vld [vmem:[#allocation2 + $0x280] sm:$0xff]
        %v404 = vld [vmem:[#allocation2 + $0x288] sm:$0xff]
        %v405 = vld [vmem:[#allocation2 + $0x290] sm:$0xff]
        %v406 = vld [vmem:[#allocation2 + $0x298] sm:$0xff]
        %v407 = vld [vmem:[#allocation2 + $0x2a0] sm:$0xff]
        %v408 = vld [vmem:[#allocation2 + $0x2a8] sm:$0xff]
        %v409 = vld [vmem:[#allocation2 + $0x2b0] sm:$0xff]
        %v410 = vld [vmem:[#allocation2 + $0x2b8] sm:$0xff]
        %v411 = vld [vmem:[#allocation2 + $0x2c0] sm:$0xff]
        %v412 = vld [vmem:[#allocation2 + $0x2c8] sm:$0xff]
        %v413 = vld [vmem:[#allocation2 + $0x2d0] sm:$0xff]
        %v414 = vld [vmem:[#allocation2 + $0x2d8] sm:$0xff]
        %v415 = vld [vmem:[#allocation2 + $0x2e0] sm:$0xff]
        %v416 = vld [vmem:[#allocation2 + $0x2e8] sm:$0xff]
        %v417 = vld [vmem:[#allocation2 + $0x2f0] sm:$0xff]
        %v418 = vld [vmem:[#allocation2 + $0x2f8] sm:$0xff]
        %v419 = vld [vmem:[%s2] sm:$0x3f]
        %v421 = vperm.slane %v419, 0
        %v422 = vperm.slane %v419, 1
        %v423 = vperm.slane %v419, 2
        %v424 = vperm.slane %v419, 3
        %v425 = vperm.slane %v419, 4
        %v426 = vperm.slane %v419, 5
        %v529 = vunpack.c.l.b16 %v323
        %v530 = vunpack.c.h.b16 %v323
        %v531 = vunpack.c.l.b16 %v324
        %v532 = vunpack.c.h.b16 %v324
        %v533 = vunpack.c.l.b16 %v325
        %v534 = vunpack.c.h.b16 %v325
        %v535 = vunpack.c.l.b16 %v326
        %v536 = vunpack.c.h.b16 %v326
        %v537 = vunpack.c.l.b16 %v327
        %v538 = vunpack.c.h.b16 %v327
        %v539 = vunpack.c.l.b16 %v328
        %v540 = vunpack.c.h.b16 %v328
        %v541 = vunpack.c.l.b16 %v329
        %v542 = vunpack.c.h.b16 %v329
        %v543 = vunpack.c.l.b16 %v330
        %v544 = vunpack.c.h.b16 %v330
        %v545 = vunpack.c.l.b16 %v331
        %v546 = vunpack.c.h.b16 %v331
        %v547 = vunpack.c.l.b16 %v332
        %v548 = vunpack.c.h.b16 %v332
        %v549 = vunpack.c.l.b16 %v333
        %v550 = vunpack.c.h.b16 %v333
        %v551 = vunpack.c.l.b16 %v334
        %v552 = vunpack.c.h.b16 %v334
        %v553 = vunpack.c.l.b16 %v335
        %v554 = vunpack.c.h.b16 %v335
        %v555 = vunpack.c.l.b16 %v336
        %v556 = vunpack.c.h.b16 %v336
        %v557 = vunpack.c.l.b16 %v337
        %v558 = vunpack.c.h.b16 %v337
        %v559 = vunpack.c.l.b16 %v338
        %v560 = vunpack.c.h.b16 %v338
        %v561 = vunpack.c.l.b16 %v339
        %v562 = vunpack.c.h.b16 %v339
        %v563 = vunpack.c.l.b16 %v340
        %v564 = vunpack.c.h.b16 %v340
        %v565 = vunpack.c.l.b16 %v341
        %v566 = vunpack.c.h.b16 %v341
        %v567 = vunpack.c.l.b16 %v342
        %v568 = vunpack.c.h.b16 %v342
        %v569 = vunpack.c.l.b16 %v343
        %v570 = vunpack.c.h.b16 %v343
        %v571 = vunpack.c.l.b16 %v344
        %v572 = vunpack.c.h.b16 %v344
        %v573 = vunpack.c.l.b16 %v345
        %v574 = vunpack.c.h.b16 %v345
        %v575 = vunpack.c.l.b16 %v346
        %v576 = vunpack.c.h.b16 %v346
        %v577 = vunpack.c.l.b16 %v347
        %v578 = vunpack.c.h.b16 %v347
        %v579 = vunpack.c.l.b16 %v348
        %v580 = vunpack.c.h.b16 %v348
        %v581 = vunpack.c.l.b16 %v349
        %v582 = vunpack.c.h.b16 %v349
        %v583 = vunpack.c.l.b16 %v350
        %v584 = vunpack.c.h.b16 %v350
        %v585 = vunpack.c.l.b16 %v351
        %v586 = vunpack.c.h.b16 %v351
        %v587 = vunpack.c.l.b16 %v352
        %v588 = vunpack.c.h.b16 %v352
        %v589 = vunpack.c.l.b16 %v353
        %v590 = vunpack.c.h.b16 %v353
        %v591 = vunpack.c.l.b16 %v354
        %v592 = vunpack.c.h.b16 %v354
        %v593 = vunpack.c.l.b16 %v355
        %v594 = vunpack.c.h.b16 %v355
        %v595 = vunpack.c.l.b16 %v356
        %v596 = vunpack.c.h.b16 %v356
        %v597 = vunpack.c.l.b16 %v357
        %v598 = vunpack.c.h.b16 %v357
        %v599 = vunpack.c.l.b16 %v358
        %v600 = vunpack.c.h.b16 %v358
        %v601 = vunpack.c.l.b16 %v359
        %v602 = vunpack.c.h.b16 %v359
        %v603 = vunpack.c.l.b16 %v360
        %v604 = vunpack.c.h.b16 %v360
        %v605 = vunpack.c.l.b16 %v361
        %v606 = vunpack.c.h.b16 %v361
        %v607 = vunpack.c.l.b16 %v362
        %v608 = vunpack.c.h.b16 %v362
        %v609 = vunpack.c.l.b16 %v363
        %v610 = vunpack.c.h.b16 %v363
        %v611 = vunpack.c.l.b16 %v364
        %v612 = vunpack.c.h.b16 %v364
        %v613 = vunpack.c.l.b16 %v365
        %v614 = vunpack.c.h.b16 %v365
        %v615 = vunpack.c.l.b16 %v366
        %v616 = vunpack.c.h.b16 %v366
        %v617 = vunpack.c.l.b16 %v367
        %v618 = vunpack.c.h.b16 %v367
        %v619 = vunpack.c.l.b16 %v368
        %v620 = vunpack.c.h.b16 %v368
        %v621 = vunpack.c.l.b16 %v369
        %v622 = vunpack.c.h.b16 %v369
        %v623 = vunpack.c.l.b16 %v370
        %v624 = vunpack.c.h.b16 %v370
        %v625 = vunpack.c.l.b16 %v371
        %v626 = vunpack.c.h.b16 %v371
        %v627 = vunpack.c.l.b16 %v372
        %v628 = vunpack.c.h.b16 %v372
        %v629 = vunpack.c.l.b16 %v373
        %v630 = vunpack.c.h.b16 %v373
        %v631 = vunpack.c.l.b16 %v374
        %v632 = vunpack.c.h.b16 %v374
        %v633 = vunpack.c.l.b16 %v375
        %v634 = vunpack.c.h.b16 %v375
        %v635 = vunpack.c.l.b16 %v376
        %v636 = vunpack.c.h.b16 %v376
        %v637 = vunpack.c.l.b16 %v377
        %v638 = vunpack.c.h.b16 %v377
        %v639 = vunpack.c.l.b16 %v378
        %v640 = vunpack.c.h.b16 %v378
        %v641 = vunpack.c.l.b16 %v379
        %v642 = vunpack.c.h.b16 %v379
        %v643 = vunpack.c.l.b16 %v380
        %v644 = vunpack.c.h.b16 %v380
        %v645 = vunpack.c.l.b16 %v381
        %v646 = vunpack.c.h.b16 %v381
        %v647 = vunpack.c.l.b16 %v382
        %v648 = vunpack.c.h.b16 %v382
        %v649 = vunpack.c.l.b16 %v383
        %v650 = vunpack.c.h.b16 %v383
        %v651 = vunpack.c.l.b16 %v384
        %v652 = vunpack.c.h.b16 %v384
        %v653 = vunpack.c.l.b16 %v385
        %v654 = vunpack.c.h.b16 %v385
        %v655 = vunpack.c.l.b16 %v386
        %v656 = vunpack.c.h.b16 %v386
        %v657 = vunpack.c.l.b16 %v387
        %v658 = vunpack.c.h.b16 %v387
        %v659 = vunpack.c.l.b16 %v388
        %v660 = vunpack.c.h.b16 %v388
        %v661 = vunpack.c.l.b16 %v389
        %v662 = vunpack.c.h.b16 %v389
        %v663 = vunpack.c.l.b16 %v390
        %v664 = vunpack.c.h.b16 %v390
        %v665 = vunpack.c.l.b16 %v391
        %v666 = vunpack.c.h.b16 %v391
        %v667 = vunpack.c.l.b16 %v392
        %v668 = vunpack.c.h.b16 %v392
        %v669 = vunpack.c.l.b16 %v393
        %v670 = vunpack.c.h.b16 %v393
        %v671 = vunpack.c.l.b16 %v394
        %v672 = vunpack.c.h.b16 %v394
        %v673 = vunpack.c.l.b16 %v395
        %v674 = vunpack.c.h.b16 %v395
        %v675 = vunpack.c.l.b16 %v396
        %v676 = vunpack.c.h.b16 %v396
        %v677 = vunpack.c.l.b16 %v397
        %v678 = vunpack.c.h.b16 %v397
        %v679 = vunpack.c.l.b16 %v398
        %v680 = vunpack.c.h.b16 %v398
        %v681 = vunpack.c.l.b16 %v399
        %v682 = vunpack.c.h.b16 %v399
        %v683 = vunpack.c.l.b16 %v400
        %v684 = vunpack.c.h.b16 %v400
        %v685 = vunpack.c.l.b16 %v401
        %v686 = vunpack.c.h.b16 %v401
        %v687 = vunpack.c.l.b16 %v402
        %v688 = vunpack.c.h.b16 %v402
        %v689 = vunpack.c.l.b16 %v403
        %v690 = vunpack.c.h.b16 %v403
        %v691 = vunpack.c.l.b16 %v404
        %v692 = vunpack.c.h.b16 %v404
        %v693 = vunpack.c.l.b16 %v405
        %v694 = vunpack.c.h.b16 %v405
        %v695 = vunpack.c.l.b16 %v406
        %v696 = vunpack.c.h.b16 %v406
        %v697 = vunpack.c.l.b16 %v407
        %v698 = vunpack.c.h.b16 %v407
        %v699 = vunpack.c.l.b16 %v408
        %v700 = vunpack.c.h.b16 %v408
        %v701 = vunpack.c.l.b16 %v409
        %v702 = vunpack.c.h.b16 %v409
        %v703 = vunpack.c.l.b16 %v410
        %v704 = vunpack.c.h.b16 %v410
        %v705 = vunpack.c.l.b16 %v411
        %v706 = vunpack.c.h.b16 %v411
        %v707 = vunpack.c.l.b16 %v412
        %v708 = vunpack.c.h.b16 %v412
        %v709 = vunpack.c.l.b16 %v413
        %v710 = vunpack.c.h.b16 %v413
        %v711 = vunpack.c.l.b16 %v414
        %v712 = vunpack.c.h.b16 %v414
        %v713 = vunpack.c.l.b16 %v415
        %v714 = vunpack.c.h.b16 %v415
        %v715 = vunpack.c.l.b16 %v416
        %v716 = vunpack.c.h.b16 %v416
        %v717 = vunpack.c.l.b16 %v417
        %v718 = vunpack.c.h.b16 %v417
        %v719 = vunpack.c.l.b16 %v418
        %v720 = vunpack.c.h.b16 %v418
        %v721 = vpack.c.b16 %v535, %v529
        %v722 = vpack.c.b16 %v536, %v530
        %v723 = vpack.c.b16 %v537, %v531
        %v724 = vpack.c.b16 %v538, %v532
        %v725 = vpack.c.b16 %v539, %v533
        %v726 = vpack.c.b16 %v540, %v534
        %v727 = vpack.c.b16 %v547, %v541
        %v728 = vpack.c.b16 %v548, %v542
        %v729 = vpack.c.b16 %v549, %v543
        %v730 = vpack.c.b16 %v550, %v544
        %v731 = vpack.c.b16 %v551, %v545
        %v732 = vpack.c.b16 %v552, %v546
        %v733 = vpack.c.b16 %v559, %v553
        %v734 = vpack.c.b16 %v560, %v554
        %v735 = vpack.c.b16 %v561, %v555
        %v736 = vpack.c.b16 %v562, %v556
        %v737 = vpack.c.b16 %v563, %v557
        %v738 = vpack.c.b16 %v564, %v558
        %v739 = vpack.c.b16 %v571, %v565
        %v740 = vpack.c.b16 %v572, %v566
        %v741 = vpack.c.b16 %v573, %v567
        %v742 = vpack.c.b16 %v574, %v568
        %v743 = vpack.c.b16 %v575, %v569
        %v744 = vpack.c.b16 %v576, %v570
        %v745 = vpack.c.b16 %v583, %v577
        %v746 = vpack.c.b16 %v584, %v578
        %v747 = vpack.c.b16 %v585, %v579
        %v748 = vpack.c.b16 %v586, %v580
        %v749 = vpack.c.b16 %v587, %v581
        %v750 = vpack.c.b16 %v588, %v582
        %v751 = vpack.c.b16 %v595, %v589
        %v752 = vpack.c.b16 %v596, %v590
        %v753 = vpack.c.b16 %v597, %v591
        %v754 = vpack.c.b16 %v598, %v592
        %v755 = vpack.c.b16 %v599, %v593
        %v756 = vpack.c.b16 %v600, %v594
        %v757 = vpack.c.b16 %v607, %v601
        %v758 = vpack.c.b16 %v608, %v602
        %v759 = vpack.c.b16 %v609, %v603
        %v760 = vpack.c.b16 %v610, %v604
        %v761 = vpack.c.b16 %v611, %v605
        %v762 = vpack.c.b16 %v612, %v606
        %v763 = vpack.c.b16 %v619, %v613
        %v764 = vpack.c.b16 %v620, %v614
        %v765 = vpack.c.b16 %v621, %v615
        %v766 = vpack.c.b16 %v622, %v616
        %v767 = vpack.c.b16 %v623, %v617
        %v768 = vpack.c.b16 %v624, %v618
        %v769 = vpack.c.b16 %v631, %v625
        %v770 = vpack.c.b16 %v632, %v626
        %v771 = vpack.c.b16 %v633, %v627
        %v772 = vpack.c.b16 %v634, %v628
        %v773 = vpack.c.b16 %v635, %v629
        %v774 = vpack.c.b16 %v636, %v630
        %v775 = vpack.c.b16 %v643, %v637
        %v776 = vpack.c.b16 %v644, %v638
        %v777 = vpack.c.b16 %v645, %v639
        %v778 = vpack.c.b16 %v646, %v640
        %v779 = vpack.c.b16 %v647, %v641
        %v780 = vpack.c.b16 %v648, %v642
        %v781 = vpack.c.b16 %v655, %v649
        %v782 = vpack.c.b16 %v656, %v650
        %v783 = vpack.c.b16 %v657, %v651
        %v784 = vpack.c.b16 %v658, %v652
        %v785 = vpack.c.b16 %v659, %v653
        %v786 = vpack.c.b16 %v660, %v654
        %v787 = vpack.c.b16 %v667, %v661
        %v788 = vpack.c.b16 %v668, %v662
        %v789 = vpack.c.b16 %v669, %v663
        %v790 = vpack.c.b16 %v670, %v664
        %v791 = vpack.c.b16 %v671, %v665
        %v792 = vpack.c.b16 %v672, %v666
        %v793 = vpack.c.b16 %v679, %v673
        %v794 = vpack.c.b16 %v680, %v674
        %v795 = vpack.c.b16 %v681, %v675
        %v796 = vpack.c.b16 %v682, %v676
        %v797 = vpack.c.b16 %v683, %v677
        %v798 = vpack.c.b16 %v684, %v678
        %v799 = vpack.c.b16 %v691, %v685
        %v800 = vpack.c.b16 %v692, %v686
        %v801 = vpack.c.b16 %v693, %v687
        %v802 = vpack.c.b16 %v694, %v688
        %v803 = vpack.c.b16 %v695, %v689
        %v804 = vpack.c.b16 %v696, %v690
        %v805 = vpack.c.b16 %v703, %v697
        %v806 = vpack.c.b16 %v704, %v698
        %v807 = vpack.c.b16 %v705, %v699
        %v808 = vpack.c.b16 %v706, %v700
        %v809 = vpack.c.b16 %v707, %v701
        %v810 = vpack.c.b16 %v708, %v702
        %v811 = vpack.c.b16 %v715, %v709
        %v812 = vpack.c.b16 %v716, %v710
        %v813 = vpack.c.b16 %v717, %v711
        %v814 = vpack.c.b16 %v718, %v712
        %v815 = vpack.c.b16 %v719, %v713
        %v816 = vpack.c.b16 %v720, %v714
        %913 = vmatpush.bf16.msra.mxu0 %v763
        %914 = vmatpush.bf16.msra.mxu0 %v757
        %915 = vmatpush.bf16.msra.mxu0 %v751
        %916 = vmatpush.bf16.msra.mxu0 %v745
        %917 = vmatpush.bf16.msra.mxu0 %v739
        %918 = vmatpush.bf16.msra.mxu0 %v733
        %919 = vmatpush.bf16.msra.mxu0 %v727
        %920 = vmatpush.bf16.msra.mxu0 %v721
        %921 = vmatmul.bf16.gmra.mxu0 %v321
        %v922 = vpop.f32.mrf.mxu0
        %v923 = vadd.f32 %v421, %v922
        %v924 = vpop.f32.mrf.mxu0
        %925 = vdwg.mxu0
        %926 = vmatpush.bf16.msra.mxu0 %v811
        %927 = vmatpush.bf16.msra.mxu0 %v805
        %928 = vmatpush.bf16.msra.mxu0 %v799
        %929 = vmatpush.bf16.msra.mxu0 %v793
        %930 = vmatpush.bf16.msra.mxu0 %v787
        %931 = vmatpush.bf16.msra.mxu0 %v781
        %932 = vmatpush.bf16.msra.mxu0 %v775
        %933 = vmatpush.bf16.msra.mxu0 %v769
        %934 = vmatmul.bf16.gmra.mxu0 %v322
        %v935 = vpop.f32.mrf.mxu0
        %v936 = vadd.f32 %v923, %v935
        %v937 = vpop.f32.mrf.mxu0
        %938 = vdwg.mxu0
        %939 = vmatpush.bf16.msra.mxu0 %v764
        %940 = vmatpush.bf16.msra.mxu0 %v758
        %941 = vmatpush.bf16.msra.mxu0 %v752
        %942 = vmatpush.bf16.msra.mxu0 %v746
        %943 = vmatpush.bf16.msra.mxu0 %v740
        %944 = vmatpush.bf16.msra.mxu0 %v734
        %945 = vmatpush.bf16.msra.mxu0 %v728
        %946 = vmatpush.bf16.msra.mxu0 %v722
        %947 = vmatmul.bf16.gmra.mxu0 %v321
        %v948 = vpop.f32.mrf.mxu0
        %v949 = vadd.f32 %v422, %v948
        %v950 = vpop.f32.mrf.mxu0
        %951 = vdwg.mxu0
        %952 = vmatpush.bf16.msra.mxu0 %v812
        %953 = vmatpush.bf16.msra.mxu0 %v806
        %954 = vmatpush.bf16.msra.mxu0 %v800
        %955 = vmatpush.bf16.msra.mxu0 %v794
        %956 = vmatpush.bf16.msra.mxu0 %v788
        %957 = vmatpush.bf16.msra.mxu0 %v782
        %958 = vmatpush.bf16.msra.mxu0 %v776
        %959 = vmatpush.bf16.msra.mxu0 %v770
        %960 = vmatmul.bf16.gmra.mxu0 %v322
        %v961 = vpop.f32.mrf.mxu0
        %v962 = vadd.f32 %v949, %v961
        %v963 = vpop.f32.mrf.mxu0
        %964 = vdwg.mxu0
        %965 = vmatpush.bf16.msra.mxu0 %v765
        %966 = vmatpush.bf16.msra.mxu0 %v759
        %967 = vmatpush.bf16.msra.mxu0 %v753
        %968 = vmatpush.bf16.msra.mxu0 %v747
        %969 = vmatpush.bf16.msra.mxu0 %v741
        %970 = vmatpush.bf16.msra.mxu0 %v735
        %971 = vmatpush.bf16.msra.mxu0 %v729
        %972 = vmatpush.bf16.msra.mxu0 %v723
        %973 = vmatmul.bf16.gmra.mxu0 %v321
        %v974 = vpop.f32.mrf.mxu0
        %v975 = vadd.f32 %v423, %v974
        %v976 = vpop.f32.mrf.mxu0
        %977 = vdwg.mxu0
        %978 = vmatpush.bf16.msra.mxu0 %v813
        %979 = vmatpush.bf16.msra.mxu0 %v807
        %980 = vmatpush.bf16.msra.mxu0 %v801
        %981 = vmatpush.bf16.msra.mxu0 %v795
        %982 = vmatpush.bf16.msra.mxu0 %v789
        %983 = vmatpush.bf16.msra.mxu0 %v783
        %984 = vmatpush.bf16.msra.mxu0 %v777
        %985 = vmatpush.bf16.msra.mxu0 %v771
        %986 = vmatmul.bf16.gmra.mxu0 %v322
        %v987 = vpop.f32.mrf.mxu0
        %v988 = vadd.f32 %v975, %v987
        %v989 = vpop.f32.mrf.mxu0
        %990 = vdwg.mxu0
        %991 = vmatpush.bf16.msra.mxu0 %v766
        %992 = vmatpush.bf16.msra.mxu0 %v760
        %993 = vmatpush.bf16.msra.mxu0 %v754
        %994 = vmatpush.bf16.msra.mxu0 %v748
        %995 = vmatpush.bf16.msra.mxu0 %v742
        %996 = vmatpush.bf16.msra.mxu0 %v736
        %997 = vmatpush.bf16.msra.mxu0 %v730
        %998 = vmatpush.bf16.msra.mxu0 %v724
        %999 = vmatmul.bf16.gmra.mxu0 %v321
        %v1000 = vpop.f32.mrf.mxu0
        %v1001 = vadd.f32 %v424, %v1000
        %v1002 = vpop.f32.mrf.mxu0
        %1003 = vdwg.mxu0
        %1004 = vmatpush.bf16.msra.mxu0 %v814
        %1005 = vmatpush.bf16.msra.mxu0 %v808
        %1006 = vmatpush.bf16.msra.mxu0 %v802
        %1007 = vmatpush.bf16.msra.mxu0 %v796
        %1008 = vmatpush.bf16.msra.mxu0 %v790
        %1009 = vmatpush.bf16.msra.mxu0 %v784
        %1010 = vmatpush.bf16.msra.mxu0 %v778
        %1011 = vmatpush.bf16.msra.mxu0 %v772
        %1012 = vmatmul.bf16.gmra.mxu0 %v322
        %v1013 = vpop.f32.mrf.mxu0
        %v1014 = vadd.f32 %v1001, %v1013
        %v1015 = vpop.f32.mrf.mxu0
        %1016 = vdwg.mxu0
        %1017 = vmatpush.bf16.msra.mxu0 %v767
        %1018 = vmatpush.bf16.msra.mxu0 %v761
        %1019 = vmatpush.bf16.msra.mxu0 %v755
        %1020 = vmatpush.bf16.msra.mxu0 %v749
        %1021 = vmatpush.bf16.msra.mxu0 %v743
        %1022 = vmatpush.bf16.msra.mxu0 %v737
        %1023 = vmatpush.bf16.msra.mxu0 %v731
        %1024 = vmatpush.bf16.msra.mxu0 %v725
        %1025 = vmatmul.bf16.gmra.mxu0 %v321
        %v1026 = vpop.f32.mrf.mxu0
        %v1027 = vadd.f32 %v425, %v1026
        %v1028 = vpop.f32.mrf.mxu0
        %1029 = vdwg.mxu0
        %1030 = vmatpush.bf16.msra.mxu0 %v815
        %1031 = vmatpush.bf16.msra.mxu0 %v809
        %1032 = vmatpush.bf16.msra.mxu0 %v803
        %1033 = vmatpush.bf16.msra.mxu0 %v797
        %1034 = vmatpush.bf16.msra.mxu0 %v791
        %1035 = vmatpush.bf16.msra.mxu0 %v785
        %1036 = vmatpush.bf16.msra.mxu0 %v779
        %1037 = vmatpush.bf16.msra.mxu0 %v773
        %1038 = vmatmul.bf16.gmra.mxu0 %v322
        %v1039 = vpop.f32.mrf.mxu0
        %v1040 = vadd.f32 %v1027, %v1039
        %v1041 = vpop.f32.mrf.mxu0
        %1042 = vdwg.mxu0
        %1043 = vmatpush.bf16.msra.mxu0 %v768
        %1044 = vmatpush.bf16.msra.mxu0 %v762
        %1045 = vmatpush.bf16.msra.mxu0 %v756
        %1046 = vmatpush.bf16.msra.mxu0 %v750
        %1047 = vmatpush.bf16.msra.mxu0 %v744
        %1048 = vmatpush.bf16.msra.mxu0 %v738
        %1049 = vmatpush.bf16.msra.mxu0 %v732
        %1050 = vmatpush.bf16.msra.mxu0 %v726
        %1051 = vmatmul.bf16.gmra.mxu0 %v321
        %v1052 = vpop.f32.mrf.mxu0
        %v1053 = vadd.f32 %v426, %v1052
        %v1054 = vpop.f32.mrf.mxu0
        %1055 = vdwg.mxu0
        %1056 = vmatpush.bf16.msra.mxu0 %v816
        %1057 = vmatpush.bf16.msra.mxu0 %v810
        %1058 = vmatpush.bf16.msra.mxu0 %v804
        %1059 = vmatpush.bf16.msra.mxu0 %v798
        %1060 = vmatpush.bf16.msra.mxu0 %v792
        %1061 = vmatpush.bf16.msra.mxu0 %v786
        %1062 = vmatpush.bf16.msra.mxu0 %v780
        %1063 = vmatpush.bf16.msra.mxu0 %v774
        %1064 = vmatmul.bf16.gmra.mxu0 %v322
        %v1065 = vpop.f32.mrf.mxu0
        %v1066 = vadd.f32 %v1053, %v1065
        %v1067 = vpop.f32.mrf.mxu0
        %1068 = vdwg.mxu0
        %v1069 = vpack.c.bf16 %v936, %v936
        %v1070 = vpack.c.bf16 %v988, %v988
        %v1071 = vpack.c.bf16 %v1040, %v1040
        %vm1072 = vcmask 261120
        %v1074 = vsel %vm1072, %v1069, 0
        %v1077 = vsel %vm1072, %v1070, 0
        %1079 = vmatpush.bf16.xpose.msra.mxu0 0
        %1080 = vmatpush.bf16.xpose.msra.mxu0 0
        %1081 = vmatpush.bf16.xpose.msra.mxu0 0
        %1082 = vmatpush.bf16.xpose.msra.mxu0 0
        %1083 = vmatpush.bf16.xpose.msra.mxu0 0
        %1084 = vmatpush.bf16.xpose.msra.mxu0 0
        %1085 = vmatpush.bf16.xpose.msra.mxu0 0
        %1086 = vmatpush.bf16.xpose.msra.mxu0 %v1077
        %1087 = vmatmul.bf16.gmra.mxu0 %v1074
        %v1088 = vpop.f32.mrf.mxu0
        %v1089 = vadd.f32 0.0, %v1088
        %v1090 = vpop.f32.mrf.mxu0
        %1091 = vdwg.mxu0
        %v1092 = vmul.f32 %v1089, 0.17677669
        %vm1093 = vcmask 27648
        %v1094 = vsel %vm1093, %v1092, -inf
        %1095 = vmax.xlane.f32.xlu0 %v1094
        %v1096 = vpop.xlane.xlu0 %1095
        %v1097 = vsub.f32 %v1092, %v1096
        %v1098 = vmul.f32 %v1097, 1.442695
        %v1099 = vpow.pop %v1098
        %v1100 = vsel %vm1093, %v1099, 0.0
        %1101 = vadd.xlane.f32.xlu0 %v1100
        %v1102 = vpop.xlane.xlu0 %1101
        %v1103 = vrcp.pop %v1102
        %v1104 = vmul.f32 %v1099, %v1103
        %v1105 = vpack.c.bf16 %v1104, %v1104
        %vm1106 = vcmask 31744
        %v1108 = vsel %vm1106, %v1105, 0
        %vm1110 = vcmask 1041408
        %v1112 = vsel %vm1110, %v1071, 0
        %1114 = vmatpush.bf16.msra.mxu0 0
        %1115 = vmatpush.bf16.msra.mxu0 0
        %1116 = vmatpush.bf16.msra.mxu0 0
        %1117 = vmatpush.bf16.msra.mxu0 0
        %1118 = vmatpush.bf16.msra.mxu0 0
        %1119 = vmatpush.bf16.msra.mxu0 0
        %1120 = vmatpush.bf16.msra.mxu0 0
        %1121 = vmatpush.bf16.msra.mxu0 %v1112
        %1122 = vmatmul.bf16.gmra.mxu0 %v1108
        %v1123 = vpop.f32.mrf.mxu0
        %v1124 = vadd.f32 0.0, %v1123
        %v1125 = vpop.f32.mrf.mxu0
        %1126 = vdwg.mxu0
        %1128 = vrot.lane.b32.xlu0 %v1069, 96
        %v1129 = vpop.permute.xlu0 %1128
        %1131 = vrot.lane.b32.xlu0 %v1070, 96
        %v1132 = vpop.permute.xlu0 %1131
        %v1134 = vsel %vm1072, %v1129, 0
        %v1137 = vsel %vm1072, %v1132, 0
        %1139 = vmatpush.bf16.xpose.msra.mxu0 0
        %1140 = vmatpush.bf16.xpose.msra.mxu0 0
        %1141 = vmatpush.bf16.xpose.msra.mxu0 0
        %1142 = vmatpush.bf16.xpose.msra.mxu0 0
        %1143 = vmatpush.bf16.xpose.msra.mxu0 0
        %1144 = vmatpush.bf16.xpose.msra.mxu0 0
        %1145 = vmatpush.bf16.xpose.msra.mxu0 0
        %1146 = vmatpush.bf16.xpose.msra.mxu0 %v1137
        %1147 = vmatmul.bf16.gmra.mxu0 %v1134
        %v1148 = vpop.f32.mrf.mxu0
        %v1149 = vadd.f32 0.0, %v1148
        %v1150 = vpop.f32.mrf.mxu0
        %1151 = vdwg.mxu0
        %v1152 = vmul.f32 %v1149, 0.17677669
        %v1153 = vsel %vm1093, %v1152, -inf
        %1154 = vmax.xlane.f32.xlu0 %v1153
        %v1155 = vpop.xlane.xlu0 %1154
        %v1156 = vsub.f32 %v1152, %v1155
        %v1157 = vmul.f32 %v1156, 1.442695
        %v1158 = vpow.pop %v1157
        %v1159 = vsel %vm1093, %v1158, 0.0
        %1160 = vadd.xlane.f32.xlu0 %v1159
        %v1161 = vpop.xlane.xlu0 %1160
        %v1162 = vrcp.pop %v1161
        %v1163 = vmul.f32 %v1158, %v1162
        %v1164 = vpack.c.bf16 %v1163, %v1163
        %1166 = vrot.lane.b32.xlu0 %v1071, 96
        %v1167 = vpop.permute.xlu0 %1166
        %v1169 = vsel %vm1106, %v1164, 0
        %v1172 = vsel %vm1110, %v1167, 0
        %1174 = vmatpush.bf16.msra.mxu0 0
        %1175 = vmatpush.bf16.msra.mxu0 0
        %1176 = vmatpush.bf16.msra.mxu0 0
        %1177 = vmatpush.bf16.msra.mxu0 0
        %1178 = vmatpush.bf16.msra.mxu0 0
        %1179 = vmatpush.bf16.msra.mxu0 0
        %1180 = vmatpush.bf16.msra.mxu0 0
        %1181 = vmatpush.bf16.msra.mxu0 %v1172
        %1182 = vmatmul.bf16.gmra.mxu0 %v1169
        %v1183 = vpop.f32.mrf.mxu0
        %v1184 = vadd.f32 0.0, %v1183
        %v1185 = vpop.f32.mrf.mxu0
        %1186 = vdwg.mxu0
        %1187 = vrot.lane.b32.xlu0 %v1069, 64
        %v1188 = vpop.permute.xlu0 %1187
        %1189 = vrot.lane.b32.xlu0 %v1070, 64
        %v1190 = vpop.permute.xlu0 %1189
        %v1192 = vsel %vm1072, %v1188, 0
        %v1195 = vsel %vm1072, %v1190, 0
        %1197 = vmatpush.bf16.xpose.msra.mxu0 0
        %1198 = vmatpush.bf16.xpose.msra.mxu0 0
        %1199 = vmatpush.bf16.xpose.msra.mxu0 0
        %1200 = vmatpush.bf16.xpose.msra.mxu0 0
        %1201 = vmatpush.bf16.xpose.msra.mxu0 0
        %1202 = vmatpush.bf16.xpose.msra.mxu0 0
        %1203 = vmatpush.bf16.xpose.msra.mxu0 0
        %1204 = vmatpush.bf16.xpose.msra.mxu0 %v1195
        %1205 = vmatmul.bf16.gmra.mxu0 %v1192
        %v1206 = vpop.f32.mrf.mxu0
        %v1207 = vadd.f32 0.0, %v1206
        %v1208 = vpop.f32.mrf.mxu0
        %1209 = vdwg.mxu0
        %v1210 = vmul.f32 %v1207, 0.17677669
        %v1211 = vsel %vm1093, %v1210, -inf
        %1212 = vmax.xlane.f32.xlu0 %v1211
        %v1213 = vpop.xlane.xlu0 %1212
        %v1214 = vsub.f32 %v1210, %v1213
        %v1215 = vmul.f32 %v1214, 1.442695
        %v1216 = vpow.pop %v1215
        %v1217 = vsel %vm1093, %v1216, 0.0
        %1218 = vadd.xlane.f32.xlu0 %v1217
        %v1219 = vpop.xlane.xlu0 %1218
        %v1220 = vrcp.pop %v1219
        %v1221 = vmul.f32 %v1216, %v1220
        %v1222 = vpack.c.bf16 %v1221, %v1221
        %1223 = vrot.lane.b32.xlu0 %v1071, 64
        %v1224 = vpop.permute.xlu0 %1223
        %v1226 = vsel %vm1106, %v1222, 0
        %v1229 = vsel %vm1110, %v1224, 0
        %1231 = vmatpush.bf16.msra.mxu0 0
        %1232 = vmatpush.bf16.msra.mxu0 0
        %1233 = vmatpush.bf16.msra.mxu0 0
        %1234 = vmatpush.bf16.msra.mxu0 0
        %1235 = vmatpush.bf16.msra.mxu0 0
        %1236 = vmatpush.bf16.msra.mxu0 0
        %1237 = vmatpush.bf16.msra.mxu0 0
        %1238 = vmatpush.bf16.msra.mxu0 %v1229
        %1239 = vmatmul.bf16.gmra.mxu0 %v1226
        %v1240 = vpop.f32.mrf.mxu0
        %v1241 = vadd.f32 0.0, %v1240
        %v1242 = vpop.f32.mrf.mxu0
        %1243 = vdwg.mxu0
        %1244 = vrot.lane.b32.xlu0 %v1069, 32
        %v1245 = vpop.permute.xlu0 %1244
        %1246 = vrot.lane.b32.xlu0 %v1070, 32
        %v1247 = vpop.permute.xlu0 %1246
        %v1249 = vsel %vm1072, %v1245, 0
        %v1252 = vsel %vm1072, %v1247, 0
        %1254 = vmatpush.bf16.xpose.msra.mxu0 0
        %1255 = vmatpush.bf16.xpose.msra.mxu0 0
        %1256 = vmatpush.bf16.xpose.msra.mxu0 0
        %1257 = vmatpush.bf16.xpose.msra.mxu0 0
        %1258 = vmatpush.bf16.xpose.msra.mxu0 0
        %1259 = vmatpush.bf16.xpose.msra.mxu0 0
        %1260 = vmatpush.bf16.xpose.msra.mxu0 0
        %1261 = vmatpush.bf16.xpose.msra.mxu0 %v1252
        %1262 = vmatmul.bf16.gmra.mxu0 %v1249
        %v1263 = vpop.f32.mrf.mxu0
        %v1264 = vadd.f32 0.0, %v1263
        %v1265 = vpop.f32.mrf.mxu0
        %1266 = vdwg.mxu0
        %v1267 = vmul.f32 %v1264, 0.17677669
        %v1268 = vsel %vm1093, %v1267, -inf
        %1269 = vmax.xlane.f32.xlu0 %v1268
        %v1270 = vpop.xlane.xlu0 %1269
        %v1271 = vsub.f32 %v1267, %v1270
        %v1272 = vmul.f32 %v1271, 1.442695
        %v1273 = vpow.pop %v1272
        %v1274 = vsel %vm1093, %v1273, 0.0
        %1275 = vadd.xlane.f32.xlu0 %v1274
        %v1276 = vpop.xlane.xlu0 %1275
        %v1277 = vrcp.pop %v1276
        %v1278 = vmul.f32 %v1273, %v1277
        %v1279 = vpack.c.bf16 %v1278, %v1278
        %1280 = vrot.lane.b32.xlu0 %v1071, 32
        %v1281 = vpop.permute.xlu0 %1280
        %v1283 = vsel %vm1106, %v1279, 0
        %v1286 = vsel %vm1110, %v1281, 0
        %1288 = vmatpush.bf16.msra.mxu0 0
        %1289 = vmatpush.bf16.msra.mxu0 0
        %1290 = vmatpush.bf16.msra.mxu0 0
        %1291 = vmatpush.bf16.msra.mxu0 0
        %1292 = vmatpush.bf16.msra.mxu0 0
        %1293 = vmatpush.bf16.msra.mxu0 0
        %1294 = vmatpush.bf16.msra.mxu0 0
        %1295 = vmatpush.bf16.msra.mxu0 %v1286
        %1296 = vmatmul.bf16.gmra.mxu0 %v1283
        %v1297 = vpop.f32.mrf.mxu0
        %v1298 = vadd.f32 0.0, %v1297
        %v1299 = vpop.f32.mrf.mxu0
        %1300 = vdwg.mxu0
        %v1301 = vpack.c.bf16 %v962, %v962
        %v1302 = vpack.c.bf16 %v1014, %v1014
        %v1303 = vpack.c.bf16 %v1066, %v1066
        %v1305 = vsel %vm1072, %v1301, 0
        %v1308 = vsel %vm1072, %v1302, 0
        %1310 = vmatpush.bf16.xpose.msra.mxu0 0
        %1311 = vmatpush.bf16.xpose.msra.mxu0 0
        %1312 = vmatpush.bf16.xpose.msra.mxu0 0
        %1313 = vmatpush.bf16.xpose.msra.mxu0 0
        %1314 = vmatpush.bf16.xpose.msra.mxu0 0
        %1315 = vmatpush.bf16.xpose.msra.mxu0 0
        %1316 = vmatpush.bf16.xpose.msra.mxu0 0
        %1317 = vmatpush.bf16.xpose.msra.mxu0 %v1308
        %1318 = vmatmul.bf16.gmra.mxu0 %v1305
        %v1319 = vpop.f32.mrf.mxu0
        %v1320 = vadd.f32 0.0, %v1319
        %v1321 = vpop.f32.mrf.mxu0
        %1322 = vdwg.mxu0
        %v1323 = vmul.f32 %v1320, 0.17677669
        %v1324 = vsel %vm1093, %v1323, -inf
        %1325 = vmax.xlane.f32.xlu0 %v1324
        %v1326 = vpop.xlane.xlu0 %1325
        %v1327 = vsub.f32 %v1323, %v1326
        %v1328 = vmul.f32 %v1327, 1.442695
        %v1329 = vpow.pop %v1328
        %v1330 = vsel %vm1093, %v1329, 0.0
        %1331 = vadd.xlane.f32.xlu0 %v1330
        %v1332 = vpop.xlane.xlu0 %1331
        %v1333 = vrcp.pop %v1332
        %v1334 = vmul.f32 %v1329, %v1333
        %v1335 = vpack.c.bf16 %v1334, %v1334
        %v1337 = vsel %vm1106, %v1335, 0
        %v1340 = vsel %vm1110, %v1303, 0
        %1342 = vmatpush.bf16.msra.mxu0 0
        %1343 = vmatpush.bf16.msra.mxu0 0
        %1344 = vmatpush.bf16.msra.mxu0 0
        %1345 = vmatpush.bf16.msra.mxu0 0
        %1346 = vmatpush.bf16.msra.mxu0 0
        %1347 = vmatpush.bf16.msra.mxu0 0
        %1348 = vmatpush.bf16.msra.mxu0 0
        %1349 = vmatpush.bf16.msra.mxu0 %v1340
        %1350 = vmatmul.bf16.gmra.mxu0 %v1337
        %v1351 = vpop.f32.mrf.mxu0
        %v1352 = vadd.f32 0.0, %v1351
        %v1353 = vpop.f32.mrf.mxu0
        %1354 = vdwg.mxu0
        %1356 = vrot.lane.b32.xlu0 %v1301, 96
        %v1357 = vpop.permute.xlu0 %1356
        %1359 = vrot.lane.b32.xlu0 %v1302, 96
        %v1360 = vpop.permute.xlu0 %1359
        %v1362 = vsel %vm1072, %v1357, 0
        %v1365 = vsel %vm1072, %v1360, 0
        %1367 = vmatpush.bf16.xpose.msra.mxu0 0
        %1368 = vmatpush.bf16.xpose.msra.mxu0 0
        %1369 = vmatpush.bf16.xpose.msra.mxu0 0
        %1370 = vmatpush.bf16.xpose.msra.mxu0 0
        %1371 = vmatpush.bf16.xpose.msra.mxu0 0
        %1372 = vmatpush.bf16.xpose.msra.mxu0 0
        %1373 = vmatpush.bf16.xpose.msra.mxu0 0
        %1374 = vmatpush.bf16.xpose.msra.mxu0 %v1365
        %1375 = vmatmul.bf16.gmra.mxu0 %v1362
        %v1376 = vpop.f32.mrf.mxu0
        %v1377 = vadd.f32 0.0, %v1376
        %v1378 = vpop.f32.mrf.mxu0
        %1379 = vdwg.mxu0
        %v1380 = vmul.f32 %v1377, 0.17677669
        %v1381 = vsel %vm1093, %v1380, -inf
        %1382 = vmax.xlane.f32.xlu0 %v1381
        %v1383 = vpop.xlane.xlu0 %1382
        %v1384 = vsub.f32 %v1380, %v1383
        %v1385 = vmul.f32 %v1384, 1.442695
        %v1386 = vpow.pop %v1385
        %v1387 = vsel %vm1093, %v1386, 0.0
        %1388 = vadd.xlane.f32.xlu0 %v1387
        %v1389 = vpop.xlane.xlu0 %1388
        %v1390 = vrcp.pop %v1389
        %v1391 = vmul.f32 %v1386, %v1390
        %v1392 = vpack.c.bf16 %v1391, %v1391
        %1394 = vrot.lane.b32.xlu0 %v1303, 96
        %v1395 = vpop.permute.xlu0 %1394
        %v1397 = vsel %vm1106, %v1392, 0
        %v1400 = vsel %vm1110, %v1395, 0
        %1402 = vmatpush.bf16.msra.mxu0 0
        %1403 = vmatpush.bf16.msra.mxu0 0
        %1404 = vmatpush.bf16.msra.mxu0 0
        %1405 = vmatpush.bf16.msra.mxu0 0
        %1406 = vmatpush.bf16.msra.mxu0 0
        %1407 = vmatpush.bf16.msra.mxu0 0
        %1408 = vmatpush.bf16.msra.mxu0 0
        %1409 = vmatpush.bf16.msra.mxu0 %v1400
        %1410 = vmatmul.bf16.gmra.mxu0 %v1397
        %v1411 = vpop.f32.mrf.mxu0
        %v1412 = vadd.f32 0.0, %v1411
        %v1413 = vpop.f32.mrf.mxu0
        %1414 = vdwg.mxu0
        %1415 = vrot.lane.b32.xlu0 %v1301, 64
        %v1416 = vpop.permute.xlu0 %1415
        %1417 = vrot.lane.b32.xlu0 %v1302, 64
        %v1418 = vpop.permute.xlu0 %1417
        %v1420 = vsel %vm1072, %v1416, 0
        %v1423 = vsel %vm1072, %v1418, 0
        %1425 = vmatpush.bf16.xpose.msra.mxu0 0
        %1426 = vmatpush.bf16.xpose.msra.mxu0 0
        %1427 = vmatpush.bf16.xpose.msra.mxu0 0
        %1428 = vmatpush.bf16.xpose.msra.mxu0 0
        %1429 = vmatpush.bf16.xpose.msra.mxu0 0
        %1430 = vmatpush.bf16.xpose.msra.mxu0 0
        %1431 = vmatpush.bf16.xpose.msra.mxu0 0
        %1432 = vmatpush.bf16.xpose.msra.mxu0 %v1423
        %1433 = vmatmul.bf16.gmra.mxu0 %v1420
        %v1434 = vpop.f32.mrf.mxu0
        %v1435 = vadd.f32 0.0, %v1434
        %v1436 = vpop.f32.mrf.mxu0
        %1437 = vdwg.mxu0
        %v1438 = vmul.f32 %v1435, 0.17677669
        %v1439 = vsel %vm1093, %v1438, -inf
        %1440 = vmax.xlane.f32.xlu0 %v1439
        %v1441 = vpop.xlane.xlu0 %1440
        %v1442 = vsub.f32 %v1438, %v1441
        %v1443 = vmul.f32 %v1442, 1.442695
        %v1444 = vpow.pop %v1443
        %v1445 = vsel %vm1093, %v1444, 0.0
        %1446 = vadd.xlane.f32.xlu0 %v1445
        %v1447 = vpop.xlane.xlu0 %1446
        %v1448 = vrcp.pop %v1447
        %v1449 = vmul.f32 %v1444, %v1448
        %v1450 = vpack.c.bf16 %v1449, %v1449
        %1451 = vrot.lane.b32.xlu0 %v1303, 64
        %v1452 = vpop.permute.xlu0 %1451
        %v1454 = vsel %vm1106, %v1450, 0
        %v1457 = vsel %vm1110, %v1452, 0
        %1459 = vmatpush.bf16.msra.mxu0 0
        %1460 = vmatpush.bf16.msra.mxu0 0
        %1461 = vmatpush.bf16.msra.mxu0 0
        %1462 = vmatpush.bf16.msra.mxu0 0
        %1463 = vmatpush.bf16.msra.mxu0 0
        %1464 = vmatpush.bf16.msra.mxu0 0
        %1465 = vmatpush.bf16.msra.mxu0 0
        %1466 = vmatpush.bf16.msra.mxu0 %v1457
        %1467 = vmatmul.bf16.gmra.mxu0 %v1454
        %v1468 = vpop.f32.mrf.mxu0
        %v1469 = vadd.f32 0.0, %v1468
        %v1470 = vpop.f32.mrf.mxu0
        %1471 = vdwg.mxu0
        %1472 = vrot.lane.b32.xlu0 %v1301, 32
        %v1473 = vpop.permute.xlu0 %1472
        %1474 = vrot.lane.b32.xlu0 %v1302, 32
        %v1475 = vpop.permute.xlu0 %1474
        %v1477 = vsel %vm1072, %v1473, 0
        %v1480 = vsel %vm1072, %v1475, 0
        %1482 = vmatpush.bf16.xpose.msra.mxu0 0
        %1483 = vmatpush.bf16.xpose.msra.mxu0 0
        %1484 = vmatpush.bf16.xpose.msra.mxu0 0
        %1485 = vmatpush.bf16.xpose.msra.mxu0 0
        %1486 = vmatpush.bf16.xpose.msra.mxu0 0
        %1487 = vmatpush.bf16.xpose.msra.mxu0 0
        %1488 = vmatpush.bf16.xpose.msra.mxu0 0
        %1489 = vmatpush.bf16.xpose.msra.mxu0 %v1480
        %1490 = vmatmul.bf16.gmra.mxu0 %v1477
        %v1491 = vpop.f32.mrf.mxu0
        %v1492 = vadd.f32 0.0, %v1491
        %v1493 = vpop.f32.mrf.mxu0
        %1494 = vdwg.mxu0
        %v1495 = vmul.f32 %v1492, 0.17677669
        %v1496 = vsel %vm1093, %v1495, -inf
        %1497 = vmax.xlane.f32.xlu0 %v1496
        %v1498 = vpop.xlane.xlu0 %1497
        %v1499 = vsub.f32 %v1495, %v1498
        %v1500 = vmul.f32 %v1499, 1.442695
        %v1501 = vpow.pop %v1500
        %v1502 = vsel %vm1093, %v1501, 0.0
        %1503 = vadd.xlane.f32.xlu0 %v1502
        %v1504 = vpop.xlane.xlu0 %1503
        %v1505 = vrcp.pop %v1504
        %v1506 = vmul.f32 %v1501, %v1505
        %v1507 = vpack.c.bf16 %v1506, %v1506
        %1508 = vrot.lane.b32.xlu0 %v1303, 32
        %v1509 = vpop.permute.xlu0 %1508
        %v1511 = vsel %vm1106, %v1507, 0
        %v1514 = vsel %vm1110, %v1509, 0
        %1516 = vmatpush.bf16.msra.mxu0 0
        %1517 = vmatpush.bf16.msra.mxu0 0
        %1518 = vmatpush.bf16.msra.mxu0 0
        %1519 = vmatpush.bf16.msra.mxu0 0
        %1520 = vmatpush.bf16.msra.mxu0 0
        %1521 = vmatpush.bf16.msra.mxu0 0
        %1522 = vmatpush.bf16.msra.mxu0 0
        %1523 = vmatpush.bf16.msra.mxu0 %v1514
        %1524 = vmatmul.bf16.gmra.mxu0 %v1511
        %v1525 = vpop.f32.mrf.mxu0
        %v1526 = vadd.f32 0.0, %v1525
        %v1527 = vpop.f32.mrf.mxu0
        %1528 = vdwg.mxu0
        %1530 = vrot.lane.b32.xlu0 %v1184, 32
        %v1531 = vpop.permute.xlu0 %1530
        %1534 = vrot.lane.b32.xlu0 %v1241, 64
        %v1535 = vpop.permute.xlu0 %1534
        %1538 = vrot.lane.b32.xlu0 %v1298, 96
        %v1539 = vpop.permute.xlu0 %1538
        %1542 = vrot.lane.b32.xlu0 %v1412, 32
        %v1543 = vpop.permute.xlu0 %1542
        %1546 = vrot.lane.b32.xlu0 %v1469, 64
        %v1547 = vpop.permute.xlu0 %1546
        %1550 = vrot.lane.b32.xlu0 %v1526, 96
        %v1551 = vpop.permute.xlu0 %1550
        %v1553 = vsel %vm1072, %v1124, %v1531
        %vm1554 = vcmask 523264
        %v1555 = vsel %vm1554, %v1553, %v1535
        %vm1556 = vcmask 785408
        %v1557 = vsel %vm1556, %v1555, %v1539
        %v1558 = vsel %vm1072, %v1352, %v1543
        %v1559 = vsel %vm1554, %v1558, %v1547
        %v1560 = vsel %vm1556, %v1559, %v1551
        %v1561 = vpack.c.bf16 %v1557, %v1557
        %v1562 = vpack.c.bf16 %v1560, %v1560
        %v1563 = vld [vmem:[#allocation4] sm:$0xff]
        %v1564 = vld [vmem:[#allocation4 + $0x8] sm:$0xff]
        %v1565 = vld [vmem:[#allocation4 + $0x10] sm:$0xff]
        %v1566 = vld [vmem:[#allocation4 + $0x18] sm:$0xff]
        %v1567 = vld [vmem:[#allocation4 + $0x20] sm:$0xff]
        %v1568 = vld [vmem:[#allocation4 + $0x28] sm:$0xff]
        %v1569 = vld [vmem:[#allocation4 + $0x30] sm:$0xff]
        %v1570 = vld [vmem:[#allocation4 + $0x38] sm:$0xff]
        %v1571 = vld [vmem:[#allocation4 + $0x40] sm:$0xff]
        %v1572 = vld [vmem:[#allocation4 + $0x48] sm:$0xff]
        %v1573 = vld [vmem:[#allocation4 + $0x50] sm:$0xff]
        %v1574 = vld [vmem:[#allocation4 + $0x58] sm:$0xff]
        %v1575 = vld [vmem:[#allocation4 + $0x60] sm:$0xff]
        %v1576 = vld [vmem:[#allocation4 + $0x68] sm:$0xff]
        %v1577 = vld [vmem:[#allocation4 + $0x70] sm:$0xff]
        %v1578 = vld [vmem:[#allocation4 + $0x78] sm:$0xff]
        %v1579 = vld [vmem:[#allocation4 + $0x80] sm:$0xff]
        %v1580 = vld [vmem:[#allocation4 + $0x88] sm:$0xff]
        %v1581 = vld [vmem:[#allocation4 + $0x90] sm:$0xff]
        %v1582 = vld [vmem:[#allocation4 + $0x98] sm:$0xff]
        %v1583 = vld [vmem:[#allocation4 + $0xa0] sm:$0xff]
        %v1584 = vld [vmem:[#allocation4 + $0xa8] sm:$0xff]
        %v1585 = vld [vmem:[#allocation4 + $0xb0] sm:$0xff]
        %v1586 = vld [vmem:[#allocation4 + $0xb8] sm:$0xff]
        %v1587 = vld [vmem:[#allocation4 + $0xc0] sm:$0xff]
        %v1588 = vld [vmem:[#allocation4 + $0xc8] sm:$0xff]
        %v1589 = vld [vmem:[#allocation4 + $0xd0] sm:$0xff]
        %v1590 = vld [vmem:[#allocation4 + $0xd8] sm:$0xff]
        %v1591 = vld [vmem:[#allocation4 + $0xe0] sm:$0xff]
        %v1592 = vld [vmem:[#allocation4 + $0xe8] sm:$0xff]
        %v1593 = vld [vmem:[#allocation4 + $0xf0] sm:$0xff]
        %v1594 = vld [vmem:[#allocation4 + $0xf8] sm:$0xff]
        %v1595 = vld [vmem:[%s4] sm:$0x3]
        %v1597 = vperm.slane %v1595, 0
        %v1598 = vperm.slane %v1595, 1
        %v1633 = vunpack.c.l.b16 %v1563
        %v1634 = vunpack.c.h.b16 %v1563
        %v1635 = vunpack.c.l.b16 %v1564
        %v1636 = vunpack.c.h.b16 %v1564
        %v1637 = vunpack.c.l.b16 %v1565
        %v1638 = vunpack.c.h.b16 %v1565
        %v1639 = vunpack.c.l.b16 %v1566
        %v1640 = vunpack.c.h.b16 %v1566
        %v1641 = vunpack.c.l.b16 %v1567
        %v1642 = vunpack.c.h.b16 %v1567
        %v1643 = vunpack.c.l.b16 %v1568
        %v1644 = vunpack.c.h.b16 %v1568
        %v1645 = vunpack.c.l.b16 %v1569
        %v1646 = vunpack.c.h.b16 %v1569
        %v1647 = vunpack.c.l.b16 %v1570
        %v1648 = vunpack.c.h.b16 %v1570
        %v1649 = vunpack.c.l.b16 %v1571
        %v1650 = vunpack.c.h.b16 %v1571
        %v1651 = vunpack.c.l.b16 %v1572
        %v1652 = vunpack.c.h.b16 %v1572
        %v1653 = vunpack.c.l.b16 %v1573
        %v1654 = vunpack.c.h.b16 %v1573
        %v1655 = vunpack.c.l.b16 %v1574
        %v1656 = vunpack.c.h.b16 %v1574
        %v1657 = vunpack.c.l.b16 %v1575
        %v1658 = vunpack.c.h.b16 %v1575
        %v1659 = vunpack.c.l.b16 %v1576
        %v1660 = vunpack.c.h.b16 %v1576
        %v1661 = vunpack.c.l.b16 %v1577
        %v1662 = vunpack.c.h.b16 %v1577
        %v1663 = vunpack.c.l.b16 %v1578
        %v1664 = vunpack.c.h.b16 %v1578
        %v1665 = vunpack.c.l.b16 %v1579
        %v1666 = vunpack.c.h.b16 %v1579
        %v1667 = vunpack.c.l.b16 %v1580
        %v1668 = vunpack.c.h.b16 %v1580
        %v1669 = vunpack.c.l.b16 %v1581
        %v1670 = vunpack.c.h.b16 %v1581
        %v1671 = vunpack.c.l.b16 %v1582
        %v1672 = vunpack.c.h.b16 %v1582
        %v1673 = vunpack.c.l.b16 %v1583
        %v1674 = vunpack.c.h.b16 %v1583
        %v1675 = vunpack.c.l.b16 %v1584
        %v1676 = vunpack.c.h.b16 %v1584
        %v1677 = vunpack.c.l.b16 %v1585
        %v1678 = vunpack.c.h.b16 %v1585
        %v1679 = vunpack.c.l.b16 %v1586
        %v1680 = vunpack.c.h.b16 %v1586
        %v1681 = vunpack.c.l.b16 %v1587
        %v1682 = vunpack.c.h.b16 %v1587
        %v1683 = vunpack.c.l.b16 %v1588
        %v1684 = vunpack.c.h.b16 %v1588
        %v1685 = vunpack.c.l.b16 %v1589
        %v1686 = vunpack.c.h.b16 %v1589
        %v1687 = vunpack.c.l.b16 %v1590
        %v1688 = vunpack.c.h.b16 %v1590
        %v1689 = vunpack.c.l.b16 %v1591
        %v1690 = vunpack.c.h.b16 %v1591
        %v1691 = vunpack.c.l.b16 %v1592
        %v1692 = vunpack.c.h.b16 %v1592
        %v1693 = vunpack.c.l.b16 %v1593
        %v1694 = vunpack.c.h.b16 %v1593
        %v1695 = vunpack.c.l.b16 %v1594
        %v1696 = vunpack.c.h.b16 %v1594
        %v1697 = vpack.c.b16 %v1635, %v1633
        %v1698 = vpack.c.b16 %v1636, %v1634
        %v1699 = vpack.c.b16 %v1639, %v1637
        %v1700 = vpack.c.b16 %v1640, %v1638
        %v1701 = vpack.c.b16 %v1643, %v1641
        %v1702 = vpack.c.b16 %v1644, %v1642
        %v1703 = vpack.c.b16 %v1647, %v1645
        %v1704 = vpack.c.b16 %v1648, %v1646
        %v1705 = vpack.c.b16 %v1651, %v1649
        %v1706 = vpack.c.b16 %v1652, %v1650
        %v1707 = vpack.c.b16 %v1655, %v1653
        %v1708 = vpack.c.b16 %v1656, %v1654
        %v1709 = vpack.c.b16 %v1659, %v1657
        %v1710 = vpack.c.b16 %v1660, %v1658
        %v1711 = vpack.c.b16 %v1663, %v1661
        %v1712 = vpack.c.b16 %v1664, %v1662
        %v1713 = vpack.c.b16 %v1667, %v1665
        %v1714 = vpack.c.b16 %v1668, %v1666
        %v1715 = vpack.c.b16 %v1671, %v1669
        %v1716 = vpack.c.b16 %v1672, %v1670
        %v1717 = vpack.c.b16 %v1675, %v1673
        %v1718 = vpack.c.b16 %v1676, %v1674
        %v1719 = vpack.c.b16 %v1679, %v1677
        %v1720 = vpack.c.b16 %v1680, %v1678
        %v1721 = vpack.c.b16 %v1683, %v1681
        %v1722 = vpack.c.b16 %v1684, %v1682
        %v1723 = vpack.c.b16 %v1687, %v1685
        %v1724 = vpack.c.b16 %v1688, %v1686
        %v1725 = vpack.c.b16 %v1691, %v1689
        %v1726 = vpack.c.b16 %v1692, %v1690
        %v1727 = vpack.c.b16 %v1695, %v1693
        %v1728 = vpack.c.b16 %v1696, %v1694
        %1761 = vmatpush.bf16.msra.mxu0 %v1711
        %1762 = vmatpush.bf16.msra.mxu0 %v1709
        %1763 = vmatpush.bf16.msra.mxu0 %v1707
        %1764 = vmatpush.bf16.msra.mxu0 %v1705
        %1765 = vmatpush.bf16.msra.mxu0 %v1703
        %1766 = vmatpush.bf16.msra.mxu0 %v1701
        %1767 = vmatpush.bf16.msra.mxu0 %v1699
        %1768 = vmatpush.bf16.msra.mxu0 %v1697
        %1769 = vmatmul.bf16.gmra.mxu0 %v1561
        %v1770 = vpop.f32.mrf.mxu0
        %v1771 = vadd.f32 %v1597, %v1770
        %v1772 = vpop.f32.mrf.mxu0
        %1773 = vdwg.mxu0
        %1774 = vmatpush.bf16.msra.mxu0 %v1727
        %1775 = vmatpush.bf16.msra.mxu0 %v1725
        %1776 = vmatpush.bf16.msra.mxu0 %v1723
        %1777 = vmatpush.bf16.msra.mxu0 %v1721
        %1778 = vmatpush.bf16.msra.mxu0 %v1719
        %1779 = vmatpush.bf16.msra.mxu0 %v1717
        %1780 = vmatpush.bf16.msra.mxu0 %v1715
        %1781 = vmatpush.bf16.msra.mxu0 %v1713
        %1782 = vmatmul.bf16.gmra.mxu0 %v1562
        %v1783 = vpop.f32.mrf.mxu0
        %v1784 = vadd.f32 %v1771, %v1783
        %v1785 = vpop.f32.mrf.mxu0
        %1786 = vdwg.mxu0
        %1787 = vmatpush.bf16.msra.mxu0 %v1712
        %1788 = vmatpush.bf16.msra.mxu0 %v1710
        %1789 = vmatpush.bf16.msra.mxu0 %v1708
        %1790 = vmatpush.bf16.msra.mxu0 %v1706
        %1791 = vmatpush.bf16.msra.mxu0 %v1704
        %1792 = vmatpush.bf16.msra.mxu0 %v1702
        %1793 = vmatpush.bf16.msra.mxu0 %v1700
        %1794 = vmatpush.bf16.msra.mxu0 %v1698
        %1795 = vmatmul.bf16.gmra.mxu0 %v1561
        %v1796 = vpop.f32.mrf.mxu0
        %v1797 = vadd.f32 %v1598, %v1796
        %v1798 = vpop.f32.mrf.mxu0
        %1799 = vdwg.mxu0
        %1800 = vmatpush.bf16.msra.mxu0 %v1728
        %1801 = vmatpush.bf16.msra.mxu0 %v1726
        %1802 = vmatpush.bf16.msra.mxu0 %v1724
        %1803 = vmatpush.bf16.msra.mxu0 %v1722
        %1804 = vmatpush.bf16.msra.mxu0 %v1720
        %1805 = vmatpush.bf16.msra.mxu0 %v1718
        %1806 = vmatpush.bf16.msra.mxu0 %v1716
        %1807 = vmatpush.bf16.msra.mxu0 %v1714
        %1808 = vmatmul.bf16.gmra.mxu0 %v1562
        %v1809 = vpop.f32.mrf.mxu0
        %v1810 = vadd.f32 %v1797, %v1809
        %v1811 = vpop.f32.mrf.mxu0
        %1812 = vdwg.mxu0
        %v1815 = vrot.slane %v1810, 4
        %vm1816 = vcmask 1043456
        %v1817 = vsel %vm1816, %v1784, %v1815
        %v1819 = vadd.f32 %v314, %v1817
        %v1820 = vld [vmem:[%s5] sm:$0x3]
        %v1821 = vld [vmem:[%s6] sm:$0x3]
        %1823 = vst [vmem:[#allocation1] ss:$2 sm:$0xff] %v1819
        %v1824 = vld.sshfl [vmem:[#allocation1] sm:$0xff pattern:$0x75316420]
        %v1825 = vld.sshfl [vmem:[#allocation1 + $0x8] sm:$0xff pattern:$0x75316420]
        %v1828 = vsel %vm1816, %v1824, 0.0
        %v1829 = vsel %vm1816, %v1825, 0.0
        %v1830 = vadd.f32 %v1828, %v1829
        %1831 = vadd.xlane.f32.xlu0 %v1830
        %v1832 = vpop.xlane.xlu0 %1831
        %v1833 = vrcp.pop 256.0
        %v1834 = vmul.f32 256.0, %v1833
        %v1835 = vsub.f32 1.0, %v1834
        %v1836 = vmul.f32 %v1833, %v1835
        %v1837 = vadd.f32 %v1833, %v1836
        %vm1838 = vweird.f32 %v1833
        %v1839 = vsel %vm1838, %v1833, %v1837
        %v1840 = vmul.f32 %v1832, %v1839
        %v1843 = vunpack.c.l.s4 839922192
        %v1844 = vunpack.c.0.s8 %v1843
        %v1845 = vperm.slane %v1840, %v1844
        %v1847 = vsub.f32 %v1819, %v1845
        %v1848 = vmul.f32 %v1847, %v1847
        %1850 = vst [vmem:[#allocation1] ss:$2 sm:$0xff] %v1848
        %v1851 = vld.sshfl [vmem:[#allocation1] sm:$0xff pattern:$0x75316420]
        %v1852 = vld.sshfl [vmem:[#allocation1 + $0x8] sm:$0xff pattern:$0x75316420]
        %v1855 = vsel %vm1816, %v1851, 0.0
        %v1856 = vsel %vm1816, %v1852, 0.0
        %v1857 = vadd.f32 %v1855, %v1856
        %1858 = vadd.xlane.f32.xlu0 %v1857
        %v1859 = vpop.xlane.xlu0 %1858
        %v1860 = vmul.f32 %v1859, %v1839
        %v1861 = vadd.f32 %v1860, 1e-05
        %v1862 = vrsqrt.pop %v1861
        %v1863 = vmul.f32 %v1862, %v1861
        %v1864 = vmul.f32 %v1863, %v1862
        %v1865 = vmul.f32 0.5, %v1864
        %v1866 = vsub.f32 1.5, %v1865
        %v1867 = vmul.f32 %v1862, %v1866
        %vm1868 = vweird.f32 %v1861
        %vm1869 = vweird.f32 %v1862
        %vm1870 = vmor %vm1868, %vm1869
        %v1871 = vsel %vm1870, %v1862, %v1867
        %v1874 = vunpack.c.l.s4 839922192
        %v1875 = vunpack.c.0.s8 %v1874
        %v1876 = vperm.slane %v1871, %v1875
        %v1878 = vmul.f32 %v1847, %v1876
        %v1880 = vperm.slane %v1820, 0
        %v1881 = vperm.slane %v1820, 1
        %v1882 = vrot.slane %v1881, 4
        %v1883 = vsel %vm1816, %v1880, %v1882
        %v1885 = vmul.f32 %v1878, %v1883
        %v1887 = vperm.slane %v1821, 0
        %v1888 = vperm.slane %v1821, 1
        %v1889 = vrot.slane %v1888, 4
        %v1890 = vsel %vm1816, %v1887, %v1889
        %v1892 = vadd.f32 %v1885, %v1890
        %1893 = vst [vmem:[%s312] sm:$0xff] %v1892
        %p1894 = scmp.lt.s32.totalorder %s20, 1
        %s1895 = scalar_select %p1894, %s20, 1
        %s1896 = smul.addr %s1895, 2
        %s1897 = smul.addr %s1896, 4
        %s1898 = scalar_lea.vmem %s7, %s1897
        // Predicated region
        $region57: #{policy_transformer_forward.15} parent=47 // pred_check
          %p1899 = pneg %p190
        $region58: #{policy_transformer_forward.15} parent=47 // pred_check_branch
          %1901 = sbr.rel (%p1899) target = $region60
        $region59: #{policy_transformer_forward.15} parent=47 // pred_region
          _
        $region60: #{policy_transformer_forward.15} parent=47 // pred_fallthru
          _
      $region48: #{policy_transformer_forward.15} parent=5 // pred_fallthru
        _
      %p1902 = scmp.le.s32.totalorder 2, %s15
      // Predicated region
      $region61: #{policy_transformer_forward.15} parent=5 // pred_check
        %p1903 = pneg %p1902
      $region62: #{policy_transformer_forward.15} parent=5 // pred_check_branch
        %1905 = sbr.rel (%p1903) target = $region64
      $region63: #{policy_transformer_forward.15} parent=5 // pred_region
        %s1906 = ssub.s32 %s15, 2
        // Predicated region
        $region65: #{policy_transformer_forward.15} parent=63 // pred_check
          %p1907 = pneg %p196
        $region66: #{policy_transformer_forward.15} parent=63 // pred_check_branch
          %1909 = sbr.rel (%p1907) target = $region68
        $region67: #{policy_transformer_forward.15} parent=63 // pred_region
          %p1910 = scmp.lt.s32.totalorder %s21, 1
          %s1911 = scalar_select %p1910, %s21, 1
          %s1912 = smul.addr %s1911, 2
          %s1913 = smul.addr %s1912, 4
          %s1914 = scalar_lea.vmem %s7, %s1913
        $region68: #{policy_transformer_forward.15} parent=63 // pred_fallthru
          _
      $region64: #{policy_transformer_forward.15} parent=5 // pred_fallthru
        _
    $region6: #{policy_transformer_forward.15} parent=1 // loop_footer
      %s19 = sadd.s32 1, %s15
    $region7: #{policy_transformer_forward.15} parent=1 // loop_footer_branch
      %14 = sbr.rel target = $region3
    $region8: #{policy_transformer_forward.15} parent=1 // loop_exit
      _
    %1915 = vsyncpa [#allocation3], 1
    %s1916 = scalar_lea.sflag [#allocation3], 1
    %1917 = vsyncpa %s1916, 1
    %1918 = vsyncpa [#allocation5], 1

// kernel: policy_transformer_forward.14
$region0: #{policy_transformer_forward.14}
  #allocation0 [shape = 'u32[]', space=smem, size = 0x4, offset = 0x4, fixed_abs, tag = 'smem constant byte address 0x4 - core index']
  #allocation1 [shape = 'u32[72,128]{1,0:T(1,128)}', space=vmem, size = 0x9000, scoped, tag = 'internal scratch']
  %s0 = inlined_call_operand.vmem [shape: f32[2,4,256], index: 0, kind: input, shape index: {}]
  %s1 = inlined_call_operand.vmem [shape: bf16[256,1024], index: 1, kind: input, shape index: {}]
  %s2 = inlined_call_operand.vmem [shape: f32[1,1024], index: 2, kind: input, shape index: {}]
  %s3 = inlined_call_operand.vmem [shape: bf16[1024,256], index: 3, kind: input, shape index: {}]
  %s4 = inlined_call_operand.vmem [shape: f32[1,256], index: 4, kind: input, shape index: {}]
  %s5 = inlined_call_operand.vmem [shape: f32[1,256], index: 5, kind: input, shape index: {}]
  %s6 = inlined_call_operand.vmem [shape: f32[1,256], index: 6, kind: input, shape index: {}]
  %s7 = inlined_call_operand.vmem [shape: f32[2,4,256], index: 7, kind: output, shape index: {}]
  %s8 = sld [smem:[#allocation0]]
  $region61: #{policy_transformer_forward.14} parent=0
    _
  %s10 = ssub.s32 1, %s8
  %s11 = scalar_select 0, %s10, %s8
  loop: start=0, step=1, limit=4
  $region2: #{policy_transformer_forward.14} parent=0 // loop_pre_header
    _
  $region3: #{policy_transformer_forward.14} parent=0 // loop_header
    %s13 = sphi 0, %s17
    %p14 = scmp.ge.s32.totalorder %s13, 4
    %s23 = sphi 0, %s25
    %s26 = sphi 0, %s23
    %s27 = sphi 0, %s26
    %s43 = sphi 0, %s27
    %s47 = sphi 0, %s47
    %s49 = sphi 0, %s47
    %s50 = sphi 0, %s49
    %s64 = sphi 0, %s50
    %s68 = sphi 0, %s68
    %s70 = sphi 0, %s68
    %s71 = sphi 0, %s70
    %s85 = sphi 0, %s71
    %s89 = sphi 0, %s89
    %s91 = sphi 0, %s89
    %s92 = sphi 0, %s91
    %s106 = sphi 0, %s92
    %s110 = sphi 0, %s110
    %s112 = sphi 0, %s110
    %s113 = sphi 0, %s112
    %s127 = sphi 0, %s113
    %s131 = sphi 0, %s131
    %s133 = sphi 0, %s131
    %s134 = sphi 0, %s133
    %s148 = sphi 0, %s134
    %s152 = sphi 0, %s152
    %s154 = sphi 0, %s152
    %s155 = sphi 0, %s154
    %s169 = sphi 0, %s155
    %s175 = sphi 0, %s177
    %s178 = sphi 0, %s175
    %s179 = sphi 0, %s178
    %s195 = sphi 0, %s179
  $region4: #{policy_transformer_forward.14} parent=0 // loop_header_branch
    %16 = sbr.rel (%p14) target = $region8
  $region5: #{policy_transformer_forward.14} parent=0 // loop_body
    %s18 = ssub.s32 %s13, 1
    %s19 = ssub.s32 %s13, 2
    %s20 = sadd.s32 %s13, 1
    %s21 = ssub.s32 %s13, %s20
    %p22 = scmp.eq.s32.totalorder %s21, 0
    %s24 = sadd.s32 %s23, 1
    %s25 = scalar_select %p22, %s23, %s24
    %p28 = pneg %p22
    %p29 = scmp.eq.s32.totalorder %s13, 1
    %p30 = por %p28, %p29
    %p31 = scmp.ne.s32.totalorder %s23, %s26
    %p32 = scmp.eq.s32.totalorder %s13, 0
    %p33 = por %p31, %p32
    %p34 = scmp.ne.s32.totalorder %s23, %s26
    %p35 = scmp.eq.s32.totalorder %s18, 1
    %p36 = por %p34, %p35
    %p37 = scmp.ne.s32.totalorder %s26, %s27
    %p38 = scmp.eq.s32.totalorder %s18, 0
    %p39 = por %p37, %p38
    %p40 = scmp.ne.s32.totalorder %s26, %s27
    %p41 = scmp.eq.s32.totalorder %s19, 1
    %p42 = por %p40, %p41
    %p44 = scmp.ne.s32.totalorder %s27, %s43
    %p45 = scmp.eq.s32.totalorder %s19, 0
    %p46 = por %p44, %p45
    %s48 = sadd.s32 %s47, 1
    %p51 = scmp.eq.s32.totalorder %s13, 1
    %p52 = scmp.ne.s32.totalorder %s47, %s49
    %p53 = scmp.eq.s32.totalorder %s13, 0
    %p54 = por %p52, %p53
    %p55 = scmp.ne.s32.totalorder %s47, %s49
    %p56 = scmp.eq.s32.totalorder %s18, 1
    %p57 = por %p55, %p56
    %p58 = scmp.ne.s32.totalorder %s49, %s50
    %p59 = scmp.eq.s32.totalorder %s18, 0
    %p60 = por %p58, %p59
    %p61 = scmp.ne.s32.totalorder %s49, %s50
    %p62 = scmp.eq.s32.totalorder %s19, 1
    %p63 = por %p61, %p62
    %p65 = scmp.ne.s32.totalorder %s50, %s64
    %p66 = scmp.eq.s32.totalorder %s19, 0
    %p67 = por %p65, %p66
    %s69 = sadd.s32 %s68, 1
    %p72 = scmp.eq.s32.totalorder %s13, 1
    %p73 = scmp.ne.s32.totalorder %s68, %s70
    %p74 = scmp.eq.s32.totalorder %s13, 0
    %p75 = por %p73, %p74
    %p76 = scmp.ne.s32.totalorder %s68, %s70
    %p77 = scmp.eq.s32.totalorder %s18, 1
    %p78 = por %p76, %p77
    %p79 = scmp.ne.s32.totalorder %s70, %s71
    %p80 = scmp.eq.s32.totalorder %s18, 0
    %p81 = por %p79, %p80
    %p82 = scmp.ne.s32.totalorder %s70, %s71
    %p83 = scmp.eq.s32.totalorder %s19, 1
    %p84 = por %p82, %p83
    %p86 = scmp.ne.s32.totalorder %s71, %s85
    %p87 = scmp.eq.s32.totalorder %s19, 0
    %p88 = por %p86, %p87
    %s90 = sadd.s32 %s89, 1
    %p93 = scmp.eq.s32.totalorder %s13, 1
    %p94 = scmp.ne.s32.totalorder %s89, %s91
    %p95 = scmp.eq.s32.totalorder %s13, 0
    %p96 = por %p94, %p95
    %p97 = scmp.ne.s32.totalorder %s89, %s91
    %p98 = scmp.eq.s32.totalorder %s18, 1
    %p99 = por %p97, %p98
    %p100 = scmp.ne.s32.totalorder %s91, %s92
    %p101 = scmp.eq.s32.totalorder %s18, 0
    %p102 = por %p100, %p101
    %p103 = scmp.ne.s32.totalorder %s91, %s92
    %p104 = scmp.eq.s32.totalorder %s19, 1
    %p105 = por %p103, %p104
    %p107 = scmp.ne.s32.totalorder %s92, %s106
    %p108 = scmp.eq.s32.totalorder %s19, 0
    %p109 = por %p107, %p108
    %s111 = sadd.s32 %s110, 1
    %p114 = scmp.eq.s32.totalorder %s13, 1
    %p115 = scmp.ne.s32.totalorder %s110, %s112
    %p116 = scmp.eq.s32.totalorder %s13, 0
    %p117 = por %p115, %p116
    %p118 = scmp.ne.s32.totalorder %s110, %s112
    %p119 = scmp.eq.s32.totalorder %s18, 1
    %p120 = por %p118, %p119
    %p121 = scmp.ne.s32.totalorder %s112, %s113
    %p122 = scmp.eq.s32.totalorder %s18, 0
    %p123 = por %p121, %p122
    %p124 = scmp.ne.s32.totalorder %s112, %s113
    %p125 = scmp.eq.s32.totalorder %s19, 1
    %p126 = por %p124, %p125
    %p128 = scmp.ne.s32.totalorder %s113, %s127
    %p129 = scmp.eq.s32.totalorder %s19, 0
    %p130 = por %p128, %p129
    %s132 = sadd.s32 %s131, 1
    %p135 = scmp.eq.s32.totalorder %s13, 1
    %p136 = scmp.ne.s32.totalorder %s131, %s133
    %p137 = scmp.eq.s32.totalorder %s13, 0
    %p138 = por %p136, %p137
    %p139 = scmp.ne.s32.totalorder %s131, %s133
    %p140 = scmp.eq.s32.totalorder %s18, 1
    %p141 = por %p139, %p140
    %p142 = scmp.ne.s32.totalorder %s133, %s134
    %p143 = scmp.eq.s32.totalorder %s18, 0
    %p144 = por %p142, %p143
    %p145 = scmp.ne.s32.totalorder %s133, %s134
    %p146 = scmp.eq.s32.totalorder %s19, 1
    %p147 = por %p145, %p146
    %p149 = scmp.ne.s32.totalorder %s134, %s148
    %p150 = scmp.eq.s32.totalorder %s19, 0
    %p151 = por %p149, %p150
    %s153 = sadd.s32 %s152, 1
    %p156 = scmp.eq.s32.totalorder %s13, 1
    %p157 = scmp.ne.s32.totalorder %s152, %s154
    %p158 = scmp.eq.s32.totalorder %s13, 0
    %p159 = por %p157, %p158
    %p160 = scmp.ne.s32.totalorder %s152, %s154
    %p161 = scmp.eq.s32.totalorder %s18, 1
    %p162 = por %p160, %p161
    %p163 = scmp.ne.s32.totalorder %s154, %s155
    %p164 = scmp.eq.s32.totalorder %s18, 0
    %p165 = por %p163, %p164
    %p166 = scmp.ne.s32.totalorder %s154, %s155
    %p167 = scmp.eq.s32.totalorder %s19, 1
    %p168 = por %p166, %p167
    %p170 = scmp.ne.s32.totalorder %s155, %s169
    %p171 = scmp.eq.s32.totalorder %s19, 0
    %p172 = por %p170, %p171
    %s173 = ssub.s32 %s13, %s20
    %p174 = scmp.eq.s32.totalorder %s173, 0
    %s176 = sadd.s32 %s175, 1
    %s177 = scalar_select %p174, %s175, %s176
    %p180 = pneg %p174
    %p181 = scmp.eq.s32.totalorder %s13, 1
    %p182 = por %p180, %p181
    %p183 = scmp.ne.s32.totalorder %s175, %s178
    %p184 = scmp.eq.s32.totalorder %s13, 0
    %p185 = por %p183, %p184
    %p186 = scmp.ne.s32.totalorder %s175, %s178
    %p187 = scmp.eq.s32.totalorder %s18, 1
    %p188 = por %p186, %p187
    %p189 = scmp.ne.s32.totalorder %s178, %s179
    %p190 = scmp.eq.s32.totalorder %s18, 0
    %p191 = por %p189, %p190
    %p192 = scmp.ne.s32.totalorder %s178, %s179
    %p193 = scmp.eq.s32.totalorder %s19, 1
    %p194 = por %p192, %p193
    %p196 = scmp.ne.s32.totalorder %s179, %s195
    %p197 = scmp.eq.s32.totalorder %s19, 0
    %p198 = por %p196, %p197
    %p199 = scmp.le.s32.totalorder 1, %s13
    %p200 = scmp.lt.s32.totalorder %s13, 3
    %p201 = pnand %p199, %p200
    %p202 = pneg %p201
    // Predicated region
    $region9: #{policy_transformer_forward.14} parent=5 // pred_check
      _
    $region10: #{policy_transformer_forward.14} parent=5 // pred_check_branch
      %204 = sbr.rel (%p201) target = $region12
    $region11: #{policy_transformer_forward.14} parent=5 // pred_region
      %s205 = ssub.s32 %s13, 1
      // Predicated region
      $region13: #{policy_transformer_forward.14} parent=11 // pred_check
        %p206 = pneg %p60
      $region14: #{policy_transformer_forward.14} parent=11 // pred_check_branch
        %208 = sbr.rel (%p206) target = $region16
      $region15: #{policy_transformer_forward.14} parent=11 // pred_region
        _
      $region16: #{policy_transformer_forward.14} parent=11 // pred_fallthru
        _
      // Predicated region
      $region17: #{policy_transformer_forward.14} parent=11 // pred_check
        %p209 = pneg %p81
      $region18: #{policy_transformer_forward.14} parent=11 // pred_check_branch
        %211 = sbr.rel (%p209) target = $region20
      $region19: #{policy_transformer_forward.14} parent=11 // pred_region
        _
      $region20: #{policy_transformer_forward.14} parent=11 // pred_fallthru
        _
      // Predicated region
      $region21: #{policy_transformer_forward.14} parent=11 // pred_check
        %p212 = pneg %p102
      $region22: #{policy_transformer_forward.14} parent=11 // pred_check_branch
        %214 = sbr.rel (%p212) target = $region24
      $region23: #{policy_transformer_forward.14} parent=11 // pred_region
        _
      $region24: #{policy_transformer_forward.14} parent=11 // pred_fallthru
        _
      // Predicated region
      $region25: #{policy_transformer_forward.14} parent=11 // pred_check
        %p215 = pneg %p123
      $region26: #{policy_transformer_forward.14} parent=11 // pred_check_branch
        %217 = sbr.rel (%p215) target = $region28
      $region27: #{policy_transformer_forward.14} parent=11 // pred_region
        _
      $region28: #{policy_transformer_forward.14} parent=11 // pred_fallthru
        _
      // Predicated region
      $region29: #{policy_transformer_forward.14} parent=11 // pred_check
        %p218 = pneg %p144
      $region30: #{policy_transformer_forward.14} parent=11 // pred_check_branch
        %220 = sbr.rel (%p218) target = $region32
      $region31: #{policy_transformer_forward.14} parent=11 // pred_region
        _
      $region32: #{policy_transformer_forward.14} parent=11 // pred_fallthru
        _
      // Predicated region
      $region33: #{policy_transformer_forward.14} parent=11 // pred_check
        %p221 = pneg %p165
      $region34: #{policy_transformer_forward.14} parent=11 // pred_check_branch
        %223 = sbr.rel (%p221) target = $region36
      $region35: #{policy_transformer_forward.14} parent=11 // pred_region
        _
      $region36: #{policy_transformer_forward.14} parent=11 // pred_fallthru
        _
    $region12: #{policy_transformer_forward.14} parent=5 // pred_fallthru
      _
    %p224 = scmp.lt.s32.totalorder %s13, 2
    // Predicated region
    $region37: #{policy_transformer_forward.14} parent=5 // pred_check
      %p225 = pneg %p224
    $region38: #{policy_transformer_forward.14} parent=5 // pred_check_branch
      %227 = sbr.rel (%p225) target = $region40
    $region39: #{policy_transformer_forward.14} parent=5 // pred_region
      // Predicated region
      $region41: #{policy_transformer_forward.14} parent=39 // pred_check
        %p228 = pneg %p33
      $region42: #{policy_transformer_forward.14} parent=39 // pred_check_branch
        %230 = sbr.rel (%p228) target = $region44
      $region43: #{policy_transformer_forward.14} parent=39 // pred_region
        %p231 = scmp.lt.s32.totalorder %s13, 1
        %s232 = scalar_select %p231, %s13, 1
        %s233 = smul.addr %s232, 2
        %s234 = smul.addr %s233, 4
        %s235 = scalar_lea.vmem %s0, %s234
      $region44: #{policy_transformer_forward.14} parent=39 // pred_fallthru
        _
    $region40: #{policy_transformer_forward.14} parent=5 // pred_fallthru
      _
    %p236 = scmp.le.s32.totalorder 1, %s13
    %p237 = scmp.lt.s32.totalorder %s13, 3
    %p238 = pnand %p236, %p237
    %p239 = pneg %p238
    // Predicated region
    $region45: #{policy_transformer_forward.14} parent=5 // pred_check
      _
    $region46: #{policy_transformer_forward.14} parent=5 // pred_check_branch
      %241 = sbr.rel (%p238) target = $region48
    $region47: #{policy_transformer_forward.14} parent=5 // pred_region
      %s242 = ssub.s32 %s13, 1
      %p243 = scmp.lt.s32.totalorder %s18, 1
      %s244 = scalar_select %p243, %s18, 1
      %s245 = smul.addr %s244, 2
      %s246 = smul.addr %s245, 4
      %s247 = scalar_lea.vmem %s0, %s246
      %p248 = pneg %p39
      %p249 = pneg %p36
      %p250 = pneg %p60
      %p251 = pneg %p57
      %p252 = pneg %p81
      %p253 = pneg %p78
      %p254 = pneg %p102
      %p255 = pneg %p99
      %p256 = pneg %p123
      %p257 = pneg %p120
      %p258 = pneg %p144
      %p259 = pneg %p141
      %p260 = pneg %p165
      %p261 = pneg %p162
      %p262 = pneg %p191
      %p263 = pneg %p188
      %p264 = scmp.lt.s32.totalorder %s18, 1
      %s265 = scalar_select %p264, %s18, 1
      %s266 = smul.addr %s265, 2
      %s267 = smul.addr %s266, 4
      %s268 = scalar_lea.vmem %s7, %s267
      %p269 = scmp.lt.s32.totalorder %s18, 1
      %s270 = scalar_select %p269, %s18, 1
      %s271 = smul.addr %s270, 2
      %s272 = smul.addr %s271, 4
      %s273 = scalar_lea.vmem %s0, %s272
      %p274 = scmp.lt.s32.totalorder %s18, 1
      %s275 = scalar_select %p274, %s18, 1
      %s276 = smul.addr %s275, 2
      %s277 = smul.addr %s276, 4
      %s278 = scalar_lea.vmem %s7, %s277
      %v279 = vld [vmem:[%s273] sm:$0xff]
      %281 = vst [vmem:[#allocation1] ss:$2 sm:$0xff] %v279
      %v282 = vld.sshfl [vmem:[#allocation1] sm:$0xff pattern:$0x75316420]
      %v283 = vld.sshfl [vmem:[#allocation1 + $0x8] sm:$0xff pattern:$0x75316420]
      %v286 = vpack.c.bf16 %v282, %v282
      %v287 = vpack.c.bf16 %v283, %v283
      %v288 = vld [vmem:[%s1] sm:$0xff]
      %v289 = vld [vmem:[%s1 + $0x8] sm:$0xff]
      %v290 = vld [vmem:[%s1 + $0x10] sm:$0xff]
      %v291 = vld [vmem:[%s1 + $0x18] sm:$0xff]
      %v292 = vld [vmem:[%s1 + $0x20] sm:$0xff]
      %v293 = vld [vmem:[%s1 + $0x28] sm:$0xff]
      %v294 = vld [vmem:[%s1 + $0x30] sm:$0xff]
      %v295 = vld [vmem:[%s1 + $0x38] sm:$0xff]
      %v296 = vld [vmem:[%s1 + $0x40] sm:$0xff]
      %v297 = vld [vmem:[%s1 + $0x48] sm:$0xff]
      %v298 = vld [vmem:[%s1 + $0x50] sm:$0xff]
      %v299 = vld [vmem:[%s1 + $0x58] sm:$0xff]
      %v300 = vld [vmem:[%s1 + $0x60] sm:$0xff]
      %v301 = vld [vmem:[%s1 + $0x68] sm:$0xff]
      %v302 = vld [vmem:[%s1 + $0x70] sm:$0xff]
      %v303 = vld [vmem:[%s1 + $0x78] sm:$0xff]
      %v304 = vld [vmem:[%s1 + $0x80] sm:$0xff]
      %v305 = vld [vmem:[%s1 + $0x88] sm:$0xff]
      %v306 = vld [vmem:[%s1 + $0x90] sm:$0xff]
      %v307 = vld [vmem:[%s1 + $0x98] sm:$0xff]
      %v308 = vld [vmem:[%s1 + $0xa0] sm:$0xff]
      %v309 = vld [vmem:[%s1 + $0xa8] sm:$0xff]
      %v310 = vld [vmem:[%s1 + $0xb0] sm:$0xff]
      %v311 = vld [vmem:[%s1 + $0xb8] sm:$0xff]
      %v312 = vld [vmem:[%s1 + $0xc0] sm:$0xff]
      %v313 = vld [vmem:[%s1 + $0xc8] sm:$0xff]
      %v314 = vld [vmem:[%s1 + $0xd0] sm:$0xff]
      %v315 = vld [vmem:[%s1 + $0xd8] sm:$0xff]
      %v316 = vld [vmem:[%s1 + $0xe0] sm:$0xff]
      %v317 = vld [vmem:[%s1 + $0xe8] sm:$0xff]
      %v318 = vld [vmem:[%s1 + $0xf0] sm:$0xff]
      %v319 = vld [vmem:[%s1 + $0xf8] sm:$0xff]
      %v320 = vld [vmem:[%s1 + $0x100] sm:$0xff]
      %v321 = vld [vmem:[%s1 + $0x108] sm:$0xff]
      %v322 = vld [vmem:[%s1 + $0x110] sm:$0xff]
      %v323 = vld [vmem:[%s1 + $0x118] sm:$0xff]
      %v324 = vld [vmem:[%s1 + $0x120] sm:$0xff]
      %v325 = vld [vmem:[%s1 + $0x128] sm:$0xff]
      %v326 = vld [vmem:[%s1 + $0x130] sm:$0xff]
      %v327 = vld [vmem:[%s1 + $0x138] sm:$0xff]
      %v328 = vld [vmem:[%s1 + $0x140] sm:$0xff]
      %v329 = vld [vmem:[%s1 + $0x148] sm:$0xff]
      %v330 = vld [vmem:[%s1 + $0x150] sm:$0xff]
      %v331 = vld [vmem:[%s1 + $0x158] sm:$0xff]
      %v332 = vld [vmem:[%s1 + $0x160] sm:$0xff]
      %v333 = vld [vmem:[%s1 + $0x168] sm:$0xff]
      %v334 = vld [vmem:[%s1 + $0x170] sm:$0xff]
      %v335 = vld [vmem:[%s1 + $0x178] sm:$0xff]
      %v336 = vld [vmem:[%s1 + $0x180] sm:$0xff]
      %v337 = vld [vmem:[%s1 + $0x188] sm:$0xff]
      %v338 = vld [vmem:[%s1 + $0x190] sm:$0xff]
      %v339 = vld [vmem:[%s1 + $0x198] sm:$0xff]
      %v340 = vld [vmem:[%s1 + $0x1a0] sm:$0xff]
      %v341 = vld [vmem:[%s1 + $0x1a8] sm:$0xff]
      %v342 = vld [vmem:[%s1 + $0x1b0] sm:$0xff]
      %v343 = vld [vmem:[%s1 + $0x1b8] sm:$0xff]
      %v344 = vld [vmem:[%s1 + $0x1c0] sm:$0xff]
      %v345 = vld [vmem:[%s1 + $0x1c8] sm:$0xff]
      %v346 = vld [vmem:[%s1 + $0x1d0] sm:$0xff]
      %v347 = vld [vmem:[%s1 + $0x1d8] sm:$0xff]
      %v348 = vld [vmem:[%s1 + $0x1e0] sm:$0xff]
      %v349 = vld [vmem:[%s1 + $0x1e8] sm:$0xff]
      %v350 = vld [vmem:[%s1 + $0x1f0] sm:$0xff]
      %v351 = vld [vmem:[%s1 + $0x1f8] sm:$0xff]
      %v352 = vld [vmem:[%s1 + $0x200] sm:$0xff]
      %v353 = vld [vmem:[%s1 + $0x208] sm:$0xff]
      %v354 = vld [vmem:[%s1 + $0x210] sm:$0xff]
      %v355 = vld [vmem:[%s1 + $0x218] sm:$0xff]
      %v356 = vld [vmem:[%s1 + $0x220] sm:$0xff]
      %v357 = vld [vmem:[%s1 + $0x228] sm:$0xff]
      %v358 = vld [vmem:[%s1 + $0x230] sm:$0xff]
      %v359 = vld [vmem:[%s1 + $0x238] sm:$0xff]
      %v360 = vld [vmem:[%s1 + $0x240] sm:$0xff]
      %v361 = vld [vmem:[%s1 + $0x248] sm:$0xff]
      %v362 = vld [vmem:[%s1 + $0x250] sm:$0xff]
      %v363 = vld [vmem:[%s1 + $0x258] sm:$0xff]
      %v364 = vld [vmem:[%s1 + $0x260] sm:$0xff]
      %v365 = vld [vmem:[%s1 + $0x268] sm:$0xff]
      %v366 = vld [vmem:[%s1 + $0x270] sm:$0xff]
      %v367 = vld [vmem:[%s1 + $0x278] sm:$0xff]
      %v368 = vld [vmem:[%s1 + $0x280] sm:$0xff]
      %v369 = vld [vmem:[%s1 + $0x288] sm:$0xff]
      %v370 = vld [vmem:[%s1 + $0x290] sm:$0xff]
      %v371 = vld [vmem:[%s1 + $0x298] sm:$0xff]
      %v372 = vld [vmem:[%s1 + $0x2a0] sm:$0xff]
      %v373 = vld [vmem:[%s1 + $0x2a8] sm:$0xff]
      %v374 = vld [vmem:[%s1 + $0x2b0] sm:$0xff]
      %v375 = vld [vmem:[%s1 + $0x2b8] sm:$0xff]
      %v376 = vld [vmem:[%s1 + $0x2c0] sm:$0xff]
      %v377 = vld [vmem:[%s1 + $0x2c8] sm:$0xff]
      %v378 = vld [vmem:[%s1 + $0x2d0] sm:$0xff]
      %v379 = vld [vmem:[%s1 + $0x2d8] sm:$0xff]
      %v380 = vld [vmem:[%s1 + $0x2e0] sm:$0xff]
      %v381 = vld [vmem:[%s1 + $0x2e8] sm:$0xff]
      %v382 = vld [vmem:[%s1 + $0x2f0] sm:$0xff]
      %v383 = vld [vmem:[%s1 + $0x2f8] sm:$0xff]
      %v384 = vld [vmem:[%s1 + $0x300] sm:$0xff]
      %v385 = vld [vmem:[%s1 + $0x308] sm:$0xff]
      %v386 = vld [vmem:[%s1 + $0x310] sm:$0xff]
      %v387 = vld [vmem:[%s1 + $0x318] sm:$0xff]
      %v388 = vld [vmem:[%s1 + $0x320] sm:$0xff]
      %v389 = vld [vmem:[%s1 + $0x328] sm:$0xff]
      %v390 = vld [vmem:[%s1 + $0x330] sm:$0xff]
      %v391 = vld [vmem:[%s1 + $0x338] sm:$0xff]
      %v392 = vld [vmem:[%s1 + $0x340] sm:$0xff]
      %v393 = vld [vmem:[%s1 + $0x348] sm:$0xff]
      %v394 = vld [vmem:[%s1 + $0x350] sm:$0xff]
      %v395 = vld [vmem:[%s1 + $0x358] sm:$0xff]
      %v396 = vld [vmem:[%s1 + $0x360] sm:$0xff]
      %v397 = vld [vmem:[%s1 + $0x368] sm:$0xff]
      %v398 = vld [vmem:[%s1 + $0x370] sm:$0xff]
      %v399 = vld [vmem:[%s1 + $0x378] sm:$0xff]
      %v400 = vld [vmem:[%s1 + $0x380] sm:$0xff]
      %v401 = vld [vmem:[%s1 + $0x388] sm:$0xff]
      %v402 = vld [vmem:[%s1 + $0x390] sm:$0xff]
      %v403 = vld [vmem:[%s1 + $0x398] sm:$0xff]
      %v404 = vld [vmem:[%s1 + $0x3a0] sm:$0xff]
      %v405 = vld [vmem:[%s1 + $0x3a8] sm:$0xff]
      %v406 = vld [vmem:[%s1 + $0x3b0] sm:$0xff]
      %v407 = vld [vmem:[%s1 + $0x3b8] sm:$0xff]
      %v408 = vld [vmem:[%s1 + $0x3c0] sm:$0xff]
      %v409 = vld [vmem:[%s1 + $0x3c8] sm:$0xff]
      %v410 = vld [vmem:[%s1 + $0x3d0] sm:$0xff]
      %v411 = vld [vmem:[%s1 + $0x3d8] sm:$0xff]
      %v412 = vld [vmem:[%s1 + $0x3e0] sm:$0xff]
      %v413 = vld [vmem:[%s1 + $0x3e8] sm:$0xff]
      %v414 = vld [vmem:[%s1 + $0x3f0] sm:$0xff]
      %v415 = vld [vmem:[%s1 + $0x3f8] sm:$0xff]
      %v416 = vld [vmem:[%s2] sm:$0xff]
      %v418 = vperm.slane %v416, 0
      %v419 = vperm.slane %v416, 1
      %v420 = vperm.slane %v416, 2
      %v421 = vperm.slane %v416, 3
      %v422 = vperm.slane %v416, 4
      %v423 = vperm.slane %v416, 5
      %v424 = vperm.slane %v416, 6
      %v425 = vperm.slane %v416, 7
      %v562 = vunpack.c.l.b16 %v288
      %v563 = vunpack.c.h.b16 %v288
      %v564 = vunpack.c.l.b16 %v289
      %v565 = vunpack.c.h.b16 %v289
      %v566 = vunpack.c.l.b16 %v290
      %v567 = vunpack.c.h.b16 %v290
      %v568 = vunpack.c.l.b16 %v291
      %v569 = vunpack.c.h.b16 %v291
      %v570 = vunpack.c.l.b16 %v292
      %v571 = vunpack.c.h.b16 %v292
      %v572 = vunpack.c.l.b16 %v293
      %v573 = vunpack.c.h.b16 %v293
      %v574 = vunpack.c.l.b16 %v294
      %v575 = vunpack.c.h.b16 %v294
      %v576 = vunpack.c.l.b16 %v295
      %v577 = vunpack.c.h.b16 %v295
      %v578 = vunpack.c.l.b16 %v296
      %v579 = vunpack.c.h.b16 %v296
      %v580 = vunpack.c.l.b16 %v297
      %v581 = vunpack.c.h.b16 %v297
      %v582 = vunpack.c.l.b16 %v298
      %v583 = vunpack.c.h.b16 %v298
      %v584 = vunpack.c.l.b16 %v299
      %v585 = vunpack.c.h.b16 %v299
      %v586 = vunpack.c.l.b16 %v300
      %v587 = vunpack.c.h.b16 %v300
      %v588 = vunpack.c.l.b16 %v301
      %v589 = vunpack.c.h.b16 %v301
      %v590 = vunpack.c.l.b16 %v302
      %v591 = vunpack.c.h.b16 %v302
      %v592 = vunpack.c.l.b16 %v303
      %v593 = vunpack.c.h.b16 %v303
      %v594 = vunpack.c.l.b16 %v304
      %v595 = vunpack.c.h.b16 %v304
      %v596 = vunpack.c.l.b16 %v305
      %v597 = vunpack.c.h.b16 %v305
      %v598 = vunpack.c.l.b16 %v306
      %v599 = vunpack.c.h.b16 %v306
      %v600 = vunpack.c.l.b16 %v307
      %v601 = vunpack.c.h.b16 %v307
      %v602 = vunpack.c.l.b16 %v308
      %v603 = vunpack.c.h.b16 %v308
      %v604 = vunpack.c.l.b16 %v309
      %v605 = vunpack.c.h.b16 %v309
      %v606 = vunpack.c.l.b16 %v310
      %v607 = vunpack.c.h.b16 %v310
      %v608 = vunpack.c.l.b16 %v311
      %v609 = vunpack.c.h.b16 %v311
      %v610 = vunpack.c.l.b16 %v312
      %v611 = vunpack.c.h.b16 %v312
      %v612 = vunpack.c.l.b16 %v313
      %v613 = vunpack.c.h.b16 %v313
      %v614 = vunpack.c.l.b16 %v314
      %v615 = vunpack.c.h.b16 %v314
      %v616 = vunpack.c.l.b16 %v315
      %v617 = vunpack.c.h.b16 %v315
      %v618 = vunpack.c.l.b16 %v316
      %v619 = vunpack.c.h.b16 %v316
      %v620 = vunpack.c.l.b16 %v317
      %v621 = vunpack.c.h.b16 %v317
      %v622 = vunpack.c.l.b16 %v318
      %v623 = vunpack.c.h.b16 %v318
      %v624 = vunpack.c.l.b16 %v319
      %v625 = vunpack.c.h.b16 %v319
      %v626 = vunpack.c.l.b16 %v320
      %v627 = vunpack.c.h.b16 %v320
      %v628 = vunpack.c.l.b16 %v321
      %v629 = vunpack.c.h.b16 %v321
      %v630 = vunpack.c.l.b16 %v322
      %v631 = vunpack.c.h.b16 %v322
      %v632 = vunpack.c.l.b16 %v323
      %v633 = vunpack.c.h.b16 %v323
      %v634 = vunpack.c.l.b16 %v324
      %v635 = vunpack.c.h.b16 %v324
      %v636 = vunpack.c.l.b16 %v325
      %v637 = vunpack.c.h.b16 %v325
      %v638 = vunpack.c.l.b16 %v326
      %v639 = vunpack.c.h.b16 %v326
      %v640 = vunpack.c.l.b16 %v327
      %v641 = vunpack.c.h.b16 %v327
      %v642 = vunpack.c.l.b16 %v328
      %v643 = vunpack.c.h.b16 %v328
      %v644 = vunpack.c.l.b16 %v329
      %v645 = vunpack.c.h.b16 %v329
      %v646 = vunpack.c.l.b16 %v330
      %v647 = vunpack.c.h.b16 %v330
      %v648 = vunpack.c.l.b16 %v331
      %v649 = vunpack.c.h.b16 %v331
      %v650 = vunpack.c.l.b16 %v332
      %v651 = vunpack.c.h.b16 %v332
      %v652 = vunpack.c.l.b16 %v333
      %v653 = vunpack.c.h.b16 %v333
      %v654 = vunpack.c.l.b16 %v334
      %v655 = vunpack.c.h.b16 %v334
      %v656 = vunpack.c.l.b16 %v335
      %v657 = vunpack.c.h.b16 %v335
      %v658 = vunpack.c.l.b16 %v336
      %v659 = vunpack.c.h.b16 %v336
      %v660 = vunpack.c.l.b16 %v337
      %v661 = vunpack.c.h.b16 %v337
      %v662 = vunpack.c.l.b16 %v338
      %v663 = vunpack.c.h.b16 %v338
      %v664 = vunpack.c.l.b16 %v339
      %v665 = vunpack.c.h.b16 %v339
      %v666 = vunpack.c.l.b16 %v340
      %v667 = vunpack.c.h.b16 %v340
      %v668 = vunpack.c.l.b16 %v341
      %v669 = vunpack.c.h.b16 %v341
      %v670 = vunpack.c.l.b16 %v342
      %v671 = vunpack.c.h.b16 %v342
      %v672 = vunpack.c.l.b16 %v343
      %v673 = vunpack.c.h.b16 %v343
      %v674 = vunpack.c.l.b16 %v344
      %v675 = vunpack.c.h.b16 %v344
      %v676 = vunpack.c.l.b16 %v345
      %v677 = vunpack.c.h.b16 %v345
      %v678 = vunpack.c.l.b16 %v346
      %v679 = vunpack.c.h.b16 %v346
      %v680 = vunpack.c.l.b16 %v347
      %v681 = vunpack.c.h.b16 %v347
      %v682 = vunpack.c.l.b16 %v348
      %v683 = vunpack.c.h.b16 %v348
      %v684 = vunpack.c.l.b16 %v349
      %v685 = vunpack.c.h.b16 %v349
      %v686 = vunpack.c.l.b16 %v350
      %v687 = vunpack.c.h.b16 %v350
      %v688 = vunpack.c.l.b16 %v351
      %v689 = vunpack.c.h.b16 %v351
      %v690 = vunpack.c.l.b16 %v352
      %v691 = vunpack.c.h.b16 %v352
      %v692 = vunpack.c.l.b16 %v353
      %v693 = vunpack.c.h.b16 %v353
      %v694 = vunpack.c.l.b16 %v354
      %v695 = vunpack.c.h.b16 %v354
      %v696 = vunpack.c.l.b16 %v355
      %v697 = vunpack.c.h.b16 %v355
      %v698 = vunpack.c.l.b16 %v356
      %v699 = vunpack.c.h.b16 %v356
      %v700 = vunpack.c.l.b16 %v357
      %v701 = vunpack.c.h.b16 %v357
      %v702 = vunpack.c.l.b16 %v358
      %v703 = vunpack.c.h.b16 %v358
      %v704 = vunpack.c.l.b16 %v359
      %v705 = vunpack.c.h.b16 %v359
      %v706 = vunpack.c.l.b16 %v360
      %v707 = vunpack.c.h.b16 %v360
      %v708 = vunpack.c.l.b16 %v361
      %v709 = vunpack.c.h.b16 %v361
      %v710 = vunpack.c.l.b16 %v362
      %v711 = vunpack.c.h.b16 %v362
      %v712 = vunpack.c.l.b16 %v363
      %v713 = vunpack.c.h.b16 %v363
      %v714 = vunpack.c.l.b16 %v364
      %v715 = vunpack.c.h.b16 %v364
      %v716 = vunpack.c.l.b16 %v365
      %v717 = vunpack.c.h.b16 %v365
      %v718 = vunpack.c.l.b16 %v366
      %v719 = vunpack.c.h.b16 %v366
      %v720 = vunpack.c.l.b16 %v367
      %v721 = vunpack.c.h.b16 %v367
      %v722 = vunpack.c.l.b16 %v368
      %v723 = vunpack.c.h.b16 %v368
      %v724 = vunpack.c.l.b16 %v369
      %v725 = vunpack.c.h.b16 %v369
      %v726 = vunpack.c.l.b16 %v370
      %v727 = vunpack.c.h.b16 %v370
      %v728 = vunpack.c.l.b16 %v371
      %v729 = vunpack.c.h.b16 %v371
      %v730 = vunpack.c.l.b16 %v372
      %v731 = vunpack.c.h.b16 %v372
      %v732 = vunpack.c.l.b16 %v373
      %v733 = vunpack.c.h.b16 %v373
      %v734 = vunpack.c.l.b16 %v374
      %v735 = vunpack.c.h.b16 %v374
      %v736 = vunpack.c.l.b16 %v375
      %v737 = vunpack.c.h.b16 %v375
      %v738 = vunpack.c.l.b16 %v376
      %v739 = vunpack.c.h.b16 %v376
      %v740 = vunpack.c.l.b16 %v377
      %v741 = vunpack.c.h.b16 %v377
      %v742 = vunpack.c.l.b16 %v378
      %v743 = vunpack.c.h.b16 %v378
      %v744 = vunpack.c.l.b16 %v379
      %v745 = vunpack.c.h.b16 %v379
      %v746 = vunpack.c.l.b16 %v380
      %v747 = vunpack.c.h.b16 %v380
      %v748 = vunpack.c.l.b16 %v381
      %v749 = vunpack.c.h.b16 %v381
      %v750 = vunpack.c.l.b16 %v382
      %v751 = vunpack.c.h.b16 %v382
      %v752 = vunpack.c.l.b16 %v383
      %v753 = vunpack.c.h.b16 %v383
      %v754 = vunpack.c.l.b16 %v384
      %v755 = vunpack.c.h.b16 %v384
      %v756 = vunpack.c.l.b16 %v385
      %v757 = vunpack.c.h.b16 %v385
      %v758 = vunpack.c.l.b16 %v386
      %v759 = vunpack.c.h.b16 %v386
      %v760 = vunpack.c.l.b16 %v387
      %v761 = vunpack.c.h.b16 %v387
      %v762 = vunpack.c.l.b16 %v388
      %v763 = vunpack.c.h.b16 %v388
      %v764 = vunpack.c.l.b16 %v389
      %v765 = vunpack.c.h.b16 %v389
      %v766 = vunpack.c.l.b16 %v390
      %v767 = vunpack.c.h.b16 %v390
      %v768 = vunpack.c.l.b16 %v391
      %v769 = vunpack.c.h.b16 %v391
      %v770 = vunpack.c.l.b16 %v392
      %v771 = vunpack.c.h.b16 %v392
      %v772 = vunpack.c.l.b16 %v393
      %v773 = vunpack.c.h.b16 %v393
      %v774 = vunpack.c.l.b16 %v394
      %v775 = vunpack.c.h.b16 %v394
      %v776 = vunpack.c.l.b16 %v395
      %v777 = vunpack.c.h.b16 %v395
      %v778 = vunpack.c.l.b16 %v396
      %v779 = vunpack.c.h.b16 %v396
      %v780 = vunpack.c.l.b16 %v397
      %v781 = vunpack.c.h.b16 %v397
      %v782 = vunpack.c.l.b16 %v398
      %v783 = vunpack.c.h.b16 %v398
      %v784 = vunpack.c.l.b16 %v399
      %v785 = vunpack.c.h.b16 %v399
      %v786 = vunpack.c.l.b16 %v400
      %v787 = vunpack.c.h.b16 %v400
      %v788 = vunpack.c.l.b16 %v401
      %v789 = vunpack.c.h.b16 %v401
      %v790 = vunpack.c.l.b16 %v402
      %v791 = vunpack.c.h.b16 %v402
      %v792 = vunpack.c.l.b16 %v403
      %v793 = vunpack.c.h.b16 %v403
      %v794 = vunpack.c.l.b16 %v404
      %v795 = vunpack.c.h.b16 %v404
      %v796 = vunpack.c.l.b16 %v405
      %v797 = vunpack.c.h.b16 %v405
      %v798 = vunpack.c.l.b16 %v406
      %v799 = vunpack.c.h.b16 %v406
      %v800 = vunpack.c.l.b16 %v407
      %v801 = vunpack.c.h.b16 %v407
      %v802 = vunpack.c.l.b16 %v408
      %v803 = vunpack.c.h.b16 %v408
      %v804 = vunpack.c.l.b16 %v409
      %v805 = vunpack.c.h.b16 %v409
      %v806 = vunpack.c.l.b16 %v410
      %v807 = vunpack.c.h.b16 %v410
      %v808 = vunpack.c.l.b16 %v411
      %v809 = vunpack.c.h.b16 %v411
      %v810 = vunpack.c.l.b16 %v412
      %v811 = vunpack.c.h.b16 %v412
      %v812 = vunpack.c.l.b16 %v413
      %v813 = vunpack.c.h.b16 %v413
      %v814 = vunpack.c.l.b16 %v414
      %v815 = vunpack.c.h.b16 %v414
      %v816 = vunpack.c.l.b16 %v415
      %v817 = vunpack.c.h.b16 %v415
      %v818 = vpack.c.b16 %v570, %v562
      %v819 = vpack.c.b16 %v571, %v563
      %v820 = vpack.c.b16 %v572, %v564
      %v821 = vpack.c.b16 %v573, %v565
      %v822 = vpack.c.b16 %v574, %v566
      %v823 = vpack.c.b16 %v575, %v567
      %v824 = vpack.c.b16 %v576, %v568
      %v825 = vpack.c.b16 %v577, %v569
      %v826 = vpack.c.b16 %v586, %v578
      %v827 = vpack.c.b16 %v587, %v579
      %v828 = vpack.c.b16 %v588, %v580
      %v829 = vpack.c.b16 %v589, %v581
      %v830 = vpack.c.b16 %v590, %v582
      %v831 = vpack.c.b16 %v591, %v583
      %v832 = vpack.c.b16 %v592, %v584
      %v833 = vpack.c.b16 %v593, %v585
      %v834 = vpack.c.b16 %v602, %v594
      %v835 = vpack.c.b16 %v603, %v595
      %v836 = vpack.c.b16 %v604, %v596
      %v837 = vpack.c.b16 %v605, %v597
      %v838 = vpack.c.b16 %v606, %v598
      %v839 = vpack.c.b16 %v607, %v599
      %v840 = vpack.c.b16 %v608, %v600
      %v841 = vpack.c.b16 %v609, %v601
      %v842 = vpack.c.b16 %v618, %v610
      %v843 = vpack.c.b16 %v619, %v611
      %v844 = vpack.c.b16 %v620, %v612
      %v845 = vpack.c.b16 %v621, %v613
      %v846 = vpack.c.b16 %v622, %v614
      %v847 = vpack.c.b16 %v623, %v615
      %v848 = vpack.c.b16 %v624, %v616
      %v849 = vpack.c.b16 %v625, %v617
      %v850 = vpack.c.b16 %v634, %v626
      %v851 = vpack.c.b16 %v635, %v627
      %v852 = vpack.c.b16 %v636, %v628
      %v853 = vpack.c.b16 %v637, %v629
      %v854 = vpack.c.b16 %v638, %v630
      %v855 = vpack.c.b16 %v639, %v631
      %v856 = vpack.c.b16 %v640, %v632
      %v857 = vpack.c.b16 %v641, %v633
      %v858 = vpack.c.b16 %v650, %v642
      %v859 = vpack.c.b16 %v651, %v643
      %v860 = vpack.c.b16 %v652, %v644
      %v861 = vpack.c.b16 %v653, %v645
      %v862 = vpack.c.b16 %v654, %v646
      %v863 = vpack.c.b16 %v655, %v647
      %v864 = vpack.c.b16 %v656, %v648
      %v865 = vpack.c.b16 %v657, %v649
      %v866 = vpack.c.b16 %v666, %v658
      %v867 = vpack.c.b16 %v667, %v659
      %v868 = vpack.c.b16 %v668, %v660
      %v869 = vpack.c.b16 %v669, %v661
      %v870 = vpack.c.b16 %v670, %v662
      %v871 = vpack.c.b16 %v671, %v663
      %v872 = vpack.c.b16 %v672, %v664
      %v873 = vpack.c.b16 %v673, %v665
      %v874 = vpack.c.b16 %v682, %v674
      %v875 = vpack.c.b16 %v683, %v675
      %v876 = vpack.c.b16 %v684, %v676
      %v877 = vpack.c.b16 %v685, %v677
      %v878 = vpack.c.b16 %v686, %v678
      %v879 = vpack.c.b16 %v687, %v679
      %v880 = vpack.c.b16 %v688, %v680
      %v881 = vpack.c.b16 %v689, %v681
      %v882 = vpack.c.b16 %v698, %v690
      %v883 = vpack.c.b16 %v699, %v691
      %v884 = vpack.c.b16 %v700, %v692
      %v885 = vpack.c.b16 %v701, %v693
      %v886 = vpack.c.b16 %v702, %v694
      %v887 = vpack.c.b16 %v703, %v695
      %v888 = vpack.c.b16 %v704, %v696
      %v889 = vpack.c.b16 %v705, %v697
      %v890 = vpack.c.b16 %v714, %v706
      %v891 = vpack.c.b16 %v715, %v707
      %v892 = vpack.c.b16 %v716, %v708
      %v893 = vpack.c.b16 %v717, %v709
      %v894 = vpack.c.b16 %v718, %v710
      %v895 = vpack.c.b16 %v719, %v711
      %v896 = vpack.c.b16 %v720, %v712
      %v897 = vpack.c.b16 %v721, %v713
      %v898 = vpack.c.b16 %v730, %v722
      %v899 = vpack.c.b16 %v731, %v723
      %v900 = vpack.c.b16 %v732, %v724
      %v901 = vpack.c.b16 %v733, %v725
      %v902 = vpack.c.b16 %v734, %v726
      %v903 = vpack.c.b16 %v735, %v727
      %v904 = vpack.c.b16 %v736, %v728
      %v905 = vpack.c.b16 %v737, %v729
      %v906 = vpack.c.b16 %v746, %v738
      %v907 = vpack.c.b16 %v747, %v739
      %v908 = vpack.c.b16 %v748, %v740
      %v909 = vpack.c.b16 %v749, %v741
      %v910 = vpack.c.b16 %v750, %v742
      %v911 = vpack.c.b16 %v751, %v743
      %v912 = vpack.c.b16 %v752, %v744
      %v913 = vpack.c.b16 %v753, %v745
      %v914 = vpack.c.b16 %v762, %v754
      %v915 = vpack.c.b16 %v763, %v755
      %v916 = vpack.c.b16 %v764, %v756
      %v917 = vpack.c.b16 %v765, %v757
      %v918 = vpack.c.b16 %v766, %v758
      %v919 = vpack.c.b16 %v767, %v759
      %v920 = vpack.c.b16 %v768, %v760
      %v921 = vpack.c.b16 %v769, %v761
      %v922 = vpack.c.b16 %v778, %v770
      %v923 = vpack.c.b16 %v779, %v771
      %v924 = vpack.c.b16 %v780, %v772
      %v925 = vpack.c.b16 %v781, %v773
      %v926 = vpack.c.b16 %v782, %v774
      %v927 = vpack.c.b16 %v783, %v775
      %v928 = vpack.c.b16 %v784, %v776
      %v929 = vpack.c.b16 %v785, %v777
      %v930 = vpack.c.b16 %v794, %v786
      %v931 = vpack.c.b16 %v795, %v787
      %v932 = vpack.c.b16 %v796, %v788
      %v933 = vpack.c.b16 %v797, %v789
      %v934 = vpack.c.b16 %v798, %v790
      %v935 = vpack.c.b16 %v799, %v791
      %v936 = vpack.c.b16 %v800, %v792
      %v937 = vpack.c.b16 %v801, %v793
      %v938 = vpack.c.b16 %v810, %v802
      %v939 = vpack.c.b16 %v811, %v803
      %v940 = vpack.c.b16 %v812, %v804
      %v941 = vpack.c.b16 %v813, %v805
      %v942 = vpack.c.b16 %v814, %v806
      %v943 = vpack.c.b16 %v815, %v807
      %v944 = vpack.c.b16 %v816, %v808
      %v945 = vpack.c.b16 %v817, %v809
      %1074 = vmatpush.bf16.msra.mxu0 %v874
      %1075 = vmatpush.bf16.msra.mxu0 %v866
      %1076 = vmatpush.bf16.msra.mxu0 %v858
      %1077 = vmatpush.bf16.msra.mxu0 %v850
      %1078 = vmatpush.bf16.msra.mxu0 %v842
      %1079 = vmatpush.bf16.msra.mxu0 %v834
      %1080 = vmatpush.bf16.msra.mxu0 %v826
      %1081 = vmatpush.bf16.msra.mxu0 %v818
      %1082 = vmatmul.bf16.gmra.mxu0 %v286
      %v1083 = vpop.f32.mrf.mxu0
      %v1084 = vadd.f32 %v418, %v1083
      %v1085 = vpop.f32.mrf.mxu0
      %1086 = vdwg.mxu0
      %1087 = vmatpush.bf16.msra.mxu0 %v938
      %1088 = vmatpush.bf16.msra.mxu0 %v930
      %1089 = vmatpush.bf16.msra.mxu0 %v922
      %1090 = vmatpush.bf16.msra.mxu0 %v914
      %1091 = vmatpush.bf16.msra.mxu0 %v906
      %1092 = vmatpush.bf16.msra.mxu0 %v898
      %1093 = vmatpush.bf16.msra.mxu0 %v890
      %1094 = vmatpush.bf16.msra.mxu0 %v882
      %1095 = vmatmul.bf16.gmra.mxu0 %v287
      %v1096 = vpop.f32.mrf.mxu0
      %v1097 = vadd.f32 %v1084, %v1096
      %v1098 = vpop.f32.mrf.mxu0
      %1099 = vdwg.mxu0
      %1100 = vmatpush.bf16.msra.mxu0 %v875
      %1101 = vmatpush.bf16.msra.mxu0 %v867
      %1102 = vmatpush.bf16.msra.mxu0 %v859
      %1103 = vmatpush.bf16.msra.mxu0 %v851
      %1104 = vmatpush.bf16.msra.mxu0 %v843
      %1105 = vmatpush.bf16.msra.mxu0 %v835
      %1106 = vmatpush.bf16.msra.mxu0 %v827
      %1107 = vmatpush.bf16.msra.mxu0 %v819
      %1108 = vmatmul.bf16.gmra.mxu0 %v286
      %v1109 = vpop.f32.mrf.mxu0
      %v1110 = vadd.f32 %v419, %v1109
      %v1111 = vpop.f32.mrf.mxu0
      %1112 = vdwg.mxu0
      %1113 = vmatpush.bf16.msra.mxu0 %v939
      %1114 = vmatpush.bf16.msra.mxu0 %v931
      %1115 = vmatpush.bf16.msra.mxu0 %v923
      %1116 = vmatpush.bf16.msra.mxu0 %v915
      %1117 = vmatpush.bf16.msra.mxu0 %v907
      %1118 = vmatpush.bf16.msra.mxu0 %v899
      %1119 = vmatpush.bf16.msra.mxu0 %v891
      %1120 = vmatpush.bf16.msra.mxu0 %v883
      %1121 = vmatmul.bf16.gmra.mxu0 %v287
      %v1122 = vpop.f32.mrf.mxu0
      %v1123 = vadd.f32 %v1110, %v1122
      %v1124 = vpop.f32.mrf.mxu0
      %1125 = vdwg.mxu0
      %1126 = vmatpush.bf16.msra.mxu0 %v876
      %1127 = vmatpush.bf16.msra.mxu0 %v868
      %1128 = vmatpush.bf16.msra.mxu0 %v860
      %1129 = vmatpush.bf16.msra.mxu0 %v852
      %1130 = vmatpush.bf16.msra.mxu0 %v844
      %1131 = vmatpush.bf16.msra.mxu0 %v836
      %1132 = vmatpush.bf16.msra.mxu0 %v828
      %1133 = vmatpush.bf16.msra.mxu0 %v820
      %1134 = vmatmul.bf16.gmra.mxu0 %v286
      %v1135 = vpop.f32.mrf.mxu0
      %v1136 = vadd.f32 %v420, %v1135
      %v1137 = vpop.f32.mrf.mxu0
      %1138 = vdwg.mxu0
      %1139 = vmatpush.bf16.msra.mxu0 %v940
      %1140 = vmatpush.bf16.msra.mxu0 %v932
      %1141 = vmatpush.bf16.msra.mxu0 %v924
      %1142 = vmatpush.bf16.msra.mxu0 %v916
      %1143 = vmatpush.bf16.msra.mxu0 %v908
      %1144 = vmatpush.bf16.msra.mxu0 %v900
      %1145 = vmatpush.bf16.msra.mxu0 %v892
      %1146 = vmatpush.bf16.msra.mxu0 %v884
      %1147 = vmatmul.bf16.gmra.mxu0 %v287
      %v1148 = vpop.f32.mrf.mxu0
      %v1149 = vadd.f32 %v1136, %v1148
      %v1150 = vpop.f32.mrf.mxu0
      %1151 = vdwg.mxu0
      %1152 = vmatpush.bf16.msra.mxu0 %v877
      %1153 = vmatpush.bf16.msra.mxu0 %v869
      %1154 = vmatpush.bf16.msra.mxu0 %v861
      %1155 = vmatpush.bf16.msra.mxu0 %v853
      %1156 = vmatpush.bf16.msra.mxu0 %v845
      %1157 = vmatpush.bf16.msra.mxu0 %v837
      %1158 = vmatpush.bf16.msra.mxu0 %v829
      %1159 = vmatpush.bf16.msra.mxu0 %v821
      %1160 = vmatmul.bf16.gmra.mxu0 %v286
      %v1161 = vpop.f32.mrf.mxu0
      %v1162 = vadd.f32 %v421, %v1161
      %v1163 = vpop.f32.mrf.mxu0
      %1164 = vdwg.mxu0
      %1165 = vmatpush.bf16.msra.mxu0 %v941
      %1166 = vmatpush.bf16.msra.mxu0 %v933
      %1167 = vmatpush.bf16.msra.mxu0 %v925
      %1168 = vmatpush.bf16.msra.mxu0 %v917
      %1169 = vmatpush.bf16.msra.mxu0 %v909
      %1170 = vmatpush.bf16.msra.mxu0 %v901
      %1171 = vmatpush.bf16.msra.mxu0 %v893
      %1172 = vmatpush.bf16.msra.mxu0 %v885
      %1173 = vmatmul.bf16.gmra.mxu0 %v287
      %v1174 = vpop.f32.mrf.mxu0
      %v1175 = vadd.f32 %v1162, %v1174
      %v1176 = vpop.f32.mrf.mxu0
      %1177 = vdwg.mxu0
      %1178 = vmatpush.bf16.msra.mxu0 %v878
      %1179 = vmatpush.bf16.msra.mxu0 %v870
      %1180 = vmatpush.bf16.msra.mxu0 %v862
      %1181 = vmatpush.bf16.msra.mxu0 %v854
      %1182 = vmatpush.bf16.msra.mxu0 %v846
      %1183 = vmatpush.bf16.msra.mxu0 %v838
      %1184 = vmatpush.bf16.msra.mxu0 %v830
      %1185 = vmatpush.bf16.msra.mxu0 %v822
      %1186 = vmatmul.bf16.gmra.mxu0 %v286
      %v1187 = vpop.f32.mrf.mxu0
      %v1188 = vadd.f32 %v422, %v1187
      %v1189 = vpop.f32.mrf.mxu0
      %1190 = vdwg.mxu0
      %1191 = vmatpush.bf16.msra.mxu0 %v942
      %1192 = vmatpush.bf16.msra.mxu0 %v934
      %1193 = vmatpush.bf16.msra.mxu0 %v926
      %1194 = vmatpush.bf16.msra.mxu0 %v918
      %1195 = vmatpush.bf16.msra.mxu0 %v910
      %1196 = vmatpush.bf16.msra.mxu0 %v902
      %1197 = vmatpush.bf16.msra.mxu0 %v894
      %1198 = vmatpush.bf16.msra.mxu0 %v886
      %1199 = vmatmul.bf16.gmra.mxu0 %v287
      %v1200 = vpop.f32.mrf.mxu0
      %v1201 = vadd.f32 %v1188, %v1200
      %v1202 = vpop.f32.mrf.mxu0
      %1203 = vdwg.mxu0
      %1204 = vmatpush.bf16.msra.mxu0 %v879
      %1205 = vmatpush.bf16.msra.mxu0 %v871
      %1206 = vmatpush.bf16.msra.mxu0 %v863
      %1207 = vmatpush.bf16.msra.mxu0 %v855
      %1208 = vmatpush.bf16.msra.mxu0 %v847
      %1209 = vmatpush.bf16.msra.mxu0 %v839
      %1210 = vmatpush.bf16.msra.mxu0 %v831
      %1211 = vmatpush.bf16.msra.mxu0 %v823
      %1212 = vmatmul.bf16.gmra.mxu0 %v286
      %v1213 = vpop.f32.mrf.mxu0
      %v1214 = vadd.f32 %v423, %v1213
      %v1215 = vpop.f32.mrf.mxu0
      %1216 = vdwg.mxu0
      %1217 = vmatpush.bf16.msra.mxu0 %v943
      %1218 = vmatpush.bf16.msra.mxu0 %v935
      %1219 = vmatpush.bf16.msra.mxu0 %v927
      %1220 = vmatpush.bf16.msra.mxu0 %v919
      %1221 = vmatpush.bf16.msra.mxu0 %v911
      %1222 = vmatpush.bf16.msra.mxu0 %v903
      %1223 = vmatpush.bf16.msra.mxu0 %v895
      %1224 = vmatpush.bf16.msra.mxu0 %v887
      %1225 = vmatmul.bf16.gmra.mxu0 %v287
      %v1226 = vpop.f32.mrf.mxu0
      %v1227 = vadd.f32 %v1214, %v1226
      %v1228 = vpop.f32.mrf.mxu0
      %1229 = vdwg.mxu0
      %1230 = vmatpush.bf16.msra.mxu0 %v880
      %1231 = vmatpush.bf16.msra.mxu0 %v872
      %1232 = vmatpush.bf16.msra.mxu0 %v864
      %1233 = vmatpush.bf16.msra.mxu0 %v856
      %1234 = vmatpush.bf16.msra.mxu0 %v848
      %1235 = vmatpush.bf16.msra.mxu0 %v840
      %1236 = vmatpush.bf16.msra.mxu0 %v832
      %1237 = vmatpush.bf16.msra.mxu0 %v824
      %1238 = vmatmul.bf16.gmra.mxu0 %v286
      %v1239 = vpop.f32.mrf.mxu0
      %v1240 = vadd.f32 %v424, %v1239
      %v1241 = vpop.f32.mrf.mxu0
      %1242 = vdwg.mxu0
      %1243 = vmatpush.bf16.msra.mxu0 %v944
      %1244 = vmatpush.bf16.msra.mxu0 %v936
      %1245 = vmatpush.bf16.msra.mxu0 %v928
      %1246 = vmatpush.bf16.msra.mxu0 %v920
      %1247 = vmatpush.bf16.msra.mxu0 %v912
      %1248 = vmatpush.bf16.msra.mxu0 %v904
      %1249 = vmatpush.bf16.msra.mxu0 %v896
      %1250 = vmatpush.bf16.msra.mxu0 %v888
      %1251 = vmatmul.bf16.gmra.mxu0 %v287
      %v1252 = vpop.f32.mrf.mxu0
      %v1253 = vadd.f32 %v1240, %v1252
      %v1254 = vpop.f32.mrf.mxu0
      %1255 = vdwg.mxu0
      %1256 = vmatpush.bf16.msra.mxu0 %v881
      %1257 = vmatpush.bf16.msra.mxu0 %v873
      %1258 = vmatpush.bf16.msra.mxu0 %v865
      %1259 = vmatpush.bf16.msra.mxu0 %v857
      %1260 = vmatpush.bf16.msra.mxu0 %v849
      %1261 = vmatpush.bf16.msra.mxu0 %v841
      %1262 = vmatpush.bf16.msra.mxu0 %v833
      %1263 = vmatpush.bf16.msra.mxu0 %v825
      %1264 = vmatmul.bf16.gmra.mxu0 %v286
      %v1265 = vpop.f32.mrf.mxu0
      %v1266 = vadd.f32 %v425, %v1265
      %v1267 = vpop.f32.mrf.mxu0
      %1268 = vdwg.mxu0
      %1269 = vmatpush.bf16.msra.mxu0 %v945
      %1270 = vmatpush.bf16.msra.mxu0 %v937
      %1271 = vmatpush.bf16.msra.mxu0 %v929
      %1272 = vmatpush.bf16.msra.mxu0 %v921
      %1273 = vmatpush.bf16.msra.mxu0 %v913
      %1274 = vmatpush.bf16.msra.mxu0 %v905
      %1275 = vmatpush.bf16.msra.mxu0 %v897
      %1276 = vmatpush.bf16.msra.mxu0 %v889
      %1277 = vmatmul.bf16.gmra.mxu0 %v287
      %v1278 = vpop.f32.mrf.mxu0
      %v1279 = vadd.f32 %v1266, %v1278
      %v1280 = vpop.f32.mrf.mxu0
      %1281 = vdwg.mxu0
      %v1282 = vmax.f32 %v1097, 0.0
      %v1283 = vmax.f32 %v1123, 0.0
      %v1284 = vmax.f32 %v1149, 0.0
      %v1285 = vmax.f32 %v1175, 0.0
      %v1286 = vmax.f32 %v1201, 0.0
      %v1287 = vmax.f32 %v1227, 0.0
      %v1288 = vmax.f32 %v1253, 0.0
      %v1289 = vmax.f32 %v1279, 0.0
      %v1290 = vpack.c.bf16 %v1282, %v1282
      %v1291 = vpack.c.bf16 %v1283, %v1283
      %v1292 = vpack.c.bf16 %v1284, %v1284
      %v1293 = vpack.c.bf16 %v1285, %v1285
      %v1294 = vpack.c.bf16 %v1286, %v1286
      %v1295 = vpack.c.bf16 %v1287, %v1287
      %v1296 = vpack.c.bf16 %v1288, %v1288
      %v1297 = vpack.c.bf16 %v1289, %v1289
      %v1298 = vld [vmem:[%s3] sm:$0xff]
      %v1299 = vld [vmem:[%s3 + $0x8] sm:$0xff]
      %v1300 = vld [vmem:[%s3 + $0x10] sm:$0xff]
      %v1301 = vld [vmem:[%s3 + $0x18] sm:$0xff]
      %v1302 = vld [vmem:[%s3 + $0x20] sm:$0xff]
      %v1303 = vld [vmem:[%s3 + $0x28] sm:$0xff]
      %v1304 = vld [vmem:[%s3 + $0x30] sm:$0xff]
      %v1305 = vld [vmem:[%s3 + $0x38] sm:$0xff]
      %v1306 = vld [vmem:[%s3 + $0x40] sm:$0xff]
      %v1307 = vld [vmem:[%s3 + $0x48] sm:$0xff]
      %v1308 = vld [vmem:[%s3 + $0x50] sm:$0xff]
      %v1309 = vld [vmem:[%s3 + $0x58] sm:$0xff]
      %v1310 = vld [vmem:[%s3 + $0x60] sm:$0xff]
      %v1311 = vld [vmem:[%s3 + $0x68] sm:$0xff]
      %v1312 = vld [vmem:[%s3 + $0x70] sm:$0xff]
      %v1313 = vld [vmem:[%s3 + $0x78] sm:$0xff]
      %v1314 = vld [vmem:[%s3 + $0x80] sm:$0xff]
      %v1315 = vld [vmem:[%s3 + $0x88] sm:$0xff]
      %v1316 = vld [vmem:[%s3 + $0x90] sm:$0xff]
      %v1317 = vld [vmem:[%s3 + $0x98] sm:$0xff]
      %v1318 = vld [vmem:[%s3 + $0xa0] sm:$0xff]
      %v1319 = vld [vmem:[%s3 + $0xa8] sm:$0xff]
      %v1320 = vld [vmem:[%s3 + $0xb0] sm:$0xff]
      %v1321 = vld [vmem:[%s3 + $0xb8] sm:$0xff]
      %v1322 = vld [vmem:[%s3 + $0xc0] sm:$0xff]
      %v1323 = vld [vmem:[%s3 + $0xc8] sm:$0xff]
      %v1324 = vld [vmem:[%s3 + $0xd0] sm:$0xff]
      %v1325 = vld [vmem:[%s3 + $0xd8] sm:$0xff]
      %v1326 = vld [vmem:[%s3 + $0xe0] sm:$0xff]
      %v1327 = vld [vmem:[%s3 + $0xe8] sm:$0xff]
      %v1328 = vld [vmem:[%s3 + $0xf0] sm:$0xff]
      %v1329 = vld [vmem:[%s3 + $0xf8] sm:$0xff]
      %v1330 = vld [vmem:[%s3 + $0x100] sm:$0xff]
      %v1331 = vld [vmem:[%s3 + $0x108] sm:$0xff]
      %v1332 = vld [vmem:[%s3 + $0x110] sm:$0xff]
      %v1333 = vld [vmem:[%s3 + $0x118] sm:$0xff]
      %v1334 = vld [vmem:[%s3 + $0x120] sm:$0xff]
      %v1335 = vld [vmem:[%s3 + $0x128] sm:$0xff]
      %v1336 = vld [vmem:[%s3 + $0x130] sm:$0xff]
      %v1337 = vld [vmem:[%s3 + $0x138] sm:$0xff]
      %v1338 = vld [vmem:[%s3 + $0x140] sm:$0xff]
      %v1339 = vld [vmem:[%s3 + $0x148] sm:$0xff]
      %v1340 = vld [vmem:[%s3 + $0x150] sm:$0xff]
      %v1341 = vld [vmem:[%s3 + $0x158] sm:$0xff]
      %v1342 = vld [vmem:[%s3 + $0x160] sm:$0xff]
      %v1343 = vld [vmem:[%s3 + $0x168] sm:$0xff]
      %v1344 = vld [vmem:[%s3 + $0x170] sm:$0xff]
      %v1345 = vld [vmem:[%s3 + $0x178] sm:$0xff]
      %v1346 = vld [vmem:[%s3 + $0x180] sm:$0xff]
      %v1347 = vld [vmem:[%s3 + $0x188] sm:$0xff]
      %v1348 = vld [vmem:[%s3 + $0x190] sm:$0xff]
      %v1349 = vld [vmem:[%s3 + $0x198] sm:$0xff]
      %v1350 = vld [vmem:[%s3 + $0x1a0] sm:$0xff]
      %v1351 = vld [vmem:[%s3 + $0x1a8] sm:$0xff]
      %v1352 = vld [vmem:[%s3 + $0x1b0] sm:$0xff]
      %v1353 = vld [vmem:[%s3 + $0x1b8] sm:$0xff]
      %v1354 = vld [vmem:[%s3 + $0x1c0] sm:$0xff]
      %v1355 = vld [vmem:[%s3 + $0x1c8] sm:$0xff]
      %v1356 = vld [vmem:[%s3 + $0x1d0] sm:$0xff]
      %v1357 = vld [vmem:[%s3 + $0x1d8] sm:$0xff]
      %v1358 = vld [vmem:[%s3 + $0x1e0] sm:$0xff]
      %v1359 = vld [vmem:[%s3 + $0x1e8] sm:$0xff]
      %v1360 = vld [vmem:[%s3 + $0x1f0] sm:$0xff]
      %v1361 = vld [vmem:[%s3 + $0x1f8] sm:$0xff]
      %v1362 = vld [vmem:[%s3 + $0x200] sm:$0xff]
      %v1363 = vld [vmem:[%s3 + $0x208] sm:$0xff]
      %v1364 = vld [vmem:[%s3 + $0x210] sm:$0xff]
      %v1365 = vld [vmem:[%s3 + $0x218] sm:$0xff]
      %v1366 = vld [vmem:[%s3 + $0x220] sm:$0xff]
      %v1367 = vld [vmem:[%s3 + $0x228] sm:$0xff]
      %v1368 = vld [vmem:[%s3 + $0x230] sm:$0xff]
      %v1369 = vld [vmem:[%s3 + $0x238] sm:$0xff]
      %v1370 = vld [vmem:[%s3 + $0x240] sm:$0xff]
      %v1371 = vld [vmem:[%s3 + $0x248] sm:$0xff]
      %v1372 = vld [vmem:[%s3 + $0x250] sm:$0xff]
      %v1373 = vld [vmem:[%s3 + $0x258] sm:$0xff]
      %v1374 = vld [vmem:[%s3 + $0x260] sm:$0xff]
      %v1375 = vld [vmem:[%s3 + $0x268] sm:$0xff]
      %v1376 = vld [vmem:[%s3 + $0x270] sm:$0xff]
      %v1377 = vld [vmem:[%s3 + $0x278] sm:$0xff]
      %v1378 = vld [vmem:[%s3 + $0x280] sm:$0xff]
      %v1379 = vld [vmem:[%s3 + $0x288] sm:$0xff]
      %v1380 = vld [vmem:[%s3 + $0x290] sm:$0xff]
      %v1381 = vld [vmem:[%s3 + $0x298] sm:$0xff]
      %v1382 = vld [vmem:[%s3 + $0x2a0] sm:$0xff]
      %v1383 = vld [vmem:[%s3 + $0x2a8] sm:$0xff]
      %v1384 = vld [vmem:[%s3 + $0x2b0] sm:$0xff]
      %v1385 = vld [vmem:[%s3 + $0x2b8] sm:$0xff]
      %v1386 = vld [vmem:[%s3 + $0x2c0] sm:$0xff]
      %v1387 = vld [vmem:[%s3 + $0x2c8] sm:$0xff]
      %v1388 = vld [vmem:[%s3 + $0x2d0] sm:$0xff]
      %v1389 = vld [vmem:[%s3 + $0x2d8] sm:$0xff]
      %v1390 = vld [vmem:[%s3 + $0x2e0] sm:$0xff]
      %v1391 = vld [vmem:[%s3 + $0x2e8] sm:$0xff]
      %v1392 = vld [vmem:[%s3 + $0x2f0] sm:$0xff]
      %v1393 = vld [vmem:[%s3 + $0x2f8] sm:$0xff]
      %v1394 = vld [vmem:[%s3 + $0x300] sm:$0xff]
      %v1395 = vld [vmem:[%s3 + $0x308] sm:$0xff]
      %v1396 = vld [vmem:[%s3 + $0x310] sm:$0xff]
      %v1397 = vld [vmem:[%s3 + $0x318] sm:$0xff]
      %v1398 = vld [vmem:[%s3 + $0x320] sm:$0xff]
      %v1399 = vld [vmem:[%s3 + $0x328] sm:$0xff]
      %v1400 = vld [vmem:[%s3 + $0x330] sm:$0xff]
      %v1401 = vld [vmem:[%s3 + $0x338] sm:$0xff]
      %v1402 = vld [vmem:[%s3 + $0x340] sm:$0xff]
      %v1403 = vld [vmem:[%s3 + $0x348] sm:$0xff]
      %v1404 = vld [vmem:[%s3 + $0x350] sm:$0xff]
      %v1405 = vld [vmem:[%s3 + $0x358] sm:$0xff]
      %v1406 = vld [vmem:[%s3 + $0x360] sm:$0xff]
      %v1407 = vld [vmem:[%s3 + $0x368] sm:$0xff]
      %v1408 = vld [vmem:[%s3 + $0x370] sm:$0xff]
      %v1409 = vld [vmem:[%s3 + $0x378] sm:$0xff]
      %v1410 = vld [vmem:[%s3 + $0x380] sm:$0xff]
      %v1411 = vld [vmem:[%s3 + $0x388] sm:$0xff]
      %v1412 = vld [vmem:[%s3 + $0x390] sm:$0xff]
      %v1413 = vld [vmem:[%s3 + $0x398] sm:$0xff]
      %v1414 = vld [vmem:[%s3 + $0x3a0] sm:$0xff]
      %v1415 = vld [vmem:[%s3 + $0x3a8] sm:$0xff]
      %v1416 = vld [vmem:[%s3 + $0x3b0] sm:$0xff]
      %v1417 = vld [vmem:[%s3 + $0x3b8] sm:$0xff]
      %v1418 = vld [vmem:[%s3 + $0x3c0] sm:$0xff]
      %v1419 = vld [vmem:[%s3 + $0x3c8] sm:$0xff]
      %v1420 = vld [vmem:[%s3 + $0x3d0] sm:$0xff]
      %v1421 = vld [vmem:[%s3 + $0x3d8] sm:$0xff]
      %v1422 = vld [vmem:[%s3 + $0x3e0] sm:$0xff]
      %v1423 = vld [vmem:[%s3 + $0x3e8] sm:$0xff]
      %v1424 = vld [vmem:[%s3 + $0x3f0] sm:$0xff]
      %v1425 = vld [vmem:[%s3 + $0x3f8] sm:$0xff]
      %v1426 = vld [vmem:[%s4] sm:$0x3]
      %v1428 = vperm.slane %v1426, 0
      %v1429 = vperm.slane %v1426, 1
      %v1560 = vunpack.c.l.b16 %v1298
      %v1561 = vunpack.c.h.b16 %v1298
      %v1562 = vunpack.c.l.b16 %v1299
      %v1563 = vunpack.c.h.b16 %v1299
      %v1564 = vunpack.c.l.b16 %v1300
      %v1565 = vunpack.c.h.b16 %v1300
      %v1566 = vunpack.c.l.b16 %v1301
      %v1567 = vunpack.c.h.b16 %v1301
      %v1568 = vunpack.c.l.b16 %v1302
      %v1569 = vunpack.c.h.b16 %v1302
      %v1570 = vunpack.c.l.b16 %v1303
      %v1571 = vunpack.c.h.b16 %v1303
      %v1572 = vunpack.c.l.b16 %v1304
      %v1573 = vunpack.c.h.b16 %v1304
      %v1574 = vunpack.c.l.b16 %v1305
      %v1575 = vunpack.c.h.b16 %v1305
      %v1576 = vunpack.c.l.b16 %v1306
      %v1577 = vunpack.c.h.b16 %v1306
      %v1578 = vunpack.c.l.b16 %v1307
      %v1579 = vunpack.c.h.b16 %v1307
      %v1580 = vunpack.c.l.b16 %v1308
      %v1581 = vunpack.c.h.b16 %v1308
      %v1582 = vunpack.c.l.b16 %v1309
      %v1583 = vunpack.c.h.b16 %v1309
      %v1584 = vunpack.c.l.b16 %v1310
      %v1585 = vunpack.c.h.b16 %v1310
      %v1586 = vunpack.c.l.b16 %v1311
      %v1587 = vunpack.c.h.b16 %v1311
      %v1588 = vunpack.c.l.b16 %v1312
      %v1589 = vunpack.c.h.b16 %v1312
      %v1590 = vunpack.c.l.b16 %v1313
      %v1591 = vunpack.c.h.b16 %v1313
      %v1592 = vunpack.c.l.b16 %v1314
      %v1593 = vunpack.c.h.b16 %v1314
      %v1594 = vunpack.c.l.b16 %v1315
      %v1595 = vunpack.c.h.b16 %v1315
      %v1596 = vunpack.c.l.b16 %v1316
      %v1597 = vunpack.c.h.b16 %v1316
      %v1598 = vunpack.c.l.b16 %v1317
      %v1599 = vunpack.c.h.b16 %v1317
      %v1600 = vunpack.c.l.b16 %v1318
      %v1601 = vunpack.c.h.b16 %v1318
      %v1602 = vunpack.c.l.b16 %v1319
      %v1603 = vunpack.c.h.b16 %v1319
      %v1604 = vunpack.c.l.b16 %v1320
      %v1605 = vunpack.c.h.b16 %v1320
      %v1606 = vunpack.c.l.b16 %v1321
      %v1607 = vunpack.c.h.b16 %v1321
      %v1608 = vunpack.c.l.b16 %v1322
      %v1609 = vunpack.c.h.b16 %v1322
      %v1610 = vunpack.c.l.b16 %v1323
      %v1611 = vunpack.c.h.b16 %v1323
      %v1612 = vunpack.c.l.b16 %v1324
      %v1613 = vunpack.c.h.b16 %v1324
      %v1614 = vunpack.c.l.b16 %v1325
      %v1615 = vunpack.c.h.b16 %v1325
      %v1616 = vunpack.c.l.b16 %v1326
      %v1617 = vunpack.c.h.b16 %v1326
      %v1618 = vunpack.c.l.b16 %v1327
      %v1619 = vunpack.c.h.b16 %v1327
      %v1620 = vunpack.c.l.b16 %v1328
      %v1621 = vunpack.c.h.b16 %v1328
      %v1622 = vunpack.c.l.b16 %v1329
      %v1623 = vunpack.c.h.b16 %v1329
      %v1624 = vunpack.c.l.b16 %v1330
      %v1625 = vunpack.c.h.b16 %v1330
      %v1626 = vunpack.c.l.b16 %v1331
      %v1627 = vunpack.c.h.b16 %v1331
      %v1628 = vunpack.c.l.b16 %v1332
      %v1629 = vunpack.c.h.b16 %v1332
      %v1630 = vunpack.c.l.b16 %v1333
      %v1631 = vunpack.c.h.b16 %v1333
      %v1632 = vunpack.c.l.b16 %v1334
      %v1633 = vunpack.c.h.b16 %v1334
      %v1634 = vunpack.c.l.b16 %v1335
      %v1635 = vunpack.c.h.b16 %v1335
      %v1636 = vunpack.c.l.b16 %v1336
      %v1637 = vunpack.c.h.b16 %v1336
      %v1638 = vunpack.c.l.b16 %v1337
      %v1639 = vunpack.c.h.b16 %v1337
      %v1640 = vunpack.c.l.b16 %v1338
      %v1641 = vunpack.c.h.b16 %v1338
      %v1642 = vunpack.c.l.b16 %v1339
      %v1643 = vunpack.c.h.b16 %v1339
      %v1644 = vunpack.c.l.b16 %v1340
      %v1645 = vunpack.c.h.b16 %v1340
      %v1646 = vunpack.c.l.b16 %v1341
      %v1647 = vunpack.c.h.b16 %v1341
      %v1648 = vunpack.c.l.b16 %v1342
      %v1649 = vunpack.c.h.b16 %v1342
      %v1650 = vunpack.c.l.b16 %v1343
      %v1651 = vunpack.c.h.b16 %v1343
      %v1652 = vunpack.c.l.b16 %v1344
      %v1653 = vunpack.c.h.b16 %v1344
      %v1654 = vunpack.c.l.b16 %v1345
      %v1655 = vunpack.c.h.b16 %v1345
      %v1656 = vunpack.c.l.b16 %v1346
      %v1657 = vunpack.c.h.b16 %v1346
      %v1658 = vunpack.c.l.b16 %v1347
      %v1659 = vunpack.c.h.b16 %v1347
      %v1660 = vunpack.c.l.b16 %v1348
      %v1661 = vunpack.c.h.b16 %v1348
      %v1662 = vunpack.c.l.b16 %v1349
      %v1663 = vunpack.c.h.b16 %v1349
      %v1664 = vunpack.c.l.b16 %v1350
      %v1665 = vunpack.c.h.b16 %v1350
      %v1666 = vunpack.c.l.b16 %v1351
      %v1667 = vunpack.c.h.b16 %v1351
      %v1668 = vunpack.c.l.b16 %v1352
      %v1669 = vunpack.c.h.b16 %v1352
      %v1670 = vunpack.c.l.b16 %v1353
      %v1671 = vunpack.c.h.b16 %v1353
      %v1672 = vunpack.c.l.b16 %v1354
      %v1673 = vunpack.c.h.b16 %v1354
      %v1674 = vunpack.c.l.b16 %v1355
      %v1675 = vunpack.c.h.b16 %v1355
      %v1676 = vunpack.c.l.b16 %v1356
      %v1677 = vunpack.c.h.b16 %v1356
      %v1678 = vunpack.c.l.b16 %v1357
      %v1679 = vunpack.c.h.b16 %v1357
      %v1680 = vunpack.c.l.b16 %v1358
      %v1681 = vunpack.c.h.b16 %v1358
      %v1682 = vunpack.c.l.b16 %v1359
      %v1683 = vunpack.c.h.b16 %v1359
      %v1684 = vunpack.c.l.b16 %v1360
      %v1685 = vunpack.c.h.b16 %v1360
      %v1686 = vunpack.c.l.b16 %v1361
      %v1687 = vunpack.c.h.b16 %v1361
      %v1688 = vunpack.c.l.b16 %v1362
      %v1689 = vunpack.c.h.b16 %v1362
      %v1690 = vunpack.c.l.b16 %v1363
      %v1691 = vunpack.c.h.b16 %v1363
      %v1692 = vunpack.c.l.b16 %v1364
      %v1693 = vunpack.c.h.b16 %v1364
      %v1694 = vunpack.c.l.b16 %v1365
      %v1695 = vunpack.c.h.b16 %v1365
      %v1696 = vunpack.c.l.b16 %v1366
      %v1697 = vunpack.c.h.b16 %v1366
      %v1698 = vunpack.c.l.b16 %v1367
      %v1699 = vunpack.c.h.b16 %v1367
      %v1700 = vunpack.c.l.b16 %v1368
      %v1701 = vunpack.c.h.b16 %v1368
      %v1702 = vunpack.c.l.b16 %v1369
      %v1703 = vunpack.c.h.b16 %v1369
      %v1704 = vunpack.c.l.b16 %v1370
      %v1705 = vunpack.c.h.b16 %v1370
      %v1706 = vunpack.c.l.b16 %v1371
      %v1707 = vunpack.c.h.b16 %v1371
      %v1708 = vunpack.c.l.b16 %v1372
      %v1709 = vunpack.c.h.b16 %v1372
      %v1710 = vunpack.c.l.b16 %v1373
      %v1711 = vunpack.c.h.b16 %v1373
      %v1712 = vunpack.c.l.b16 %v1374
      %v1713 = vunpack.c.h.b16 %v1374
      %v1714 = vunpack.c.l.b16 %v1375
      %v1715 = vunpack.c.h.b16 %v1375
      %v1716 = vunpack.c.l.b16 %v1376
      %v1717 = vunpack.c.h.b16 %v1376
      %v1718 = vunpack.c.l.b16 %v1377
      %v1719 = vunpack.c.h.b16 %v1377
      %v1720 = vunpack.c.l.b16 %v1378
      %v1721 = vunpack.c.h.b16 %v1378
      %v1722 = vunpack.c.l.b16 %v1379
      %v1723 = vunpack.c.h.b16 %v1379
      %v1724 = vunpack.c.l.b16 %v1380
      %v1725 = vunpack.c.h.b16 %v1380
      %v1726 = vunpack.c.l.b16 %v1381
      %v1727 = vunpack.c.h.b16 %v1381
      %v1728 = vunpack.c.l.b16 %v1382
      %v1729 = vunpack.c.h.b16 %v1382
      %v1730 = vunpack.c.l.b16 %v1383
      %v1731 = vunpack.c.h.b16 %v1383
      %v1732 = vunpack.c.l.b16 %v1384
      %v1733 = vunpack.c.h.b16 %v1384
      %v1734 = vunpack.c.l.b16 %v1385
      %v1735 = vunpack.c.h.b16 %v1385
      %v1736 = vunpack.c.l.b16 %v1386
      %v1737 = vunpack.c.h.b16 %v1386
      %v1738 = vunpack.c.l.b16 %v1387
      %v1739 = vunpack.c.h.b16 %v1387
      %v1740 = vunpack.c.l.b16 %v1388
      %v1741 = vunpack.c.h.b16 %v1388
      %v1742 = vunpack.c.l.b16 %v1389
      %v1743 = vunpack.c.h.b16 %v1389
      %v1744 = vunpack.c.l.b16 %v1390
      %v1745 = vunpack.c.h.b16 %v1390
      %v1746 = vunpack.c.l.b16 %v1391
      %v1747 = vunpack.c.h.b16 %v1391
      %v1748 = vunpack.c.l.b16 %v1392
      %v1749 = vunpack.c.h.b16 %v1392
      %v1750 = vunpack.c.l.b16 %v1393
      %v1751 = vunpack.c.h.b16 %v1393
      %v1752 = vunpack.c.l.b16 %v1394
      %v1753 = vunpack.c.h.b16 %v1394
      %v1754 = vunpack.c.l.b16 %v1395
      %v1755 = vunpack.c.h.b16 %v1395
      %v1756 = vunpack.c.l.b16 %v1396
      %v1757 = vunpack.c.h.b16 %v1396
      %v1758 = vunpack.c.l.b16 %v1397
      %v1759 = vunpack.c.h.b16 %v1397
      %v1760 = vunpack.c.l.b16 %v1398
      %v1761 = vunpack.c.h.b16 %v1398
      %v1762 = vunpack.c.l.b16 %v1399
      %v1763 = vunpack.c.h.b16 %v1399
      %v1764 = vunpack.c.l.b16 %v1400
      %v1765 = vunpack.c.h.b16 %v1400
      %v1766 = vunpack.c.l.b16 %v1401
      %v1767 = vunpack.c.h.b16 %v1401
      %v1768 = vunpack.c.l.b16 %v1402
      %v1769 = vunpack.c.h.b16 %v1402
      %v1770 = vunpack.c.l.b16 %v1403
      %v1771 = vunpack.c.h.b16 %v1403
      %v1772 = vunpack.c.l.b16 %v1404
      %v1773 = vunpack.c.h.b16 %v1404
      %v1774 = vunpack.c.l.b16 %v1405
      %v1775 = vunpack.c.h.b16 %v1405
      %v1776 = vunpack.c.l.b16 %v1406
      %v1777 = vunpack.c.h.b16 %v1406
      %v1778 = vunpack.c.l.b16 %v1407
      %v1779 = vunpack.c.h.b16 %v1407
      %v1780 = vunpack.c.l.b16 %v1408
      %v1781 = vunpack.c.h.b16 %v1408
      %v1782 = vunpack.c.l.b16 %v1409
      %v1783 = vunpack.c.h.b16 %v1409
      %v1784 = vunpack.c.l.b16 %v1410
      %v1785 = vunpack.c.h.b16 %v1410
      %v1786 = vunpack.c.l.b16 %v1411
      %v1787 = vunpack.c.h.b16 %v1411
      %v1788 = vunpack.c.l.b16 %v1412
      %v1789 = vunpack.c.h.b16 %v1412
      %v1790 = vunpack.c.l.b16 %v1413
      %v1791 = vunpack.c.h.b16 %v1413
      %v1792 = vunpack.c.l.b16 %v1414
      %v1793 = vunpack.c.h.b16 %v1414
      %v1794 = vunpack.c.l.b16 %v1415
      %v1795 = vunpack.c.h.b16 %v1415
      %v1796 = vunpack.c.l.b16 %v1416
      %v1797 = vunpack.c.h.b16 %v1416
      %v1798 = vunpack.c.l.b16 %v1417
      %v1799 = vunpack.c.h.b16 %v1417
      %v1800 = vunpack.c.l.b16 %v1418
      %v1801 = vunpack.c.h.b16 %v1418
      %v1802 = vunpack.c.l.b16 %v1419
      %v1803 = vunpack.c.h.b16 %v1419
      %v1804 = vunpack.c.l.b16 %v1420
      %v1805 = vunpack.c.h.b16 %v1420
      %v1806 = vunpack.c.l.b16 %v1421
      %v1807 = vunpack.c.h.b16 %v1421
      %v1808 = vunpack.c.l.b16 %v1422
      %v1809 = vunpack.c.h.b16 %v1422
      %v1810 = vunpack.c.l.b16 %v1423
      %v1811 = vunpack.c.h.b16 %v1423
      %v1812 = vunpack.c.l.b16 %v1424
      %v1813 = vunpack.c.h.b16 %v1424
      %v1814 = vunpack.c.l.b16 %v1425
      %v1815 = vunpack.c.h.b16 %v1425
      %v1816 = vpack.c.b16 %v1562, %v1560
      %v1817 = vpack.c.b16 %v1563, %v1561
      %v1818 = vpack.c.b16 %v1566, %v1564
      %v1819 = vpack.c.b16 %v1567, %v1565
      %v1820 = vpack.c.b16 %v1570, %v1568
      %v1821 = vpack.c.b16 %v1571, %v1569
      %v1822 = vpack.c.b16 %v1574, %v1572
      %v1823 = vpack.c.b16 %v1575, %v1573
      %v1824 = vpack.c.b16 %v1578, %v1576
      %v1825 = vpack.c.b16 %v1579, %v1577
      %v1826 = vpack.c.b16 %v1582, %v1580
      %v1827 = vpack.c.b16 %v1583, %v1581
      %v1828 = vpack.c.b16 %v1586, %v1584
      %v1829 = vpack.c.b16 %v1587, %v1585
      %v1830 = vpack.c.b16 %v1590, %v1588
      %v1831 = vpack.c.b16 %v1591, %v1589
      %v1832 = vpack.c.b16 %v1594, %v1592
      %v1833 = vpack.c.b16 %v1595, %v1593
      %v1834 = vpack.c.b16 %v1598, %v1596
      %v1835 = vpack.c.b16 %v1599, %v1597
      %v1836 = vpack.c.b16 %v1602, %v1600
      %v1837 = vpack.c.b16 %v1603, %v1601
      %v1838 = vpack.c.b16 %v1606, %v1604
      %v1839 = vpack.c.b16 %v1607, %v1605
      %v1840 = vpack.c.b16 %v1610, %v1608
      %v1841 = vpack.c.b16 %v1611, %v1609
      %v1842 = vpack.c.b16 %v1614, %v1612
      %v1843 = vpack.c.b16 %v1615, %v1613
      %v1844 = vpack.c.b16 %v1618, %v1616
      %v1845 = vpack.c.b16 %v1619, %v1617
      %v1846 = vpack.c.b16 %v1622, %v1620
      %v1847 = vpack.c.b16 %v1623, %v1621
      %v1848 = vpack.c.b16 %v1626, %v1624
      %v1849 = vpack.c.b16 %v1627, %v1625
      %v1850 = vpack.c.b16 %v1630, %v1628
      %v1851 = vpack.c.b16 %v1631, %v1629
      %v1852 = vpack.c.b16 %v1634, %v1632
      %v1853 = vpack.c.b16 %v1635, %v1633
      %v1854 = vpack.c.b16 %v1638, %v1636
      %v1855 = vpack.c.b16 %v1639, %v1637
      %v1856 = vpack.c.b16 %v1642, %v1640
      %v1857 = vpack.c.b16 %v1643, %v1641
      %v1858 = vpack.c.b16 %v1646, %v1644
      %v1859 = vpack.c.b16 %v1647, %v1645
      %v1860 = vpack.c.b16 %v1650, %v1648
      %v1861 = vpack.c.b16 %v1651, %v1649
      %v1862 = vpack.c.b16 %v1654, %v1652
      %v1863 = vpack.c.b16 %v1655, %v1653
      %v1864 = vpack.c.b16 %v1658, %v1656
      %v1865 = vpack.c.b16 %v1659, %v1657
      %v1866 = vpack.c.b16 %v1662, %v1660
      %v1867 = vpack.c.b16 %v1663, %v1661
      %v1868 = vpack.c.b16 %v1666, %v1664
      %v1869 = vpack.c.b16 %v1667, %v1665
      %v1870 = vpack.c.b16 %v1670, %v1668
      %v1871 = vpack.c.b16 %v1671, %v1669
      %v1872 = vpack.c.b16 %v1674, %v1672
      %v1873 = vpack.c.b16 %v1675, %v1673
      %v1874 = vpack.c.b16 %v1678, %v1676
      %v1875 = vpack.c.b16 %v1679, %v1677
      %v1876 = vpack.c.b16 %v1682, %v1680
      %v1877 = vpack.c.b16 %v1683, %v1681
      %v1878 = vpack.c.b16 %v1686, %v1684
      %v1879 = vpack.c.b16 %v1687, %v1685
      %v1880 = vpack.c.b16 %v1690, %v1688
      %v1881 = vpack.c.b16 %v1691, %v1689
      %v1882 = vpack.c.b16 %v1694, %v1692
      %v1883 = vpack.c.b16 %v1695, %v1693
      %v1884 = vpack.c.b16 %v1698, %v1696
      %v1885 = vpack.c.b16 %v1699, %v1697
      %v1886 = vpack.c.b16 %v1702, %v1700
      %v1887 = vpack.c.b16 %v1703, %v1701
      %v1888 = vpack.c.b16 %v1706, %v1704
      %v1889 = vpack.c.b16 %v1707, %v1705
      %v1890 = vpack.c.b16 %v1710, %v1708
      %v1891 = vpack.c.b16 %v1711, %v1709
      %v1892 = vpack.c.b16 %v1714, %v1712
      %v1893 = vpack.c.b16 %v1715, %v1713
      %v1894 = vpack.c.b16 %v1718, %v1716
      %v1895 = vpack.c.b16 %v1719, %v1717
      %v1896 = vpack.c.b16 %v1722, %v1720
      %v1897 = vpack.c.b16 %v1723, %v1721
      %v1898 = vpack.c.b16 %v1726, %v1724
      %v1899 = vpack.c.b16 %v1727, %v1725
      %v1900 = vpack.c.b16 %v1730, %v1728
      %v1901 = vpack.c.b16 %v1731, %v1729
      %v1902 = vpack.c.b16 %v1734, %v1732
      %v1903 = vpack.c.b16 %v1735, %v1733
      %v1904 = vpack.c.b16 %v1738, %v1736
      %v1905 = vpack.c.b16 %v1739, %v1737
      %v1906 = vpack.c.b16 %v1742, %v1740
      %v1907 = vpack.c.b16 %v1743, %v1741
      %v1908 = vpack.c.b16 %v1746, %v1744
      %v1909 = vpack.c.b16 %v1747, %v1745
      %v1910 = vpack.c.b16 %v1750, %v1748
      %v1911 = vpack.c.b16 %v1751, %v1749
      %v1912 = vpack.c.b16 %v1754, %v1752
      %v1913 = vpack.c.b16 %v1755, %v1753
      %v1914 = vpack.c.b16 %v1758, %v1756
      %v1915 = vpack.c.b16 %v1759, %v1757
      %v1916 = vpack.c.b16 %v1762, %v1760
      %v1917 = vpack.c.b16 %v1763, %v1761
      %v1918 = vpack.c.b16 %v1766, %v1764
      %v1919 = vpack.c.b16 %v1767, %v1765
      %v1920 = vpack.c.b16 %v1770, %v1768
      %v1921 = vpack.c.b16 %v1771, %v1769
      %v1922 = vpack.c.b16 %v1774, %v1772
      %v1923 = vpack.c.b16 %v1775, %v1773
      %v1924 = vpack.c.b16 %v1778, %v1776
      %v1925 = vpack.c.b16 %v1779, %v1777
      %v1926 = vpack.c.b16 %v1782, %v1780
      %v1927 = vpack.c.b16 %v1783, %v1781
      %v1928 = vpack.c.b16 %v1786, %v1784
      %v1929 = vpack.c.b16 %v1787, %v1785
      %v1930 = vpack.c.b16 %v1790, %v1788
      %v1931 = vpack.c.b16 %v1791, %v1789
      %v1932 = vpack.c.b16 %v1794, %v1792
      %v1933 = vpack.c.b16 %v1795, %v1793
      %v1934 = vpack.c.b16 %v1798, %v1796
      %v1935 = vpack.c.b16 %v1799, %v1797
      %v1936 = vpack.c.b16 %v1802, %v1800
      %v1937 = vpack.c.b16 %v1803, %v1801
      %v1938 = vpack.c.b16 %v1806, %v1804
      %v1939 = vpack.c.b16 %v1807, %v1805
      %v1940 = vpack.c.b16 %v1810, %v1808
      %v1941 = vpack.c.b16 %v1811, %v1809
      %v1942 = vpack.c.b16 %v1814, %v1812
      %v1943 = vpack.c.b16 %v1815, %v1813
      %2072 = vmatpush.bf16.msra.mxu0 %v1830
      %2073 = vmatpush.bf16.msra.mxu0 %v1828
      %2074 = vmatpush.bf16.msra.mxu0 %v1826
      %2075 = vmatpush.bf16.msra.mxu0 %v1824
      %2076 = vmatpush.bf16.msra.mxu0 %v1822
      %2077 = vmatpush.bf16.msra.mxu0 %v1820
      %2078 = vmatpush.bf16.msra.mxu0 %v1818
      %2079 = vmatpush.bf16.msra.mxu0 %v1816
      %2080 = vmatmul.bf16.gmra.mxu0 %v1290
      %v2081 = vpop.f32.mrf.mxu0
      %v2082 = vadd.f32 %v1428, %v2081
      %v2083 = vpop.f32.mrf.mxu0
      %2084 = vdwg.mxu0
      %2085 = vmatpush.bf16.msra.mxu0 %v1846
      %2086 = vmatpush.bf16.msra.mxu0 %v1844
      %2087 = vmatpush.bf16.msra.mxu0 %v1842
      %2088 = vmatpush.bf16.msra.mxu0 %v1840
      %2089 = vmatpush.bf16.msra.mxu0 %v1838
      %2090 = vmatpush.bf16.msra.mxu0 %v1836
      %2091 = vmatpush.bf16.msra.mxu0 %v1834
      %2092 = vmatpush.bf16.msra.mxu0 %v1832
      %2093 = vmatmul.bf16.gmra.mxu0 %v1291
      %v2094 = vpop.f32.mrf.mxu0
      %v2095 = vadd.f32 %v2082, %v2094
      %v2096 = vpop.f32.mrf.mxu0
      %2097 = vdwg.mxu0
      %2098 = vmatpush.bf16.msra.mxu0 %v1862
      %2099 = vmatpush.bf16.msra.mxu0 %v1860
      %2100 = vmatpush.bf16.msra.mxu0 %v1858
      %2101 = vmatpush.bf16.msra.mxu0 %v1856
      %2102 = vmatpush.bf16.msra.mxu0 %v1854
      %2103 = vmatpush.bf16.msra.mxu0 %v1852
      %2104 = vmatpush.bf16.msra.mxu0 %v1850
      %2105 = vmatpush.bf16.msra.mxu0 %v1848
      %2106 = vmatmul.bf16.gmra.mxu0 %v1292
      %v2107 = vpop.f32.mrf.mxu0
      %v2108 = vadd.f32 %v2095, %v2107
      %v2109 = vpop.f32.mrf.mxu0
      %2110 = vdwg.mxu0
      %2111 = vmatpush.bf16.msra.mxu0 %v1878
      %2112 = vmatpush.bf16.msra.mxu0 %v1876
      %2113 = vmatpush.bf16.msra.mxu0 %v1874
      %2114 = vmatpush.bf16.msra.mxu0 %v1872
      %2115 = vmatpush.bf16.msra.mxu0 %v1870
      %2116 = vmatpush.bf16.msra.mxu0 %v1868
      %2117 = vmatpush.bf16.msra.mxu0 %v1866
      %2118 = vmatpush.bf16.msra.mxu0 %v1864
      %2119 = vmatmul.bf16.gmra.mxu0 %v1293
      %v2120 = vpop.f32.mrf.mxu0
      %v2121 = vadd.f32 %v2108, %v2120
      %v2122 = vpop.f32.mrf.mxu0
      %2123 = vdwg.mxu0
      %2124 = vmatpush.bf16.msra.mxu0 %v1894
      %2125 = vmatpush.bf16.msra.mxu0 %v1892
      %2126 = vmatpush.bf16.msra.mxu0 %v1890
      %2127 = vmatpush.bf16.msra.mxu0 %v1888
      %2128 = vmatpush.bf16.msra.mxu0 %v1886
      %2129 = vmatpush.bf16.msra.mxu0 %v1884
      %2130 = vmatpush.bf16.msra.mxu0 %v1882
      %2131 = vmatpush.bf16.msra.mxu0 %v1880
      %2132 = vmatmul.bf16.gmra.mxu0 %v1294
      %v2133 = vpop.f32.mrf.mxu0
      %v2134 = vadd.f32 %v2121, %v2133
      %v2135 = vpop.f32.mrf.mxu0
      %2136 = vdwg.mxu0
      %2137 = vmatpush.bf16.msra.mxu0 %v1910
      %2138 = vmatpush.bf16.msra.mxu0 %v1908
      %2139 = vmatpush.bf16.msra.mxu0 %v1906
      %2140 = vmatpush.bf16.msra.mxu0 %v1904
      %2141 = vmatpush.bf16.msra.mxu0 %v1902
      %2142 = vmatpush.bf16.msra.mxu0 %v1900
      %2143 = vmatpush.bf16.msra.mxu0 %v1898
      %2144 = vmatpush.bf16.msra.mxu0 %v1896
      %2145 = vmatmul.bf16.gmra.mxu0 %v1295
      %v2146 = vpop.f32.mrf.mxu0
      %v2147 = vadd.f32 %v2134, %v2146
      %v2148 = vpop.f32.mrf.mxu0
      %2149 = vdwg.mxu0
      %2150 = vmatpush.bf16.msra.mxu0 %v1926
      %2151 = vmatpush.bf16.msra.mxu0 %v1924
      %2152 = vmatpush.bf16.msra.mxu0 %v1922
      %2153 = vmatpush.bf16.msra.mxu0 %v1920
      %2154 = vmatpush.bf16.msra.mxu0 %v1918
      %2155 = vmatpush.bf16.msra.mxu0 %v1916
      %2156 = vmatpush.bf16.msra.mxu0 %v1914
      %2157 = vmatpush.bf16.msra.mxu0 %v1912
      %2158 = vmatmul.bf16.gmra.mxu0 %v1296
      %v2159 = vpop.f32.mrf.mxu0
      %v2160 = vadd.f32 %v2147, %v2159
      %v2161 = vpop.f32.mrf.mxu0
      %2162 = vdwg.mxu0
      %2163 = vmatpush.bf16.msra.mxu0 %v1942
      %2164 = vmatpush.bf16.msra.mxu0 %v1940
      %2165 = vmatpush.bf16.msra.mxu0 %v1938
      %2166 = vmatpush.bf16.msra.mxu0 %v1936
      %2167 = vmatpush.bf16.msra.mxu0 %v1934
      %2168 = vmatpush.bf16.msra.mxu0 %v1932
      %2169 = vmatpush.bf16.msra.mxu0 %v1930
      %2170 = vmatpush.bf16.msra.mxu0 %v1928
      %2171 = vmatmul.bf16.gmra.mxu0 %v1297
      %v2172 = vpop.f32.mrf.mxu0
      %v2173 = vadd.f32 %v2160, %v2172
      %v2174 = vpop.f32.mrf.mxu0
      %2175 = vdwg.mxu0
      %2176 = vmatpush.bf16.msra.mxu0 %v1831
      %2177 = vmatpush.bf16.msra.mxu0 %v1829
      %2178 = vmatpush.bf16.msra.mxu0 %v1827
      %2179 = vmatpush.bf16.msra.mxu0 %v1825
      %2180 = vmatpush.bf16.msra.mxu0 %v1823
      %2181 = vmatpush.bf16.msra.mxu0 %v1821
      %2182 = vmatpush.bf16.msra.mxu0 %v1819
      %2183 = vmatpush.bf16.msra.mxu0 %v1817
      %2184 = vmatmul.bf16.gmra.mxu0 %v1290
      %v2185 = vpop.f32.mrf.mxu0
      %v2186 = vadd.f32 %v1429, %v2185
      %v2187 = vpop.f32.mrf.mxu0
      %2188 = vdwg.mxu0
      %2189 = vmatpush.bf16.msra.mxu0 %v1847
      %2190 = vmatpush.bf16.msra.mxu0 %v1845
      %2191 = vmatpush.bf16.msra.mxu0 %v1843
      %2192 = vmatpush.bf16.msra.mxu0 %v1841
      %2193 = vmatpush.bf16.msra.mxu0 %v1839
      %2194 = vmatpush.bf16.msra.mxu0 %v1837
      %2195 = vmatpush.bf16.msra.mxu0 %v1835
      %2196 = vmatpush.bf16.msra.mxu0 %v1833
      %2197 = vmatmul.bf16.gmra.mxu0 %v1291
      %v2198 = vpop.f32.mrf.mxu0
      %v2199 = vadd.f32 %v2186, %v2198
      %v2200 = vpop.f32.mrf.mxu0
      %2201 = vdwg.mxu0
      %2202 = vmatpush.bf16.msra.mxu0 %v1863
      %2203 = vmatpush.bf16.msra.mxu0 %v1861
      %2204 = vmatpush.bf16.msra.mxu0 %v1859
      %2205 = vmatpush.bf16.msra.mxu0 %v1857
      %2206 = vmatpush.bf16.msra.mxu0 %v1855
      %2207 = vmatpush.bf16.msra.mxu0 %v1853
      %2208 = vmatpush.bf16.msra.mxu0 %v1851
      %2209 = vmatpush.bf16.msra.mxu0 %v1849
      %2210 = vmatmul.bf16.gmra.mxu0 %v1292
      %v2211 = vpop.f32.mrf.mxu0
      %v2212 = vadd.f32 %v2199, %v2211
      %v2213 = vpop.f32.mrf.mxu0
      %2214 = vdwg.mxu0
      %2215 = vmatpush.bf16.msra.mxu0 %v1879
      %2216 = vmatpush.bf16.msra.mxu0 %v1877
      %2217 = vmatpush.bf16.msra.mxu0 %v1875
      %2218 = vmatpush.bf16.msra.mxu0 %v1873
      %2219 = vmatpush.bf16.msra.mxu0 %v1871
      %2220 = vmatpush.bf16.msra.mxu0 %v1869
      %2221 = vmatpush.bf16.msra.mxu0 %v1867
      %2222 = vmatpush.bf16.msra.mxu0 %v1865
      %2223 = vmatmul.bf16.gmra.mxu0 %v1293
      %v2224 = vpop.f32.mrf.mxu0
      %v2225 = vadd.f32 %v2212, %v2224
      %v2226 = vpop.f32.mrf.mxu0
      %2227 = vdwg.mxu0
      %2228 = vmatpush.bf16.msra.mxu0 %v1895
      %2229 = vmatpush.bf16.msra.mxu0 %v1893
      %2230 = vmatpush.bf16.msra.mxu0 %v1891
      %2231 = vmatpush.bf16.msra.mxu0 %v1889
      %2232 = vmatpush.bf16.msra.mxu0 %v1887
      %2233 = vmatpush.bf16.msra.mxu0 %v1885
      %2234 = vmatpush.bf16.msra.mxu0 %v1883
      %2235 = vmatpush.bf16.msra.mxu0 %v1881
      %2236 = vmatmul.bf16.gmra.mxu0 %v1294
      %v2237 = vpop.f32.mrf.mxu0
      %v2238 = vadd.f32 %v2225, %v2237
      %v2239 = vpop.f32.mrf.mxu0
      %2240 = vdwg.mxu0
      %2241 = vmatpush.bf16.msra.mxu0 %v1911
      %2242 = vmatpush.bf16.msra.mxu0 %v1909
      %2243 = vmatpush.bf16.msra.mxu0 %v1907
      %2244 = vmatpush.bf16.msra.mxu0 %v1905
      %2245 = vmatpush.bf16.msra.mxu0 %v1903
      %2246 = vmatpush.bf16.msra.mxu0 %v1901
      %2247 = vmatpush.bf16.msra.mxu0 %v1899
      %2248 = vmatpush.bf16.msra.mxu0 %v1897
      %2249 = vmatmul.bf16.gmra.mxu0 %v1295
      %v2250 = vpop.f32.mrf.mxu0
      %v2251 = vadd.f32 %v2238, %v2250
      %v2252 = vpop.f32.mrf.mxu0
      %2253 = vdwg.mxu0
      %2254 = vmatpush.bf16.msra.mxu0 %v1927
      %2255 = vmatpush.bf16.msra.mxu0 %v1925
      %2256 = vmatpush.bf16.msra.mxu0 %v1923
      %2257 = vmatpush.bf16.msra.mxu0 %v1921
      %2258 = vmatpush.bf16.msra.mxu0 %v1919
      %2259 = vmatpush.bf16.msra.mxu0 %v1917
      %2260 = vmatpush.bf16.msra.mxu0 %v1915
      %2261 = vmatpush.bf16.msra.mxu0 %v1913
      %2262 = vmatmul.bf16.gmra.mxu0 %v1296
      %v2263 = vpop.f32.mrf.mxu0
      %v2264 = vadd.f32 %v2251, %v2263
      %v2265 = vpop.f32.mrf.mxu0
      %2266 = vdwg.mxu0
      %2267 = vmatpush.bf16.msra.mxu0 %v1943
      %2268 = vmatpush.bf16.msra.mxu0 %v1941
      %2269 = vmatpush.bf16.msra.mxu0 %v1939
      %2270 = vmatpush.bf16.msra.mxu0 %v1937
      %2271 = vmatpush.bf16.msra.mxu0 %v1935
      %2272 = vmatpush.bf16.msra.mxu0 %v1933
      %2273 = vmatpush.bf16.msra.mxu0 %v1931
      %2274 = vmatpush.bf16.msra.mxu0 %v1929
      %2275 = vmatmul.bf16.gmra.mxu0 %v1297
      %v2276 = vpop.f32.mrf.mxu0
      %v2277 = vadd.f32 %v2264, %v2276
      %v2278 = vpop.f32.mrf.mxu0
      %2279 = vdwg.mxu0
      %v2282 = vrot.slane %v2277, 4
      %vm2283 = vcmask 1043456
      %v2284 = vsel %vm2283, %v2173, %v2282
      %v2286 = vadd.f32 %v279, %v2284
      %v2287 = vld [vmem:[%s5] sm:$0x3]
      %v2288 = vld [vmem:[%s6] sm:$0x3]
      %2290 = vst [vmem:[#allocation1] ss:$2 sm:$0xff] %v2286
      %v2291 = vld.sshfl [vmem:[#allocation1] sm:$0xff pattern:$0x75316420]
      %v2292 = vld.sshfl [vmem:[#allocation1 + $0x8] sm:$0xff pattern:$0x75316420]
      %v2295 = vsel %vm2283, %v2291, 0.0
      %v2296 = vsel %vm2283, %v2292, 0.0
      %v2297 = vadd.f32 %v2295, %v2296
      %2298 = vadd.xlane.f32.xlu0 %v2297
      %v2299 = vpop.xlane.xlu0 %2298
      %v2300 = vrcp.pop 256.0
      %v2301 = vmul.f32 256.0, %v2300
      %v2302 = vsub.f32 1.0, %v2301
      %v2303 = vmul.f32 %v2300, %v2302
      %v2304 = vadd.f32 %v2300, %v2303
      %vm2305 = vweird.f32 %v2300
      %v2306 = vsel %vm2305, %v2300, %v2304
      %v2307 = vmul.f32 %v2299, %v2306
      %v2310 = vunpack.c.l.s4 839922192
      %v2311 = vunpack.c.0.s8 %v2310
      %v2312 = vperm.slane %v2307, %v2311
      %v2314 = vsub.f32 %v2286, %v2312
      %v2315 = vmul.f32 %v2314, %v2314
      %2317 = vst [vmem:[#allocation1] ss:$2 sm:$0xff] %v2315
      %v2318 = vld.sshfl [vmem:[#allocation1] sm:$0xff pattern:$0x75316420]
      %v2319 = vld.sshfl [vmem:[#allocation1 + $0x8] sm:$0xff pattern:$0x75316420]
      %v2322 = vsel %vm2283, %v2318, 0.0
      %v2323 = vsel %vm2283, %v2319, 0.0
      %v2324 = vadd.f32 %v2322, %v2323
      %2325 = vadd.xlane.f32.xlu0 %v2324
      %v2326 = vpop.xlane.xlu0 %2325
      %v2327 = vmul.f32 %v2326, %v2306
      %v2328 = vadd.f32 %v2327, 1e-05
      %v2329 = vrsqrt.pop %v2328
      %v2330 = vmul.f32 %v2329, %v2328
      %v2331 = vmul.f32 %v2330, %v2329
      %v2332 = vmul.f32 0.5, %v2331
      %v2333 = vsub.f32 1.5, %v2332
      %v2334 = vmul.f32 %v2329, %v2333
      %vm2335 = vweird.f32 %v2328
      %vm2336 = vweird.f32 %v2329
      %vm2337 = vmor %vm2335, %vm2336
      %v2338 = vsel %vm2337, %v2329, %v2334
      %v2341 = vunpack.c.l.s4 839922192
      %v2342 = vunpack.c.0.s8 %v2341
      %v2343 = vperm.slane %v2338, %v2342
      %v2345 = vmul.f32 %v2314, %v2343
      %v2347 = vperm.slane %v2287, 0
      %v2348 = vperm.slane %v2287, 1
      %v2349 = vrot.slane %v2348, 4
      %v2350 = vsel %vm2283, %v2347, %v2349
      %v2352 = vmul.f32 %v2345, %v2350
      %v2354 = vperm.slane %v2288, 0
      %v2355 = vperm.slane %v2288, 1
      %v2356 = vrot.slane %v2355, 4
      %v2357 = vsel %vm2283, %v2354, %v2356
      %v2359 = vadd.f32 %v2352, %v2357
      %2360 = vst [vmem:[%s278] sm:$0xff] %v2359
      %p2361 = scmp.lt.s32.totalorder %s18, 1
      %s2362 = scalar_select %p2361, %s18, 1
      %s2363 = smul.addr %s2362, 2
      %s2364 = smul.addr %s2363, 4
      %s2365 = scalar_lea.vmem %s7, %s2364
      // Predicated region
      $region49: #{policy_transformer_forward.14} parent=47 // pred_check
        %p2366 = pneg %p188
      $region50: #{policy_transformer_forward.14} parent=47 // pred_check_branch
        %2368 = sbr.rel (%p2366) target = $region52
      $region51: #{policy_transformer_forward.14} parent=47 // pred_region
        _
      $region52: #{policy_transformer_forward.14} parent=47 // pred_fallthru
        _
    $region48: #{policy_transformer_forward.14} parent=5 // pred_fallthru
      _
    %p2369 = scmp.le.s32.totalorder 2, %s13
    // Predicated region
    $region53: #{policy_transformer_forward.14} parent=5 // pred_check
      %p2370 = pneg %p2369
    $region54: #{policy_transformer_forward.14} parent=5 // pred_check_branch
      %2372 = sbr.rel (%p2370) target = $region56
    $region55: #{policy_transformer_forward.14} parent=5 // pred_region
      %s2373 = ssub.s32 %s13, 2
      // Predicated region
      $region57: #{policy_transformer_forward.14} parent=55 // pred_check
        %p2374 = pneg %p194
      $region58: #{policy_transformer_forward.14} parent=55 // pred_check_branch
        %2376 = sbr.rel (%p2374) target = $region60
      $region59: #{policy_transformer_forward.14} parent=55 // pred_region
        %p2377 = scmp.lt.s32.totalorder %s19, 1
        %s2378 = scalar_select %p2377, %s19, 1
        %s2379 = smul.addr %s2378, 2
        %s2380 = smul.addr %s2379, 4
        %s2381 = scalar_lea.vmem %s7, %s2380
      $region60: #{policy_transformer_forward.14} parent=55 // pred_fallthru
        _
    $region56: #{policy_transformer_forward.14} parent=5 // pred_fallthru
      _
  $region6: #{policy_transformer_forward.14} parent=0 // loop_footer
    %s17 = sadd.s32 1, %s13
  $region7: #{policy_transformer_forward.14} parent=0 // loop_footer_branch
    %12 = sbr.rel target = $region3
  $region8: #{policy_transformer_forward.14} parent=0 // loop_exit
    _

// kernel: policy_transformer_forward.19
$region0: #{policy_transformer_forward.19}
  #allocation0 [shape = 'u32[]', space=smem, size = 0x4, offset = 0x4, fixed_abs, tag = 'smem constant byte address 0x4 - core index']
  #allocation1 [shape = 'u32[72,128]{1,0:T(1,128)}', space=vmem, size = 0x9000, scoped, tag = 'internal scratch']
  %s0 = inlined_call_operand.vmem [shape: f32[2,4,256], index: 0, kind: input, shape index: {}]
  %s1 = inlined_call_operand.hbm [shape: bf16[256,512], index: 1, kind: input, shape index: {}]
  %s2 = inlined_call_operand.vmem [shape: f32[1,512], index: 2, kind: input, shape index: {}]
  %s3 = inlined_call_operand.hbm [shape: bf16[512,128], index: 3, kind: input, shape index: {}]
  %s4 = inlined_call_operand.vmem [shape: f32[1,128], index: 4, kind: input, shape index: {}]
  %s5 = inlined_call_operand.hbm [shape: f32[2,128], index: 5, kind: output, shape index: {}]
  %s6 = sld [smem:[#allocation0]]
  $region38: #{policy_transformer_forward.19} parent=0
    _
  %s8 = ssub.s32 1, %s6
  %s9 = scalar_select 0, %s8, %s6
  $region1: #{policy_transformer_forward.19} parent=0
    #allocation2 [shape = 'u8[262144]{0}', space=vmem, size = 0x40000, scoped, tag = 'input window, operand 1, single buffered']
    #allocation3 [shape = 's32[1]{0}', space=sflag, size = 0x4, scoped, tag = 'scoped memory for policy_transformer_forward.19']
    #allocation4 [shape = 's32[1]{0}', space=sflag, size = 0x4, scoped, tag = 'scoped memory for policy_transformer_forward.19']
    #allocation5 [shape = 'u8[131072]{0}', space=vmem, size = 0x20000, scoped, tag = 'input window, operand 3, single buffered']
    #allocation6 [shape = 's32[1]{0}', space=sflag, size = 0x4, scoped, tag = 'scoped memory for policy_transformer_forward.19']
    #allocation7 [shape = 'u8[1024]{0}', space=vmem, size = 0x400, scoped, tag = 'output window, operand 0, single buffered']
    %10 = vsyncpa [#allocation3], 0
    %11 = vsyncpa [#allocation6], 0
    %12 = vsyncpa [#allocation4], 0
    // Predicated region
    $region2: #{policy_transformer_forward.19} parent=1 // pred_check
      _
    $region3: #{policy_transformer_forward.19} parent=1 // pred_check_branch
      %14 = sbr.rel (0) target = $region5
    $region4: #{policy_transformer_forward.19} parent=1 // pred_region
      _
    $region5: #{policy_transformer_forward.19} parent=1 // pred_fallthru
      _
    // Predicated region
    $region6: #{policy_transformer_forward.19} parent=1 // pred_check
      _
    $region7: #{policy_transformer_forward.19} parent=1 // pred_check_branch
      %16 = sbr.rel (0) target = $region9
    $region8: #{policy_transformer_forward.19} parent=1 // pred_region
      %18 = vsyncadd [#allocation3], 0
      %s19 = sshll.u32 %s1, 4
      %s20 = int_to_ptr.hbm [resolvable:$true] %s19
      %s21 = sshll.u32 [#allocation2], 4
      %s22 = int_to_ptr.vmem [resolvable:$true] %s21
      %27 = dma.hbm_to_vmem [thread:$0]  %s20, 8192, %s22, [#allocation3], 256, 256, 16
    $region9: #{policy_transformer_forward.19} parent=1 // pred_fallthru
      _
    // Predicated region
    $region10: #{policy_transformer_forward.19} parent=1 // pred_check
      _
    $region11: #{policy_transformer_forward.19} parent=1 // pred_check_branch
      %29 = sbr.rel (0) target = $region13
    $region12: #{policy_transformer_forward.19} parent=1 // pred_region
      _
    $region13: #{policy_transformer_forward.19} parent=1 // pred_fallthru
      _
    // Predicated region
    $region14: #{policy_transformer_forward.19} parent=1 // pred_check
      _
    $region15: #{policy_transformer_forward.19} parent=1 // pred_check_branch
      %31 = sbr.rel (0) target = $region17
    $region16: #{policy_transformer_forward.19} parent=1 // pred_region
      %33 = vsyncadd [#allocation6], 0
      %s34 = sshll.u32 %s3, 4
      %s35 = int_to_ptr.hbm [resolvable:$true] %s34
      %s36 = sshll.u32 [#allocation5], 4
      %s37 = int_to_ptr.vmem [resolvable:$true] %s36
      %42 = dma.hbm_to_vmem [thread:$0]  %s35, 4096, %s37, [#allocation6], 64, 64, 4
    $region17: #{policy_transformer_forward.19} parent=1 // pred_fallthru
      _
    // Predicated region
    $region18: #{policy_transformer_forward.19} parent=1 // pred_check
      _
    $region19: #{policy_transformer_forward.19} parent=1 // pred_check_branch
      %44 = sbr.rel (0) target = $region21
    $region20: #{policy_transformer_forward.19} parent=1 // pred_region
      _
    $region21: #{policy_transformer_forward.19} parent=1 // pred_fallthru
      _
    // Predicated region
    $region22: #{policy_transformer_forward.19} parent=1 // pred_check
      _
    $region23: #{policy_transformer_forward.19} parent=1 // pred_check_branch
      %46 = sbr.rel (0) target = $region25
    $region24: #{policy_transformer_forward.19} parent=1 // pred_region
      %48 = dma.done [#allocation3], 8192
    $region25: #{policy_transformer_forward.19} parent=1 // pred_fallthru
      _
    // Predicated region
    $region26: #{policy_transformer_forward.19} parent=1 // pred_check
      _
    $region27: #{policy_transformer_forward.19} parent=1 // pred_check_branch
      %50 = sbr.rel (0) target = $region29
    $region28: #{policy_transformer_forward.19} parent=1 // pred_region
      %52 = dma.done [#allocation6], 4096
    $region29: #{policy_transformer_forward.19} parent=1 // pred_fallthru
      _
    %v53 = vld [vmem:[%s0] sm:$0xff]
    %v54 = vld [vmem:[%s0 + $0x8] sm:$0xff]
    %57 = vst [vmem:[#allocation1] ss:$2 sm:$0xff] %v53
    %v58 = vld.sshfl [vmem:[#allocation1] sm:$0xff pattern:$0x75316420]
    %v59 = vld.sshfl [vmem:[#allocation1 + $0x8] sm:$0xff pattern:$0x75316420]
    %s60 = scalar_lea.vmem [#allocation1], 16
    %61 = vst [vmem:[%s60] ss:$2 sm:$0xff] %v54
    %v62 = vld.sshfl [vmem:[#allocation1 + $0x10] sm:$0xff pattern:$0x75316420]
    %v63 = vld.sshfl [vmem:[#allocation1 + $0x18] sm:$0xff pattern:$0x75316420]
    %vm68 = vcmask 1043456
    %v69 = vsel %vm68, %v58, 0.0
    %v70 = vrot.slane %v69, 4
    %v71 = vadd.f32 %v69, %v70
    %v72 = vrot.slane %v71, 2
    %v73 = vadd.f32 %v71, %v72
    %v74 = vrot.slane %v73, 1
    %v75 = vadd.f32 %v73, %v74
    %v76 = vsel %vm68, %v59, 0.0
    %v77 = vrot.slane %v76, 4
    %v78 = vadd.f32 %v76, %v77
    %v79 = vrot.slane %v78, 2
    %v80 = vadd.f32 %v78, %v79
    %v81 = vrot.slane %v80, 1
    %v82 = vadd.f32 %v80, %v81
    %v83 = vsel %vm68, %v62, 0.0
    %v84 = vrot.slane %v83, 4
    %v85 = vadd.f32 %v83, %v84
    %v86 = vrot.slane %v85, 2
    %v87 = vadd.f32 %v85, %v86
    %v88 = vrot.slane %v87, 1
    %v89 = vadd.f32 %v87, %v88
    %v90 = vsel %vm68, %v63, 0.0
    %v91 = vrot.slane %v90, 4
    %v92 = vadd.f32 %v90, %v91
    %v93 = vrot.slane %v92, 2
    %v94 = vadd.f32 %v92, %v93
    %v95 = vrot.slane %v94, 1
    %v96 = vadd.f32 %v94, %v95
    %v97 = vrcp.pop 4.0
    %v98 = vmul.f32 4.0, %v97
    %v99 = vsub.f32 1.0, %v98
    %v100 = vmul.f32 %v97, %v99
    %v101 = vadd.f32 %v97, %v100
    %vm102 = vweird.f32 %v97
    %v103 = vsel %vm102, %v97, %v101
    %v104 = vmul.f32 %v75, %v103
    %v105 = vmul.f32 %v82, %v103
    %v106 = vmul.f32 %v89, %v103
    %v107 = vmul.f32 %v96, %v103
    %v108 = vpack.c.bf16 %v104, %v104
    %v109 = vpack.c.bf16 %v105, %v105
    %v110 = vpack.c.bf16 %v106, %v106
    %v111 = vpack.c.bf16 %v107, %v107
    %v112 = vld [vmem:[#allocation2] sm:$0xff]
    %v113 = vld [vmem:[#allocation2 + $0x8] sm:$0xff]
    %v114 = vld [vmem:[#allocation2 + $0x10] sm:$0xff]
    %v115 = vld [vmem:[#allocation2 + $0x18] sm:$0xff]
    %v116 = vld [vmem:[#allocation2 + $0x20] sm:$0xff]
    %v117 = vld [vmem:[#allocation2 + $0x28] sm:$0xff]
    %v118 = vld [vmem:[#allocation2 + $0x30] sm:$0xff]
    %v119 = vld [vmem:[#allocation2 + $0x38] sm:$0xff]
    %v120 = vld [vmem:[#allocation2 + $0x40] sm:$0xff]
    %v121 = vld [vmem:[#allocation2 + $0x48] sm:$0xff]
    %v122 = vld [vmem:[#allocation2 + $0x50] sm:$0xff]
    %v123 = vld [vmem:[#allocation2 + $0x58] sm:$0xff]
    %v124 = vld [vmem:[#allocation2 + $0x60] sm:$0xff]
    %v125 = vld [vmem:[#allocation2 + $0x68] sm:$0xff]
    %v126 = vld [vmem:[#allocation2 + $0x70] sm:$0xff]
    %v127 = vld [vmem:[#allocation2 + $0x78] sm:$0xff]
    %v128 = vld [vmem:[#allocation2 + $0x80] sm:$0xff]
    %v129 = vld [vmem:[#allocation2 + $0x88] sm:$0xff]
    %v130 = vld [vmem:[#allocation2 + $0x90] sm:$0xff]
    %v131 = vld [vmem:[#allocation2 + $0x98] sm:$0xff]
    %v132 = vld [vmem:[#allocation2 + $0xa0] sm:$0xff]
    %v133 = vld [vmem:[#allocation2 + $0xa8] sm:$0xff]
    %v134 = vld [vmem:[#allocation2 + $0xb0] sm:$0xff]
    %v135 = vld [vmem:[#allocation2 + $0xb8] sm:$0xff]
    %v136 = vld [vmem:[#allocation2 + $0xc0] sm:$0xff]
    %v137 = vld [vmem:[#allocation2 + $0xc8] sm:$0xff]
    %v138 = vld [vmem:[#allocation2 + $0xd0] sm:$0xff]
    %v139 = vld [vmem:[#allocation2 + $0xd8] sm:$0xff]
    %v140 = vld [vmem:[#allocation2 + $0xe0] sm:$0xff]
    %v141 = vld [vmem:[#allocation2 + $0xe8] sm:$0xff]
    %v142 = vld [vmem:[#allocation2 + $0xf0] sm:$0xff]
    %v143 = vld [vmem:[#allocation2 + $0xf8] sm:$0xff]
    %v144 = vld [vmem:[#allocation2 + $0x100] sm:$0xff]
    %v145 = vld [vmem:[#allocation2 + $0x108] sm:$0xff]
    %v146 = vld [vmem:[#allocation2 + $0x110] sm:$0xff]
    %v147 = vld [vmem:[#allocation2 + $0x118] sm:$0xff]
    %v148 = vld [vmem:[#allocation2 + $0x120] sm:$0xff]
    %v149 = vld [vmem:[#allocation2 + $0x128] sm:$0xff]
    %v150 = vld [vmem:[#allocation2 + $0x130] sm:$0xff]
    %v151 = vld [vmem:[#allocation2 + $0x138] sm:$0xff]
    %v152 = vld [vmem:[#allocation2 + $0x140] sm:$0xff]
    %v153 = vld [vmem:[#allocation2 + $0x148] sm:$0xff]
    %v154 = vld [vmem:[#allocation2 + $0x150] sm:$0xff]
    %v155 = vld [vmem:[#allocation2 + $0x158] sm:$0xff]
    %v156 = vld [vmem:[#allocation2 + $0x160] sm:$0xff]
    %v157 = vld [vmem:[#allocation2 + $0x168] sm:$0xff]
    %v158 = vld [vmem:[#allocation2 + $0x170] sm:$0xff]
    %v159 = vld [vmem:[#allocation2 + $0x178] sm:$0xff]
    %v160 = vld [vmem:[#allocation2 + $0x180] sm:$0xff]
    %v161 = vld [vmem:[#allocation2 + $0x188] sm:$0xff]
    %v162 = vld [vmem:[#allocation2 + $0x190] sm:$0xff]
    %v163 = vld [vmem:[#allocation2 + $0x198] sm:$0xff]
    %v164 = vld [vmem:[#allocation2 + $0x1a0] sm:$0xff]
    %v165 = vld [vmem:[#allocation2 + $0x1a8] sm:$0xff]
    %v166 = vld [vmem:[#allocation2 + $0x1b0] sm:$0xff]
    %v167 = vld [vmem:[#allocation2 + $0x1b8] sm:$0xff]
    %v168 = vld [vmem:[#allocation2 + $0x1c0] sm:$0xff]
    %v169 = vld [vmem:[#allocation2 + $0x1c8] sm:$0xff]
    %v170 = vld [vmem:[#allocation2 + $0x1d0] sm:$0xff]
    %v171 = vld [vmem:[#allocation2 + $0x1d8] sm:$0xff]
    %v172 = vld [vmem:[#allocation2 + $0x1e0] sm:$0xff]
    %v173 = vld [vmem:[#allocation2 + $0x1e8] sm:$0xff]
    %v174 = vld [vmem:[#allocation2 + $0x1f0] sm:$0xff]
    %v175 = vld [vmem:[#allocation2 + $0x1f8] sm:$0xff]
    %v176 = vld [vmem:[%s2] sm:$0xf]
    %v178 = vperm.slane %v176, 0
    %v179 = vperm.slane %v176, 1
    %v180 = vperm.slane %v176, 2
    %v181 = vperm.slane %v176, 3
    %v190 = vunpack.c.l.b16 %v108
    %v191 = vunpack.c.l.b16 %v109
    %v192 = vunpack.c.l.b16 %v110
    %v193 = vunpack.c.l.b16 %v111
    %vm194 = vcmask 1041409
    %v195 = vsel %vm194, %v192, %v190
    %v196 = vsel %vm194, %v193, %v191
    %v197 = vpack.c.b16 %v195, %v195
    %v198 = vpack.c.b16 %v196, %v196
    %v265 = vunpack.c.l.b16 %v112
    %v266 = vunpack.c.h.b16 %v112
    %v267 = vunpack.c.l.b16 %v113
    %v268 = vunpack.c.h.b16 %v113
    %v269 = vunpack.c.l.b16 %v114
    %v270 = vunpack.c.h.b16 %v114
    %v271 = vunpack.c.l.b16 %v115
    %v272 = vunpack.c.h.b16 %v115
    %v273 = vunpack.c.l.b16 %v116
    %v274 = vunpack.c.h.b16 %v116
    %v275 = vunpack.c.l.b16 %v117
    %v276 = vunpack.c.h.b16 %v117
    %v277 = vunpack.c.l.b16 %v118
    %v278 = vunpack.c.h.b16 %v118
    %v279 = vunpack.c.l.b16 %v119
    %v280 = vunpack.c.h.b16 %v119
    %v281 = vunpack.c.l.b16 %v120
    %v282 = vunpack.c.h.b16 %v120
    %v283 = vunpack.c.l.b16 %v121
    %v284 = vunpack.c.h.b16 %v121
    %v285 = vunpack.c.l.b16 %v122
    %v286 = vunpack.c.h.b16 %v122
    %v287 = vunpack.c.l.b16 %v123
    %v288 = vunpack.c.h.b16 %v123
    %v289 = vunpack.c.l.b16 %v124
    %v290 = vunpack.c.h.b16 %v124
    %v291 = vunpack.c.l.b16 %v125
    %v292 = vunpack.c.h.b16 %v125
    %v293 = vunpack.c.l.b16 %v126
    %v294 = vunpack.c.h.b16 %v126
    %v295 = vunpack.c.l.b16 %v127
    %v296 = vunpack.c.h.b16 %v127
    %v297 = vunpack.c.l.b16 %v128
    %v298 = vunpack.c.h.b16 %v128
    %v299 = vunpack.c.l.b16 %v129
    %v300 = vunpack.c.h.b16 %v129
    %v301 = vunpack.c.l.b16 %v130
    %v302 = vunpack.c.h.b16 %v130
    %v303 = vunpack.c.l.b16 %v131
    %v304 = vunpack.c.h.b16 %v131
    %v305 = vunpack.c.l.b16 %v132
    %v306 = vunpack.c.h.b16 %v132
    %v307 = vunpack.c.l.b16 %v133
    %v308 = vunpack.c.h.b16 %v133
    %v309 = vunpack.c.l.b16 %v134
    %v310 = vunpack.c.h.b16 %v134
    %v311 = vunpack.c.l.b16 %v135
    %v312 = vunpack.c.h.b16 %v135
    %v313 = vunpack.c.l.b16 %v136
    %v314 = vunpack.c.h.b16 %v136
    %v315 = vunpack.c.l.b16 %v137
    %v316 = vunpack.c.h.b16 %v137
    %v317 = vunpack.c.l.b16 %v138
    %v318 = vunpack.c.h.b16 %v138
    %v319 = vunpack.c.l.b16 %v139
    %v320 = vunpack.c.h.b16 %v139
    %v321 = vunpack.c.l.b16 %v140
    %v322 = vunpack.c.h.b16 %v140
    %v323 = vunpack.c.l.b16 %v141
    %v324 = vunpack.c.h.b16 %v141
    %v325 = vunpack.c.l.b16 %v142
    %v326 = vunpack.c.h.b16 %v142
    %v327 = vunpack.c.l.b16 %v143
    %v328 = vunpack.c.h.b16 %v143
    %v329 = vunpack.c.l.b16 %v144
    %v330 = vunpack.c.h.b16 %v144
    %v331 = vunpack.c.l.b16 %v145
    %v332 = vunpack.c.h.b16 %v145
    %v333 = vunpack.c.l.b16 %v146
    %v334 = vunpack.c.h.b16 %v146
    %v335 = vunpack.c.l.b16 %v147
    %v336 = vunpack.c.h.b16 %v147
    %v337 = vunpack.c.l.b16 %v148
    %v338 = vunpack.c.h.b16 %v148
    %v339 = vunpack.c.l.b16 %v149
    %v340 = vunpack.c.h.b16 %v149
    %v341 = vunpack.c.l.b16 %v150
    %v342 = vunpack.c.h.b16 %v150
    %v343 = vunpack.c.l.b16 %v151
    %v344 = vunpack.c.h.b16 %v151
    %v345 = vunpack.c.l.b16 %v152
    %v346 = vunpack.c.h.b16 %v152
    %v347 = vunpack.c.l.b16 %v153
    %v348 = vunpack.c.h.b16 %v153
    %v349 = vunpack.c.l.b16 %v154
    %v350 = vunpack.c.h.b16 %v154
    %v351 = vunpack.c.l.b16 %v155
    %v352 = vunpack.c.h.b16 %v155
    %v353 = vunpack.c.l.b16 %v156
    %v354 = vunpack.c.h.b16 %v156
    %v355 = vunpack.c.l.b16 %v157
    %v356 = vunpack.c.h.b16 %v157
    %v357 = vunpack.c.l.b16 %v158
    %v358 = vunpack.c.h.b16 %v158
    %v359 = vunpack.c.l.b16 %v159
    %v360 = vunpack.c.h.b16 %v159
    %v361 = vunpack.c.l.b16 %v160
    %v362 = vunpack.c.h.b16 %v160
    %v363 = vunpack.c.l.b16 %v161
    %v364 = vunpack.c.h.b16 %v161
    %v365 = vunpack.c.l.b16 %v162
    %v366 = vunpack.c.h.b16 %v162
    %v367 = vunpack.c.l.b16 %v163
    %v368 = vunpack.c.h.b16 %v163
    %v369 = vunpack.c.l.b16 %v164
    %v370 = vunpack.c.h.b16 %v164
    %v371 = vunpack.c.l.b16 %v165
    %v372 = vunpack.c.h.b16 %v165
    %v373 = vunpack.c.l.b16 %v166
    %v374 = vunpack.c.h.b16 %v166
    %v375 = vunpack.c.l.b16 %v167
    %v376 = vunpack.c.h.b16 %v167
    %v377 = vunpack.c.l.b16 %v168
    %v378 = vunpack.c.h.b16 %v168
    %v379 = vunpack.c.l.b16 %v169
    %v380 = vunpack.c.h.b16 %v169
    %v381 = vunpack.c.l.b16 %v170
    %v382 = vunpack.c.h.b16 %v170
    %v383 = vunpack.c.l.b16 %v171
    %v384 = vunpack.c.h.b16 %v171
    %v385 = vunpack.c.l.b16 %v172
    %v386 = vunpack.c.h.b16 %v172
    %v387 = vunpack.c.l.b16 %v173
    %v388 = vunpack.c.h.b16 %v173
    %v389 = vunpack.c.l.b16 %v174
    %v390 = vunpack.c.h.b16 %v174
    %v391 = vunpack.c.l.b16 %v175
    %v392 = vunpack.c.h.b16 %v175
    %v393 = vpack.c.b16 %v269, %v265
    %v394 = vpack.c.b16 %v270, %v266
    %v395 = vpack.c.b16 %v271, %v267
    %v396 = vpack.c.b16 %v272, %v268
    %v397 = vpack.c.b16 %v277, %v273
    %v398 = vpack.c.b16 %v278, %v274
    %v399 = vpack.c.b16 %v279, %v275
    %v400 = vpack.c.b16 %v280, %v276
    %v401 = vpack.c.b16 %v285, %v281
    %v402 = vpack.c.b16 %v286, %v282
    %v403 = vpack.c.b16 %v287, %v283
    %v404 = vpack.c.b16 %v288, %v284
    %v405 = vpack.c.b16 %v293, %v289
    %v406 = vpack.c.b16 %v294, %v290
    %v407 = vpack.c.b16 %v295, %v291
    %v408 = vpack.c.b16 %v296, %v292
    %v409 = vpack.c.b16 %v301, %v297
    %v410 = vpack.c.b16 %v302, %v298
    %v411 = vpack.c.b16 %v303, %v299
    %v412 = vpack.c.b16 %v304, %v300
    %v413 = vpack.c.b16 %v309, %v305
    %v414 = vpack.c.b16 %v310, %v306
    %v415 = vpack.c.b16 %v311, %v307
    %v416 = vpack.c.b16 %v312, %v308
    %v417 = vpack.c.b16 %v317, %v313
    %v418 = vpack.c.b16 %v318, %v314
    %v419 = vpack.c.b16 %v319, %v315
    %v420 = vpack.c.b16 %v320, %v316
    %v421 = vpack.c.b16 %v325, %v321
    %v422 = vpack.c.b16 %v326, %v322
    %v423 = vpack.c.b16 %v327, %v323
    %v424 = vpack.c.b16 %v328, %v324
    %v425 = vpack.c.b16 %v333, %v329
    %v426 = vpack.c.b16 %v334, %v330
    %v427 = vpack.c.b16 %v335, %v331
    %v428 = vpack.c.b16 %v336, %v332
    %v429 = vpack.c.b16 %v341, %v337
    %v430 = vpack.c.b16 %v342, %v338
    %v431 = vpack.c.b16 %v343, %v339
    %v432 = vpack.c.b16 %v344, %v340
    %v433 = vpack.c.b16 %v349, %v345
    %v434 = vpack.c.b16 %v350, %v346
    %v435 = vpack.c.b16 %v351, %v347
    %v436 = vpack.c.b16 %v352, %v348
    %v437 = vpack.c.b16 %v357, %v353
    %v438 = vpack.c.b16 %v358, %v354
    %v439 = vpack.c.b16 %v359, %v355
    %v440 = vpack.c.b16 %v360, %v356
    %v441 = vpack.c.b16 %v365, %v361
    %v442 = vpack.c.b16 %v366, %v362
    %v443 = vpack.c.b16 %v367, %v363
    %v444 = vpack.c.b16 %v368, %v364
    %v445 = vpack.c.b16 %v373, %v369
    %v446 = vpack.c.b16 %v374, %v370
    %v447 = vpack.c.b16 %v375, %v371
    %v448 = vpack.c.b16 %v376, %v372
    %v449 = vpack.c.b16 %v381, %v377
    %v450 = vpack.c.b16 %v382, %v378
    %v451 = vpack.c.b16 %v383, %v379
    %v452 = vpack.c.b16 %v384, %v380
    %v453 = vpack.c.b16 %v389, %v385
    %v454 = vpack.c.b16 %v390, %v386
    %v455 = vpack.c.b16 %v391, %v387
    %v456 = vpack.c.b16 %v392, %v388
    %521 = vmatpush.bf16.msra.mxu0 %v421
    %522 = vmatpush.bf16.msra.mxu0 %v417
    %523 = vmatpush.bf16.msra.mxu0 %v413
    %524 = vmatpush.bf16.msra.mxu0 %v409
    %525 = vmatpush.bf16.msra.mxu0 %v405
    %526 = vmatpush.bf16.msra.mxu0 %v401
    %527 = vmatpush.bf16.msra.mxu0 %v397
    %528 = vmatpush.bf16.msra.mxu0 %v393
    %529 = vmatmul.bf16.gmra.mxu0 %v197
    %v530 = vpop.f32.mrf.mxu0
    %v531 = vadd.f32 %v178, %v530
    %v532 = vpop.f32.mrf.mxu0
    %533 = vdwg.mxu0
    %534 = vmatpush.bf16.msra.mxu0 %v453
    %535 = vmatpush.bf16.msra.mxu0 %v449
    %536 = vmatpush.bf16.msra.mxu0 %v445
    %537 = vmatpush.bf16.msra.mxu0 %v441
    %538 = vmatpush.bf16.msra.mxu0 %v437
    %539 = vmatpush.bf16.msra.mxu0 %v433
    %540 = vmatpush.bf16.msra.mxu0 %v429
    %541 = vmatpush.bf16.msra.mxu0 %v425
    %542 = vmatmul.bf16.gmra.mxu0 %v198
    %v543 = vpop.f32.mrf.mxu0
    %v544 = vadd.f32 %v531, %v543
    %v545 = vpop.f32.mrf.mxu0
    %546 = vdwg.mxu0
    %547 = vmatpush.bf16.msra.mxu0 %v422
    %548 = vmatpush.bf16.msra.mxu0 %v418
    %549 = vmatpush.bf16.msra.mxu0 %v414
    %550 = vmatpush.bf16.msra.mxu0 %v410
    %551 = vmatpush.bf16.msra.mxu0 %v406
    %552 = vmatpush.bf16.msra.mxu0 %v402
    %553 = vmatpush.bf16.msra.mxu0 %v398
    %554 = vmatpush.bf16.msra.mxu0 %v394
    %555 = vmatmul.bf16.gmra.mxu0 %v197
    %v556 = vpop.f32.mrf.mxu0
    %v557 = vadd.f32 %v179, %v556
    %v558 = vpop.f32.mrf.mxu0
    %559 = vdwg.mxu0
    %560 = vmatpush.bf16.msra.mxu0 %v454
    %561 = vmatpush.bf16.msra.mxu0 %v450
    %562 = vmatpush.bf16.msra.mxu0 %v446
    %563 = vmatpush.bf16.msra.mxu0 %v442
    %564 = vmatpush.bf16.msra.mxu0 %v438
    %565 = vmatpush.bf16.msra.mxu0 %v434
    %566 = vmatpush.bf16.msra.mxu0 %v430
    %567 = vmatpush.bf16.msra.mxu0 %v426
    %568 = vmatmul.bf16.gmra.mxu0 %v198
    %v569 = vpop.f32.mrf.mxu0
    %v570 = vadd.f32 %v557, %v569
    %v571 = vpop.f32.mrf.mxu0
    %572 = vdwg.mxu0
    %573 = vmatpush.bf16.msra.mxu0 %v423
    %574 = vmatpush.bf16.msra.mxu0 %v419
    %575 = vmatpush.bf16.msra.mxu0 %v415
    %576 = vmatpush.bf16.msra.mxu0 %v411
    %577 = vmatpush.bf16.msra.mxu0 %v407
    %578 = vmatpush.bf16.msra.mxu0 %v403
    %579 = vmatpush.bf16.msra.mxu0 %v399
    %580 = vmatpush.bf16.msra.mxu0 %v395
    %581 = vmatmul.bf16.gmra.mxu0 %v197
    %v582 = vpop.f32.mrf.mxu0
    %v583 = vadd.f32 %v180, %v582
    %v584 = vpop.f32.mrf.mxu0
    %585 = vdwg.mxu0
    %586 = vmatpush.bf16.msra.mxu0 %v455
    %587 = vmatpush.bf16.msra.mxu0 %v451
    %588 = vmatpush.bf16.msra.mxu0 %v447
    %589 = vmatpush.bf16.msra.mxu0 %v443
    %590 = vmatpush.bf16.msra.mxu0 %v439
    %591 = vmatpush.bf16.msra.mxu0 %v435
    %592 = vmatpush.bf16.msra.mxu0 %v431
    %593 = vmatpush.bf16.msra.mxu0 %v427
    %594 = vmatmul.bf16.gmra.mxu0 %v198
    %v595 = vpop.f32.mrf.mxu0
    %v596 = vadd.f32 %v583, %v595
    %v597 = vpop.f32.mrf.mxu0
    %598 = vdwg.mxu0
    %599 = vmatpush.bf16.msra.mxu0 %v424
    %600 = vmatpush.bf16.msra.mxu0 %v420
    %601 = vmatpush.bf16.msra.mxu0 %v416
    %602 = vmatpush.bf16.msra.mxu0 %v412
    %603 = vmatpush.bf16.msra.mxu0 %v408
    %604 = vmatpush.bf16.msra.mxu0 %v404
    %605 = vmatpush.bf16.msra.mxu0 %v400
    %606 = vmatpush.bf16.msra.mxu0 %v396
    %607 = vmatmul.bf16.gmra.mxu0 %v197
    %v608 = vpop.f32.mrf.mxu0
    %v609 = vadd.f32 %v181, %v608
    %v610 = vpop.f32.mrf.mxu0
    %611 = vdwg.mxu0
    %612 = vmatpush.bf16.msra.mxu0 %v456
    %613 = vmatpush.bf16.msra.mxu0 %v452
    %614 = vmatpush.bf16.msra.mxu0 %v448
    %615 = vmatpush.bf16.msra.mxu0 %v444
    %616 = vmatpush.bf16.msra.mxu0 %v440
    %617 = vmatpush.bf16.msra.mxu0 %v436
    %618 = vmatpush.bf16.msra.mxu0 %v432
    %619 = vmatpush.bf16.msra.mxu0 %v428
    %620 = vmatmul.bf16.gmra.mxu0 %v198
    %v621 = vpop.f32.mrf.mxu0
    %v622 = vadd.f32 %v609, %v621
    %v623 = vpop.f32.mrf.mxu0
    %624 = vdwg.mxu0
    %v625 = vmax.f32 %v544, 0.0
    %v626 = vmax.f32 %v570, 0.0
    %v627 = vmax.f32 %v596, 0.0
    %v628 = vmax.f32 %v622, 0.0
    %v629 = vpack.c.bf16 %v625, %v625
    %v630 = vpack.c.bf16 %v626, %v626
    %v631 = vpack.c.bf16 %v627, %v627
    %v632 = vpack.c.bf16 %v628, %v628
    %v633 = vld [vmem:[#allocation5] sm:$0xf]
    %v634 = vld [vmem:[#allocation5 + $0x4] sm:$0xf]
    %v635 = vld [vmem:[#allocation5 + $0x8] sm:$0xf]
    %v636 = vld [vmem:[#allocation5 + $0xc] sm:$0xf]
    %v637 = vld [vmem:[#allocation5 + $0x10] sm:$0xf]
    %v638 = vld [vmem:[#allocation5 + $0x14] sm:$0xf]
    %v639 = vld [vmem:[#allocation5 + $0x18] sm:$0xf]
    %v640 = vld [vmem:[#allocation5 + $0x1c] sm:$0xf]
    %v641 = vld [vmem:[#allocation5 + $0x20] sm:$0xf]
    %v642 = vld [vmem:[#allocation5 + $0x24] sm:$0xf]
    %v643 = vld [vmem:[#allocation5 + $0x28] sm:$0xf]
    %v644 = vld [vmem:[#allocation5 + $0x2c] sm:$0xf]
    %v645 = vld [vmem:[#allocation5 + $0x30] sm:$0xf]
    %v646 = vld [vmem:[#allocation5 + $0x34] sm:$0xf]
    %v647 = vld [vmem:[#allocation5 + $0x38] sm:$0xf]
    %v648 = vld [vmem:[#allocation5 + $0x3c] sm:$0xf]
    %v649 = vld [vmem:[#allocation5 + $0x40] sm:$0xf]
    %v650 = vld [vmem:[#allocation5 + $0x44] sm:$0xf]
    %v651 = vld [vmem:[#allocation5 + $0x48] sm:$0xf]
    %v652 = vld [vmem:[#allocation5 + $0x4c] sm:$0xf]
    %v653 = vld [vmem:[#allocation5 + $0x50] sm:$0xf]
    %v654 = vld [vmem:[#allocation5 + $0x54] sm:$0xf]
    %v655 = vld [vmem:[#allocation5 + $0x58] sm:$0xf]
    %v656 = vld [vmem:[#allocation5 + $0x5c] sm:$0xf]
    %v657 = vld [vmem:[#allocation5 + $0x60] sm:$0xf]
    %v658 = vld [vmem:[#allocation5 + $0x64] sm:$0xf]
    %v659 = vld [vmem:[#allocation5 + $0x68] sm:$0xf]
    %v660 = vld [vmem:[#allocation5 + $0x6c] sm:$0xf]
    %v661 = vld [vmem:[#allocation5 + $0x70] sm:$0xf]
    %v662 = vld [vmem:[#allocation5 + $0x74] sm:$0xf]
    %v663 = vld [vmem:[#allocation5 + $0x78] sm:$0xf]
    %v664 = vld [vmem:[#allocation5 + $0x7c] sm:$0xf]
    %v665 = vld [vmem:[#allocation5 + $0x80] sm:$0xf]
    %v666 = vld [vmem:[#allocation5 + $0x84] sm:$0xf]
    %v667 = vld [vmem:[#allocation5 + $0x88] sm:$0xf]
    %v668 = vld [vmem:[#allocation5 + $0x8c] sm:$0xf]
    %v669 = vld [vmem:[#allocation5 + $0x90] sm:$0xf]
    %v670 = vld [vmem:[#allocation5 + $0x94] sm:$0xf]
    %v671 = vld [vmem:[#allocation5 + $0x98] sm:$0xf]
    %v672 = vld [vmem:[#allocation5 + $0x9c] sm:$0xf]
    %v673 = vld [vmem:[#allocation5 + $0xa0] sm:$0xf]
    %v674 = vld [vmem:[#allocation5 + $0xa4] sm:$0xf]
    %v675 = vld [vmem:[#allocation5 + $0xa8] sm:$0xf]
    %v676 = vld [vmem:[#allocation5 + $0xac] sm:$0xf]
    %v677 = vld [vmem:[#allocation5 + $0xb0] sm:$0xf]
    %v678 = vld [vmem:[#allocation5 + $0xb4] sm:$0xf]
    %v679 = vld [vmem:[#allocation5 + $0xb8] sm:$0xf]
    %v680 = vld [vmem:[#allocation5 + $0xbc] sm:$0xf]
    %v681 = vld [vmem:[#allocation5 + $0xc0] sm:$0xf]
    %v682 = vld [vmem:[#allocation5 + $0xc4] sm:$0xf]
    %v683 = vld [vmem:[#allocation5 + $0xc8] sm:$0xf]
    %v684 = vld [vmem:[#allocation5 + $0xcc] sm:$0xf]
    %v685 = vld [vmem:[#allocation5 + $0xd0] sm:$0xf]
    %v686 = vld [vmem:[#allocation5 + $0xd4] sm:$0xf]
    %v687 = vld [vmem:[#allocation5 + $0xd8] sm:$0xf]
    %v688 = vld [vmem:[#allocation5 + $0xdc] sm:$0xf]
    %v689 = vld [vmem:[#allocation5 + $0xe0] sm:$0xf]
    %v690 = vld [vmem:[#allocation5 + $0xe4] sm:$0xf]
    %v691 = vld [vmem:[#allocation5 + $0xe8] sm:$0xf]
    %v692 = vld [vmem:[#allocation5 + $0xec] sm:$0xf]
    %v693 = vld [vmem:[#allocation5 + $0xf0] sm:$0xf]
    %v694 = vld [vmem:[#allocation5 + $0xf4] sm:$0xf]
    %v695 = vld [vmem:[#allocation5 + $0xf8] sm:$0xf]
    %v696 = vld [vmem:[#allocation5 + $0xfc] sm:$0xf]
    %v697 = vld [vmem:[%s4] sm:$0x1]
    %v699 = vperm.slane %v697, 0
    %v765 = vunpack.c.l.b16 %v633
    %v766 = vunpack.c.l.b16 %v634
    %v767 = vunpack.c.l.b16 %v635
    %v768 = vunpack.c.l.b16 %v636
    %v769 = vunpack.c.l.b16 %v637
    %v770 = vunpack.c.l.b16 %v638
    %v771 = vunpack.c.l.b16 %v639
    %v772 = vunpack.c.l.b16 %v640
    %v773 = vunpack.c.l.b16 %v641
    %v774 = vunpack.c.l.b16 %v642
    %v775 = vunpack.c.l.b16 %v643
    %v776 = vunpack.c.l.b16 %v644
    %v777 = vunpack.c.l.b16 %v645
    %v778 = vunpack.c.l.b16 %v646
    %v779 = vunpack.c.l.b16 %v647
    %v780 = vunpack.c.l.b16 %v648
    %v781 = vunpack.c.l.b16 %v649
    %v782 = vunpack.c.l.b16 %v650
    %v783 = vunpack.c.l.b16 %v651
    %v784 = vunpack.c.l.b16 %v652
    %v785 = vunpack.c.l.b16 %v653
    %v786 = vunpack.c.l.b16 %v654
    %v787 = vunpack.c.l.b16 %v655
    %v788 = vunpack.c.l.b16 %v656
    %v789 = vunpack.c.l.b16 %v657
    %v790 = vunpack.c.l.b16 %v658
    %v791 = vunpack.c.l.b16 %v659
    %v792 = vunpack.c.l.b16 %v660
    %v793 = vunpack.c.l.b16 %v661
    %v794 = vunpack.c.l.b16 %v662
    %v795 = vunpack.c.l.b16 %v663
    %v796 = vunpack.c.l.b16 %v664
    %v797 = vunpack.c.l.b16 %v665
    %v798 = vunpack.c.l.b16 %v666
    %v799 = vunpack.c.l.b16 %v667
    %v800 = vunpack.c.l.b16 %v668
    %v801 = vunpack.c.l.b16 %v669
    %v802 = vunpack.c.l.b16 %v670
    %v803 = vunpack.c.l.b16 %v671
    %v804 = vunpack.c.l.b16 %v672
    %v805 = vunpack.c.l.b16 %v673
    %v806 = vunpack.c.l.b16 %v674
    %v807 = vunpack.c.l.b16 %v675
    %v808 = vunpack.c.l.b16 %v676
    %v809 = vunpack.c.l.b16 %v677
    %v810 = vunpack.c.l.b16 %v678
    %v811 = vunpack.c.l.b16 %v679
    %v812 = vunpack.c.l.b16 %v680
    %v813 = vunpack.c.l.b16 %v681
    %v814 = vunpack.c.l.b16 %v682
    %v815 = vunpack.c.l.b16 %v683
    %v816 = vunpack.c.l.b16 %v684
    %v817 = vunpack.c.l.b16 %v685
    %v818 = vunpack.c.l.b16 %v686
    %v819 = vunpack.c.l.b16 %v687
    %v820 = vunpack.c.l.b16 %v688
    %v821 = vunpack.c.l.b16 %v689
    %v822 = vunpack.c.l.b16 %v690
    %v823 = vunpack.c.l.b16 %v691
    %v824 = vunpack.c.l.b16 %v692
    %v825 = vunpack.c.l.b16 %v693
    %v826 = vunpack.c.l.b16 %v694
    %v827 = vunpack.c.l.b16 %v695
    %v828 = vunpack.c.l.b16 %v696
    %v829 = vpack.c.b16 %v766, %v765
    %v830 = vpack.c.b16 %v768, %v767
    %v831 = vpack.c.b16 %v770, %v769
    %v832 = vpack.c.b16 %v772, %v771
    %v833 = vpack.c.b16 %v774, %v773
    %v834 = vpack.c.b16 %v776, %v775
    %v835 = vpack.c.b16 %v778, %v777
    %v836 = vpack.c.b16 %v780, %v779
    %v837 = vpack.c.b16 %v782, %v781
    %v838 = vpack.c.b16 %v784, %v783
    %v839 = vpack.c.b16 %v786, %v785
    %v840 = vpack.c.b16 %v788, %v787
    %v841 = vpack.c.b16 %v790, %v789
    %v842 = vpack.c.b16 %v792, %v791
    %v843 = vpack.c.b16 %v794, %v793
    %v844 = vpack.c.b16 %v796, %v795
    %v845 = vpack.c.b16 %v798, %v797
    %v846 = vpack.c.b16 %v800, %v799
    %v847 = vpack.c.b16 %v802, %v801
    %v848 = vpack.c.b16 %v804, %v803
    %v849 = vpack.c.b16 %v806, %v805
    %v850 = vpack.c.b16 %v808, %v807
    %v851 = vpack.c.b16 %v810, %v809
    %v852 = vpack.c.b16 %v812, %v811
    %v853 = vpack.c.b16 %v814, %v813
    %v854 = vpack.c.b16 %v816, %v815
    %v855 = vpack.c.b16 %v818, %v817
    %v856 = vpack.c.b16 %v820, %v819
    %v857 = vpack.c.b16 %v822, %v821
    %v858 = vpack.c.b16 %v824, %v823
    %v859 = vpack.c.b16 %v826, %v825
    %v860 = vpack.c.b16 %v828, %v827
    %893 = vmatpush.bf16.msra.mxu0 %v836
    %894 = vmatpush.bf16.msra.mxu0 %v835
    %895 = vmatpush.bf16.msra.mxu0 %v834
    %896 = vmatpush.bf16.msra.mxu0 %v833
    %897 = vmatpush.bf16.msra.mxu0 %v832
    %898 = vmatpush.bf16.msra.mxu0 %v831
    %899 = vmatpush.bf16.msra.mxu0 %v830
    %900 = vmatpush.bf16.msra.mxu0 %v829
    %901 = vmatmul.bf16.gmra.mxu0 %v629
    %v902 = vpop.f32.mrf.mxu0
    %v903 = vadd.f32 %v699, %v902
    %v904 = vpop.f32.mrf.mxu0
    %905 = vdwg.mxu0
    %906 = vmatpush.bf16.msra.mxu0 %v844
    %907 = vmatpush.bf16.msra.mxu0 %v843
    %908 = vmatpush.bf16.msra.mxu0 %v842
    %909 = vmatpush.bf16.msra.mxu0 %v841
    %910 = vmatpush.bf16.msra.mxu0 %v840
    %911 = vmatpush.bf16.msra.mxu0 %v839
    %912 = vmatpush.bf16.msra.mxu0 %v838
    %913 = vmatpush.bf16.msra.mxu0 %v837
    %914 = vmatmul.bf16.gmra.mxu0 %v630
    %v915 = vpop.f32.mrf.mxu0
    %v916 = vadd.f32 %v903, %v915
    %v917 = vpop.f32.mrf.mxu0
    %918 = vdwg.mxu0
    %919 = vmatpush.bf16.msra.mxu0 %v852
    %920 = vmatpush.bf16.msra.mxu0 %v851
    %921 = vmatpush.bf16.msra.mxu0 %v850
    %922 = vmatpush.bf16.msra.mxu0 %v849
    %923 = vmatpush.bf16.msra.mxu0 %v848
    %924 = vmatpush.bf16.msra.mxu0 %v847
    %925 = vmatpush.bf16.msra.mxu0 %v846
    %926 = vmatpush.bf16.msra.mxu0 %v845
    %927 = vmatmul.bf16.gmra.mxu0 %v631
    %v928 = vpop.f32.mrf.mxu0
    %v929 = vadd.f32 %v916, %v928
    %v930 = vpop.f32.mrf.mxu0
    %931 = vdwg.mxu0
    %932 = vmatpush.bf16.msra.mxu0 %v860
    %933 = vmatpush.bf16.msra.mxu0 %v859
    %934 = vmatpush.bf16.msra.mxu0 %v858
    %935 = vmatpush.bf16.msra.mxu0 %v857
    %936 = vmatpush.bf16.msra.mxu0 %v856
    %937 = vmatpush.bf16.msra.mxu0 %v855
    %938 = vmatpush.bf16.msra.mxu0 %v854
    %939 = vmatpush.bf16.msra.mxu0 %v853
    %940 = vmatmul.bf16.gmra.mxu0 %v632
    %v941 = vpop.f32.mrf.mxu0
    %v942 = vadd.f32 %v929, %v941
    %v943 = vpop.f32.mrf.mxu0
    %944 = vdwg.mxu0
    %v945 = vand.u32 2147483647, %v942
    %v946 = vsub.f32 0.0, %v945
    %v947 = vmul.f32 %v946, 1.442695
    %v948 = vpow.pop %v947
    %v949 = vadd.f32 %v948, 1.0
    %v950 = vrcp.pop %v949
    %v951 = vmul.f32 %v949, %v950
    %v952 = vsub.f32 1.0, %v951
    %v953 = vmul.f32 %v950, %v952
    %v954 = vadd.f32 %v950, %v953
    %vm955 = vweird.f32 %v949
    %vm956 = vweird.f32 %v950
    %vm957 = vmor %vm955, %vm956
    %v958 = vsel %vm957, %v950, %v954
    %v959 = vand.u32 2147483647, %v949
    %vm960 = vcmp.eq.f32.partialorder %v959, 8.507059e+37
    %v961 = vand.u32 %v949, 2147483648
    %v962 = vor.u32 1.1754944e-38, %v961
    %v963 = vsel %vm960, %v962, %v958
    %v964 = vmul.f32 1.0, %v963
    %vm965 = vcmp.ge.f32.partialorder %v942, 0.0
    %v966 = vsub.f32 1.0, %v964
    %v967 = vsel %vm965, %v964, %v966
    %968 = vst [vmem:[#allocation7] sm:$0x3] %v967
    // Predicated region
    $region30: #{policy_transformer_forward.19} parent=1 // pred_check
      _
    $region31: #{policy_transformer_forward.19} parent=1 // pred_check_branch
      %970 = sbr.rel (0) target = $region33
    $region32: #{policy_transformer_forward.19} parent=1 // pred_region
      %972 = vsyncadd [#allocation4], 0
      %s974 = sshll.u32 [#allocation7], 4
      %s975 = int_to_ptr.vmem [resolvable:$true] %s974
      %s976 = sshll.u32 %s5, 4
      %s977 = int_to_ptr.hbm [resolvable:$true] %s976
      %979 = dma.vmem_to_hbm [thread:$0]  %s975, 32, %s977, [#allocation4]
    $region33: #{policy_transformer_forward.19} parent=1 // pred_fallthru
      _
    // Predicated region
    $region34: #{policy_transformer_forward.19} parent=1 // pred_check
      _
    $region35: #{policy_transformer_forward.19} parent=1 // pred_check_branch
      %981 = sbr.rel (0) target = $region37
    $region36: #{policy_transformer_forward.19} parent=1 // pred_region
      %983 = dma.done [#allocation4], 32
    $region37: #{policy_transformer_forward.19} parent=1 // pred_fallthru
      _
    %984 = vsyncpa [#allocation3], 1
    %985 = vsyncpa [#allocation6], 1
    %986 = vsyncpa [#allocation4], 1

// kernel: policy_transformer_forward.16
$region0: #{policy_transformer_forward.16}
  #allocation0 [shape = 'u32[]', space=smem, size = 0x4, offset = 0x4, fixed_abs, tag = 'smem constant byte address 0x4 - core index']
  #allocation1 [shape = 'u32[72,128]{1,0:T(1,128)}', space=vmem, size = 0x9000, scoped, tag = 'internal scratch']
  %s0 = inlined_call_operand.vmem [shape: f32[2,4,256], index: 0, kind: input, shape index: {}]
  %s1 = inlined_call_operand.hbm [shape: bf16[256,1024], index: 1, kind: input, shape index: {}]
  %s2 = inlined_call_operand.vmem [shape: f32[1,1024], index: 2, kind: input, shape index: {}]
  %s3 = inlined_call_operand.hbm [shape: bf16[1024,256], index: 3, kind: input, shape index: {}]
  %s4 = inlined_call_operand.vmem [shape: f32[1,256], index: 4, kind: input, shape index: {}]
  %s5 = inlined_call_operand.vmem [shape: f32[1,256], index: 5, kind: input, shape index: {}]
  %s6 = inlined_call_operand.vmem [shape: f32[1,256], index: 6, kind: input, shape index: {}]
  %s7 = inlined_call_operand.vmem [shape: f32[2,4,256], index: 7, kind: output, shape index: {}]
  %s8 = sld [smem:[#allocation0]]
  $region69: #{policy_transformer_forward.16} parent=0
    _
  %s10 = ssub.s32 1, %s8
  %s11 = scalar_select 0, %s10, %s8
  $region1: #{policy_transformer_forward.16} parent=0
    #allocation2 [shape = 'u8[524288]{0}', space=vmem, size = 0x80000, scoped, tag = 'input window, operand 1, single buffered']
    #allocation3 [shape = 's32[2]{0}', space=sflag, size = 0x8, scoped, tag = 'scoped memory for policy_transformer_forward.16']
    #allocation4 [shape = 'u8[524288]{0}', space=vmem, size = 0x80000, scoped, tag = 'input window, operand 3, single buffered']
    #allocation5 [shape = 's32[1]{0}', space=sflag, size = 0x4, scoped, tag = 'scoped memory for policy_transformer_forward.16']
    %12 = vsyncpa [#allocation3], 0
    %13 = vsyncpa [#allocation5], 0
    loop: start=0, step=1, limit=4
    $region2: #{policy_transformer_forward.16} parent=1 // loop_pre_header
      _
    $region3: #{policy_transformer_forward.16} parent=1 // loop_header
      %s15 = sphi 0, %s19
      %p16 = scmp.ge.s32.totalorder %s15, 4
      %s25 = sphi 0, %s27
      %s28 = sphi 0, %s25
      %s29 = sphi 0, %s28
      %s45 = sphi 0, %s29
      %s49 = sphi 0, %s49
      %s51 = sphi 0, %s49
      %s52 = sphi 0, %s51
      %s66 = sphi 0, %s52
      %s70 = sphi 0, %s70
      %s72 = sphi 0, %s70
      %s73 = sphi 0, %s72
      %s87 = sphi 0, %s73
      %s91 = sphi 0, %s91
      %s93 = sphi 0, %s91
      %s94 = sphi 0, %s93
      %s108 = sphi 0, %s94
      %s112 = sphi 0, %s112
      %s114 = sphi 0, %s112
      %s115 = sphi 0, %s114
      %s129 = sphi 0, %s115
      %s133 = sphi 0, %s133
      %s135 = sphi 0, %s133
      %s136 = sphi 0, %s135
      %s150 = sphi 0, %s136
      %s154 = sphi 0, %s154
      %s156 = sphi 0, %s154
      %s157 = sphi 0, %s156
      %s171 = sphi 0, %s157
      %s177 = sphi 0, %s179
      %s180 = sphi 0, %s177
      %s181 = sphi 0, %s180
      %s197 = sphi 0, %s181
    $region4: #{policy_transformer_forward.16} parent=1 // loop_header_branch
      %18 = sbr.rel (%p16) target = $region8
    $region5: #{policy_transformer_forward.16} parent=1 // loop_body
      %s20 = ssub.s32 %s15, 1
      %s21 = ssub.s32 %s15, 2
      %s22 = sadd.s32 %s15, 1
      %s23 = ssub.s32 %s15, %s22
      %p24 = scmp.eq.s32.totalorder %s23, 0
      %s26 = sadd.s32 %s25, 1
      %s27 = scalar_select %p24, %s25, %s26
      %p30 = pneg %p24
      %p31 = scmp.eq.s32.totalorder %s15, 1
      %p32 = por %p30, %p31
      %p33 = scmp.ne.s32.totalorder %s25, %s28
      %p34 = scmp.eq.s32.totalorder %s15, 0
      %p35 = por %p33, %p34
      %p36 = scmp.ne.s32.totalorder %s25, %s28
      %p37 = scmp.eq.s32.totalorder %s20, 1
      %p38 = por %p36, %p37
      %p39 = scmp.ne.s32.totalorder %s28, %s29
      %p40 = scmp.eq.s32.totalorder %s20, 0
      %p41 = por %p39, %p40
      %p42 = scmp.ne.s32.totalorder %s28, %s29
      %p43 = scmp.eq.s32.totalorder %s21, 1
      %p44 = por %p42, %p43
      %p46 = scmp.ne.s32.totalorder %s29, %s45
      %p47 = scmp.eq.s32.totalorder %s21, 0
      %p48 = por %p46, %p47
      %s50 = sadd.s32 %s49, 1
      %p53 = scmp.eq.s32.totalorder %s15, 1
      %p54 = scmp.ne.s32.totalorder %s49, %s51
      %p55 = scmp.eq.s32.totalorder %s15, 0
      %p56 = por %p54, %p55
      %p57 = scmp.ne.s32.totalorder %s49, %s51
      %p58 = scmp.eq.s32.totalorder %s20, 1
      %p59 = por %p57, %p58
      %p60 = scmp.ne.s32.totalorder %s51, %s52
      %p61 = scmp.eq.s32.totalorder %s20, 0
      %p62 = por %p60, %p61
      %p63 = scmp.ne.s32.totalorder %s51, %s52
      %p64 = scmp.eq.s32.totalorder %s21, 1
      %p65 = por %p63, %p64
      %p67 = scmp.ne.s32.totalorder %s52, %s66
      %p68 = scmp.eq.s32.totalorder %s21, 0
      %p69 = por %p67, %p68
      %s71 = sadd.s32 %s70, 1
      %p74 = scmp.eq.s32.totalorder %s15, 1
      %p75 = scmp.ne.s32.totalorder %s70, %s72
      %p76 = scmp.eq.s32.totalorder %s15, 0
      %p77 = por %p75, %p76
      %p78 = scmp.ne.s32.totalorder %s70, %s72
      %p79 = scmp.eq.s32.totalorder %s20, 1
      %p80 = por %p78, %p79
      %p81 = scmp.ne.s32.totalorder %s72, %s73
      %p82 = scmp.eq.s32.totalorder %s20, 0
      %p83 = por %p81, %p82
      %p84 = scmp.ne.s32.totalorder %s72, %s73
      %p85 = scmp.eq.s32.totalorder %s21, 1
      %p86 = por %p84, %p85
      %p88 = scmp.ne.s32.totalorder %s73, %s87
      %p89 = scmp.eq.s32.totalorder %s21, 0
      %p90 = por %p88, %p89
      %s92 = sadd.s32 %s91, 1
      %p95 = scmp.eq.s32.totalorder %s15, 1
      %p96 = scmp.ne.s32.totalorder %s91, %s93
      %p97 = scmp.eq.s32.totalorder %s15, 0
      %p98 = por %p96, %p97
      %p99 = scmp.ne.s32.totalorder %s91, %s93
      %p100 = scmp.eq.s32.totalorder %s20, 1
      %p101 = por %p99, %p100
      %p102 = scmp.ne.s32.totalorder %s93, %s94
      %p103 = scmp.eq.s32.totalorder %s20, 0
      %p104 = por %p102, %p103
      %p105 = scmp.ne.s32.totalorder %s93, %s94
      %p106 = scmp.eq.s32.totalorder %s21, 1
      %p107 = por %p105, %p106
      %p109 = scmp.ne.s32.totalorder %s94, %s108
      %p110 = scmp.eq.s32.totalorder %s21, 0
      %p111 = por %p109, %p110
      %s113 = sadd.s32 %s112, 1
      %p116 = scmp.eq.s32.totalorder %s15, 1
      %p117 = scmp.ne.s32.totalorder %s112, %s114
      %p118 = scmp.eq.s32.totalorder %s15, 0
      %p119 = por %p117, %p118
      %p120 = scmp.ne.s32.totalorder %s112, %s114
      %p121 = scmp.eq.s32.totalorder %s20, 1
      %p122 = por %p120, %p121
      %p123 = scmp.ne.s32.totalorder %s114, %s115
      %p124 = scmp.eq.s32.totalorder %s20, 0
      %p125 = por %p123, %p124
      %p126 = scmp.ne.s32.totalorder %s114, %s115
      %p127 = scmp.eq.s32.totalorder %s21, 1
      %p128 = por %p126, %p127
      %p130 = scmp.ne.s32.totalorder %s115, %s129
      %p131 = scmp.eq.s32.totalorder %s21, 0
      %p132 = por %p130, %p131
      %s134 = sadd.s32 %s133, 1
      %p137 = scmp.eq.s32.totalorder %s15, 1
      %p138 = scmp.ne.s32.totalorder %s133, %s135
      %p139 = scmp.eq.s32.totalorder %s15, 0
      %p140 = por %p138, %p139
      %p141 = scmp.ne.s32.totalorder %s133, %s135
      %p142 = scmp.eq.s32.totalorder %s20, 1
      %p143 = por %p141, %p142
      %p144 = scmp.ne.s32.totalorder %s135, %s136
      %p145 = scmp.eq.s32.totalorder %s20, 0
      %p146 = por %p144, %p145
      %p147 = scmp.ne.s32.totalorder %s135, %s136
      %p148 = scmp.eq.s32.totalorder %s21, 1
      %p149 = por %p147, %p148
      %p151 = scmp.ne.s32.totalorder %s136, %s150
      %p152 = scmp.eq.s32.totalorder %s21, 0
      %p153 = por %p151, %p152
      %s155 = sadd.s32 %s154, 1
      %p158 = scmp.eq.s32.totalorder %s15, 1
      %p159 = scmp.ne.s32.totalorder %s154, %s156
      %p160 = scmp.eq.s32.totalorder %s15, 0
      %p161 = por %p159, %p160
      %p162 = scmp.ne.s32.totalorder %s154, %s156
      %p163 = scmp.eq.s32.totalorder %s20, 1
      %p164 = por %p162, %p163
      %p165 = scmp.ne.s32.totalorder %s156, %s157
      %p166 = scmp.eq.s32.totalorder %s20, 0
      %p167 = por %p165, %p166
      %p168 = scmp.ne.s32.totalorder %s156, %s157
      %p169 = scmp.eq.s32.totalorder %s21, 1
      %p170 = por %p168, %p169
      %p172 = scmp.ne.s32.totalorder %s157, %s171
      %p173 = scmp.eq.s32.totalorder %s21, 0
      %p174 = por %p172, %p173
      %s175 = ssub.s32 %s15, %s22
      %p176 = scmp.eq.s32.totalorder %s175, 0
      %s178 = sadd.s32 %s177, 1
      %s179 = scalar_select %p176, %s177, %s178
      %p182 = pneg %p176
      %p183 = scmp.eq.s32.totalorder %s15, 1
      %p184 = por %p182, %p183
      %p185 = scmp.ne.s32.totalorder %s177, %s180
      %p186 = scmp.eq.s32.totalorder %s15, 0
      %p187 = por %p185, %p186
      %p188 = scmp.ne.s32.totalorder %s177, %s180
      %p189 = scmp.eq.s32.totalorder %s20, 1
      %p190 = por %p188, %p189
      %p191 = scmp.ne.s32.totalorder %s180, %s181
      %p192 = scmp.eq.s32.totalorder %s20, 0
      %p193 = por %p191, %p192
      %p194 = scmp.ne.s32.totalorder %s180, %s181
      %p195 = scmp.eq.s32.totalorder %s21, 1
      %p196 = por %p194, %p195
      %p198 = scmp.ne.s32.totalorder %s181, %s197
      %p199 = scmp.eq.s32.totalorder %s21, 0
      %p200 = por %p198, %p199
      %p201 = scmp.le.s32.totalorder 1, %s15
      %p202 = scmp.lt.s32.totalorder %s15, 3
      %p203 = pnand %p201, %p202
      %p204 = pneg %p203
      // Predicated region
      $region9: #{policy_transformer_forward.16} parent=5 // pred_check
        _
      $region10: #{policy_transformer_forward.16} parent=5 // pred_check_branch
        %206 = sbr.rel (%p203) target = $region12
      $region11: #{policy_transformer_forward.16} parent=5 // pred_region
        %s207 = ssub.s32 %s15, 1
        // Predicated region
        $region13: #{policy_transformer_forward.16} parent=11 // pred_check
          %p208 = pneg %p62
        $region14: #{policy_transformer_forward.16} parent=11 // pred_check_branch
          %210 = sbr.rel (%p208) target = $region16
        $region15: #{policy_transformer_forward.16} parent=11 // pred_region
          %212 = vsyncadd [#allocation3], 0
          %s213 = sshll.u32 %s1, 4
          %s214 = int_to_ptr.hbm [resolvable:$true] %s213
          %s215 = sshll.u32 [#allocation2], 4
          %s216 = int_to_ptr.vmem [resolvable:$true] %s215
          %221 = dma.hbm_to_vmem [thread:$0]  %s214, 16384, %s216, [#allocation3], 512, 512, 32
        $region16: #{policy_transformer_forward.16} parent=11 // pred_fallthru
          _
        // Predicated region
        $region17: #{policy_transformer_forward.16} parent=11 // pred_check
          %p222 = pneg %p83
        $region18: #{policy_transformer_forward.16} parent=11 // pred_check_branch
          %224 = sbr.rel (%p222) target = $region20
        $region19: #{policy_transformer_forward.16} parent=11 // pred_region
          _
        $region20: #{policy_transformer_forward.16} parent=11 // pred_fallthru
          _
        // Predicated region
        $region21: #{policy_transformer_forward.16} parent=11 // pred_check
          %p225 = pneg %p104
        $region22: #{policy_transformer_forward.16} parent=11 // pred_check_branch
          %227 = sbr.rel (%p225) target = $region24
        $region23: #{policy_transformer_forward.16} parent=11 // pred_region
          %229 = vsyncadd [#allocation5], 0
          %s230 = sshll.u32 %s3, 4
          %s231 = int_to_ptr.hbm [resolvable:$true] %s230
          %s232 = sshll.u32 [#allocation4], 4
          %s233 = int_to_ptr.vmem [resolvable:$true] %s232
          %238 = dma.hbm_to_vmem [thread:$0]  %s231, 16384, %s233, [#allocation5], 128, 128, 8
        $region24: #{policy_transformer_forward.16} parent=11 // pred_fallthru
          _
        // Predicated region
        $region25: #{policy_transformer_forward.16} parent=11 // pred_check
          %p239 = pneg %p125
        $region26: #{policy_transformer_forward.16} parent=11 // pred_check_branch
          %241 = sbr.rel (%p239) target = $region28
        $region27: #{policy_transformer_forward.16} parent=11 // pred_region
          _
        $region28: #{policy_transformer_forward.16} parent=11 // pred_fallthru
          _
        // Predicated region
        $region29: #{policy_transformer_forward.16} parent=11 // pred_check
          %p242 = pneg %p146
        $region30: #{policy_transformer_forward.16} parent=11 // pred_check_branch
          %244 = sbr.rel (%p242) target = $region32
        $region31: #{policy_transformer_forward.16} parent=11 // pred_region
          _
        $region32: #{policy_transformer_forward.16} parent=11 // pred_fallthru
          _
        // Predicated region
        $region33: #{policy_transformer_forward.16} parent=11 // pred_check
          %p245 = pneg %p167
        $region34: #{policy_transformer_forward.16} parent=11 // pred_check_branch
          %247 = sbr.rel (%p245) target = $region36
        $region35: #{policy_transformer_forward.16} parent=11 // pred_region
          _
        $region36: #{policy_transformer_forward.16} parent=11 // pred_fallthru
          _
      $region12: #{policy_transformer_forward.16} parent=5 // pred_fallthru
        _
      %p248 = scmp.lt.s32.totalorder %s15, 2
      // Predicated region
      $region37: #{policy_transformer_forward.16} parent=5 // pred_check
        %p249 = pneg %p248
      $region38: #{policy_transformer_forward.16} parent=5 // pred_check_branch
        %251 = sbr.rel (%p249) target = $region40
      $region39: #{policy_transformer_forward.16} parent=5 // pred_region
        // Predicated region
        $region41: #{policy_transformer_forward.16} parent=39 // pred_check
          %p252 = pneg %p35
        $region42: #{policy_transformer_forward.16} parent=39 // pred_check_branch
          %254 = sbr.rel (%p252) target = $region44
        $region43: #{policy_transformer_forward.16} parent=39 // pred_region
          %p255 = scmp.lt.s32.totalorder %s15, 1
          %s256 = scalar_select %p255, %s15, 1
          %s257 = smul.addr %s256, 2
          %s258 = smul.addr %s257, 4
          %s259 = scalar_lea.vmem %s0, %s258
        $region44: #{policy_transformer_forward.16} parent=39 // pred_fallthru
          _
      $region40: #{policy_transformer_forward.16} parent=5 // pred_fallthru
        _
      %p260 = scmp.le.s32.totalorder 1, %s15
      %p261 = scmp.lt.s32.totalorder %s15, 3
      %p262 = pnand %p260, %p261
      %p263 = pneg %p262
      // Predicated region
      $region45: #{policy_transformer_forward.16} parent=5 // pred_check
        _
      $region46: #{policy_transformer_forward.16} parent=5 // pred_check_branch
        %265 = sbr.rel (%p262) target = $region48
      $region47: #{policy_transformer_forward.16} parent=5 // pred_region
        %s266 = ssub.s32 %s15, 1
        // Predicated region
        $region49: #{policy_transformer_forward.16} parent=47 // pred_check
          %p267 = pneg %p62
        $region50: #{policy_transformer_forward.16} parent=47 // pred_check_branch
          %269 = sbr.rel (%p267) target = $region52
        $region51: #{policy_transformer_forward.16} parent=47 // pred_region
          %271 = dma.done [#allocation3], 16384
        $region52: #{policy_transformer_forward.16} parent=47 // pred_fallthru
          _
        // Predicated region
        $region53: #{policy_transformer_forward.16} parent=47 // pred_check
          %p272 = pneg %p104
        $region54: #{policy_transformer_forward.16} parent=47 // pred_check_branch
          %274 = sbr.rel (%p272) target = $region56
        $region55: #{policy_transformer_forward.16} parent=47 // pred_region
          %276 = dma.done [#allocation5], 16384
        $region56: #{policy_transformer_forward.16} parent=47 // pred_fallthru
          _
        %p277 = scmp.lt.s32.totalorder %s20, 1
        %s278 = scalar_select %p277, %s20, 1
        %s279 = smul.addr %s278, 2
        %s280 = smul.addr %s279, 4
        %s281 = scalar_lea.vmem %s0, %s280
        %p282 = pneg %p41
        %p283 = pneg %p38
        %p284 = pneg %p62
        %p285 = pneg %p59
        %p286 = pneg %p83
        %p287 = pneg %p80
        %p288 = pneg %p104
        %p289 = pneg %p101
        %p290 = pneg %p125
        %p291 = pneg %p122
        %p292 = pneg %p146
        %p293 = pneg %p143
        %p294 = pneg %p167
        %p295 = pneg %p164
        %p296 = pneg %p193
        %p297 = pneg %p190
        %p298 = scmp.lt.s32.totalorder %s20, 1
        %s299 = scalar_select %p298, %s20, 1
        %s300 = smul.addr %s299, 2
        %s301 = smul.addr %s300, 4
        %s302 = scalar_lea.vmem %s7, %s301
        %p303 = scmp.lt.s32.totalorder %s20, 1
        %s304 = scalar_select %p303, %s20, 1
        %s305 = smul.addr %s304, 2
        %s306 = smul.addr %s305, 4
        %s307 = scalar_lea.vmem %s0, %s306
        %p308 = scmp.lt.s32.totalorder %s20, 1
        %s309 = scalar_select %p308, %s20, 1
        %s310 = smul.addr %s309, 2
        %s311 = smul.addr %s310, 4
        %s312 = scalar_lea.vmem %s7, %s311
        %v313 = vld [vmem:[%s307] sm:$0xff]
        %315 = vst [vmem:[#allocation1] ss:$2 sm:$0xff] %v313
        %v316 = vld.sshfl [vmem:[#allocation1] sm:$0xff pattern:$0x75316420]
        %v317 = vld.sshfl [vmem:[#allocation1 + $0x8] sm:$0xff pattern:$0x75316420]
        %v320 = vpack.c.bf16 %v316, %v316
        %v321 = vpack.c.bf16 %v317, %v317
        %v322 = vld [vmem:[#allocation2] sm:$0xff]
        %v323 = vld [vmem:[#allocation2 + $0x8] sm:$0xff]
        %v324 = vld [vmem:[#allocation2 + $0x10] sm:$0xff]
        %v325 = vld [vmem:[#allocation2 + $0x18] sm:$0xff]
        %v326 = vld [vmem:[#allocation2 + $0x20] sm:$0xff]
        %v327 = vld [vmem:[#allocation2 + $0x28] sm:$0xff]
        %v328 = vld [vmem:[#allocation2 + $0x30] sm:$0xff]
        %v329 = vld [vmem:[#allocation2 + $0x38] sm:$0xff]
        %v330 = vld [vmem:[#allocation2 + $0x40] sm:$0xff]
        %v331 = vld [vmem:[#allocation2 + $0x48] sm:$0xff]
        %v332 = vld [vmem:[#allocation2 + $0x50] sm:$0xff]
        %v333 = vld [vmem:[#allocation2 + $0x58] sm:$0xff]
        %v334 = vld [vmem:[#allocation2 + $0x60] sm:$0xff]
        %v335 = vld [vmem:[#allocation2 + $0x68] sm:$0xff]
        %v336 = vld [vmem:[#allocation2 + $0x70] sm:$0xff]
        %v337 = vld [vmem:[#allocation2 + $0x78] sm:$0xff]
        %v338 = vld [vmem:[#allocation2 + $0x80] sm:$0xff]
        %v339 = vld [vmem:[#allocation2 + $0x88] sm:$0xff]
        %v340 = vld [vmem:[#allocation2 + $0x90] sm:$0xff]
        %v341 = vld [vmem:[#allocation2 + $0x98] sm:$0xff]
        %v342 = vld [vmem:[#allocation2 + $0xa0] sm:$0xff]
        %v343 = vld [vmem:[#allocation2 + $0xa8] sm:$0xff]
        %v344 = vld [vmem:[#allocation2 + $0xb0] sm:$0xff]
        %v345 = vld [vmem:[#allocation2 + $0xb8] sm:$0xff]
        %v346 = vld [vmem:[#allocation2 + $0xc0] sm:$0xff]
        %v347 = vld [vmem:[#allocation2 + $0xc8] sm:$0xff]
        %v348 = vld [vmem:[#allocation2 + $0xd0] sm:$0xff]
        %v349 = vld [vmem:[#allocation2 + $0xd8] sm:$0xff]
        %v350 = vld [vmem:[#allocation2 + $0xe0] sm:$0xff]
        %v351 = vld [vmem:[#allocation2 + $0xe8] sm:$0xff]
        %v352 = vld [vmem:[#allocation2 + $0xf0] sm:$0xff]
        %v353 = vld [vmem:[#allocation2 + $0xf8] sm:$0xff]
        %v354 = vld [vmem:[#allocation2 + $0x100] sm:$0xff]
        %v355 = vld [vmem:[#allocation2 + $0x108] sm:$0xff]
        %v356 = vld [vmem:[#allocation2 + $0x110] sm:$0xff]
        %v357 = vld [vmem:[#allocation2 + $0x118] sm:$0xff]
        %v358 = vld [vmem:[#allocation2 + $0x120] sm:$0xff]
        %v359 = vld [vmem:[#allocation2 + $0x128] sm:$0xff]
        %v360 = vld [vmem:[#allocation2 + $0x130] sm:$0xff]
        %v361 = vld [vmem:[#allocation2 + $0x138] sm:$0xff]
        %v362 = vld [vmem:[#allocation2 + $0x140] sm:$0xff]
        %v363 = vld [vmem:[#allocation2 + $0x148] sm:$0xff]
        %v364 = vld [vmem:[#allocation2 + $0x150] sm:$0xff]
        %v365 = vld [vmem:[#allocation2 + $0x158] sm:$0xff]
        %v366 = vld [vmem:[#allocation2 + $0x160] sm:$0xff]
        %v367 = vld [vmem:[#allocation2 + $0x168] sm:$0xff]
        %v368 = vld [vmem:[#allocation2 + $0x170] sm:$0xff]
        %v369 = vld [vmem:[#allocation2 + $0x178] sm:$0xff]
        %v370 = vld [vmem:[#allocation2 + $0x180] sm:$0xff]
        %v371 = vld [vmem:[#allocation2 + $0x188] sm:$0xff]
        %v372 = vld [vmem:[#allocation2 + $0x190] sm:$0xff]
        %v373 = vld [vmem:[#allocation2 + $0x198] sm:$0xff]
        %v374 = vld [vmem:[#allocation2 + $0x1a0] sm:$0xff]
        %v375 = vld [vmem:[#allocation2 + $0x1a8] sm:$0xff]
        %v376 = vld [vmem:[#allocation2 + $0x1b0] sm:$0xff]
        %v377 = vld [vmem:[#allocation2 + $0x1b8] sm:$0xff]
        %v378 = vld [vmem:[#allocation2 + $0x1c0] sm:$0xff]
        %v379 = vld [vmem:[#allocation2 + $0x1c8] sm:$0xff]
        %v380 = vld [vmem:[#allocation2 + $0x1d0] sm:$0xff]
        %v381 = vld [vmem:[#allocation2 + $0x1d8] sm:$0xff]
        %v382 = vld [vmem:[#allocation2 + $0x1e0] sm:$0xff]
        %v383 = vld [vmem:[#allocation2 + $0x1e8] sm:$0xff]
        %v384 = vld [vmem:[#allocation2 + $0x1f0] sm:$0xff]
        %v385 = vld [vmem:[#allocation2 + $0x1f8] sm:$0xff]
        %v386 = vld [vmem:[#allocation2 + $0x200] sm:$0xff]
        %v387 = vld [vmem:[#allocation2 + $0x208] sm:$0xff]
        %v388 = vld [vmem:[#allocation2 + $0x210] sm:$0xff]
        %v389 = vld [vmem:[#allocation2 + $0x218] sm:$0xff]
        %v390 = vld [vmem:[#allocation2 + $0x220] sm:$0xff]
        %v391 = vld [vmem:[#allocation2 + $0x228] sm:$0xff]
        %v392 = vld [vmem:[#allocation2 + $0x230] sm:$0xff]
        %v393 = vld [vmem:[#allocation2 + $0x238] sm:$0xff]
        %v394 = vld [vmem:[#allocation2 + $0x240] sm:$0xff]
        %v395 = vld [vmem:[#allocation2 + $0x248] sm:$0xff]
        %v396 = vld [vmem:[#allocation2 + $0x250] sm:$0xff]
        %v397 = vld [vmem:[#allocation2 + $0x258] sm:$0xff]
        %v398 = vld [vmem:[#allocation2 + $0x260] sm:$0xff]
        %v399 = vld [vmem:[#allocation2 + $0x268] sm:$0xff]
        %v400 = vld [vmem:[#allocation2 + $0x270] sm:$0xff]
        %v401 = vld [vmem:[#allocation2 + $0x278] sm:$0xff]
        %v402 = vld [vmem:[#allocation2 + $0x280] sm:$0xff]
        %v403 = vld [vmem:[#allocation2 + $0x288] sm:$0xff]
        %v404 = vld [vmem:[#allocation2 + $0x290] sm:$0xff]
        %v405 = vld [vmem:[#allocation2 + $0x298] sm:$0xff]
        %v406 = vld [vmem:[#allocation2 + $0x2a0] sm:$0xff]
        %v407 = vld [vmem:[#allocation2 + $0x2a8] sm:$0xff]
        %v408 = vld [vmem:[#allocation2 + $0x2b0] sm:$0xff]
        %v409 = vld [vmem:[#allocation2 + $0x2b8] sm:$0xff]
        %v410 = vld [vmem:[#allocation2 + $0x2c0] sm:$0xff]
        %v411 = vld [vmem:[#allocation2 + $0x2c8] sm:$0xff]
        %v412 = vld [vmem:[#allocation2 + $0x2d0] sm:$0xff]
        %v413 = vld [vmem:[#allocation2 + $0x2d8] sm:$0xff]
        %v414 = vld [vmem:[#allocation2 + $0x2e0] sm:$0xff]
        %v415 = vld [vmem:[#allocation2 + $0x2e8] sm:$0xff]
        %v416 = vld [vmem:[#allocation2 + $0x2f0] sm:$0xff]
        %v417 = vld [vmem:[#allocation2 + $0x2f8] sm:$0xff]
        %v418 = vld [vmem:[#allocation2 + $0x300] sm:$0xff]
        %v419 = vld [vmem:[#allocation2 + $0x308] sm:$0xff]
        %v420 = vld [vmem:[#allocation2 + $0x310] sm:$0xff]
        %v421 = vld [vmem:[#allocation2 + $0x318] sm:$0xff]
        %v422 = vld [vmem:[#allocation2 + $0x320] sm:$0xff]
        %v423 = vld [vmem:[#allocation2 + $0x328] sm:$0xff]
        %v424 = vld [vmem:[#allocation2 + $0x330] sm:$0xff]
        %v425 = vld [vmem:[#allocation2 + $0x338] sm:$0xff]
        %v426 = vld [vmem:[#allocation2 + $0x340] sm:$0xff]
        %v427 = vld [vmem:[#allocation2 + $0x348] sm:$0xff]
        %v428 = vld [vmem:[#allocation2 + $0x350] sm:$0xff]
        %v429 = vld [vmem:[#allocation2 + $0x358] sm:$0xff]
        %v430 = vld [vmem:[#allocation2 + $0x360] sm:$0xff]
        %v431 = vld [vmem:[#allocation2 + $0x368] sm:$0xff]
        %v432 = vld [vmem:[#allocation2 + $0x370] sm:$0xff]
        %v433 = vld [vmem:[#allocation2 + $0x378] sm:$0xff]
        %v434 = vld [vmem:[#allocation2 + $0x380] sm:$0xff]
        %v435 = vld [vmem:[#allocation2 + $0x388] sm:$0xff]
        %v436 = vld [vmem:[#allocation2 + $0x390] sm:$0xff]
        %v437 = vld [vmem:[#allocation2 + $0x398] sm:$0xff]
        %v438 = vld [vmem:[#allocation2 + $0x3a0] sm:$0xff]
        %v439 = vld [vmem:[#allocation2 + $0x3a8] sm:$0xff]
        %v440 = vld [vmem:[#allocation2 + $0x3b0] sm:$0xff]
        %v441 = vld [vmem:[#allocation2 + $0x3b8] sm:$0xff]
        %v442 = vld [vmem:[#allocation2 + $0x3c0] sm:$0xff]
        %v443 = vld [vmem:[#allocation2 + $0x3c8] sm:$0xff]
        %v444 = vld [vmem:[#allocation2 + $0x3d0] sm:$0xff]
        %v445 = vld [vmem:[#allocation2 + $0x3d8] sm:$0xff]
        %v446 = vld [vmem:[#allocation2 + $0x3e0] sm:$0xff]
        %v447 = vld [vmem:[#allocation2 + $0x3e8] sm:$0xff]
        %v448 = vld [vmem:[#allocation2 + $0x3f0] sm:$0xff]
        %v449 = vld [vmem:[#allocation2 + $0x3f8] sm:$0xff]
        %v450 = vld [vmem:[%s2] sm:$0xff]
        %v452 = vperm.slane %v450, 0
        %v453 = vperm.slane %v450, 1
        %v454 = vperm.slane %v450, 2
        %v455 = vperm.slane %v450, 3
        %v456 = vperm.slane %v450, 4
        %v457 = vperm.slane %v450, 5
        %v458 = vperm.slane %v450, 6
        %v459 = vperm.slane %v450, 7
        %v596 = vunpack.c.l.b16 %v322
        %v597 = vunpack.c.h.b16 %v322
        %v598 = vunpack.c.l.b16 %v323
        %v599 = vunpack.c.h.b16 %v323
        %v600 = vunpack.c.l.b16 %v324
        %v601 = vunpack.c.h.b16 %v324
        %v602 = vunpack.c.l.b16 %v325
        %v603 = vunpack.c.h.b16 %v325
        %v604 = vunpack.c.l.b16 %v326
        %v605 = vunpack.c.h.b16 %v326
        %v606 = vunpack.c.l.b16 %v327
        %v607 = vunpack.c.h.b16 %v327
        %v608 = vunpack.c.l.b16 %v328
        %v609 = vunpack.c.h.b16 %v328
        %v610 = vunpack.c.l.b16 %v329
        %v611 = vunpack.c.h.b16 %v329
        %v612 = vunpack.c.l.b16 %v330
        %v613 = vunpack.c.h.b16 %v330
        %v614 = vunpack.c.l.b16 %v331
        %v615 = vunpack.c.h.b16 %v331
        %v616 = vunpack.c.l.b16 %v332
        %v617 = vunpack.c.h.b16 %v332
        %v618 = vunpack.c.l.b16 %v333
        %v619 = vunpack.c.h.b16 %v333
        %v620 = vunpack.c.l.b16 %v334
        %v621 = vunpack.c.h.b16 %v334
        %v622 = vunpack.c.l.b16 %v335
        %v623 = vunpack.c.h.b16 %v335
        %v624 = vunpack.c.l.b16 %v336
        %v625 = vunpack.c.h.b16 %v336
        %v626 = vunpack.c.l.b16 %v337
        %v627 = vunpack.c.h.b16 %v337
        %v628 = vunpack.c.l.b16 %v338
        %v629 = vunpack.c.h.b16 %v338
        %v630 = vunpack.c.l.b16 %v339
        %v631 = vunpack.c.h.b16 %v339
        %v632 = vunpack.c.l.b16 %v340
        %v633 = vunpack.c.h.b16 %v340
        %v634 = vunpack.c.l.b16 %v341
        %v635 = vunpack.c.h.b16 %v341
        %v636 = vunpack.c.l.b16 %v342
        %v637 = vunpack.c.h.b16 %v342
        %v638 = vunpack.c.l.b16 %v343
        %v639 = vunpack.c.h.b16 %v343
        %v640 = vunpack.c.l.b16 %v344
        %v641 = vunpack.c.h.b16 %v344
        %v642 = vunpack.c.l.b16 %v345
        %v643 = vunpack.c.h.b16 %v345
        %v644 = vunpack.c.l.b16 %v346
        %v645 = vunpack.c.h.b16 %v346
        %v646 = vunpack.c.l.b16 %v347
        %v647 = vunpack.c.h.b16 %v347
        %v648 = vunpack.c.l.b16 %v348
        %v649 = vunpack.c.h.b16 %v348
        %v650 = vunpack.c.l.b16 %v349
        %v651 = vunpack.c.h.b16 %v349
        %v652 = vunpack.c.l.b16 %v350
        %v653 = vunpack.c.h.b16 %v350
        %v654 = vunpack.c.l.b16 %v351
        %v655 = vunpack.c.h.b16 %v351
        %v656 = vunpack.c.l.b16 %v352
        %v657 = vunpack.c.h.b16 %v352
        %v658 = vunpack.c.l.b16 %v353
        %v659 = vunpack.c.h.b16 %v353
        %v660 = vunpack.c.l.b16 %v354
        %v661 = vunpack.c.h.b16 %v354
        %v662 = vunpack.c.l.b16 %v355
        %v663 = vunpack.c.h.b16 %v355
        %v664 = vunpack.c.l.b16 %v356
        %v665 = vunpack.c.h.b16 %v356
        %v666 = vunpack.c.l.b16 %v357
        %v667 = vunpack.c.h.b16 %v357
        %v668 = vunpack.c.l.b16 %v358
        %v669 = vunpack.c.h.b16 %v358
        %v670 = vunpack.c.l.b16 %v359
        %v671 = vunpack.c.h.b16 %v359
        %v672 = vunpack.c.l.b16 %v360
        %v673 = vunpack.c.h.b16 %v360
        %v674 = vunpack.c.l.b16 %v361
        %v675 = vunpack.c.h.b16 %v361
        %v676 = vunpack.c.l.b16 %v362
        %v677 = vunpack.c.h.b16 %v362
        %v678 = vunpack.c.l.b16 %v363
        %v679 = vunpack.c.h.b16 %v363
        %v680 = vunpack.c.l.b16 %v364
        %v681 = vunpack.c.h.b16 %v364
        %v682 = vunpack.c.l.b16 %v365
        %v683 = vunpack.c.h.b16 %v365
        %v684 = vunpack.c.l.b16 %v366
        %v685 = vunpack.c.h.b16 %v366
        %v686 = vunpack.c.l.b16 %v367
        %v687 = vunpack.c.h.b16 %v367
        %v688 = vunpack.c.l.b16 %v368
        %v689 = vunpack.c.h.b16 %v368
        %v690 = vunpack.c.l.b16 %v369
        %v691 = vunpack.c.h.b16 %v369
        %v692 = vunpack.c.l.b16 %v370
        %v693 = vunpack.c.h.b16 %v370
        %v694 = vunpack.c.l.b16 %v371
        %v695 = vunpack.c.h.b16 %v371
        %v696 = vunpack.c.l.b16 %v372
        %v697 = vunpack.c.h.b16 %v372
        %v698 = vunpack.c.l.b16 %v373
        %v699 = vunpack.c.h.b16 %v373
        %v700 = vunpack.c.l.b16 %v374
        %v701 = vunpack.c.h.b16 %v374
        %v702 = vunpack.c.l.b16 %v375
        %v703 = vunpack.c.h.b16 %v375
        %v704 = vunpack.c.l.b16 %v376
        %v705 = vunpack.c.h.b16 %v376
        %v706 = vunpack.c.l.b16 %v377
        %v707 = vunpack.c.h.b16 %v377
        %v708 = vunpack.c.l.b16 %v378
        %v709 = vunpack.c.h.b16 %v378
        %v710 = vunpack.c.l.b16 %v379
        %v711 = vunpack.c.h.b16 %v379
        %v712 = vunpack.c.l.b16 %v380
        %v713 = vunpack.c.h.b16 %v380
        %v714 = vunpack.c.l.b16 %v381
        %v715 = vunpack.c.h.b16 %v381
        %v716 = vunpack.c.l.b16 %v382
        %v717 = vunpack.c.h.b16 %v382
        %v718 = vunpack.c.l.b16 %v383
        %v719 = vunpack.c.h.b16 %v383
        %v720 = vunpack.c.l.b16 %v384
        %v721 = vunpack.c.h.b16 %v384
        %v722 = vunpack.c.l.b16 %v385
        %v723 = vunpack.c.h.b16 %v385
        %v724 = vunpack.c.l.b16 %v386
        %v725 = vunpack.c.h.b16 %v386
        %v726 = vunpack.c.l.b16 %v387
        %v727 = vunpack.c.h.b16 %v387
        %v728 = vunpack.c.l.b16 %v388
        %v729 = vunpack.c.h.b16 %v388
        %v730 = vunpack.c.l.b16 %v389
        %v731 = vunpack.c.h.b16 %v389
        %v732 = vunpack.c.l.b16 %v390
        %v733 = vunpack.c.h.b16 %v390
        %v734 = vunpack.c.l.b16 %v391
        %v735 = vunpack.c.h.b16 %v391
        %v736 = vunpack.c.l.b16 %v392
        %v737 = vunpack.c.h.b16 %v392
        %v738 = vunpack.c.l.b16 %v393
        %v739 = vunpack.c.h.b16 %v393
        %v740 = vunpack.c.l.b16 %v394
        %v741 = vunpack.c.h.b16 %v394
        %v742 = vunpack.c.l.b16 %v395
        %v743 = vunpack.c.h.b16 %v395
        %v744 = vunpack.c.l.b16 %v396
        %v745 = vunpack.c.h.b16 %v396
        %v746 = vunpack.c.l.b16 %v397
        %v747 = vunpack.c.h.b16 %v397
        %v748 = vunpack.c.l.b16 %v398
        %v749 = vunpack.c.h.b16 %v398
        %v750 = vunpack.c.l.b16 %v399
        %v751 = vunpack.c.h.b16 %v399
        %v752 = vunpack.c.l.b16 %v400
        %v753 = vunpack.c.h.b16 %v400
        %v754 = vunpack.c.l.b16 %v401
        %v755 = vunpack.c.h.b16 %v401
        %v756 = vunpack.c.l.b16 %v402
        %v757 = vunpack.c.h.b16 %v402
        %v758 = vunpack.c.l.b16 %v403
        %v759 = vunpack.c.h.b16 %v403
        %v760 = vunpack.c.l.b16 %v404
        %v761 = vunpack.c.h.b16 %v404
        %v762 = vunpack.c.l.b16 %v405
        %v763 = vunpack.c.h.b16 %v405
        %v764 = vunpack.c.l.b16 %v406
        %v765 = vunpack.c.h.b16 %v406
        %v766 = vunpack.c.l.b16 %v407
        %v767 = vunpack.c.h.b16 %v407
        %v768 = vunpack.c.l.b16 %v408
        %v769 = vunpack.c.h.b16 %v408
        %v770 = vunpack.c.l.b16 %v409
        %v771 = vunpack.c.h.b16 %v409
        %v772 = vunpack.c.l.b16 %v410
        %v773 = vunpack.c.h.b16 %v410
        %v774 = vunpack.c.l.b16 %v411
        %v775 = vunpack.c.h.b16 %v411
        %v776 = vunpack.c.l.b16 %v412
        %v777 = vunpack.c.h.b16 %v412
        %v778 = vunpack.c.l.b16 %v413
        %v779 = vunpack.c.h.b16 %v413
        %v780 = vunpack.c.l.b16 %v414
        %v781 = vunpack.c.h.b16 %v414
        %v782 = vunpack.c.l.b16 %v415
        %v783 = vunpack.c.h.b16 %v415
        %v784 = vunpack.c.l.b16 %v416
        %v785 = vunpack.c.h.b16 %v416
        %v786 = vunpack.c.l.b16 %v417
        %v787 = vunpack.c.h.b16 %v417
        %v788 = vunpack.c.l.b16 %v418
        %v789 = vunpack.c.h.b16 %v418
        %v790 = vunpack.c.l.b16 %v419
        %v791 = vunpack.c.h.b16 %v419
        %v792 = vunpack.c.l.b16 %v420
        %v793 = vunpack.c.h.b16 %v420
        %v794 = vunpack.c.l.b16 %v421
        %v795 = vunpack.c.h.b16 %v421
        %v796 = vunpack.c.l.b16 %v422
        %v797 = vunpack.c.h.b16 %v422
        %v798 = vunpack.c.l.b16 %v423
        %v799 = vunpack.c.h.b16 %v423
        %v800 = vunpack.c.l.b16 %v424
        %v801 = vunpack.c.h.b16 %v424
        %v802 = vunpack.c.l.b16 %v425
        %v803 = vunpack.c.h.b16 %v425
        %v804 = vunpack.c.l.b16 %v426
        %v805 = vunpack.c.h.b16 %v426
        %v806 = vunpack.c.l.b16 %v427
        %v807 = vunpack.c.h.b16 %v427
        %v808 = vunpack.c.l.b16 %v428
        %v809 = vunpack.c.h.b16 %v428
        %v810 = vunpack.c.l.b16 %v429
        %v811 = vunpack.c.h.b16 %v429
        %v812 = vunpack.c.l.b16 %v430
        %v813 = vunpack.c.h.b16 %v430
        %v814 = vunpack.c.l.b16 %v431
        %v815 = vunpack.c.h.b16 %v431
        %v816 = vunpack.c.l.b16 %v432
        %v817 = vunpack.c.h.b16 %v432
        %v818 = vunpack.c.l.b16 %v433
        %v819 = vunpack.c.h.b16 %v433
        %v820 = vunpack.c.l.b16 %v434
        %v821 = vunpack.c.h.b16 %v434
        %v822 = vunpack.c.l.b16 %v435
        %v823 = vunpack.c.h.b16 %v435
        %v824 = vunpack.c.l.b16 %v436
        %v825 = vunpack.c.h.b16 %v436
        %v826 = vunpack.c.l.b16 %v437
        %v827 = vunpack.c.h.b16 %v437
        %v828 = vunpack.c.l.b16 %v438
        %v829 = vunpack.c.h.b16 %v438
        %v830 = vunpack.c.l.b16 %v439
        %v831 = vunpack.c.h.b16 %v439
        %v832 = vunpack.c.l.b16 %v440
        %v833 = vunpack.c.h.b16 %v440
        %v834 = vunpack.c.l.b16 %v441
        %v835 = vunpack.c.h.b16 %v441
        %v836 = vunpack.c.l.b16 %v442
        %v837 = vunpack.c.h.b16 %v442
        %v838 = vunpack.c.l.b16 %v443
        %v839 = vunpack.c.h.b16 %v443
        %v840 = vunpack.c.l.b16 %v444
        %v841 = vunpack.c.h.b16 %v444
        %v842 = vunpack.c.l.b16 %v445
        %v843 = vunpack.c.h.b16 %v445
        %v844 = vunpack.c.l.b16 %v446
        %v845 = vunpack.c.h.b16 %v446
        %v846 = vunpack.c.l.b16 %v447
        %v847 = vunpack.c.h.b16 %v447
        %v848 = vunpack.c.l.b16 %v448
        %v849 = vunpack.c.h.b16 %v448
        %v850 = vunpack.c.l.b16 %v449
        %v851 = vunpack.c.h.b16 %v449
        %v852 = vpack.c.b16 %v604, %v596
        %v853 = vpack.c.b16 %v605, %v597
        %v854 = vpack.c.b16 %v606, %v598
        %v855 = vpack.c.b16 %v607, %v599
        %v856 = vpack.c.b16 %v608, %v600
        %v857 = vpack.c.b16 %v609, %v601
        %v858 = vpack.c.b16 %v610, %v602
        %v859 = vpack.c.b16 %v611, %v603
        %v860 = vpack.c.b16 %v620, %v612
        %v861 = vpack.c.b16 %v621, %v613
        %v862 = vpack.c.b16 %v622, %v614
        %v863 = vpack.c.b16 %v623, %v615
        %v864 = vpack.c.b16 %v624, %v616
        %v865 = vpack.c.b16 %v625, %v617
        %v866 = vpack.c.b16 %v626, %v618
        %v867 = vpack.c.b16 %v627, %v619
        %v868 = vpack.c.b16 %v636, %v628
        %v869 = vpack.c.b16 %v637, %v629
        %v870 = vpack.c.b16 %v638, %v630
        %v871 = vpack.c.b16 %v639, %v631
        %v872 = vpack.c.b16 %v640, %v632
        %v873 = vpack.c.b16 %v641, %v633
        %v874 = vpack.c.b16 %v642, %v634
        %v875 = vpack.c.b16 %v643, %v635
        %v876 = vpack.c.b16 %v652, %v644
        %v877 = vpack.c.b16 %v653, %v645
        %v878 = vpack.c.b16 %v654, %v646
        %v879 = vpack.c.b16 %v655, %v647
        %v880 = vpack.c.b16 %v656, %v648
        %v881 = vpack.c.b16 %v657, %v649
        %v882 = vpack.c.b16 %v658, %v650
        %v883 = vpack.c.b16 %v659, %v651
        %v884 = vpack.c.b16 %v668, %v660
        %v885 = vpack.c.b16 %v669, %v661
        %v886 = vpack.c.b16 %v670, %v662
        %v887 = vpack.c.b16 %v671, %v663
        %v888 = vpack.c.b16 %v672, %v664
        %v889 = vpack.c.b16 %v673, %v665
        %v890 = vpack.c.b16 %v674, %v666
        %v891 = vpack.c.b16 %v675, %v667
        %v892 = vpack.c.b16 %v684, %v676
        %v893 = vpack.c.b16 %v685, %v677
        %v894 = vpack.c.b16 %v686, %v678
        %v895 = vpack.c.b16 %v687, %v679
        %v896 = vpack.c.b16 %v688, %v680
        %v897 = vpack.c.b16 %v689, %v681
        %v898 = vpack.c.b16 %v690, %v682
        %v899 = vpack.c.b16 %v691, %v683
        %v900 = vpack.c.b16 %v700, %v692
        %v901 = vpack.c.b16 %v701, %v693
        %v902 = vpack.c.b16 %v702, %v694
        %v903 = vpack.c.b16 %v703, %v695
        %v904 = vpack.c.b16 %v704, %v696
        %v905 = vpack.c.b16 %v705, %v697
        %v906 = vpack.c.b16 %v706, %v698
        %v907 = vpack.c.b16 %v707, %v699
        %v908 = vpack.c.b16 %v716, %v708
        %v909 = vpack.c.b16 %v717, %v709
        %v910 = vpack.c.b16 %v718, %v710
        %v911 = vpack.c.b16 %v719, %v711
        %v912 = vpack.c.b16 %v720, %v712
        %v913 = vpack.c.b16 %v721, %v713
        %v914 = vpack.c.b16 %v722, %v714
        %v915 = vpack.c.b16 %v723, %v715
        %v916 = vpack.c.b16 %v732, %v724
        %v917 = vpack.c.b16 %v733, %v725
        %v918 = vpack.c.b16 %v734, %v726
        %v919 = vpack.c.b16 %v735, %v727
        %v920 = vpack.c.b16 %v736, %v728
        %v921 = vpack.c.b16 %v737, %v729
        %v922 = vpack.c.b16 %v738, %v730
        %v923 = vpack.c.b16 %v739, %v731
        %v924 = vpack.c.b16 %v748, %v740
        %v925 = vpack.c.b16 %v749, %v741
        %v926 = vpack.c.b16 %v750, %v742
        %v927 = vpack.c.b16 %v751, %v743
        %v928 = vpack.c.b16 %v752, %v744
        %v929 = vpack.c.b16 %v753, %v745
        %v930 = vpack.c.b16 %v754, %v746
        %v931 = vpack.c.b16 %v755, %v747
        %v932 = vpack.c.b16 %v764, %v756
        %v933 = vpack.c.b16 %v765, %v757
        %v934 = vpack.c.b16 %v766, %v758
        %v935 = vpack.c.b16 %v767, %v759
        %v936 = vpack.c.b16 %v768, %v760
        %v937 = vpack.c.b16 %v769, %v761
        %v938 = vpack.c.b16 %v770, %v762
        %v939 = vpack.c.b16 %v771, %v763
        %v940 = vpack.c.b16 %v780, %v772
        %v941 = vpack.c.b16 %v781, %v773
        %v942 = vpack.c.b16 %v782, %v774
        %v943 = vpack.c.b16 %v783, %v775
        %v944 = vpack.c.b16 %v784, %v776
        %v945 = vpack.c.b16 %v785, %v777
        %v946 = vpack.c.b16 %v786, %v778
        %v947 = vpack.c.b16 %v787, %v779
        %v948 = vpack.c.b16 %v796, %v788
        %v949 = vpack.c.b16 %v797, %v789
        %v950 = vpack.c.b16 %v798, %v790
        %v951 = vpack.c.b16 %v799, %v791
        %v952 = vpack.c.b16 %v800, %v792
        %v953 = vpack.c.b16 %v801, %v793
        %v954 = vpack.c.b16 %v802, %v794
        %v955 = vpack.c.b16 %v803, %v795
        %v956 = vpack.c.b16 %v812, %v804
        %v957 = vpack.c.b16 %v813, %v805
        %v958 = vpack.c.b16 %v814, %v806
        %v959 = vpack.c.b16 %v815, %v807
        %v960 = vpack.c.b16 %v816, %v808
        %v961 = vpack.c.b16 %v817, %v809
        %v962 = vpack.c.b16 %v818, %v810
        %v963 = vpack.c.b16 %v819, %v811
        %v964 = vpack.c.b16 %v828, %v820
        %v965 = vpack.c.b16 %v829, %v821
        %v966 = vpack.c.b16 %v830, %v822
        %v967 = vpack.c.b16 %v831, %v823
        %v968 = vpack.c.b16 %v832, %v824
        %v969 = vpack.c.b16 %v833, %v825
        %v970 = vpack.c.b16 %v834, %v826
        %v971 = vpack.c.b16 %v835, %v827
        %v972 = vpack.c.b16 %v844, %v836
        %v973 = vpack.c.b16 %v845, %v837
        %v974 = vpack.c.b16 %v846, %v838
        %v975 = vpack.c.b16 %v847, %v839
        %v976 = vpack.c.b16 %v848, %v840
        %v977 = vpack.c.b16 %v849, %v841
        %v978 = vpack.c.b16 %v850, %v842
        %v979 = vpack.c.b16 %v851, %v843
        %1108 = vmatpush.bf16.msra.mxu0 %v908
        %1109 = vmatpush.bf16.msra.mxu0 %v900
        %1110 = vmatpush.bf16.msra.mxu0 %v892
        %1111 = vmatpush.bf16.msra.mxu0 %v884
        %1112 = vmatpush.bf16.msra.mxu0 %v876
        %1113 = vmatpush.bf16.msra.mxu0 %v868
        %1114 = vmatpush.bf16.msra.mxu0 %v860
        %1115 = vmatpush.bf16.msra.mxu0 %v852
        %1116 = vmatmul.bf16.gmra.mxu0 %v320
        %v1117 = vpop.f32.mrf.mxu0
        %v1118 = vadd.f32 %v452, %v1117
        %v1119 = vpop.f32.mrf.mxu0
        %1120 = vdwg.mxu0
        %1121 = vmatpush.bf16.msra.mxu0 %v972
        %1122 = vmatpush.bf16.msra.mxu0 %v964
        %1123 = vmatpush.bf16.msra.mxu0 %v956
        %1124 = vmatpush.bf16.msra.mxu0 %v948
        %1125 = vmatpush.bf16.msra.mxu0 %v940
        %1126 = vmatpush.bf16.msra.mxu0 %v932
        %1127 = vmatpush.bf16.msra.mxu0 %v924
        %1128 = vmatpush.bf16.msra.mxu0 %v916
        %1129 = vmatmul.bf16.gmra.mxu0 %v321
        %v1130 = vpop.f32.mrf.mxu0
        %v1131 = vadd.f32 %v1118, %v1130
        %v1132 = vpop.f32.mrf.mxu0
        %1133 = vdwg.mxu0
        %1134 = vmatpush.bf16.msra.mxu0 %v909
        %1135 = vmatpush.bf16.msra.mxu0 %v901
        %1136 = vmatpush.bf16.msra.mxu0 %v893
        %1137 = vmatpush.bf16.msra.mxu0 %v885
        %1138 = vmatpush.bf16.msra.mxu0 %v877
        %1139 = vmatpush.bf16.msra.mxu0 %v869
        %1140 = vmatpush.bf16.msra.mxu0 %v861
        %1141 = vmatpush.bf16.msra.mxu0 %v853
        %1142 = vmatmul.bf16.gmra.mxu0 %v320
        %v1143 = vpop.f32.mrf.mxu0
        %v1144 = vadd.f32 %v453, %v1143
        %v1145 = vpop.f32.mrf.mxu0
        %1146 = vdwg.mxu0
        %1147 = vmatpush.bf16.msra.mxu0 %v973
        %1148 = vmatpush.bf16.msra.mxu0 %v965
        %1149 = vmatpush.bf16.msra.mxu0 %v957
        %1150 = vmatpush.bf16.msra.mxu0 %v949
        %1151 = vmatpush.bf16.msra.mxu0 %v941
        %1152 = vmatpush.bf16.msra.mxu0 %v933
        %1153 = vmatpush.bf16.msra.mxu0 %v925
        %1154 = vmatpush.bf16.msra.mxu0 %v917
        %1155 = vmatmul.bf16.gmra.mxu0 %v321
        %v1156 = vpop.f32.mrf.mxu0
        %v1157 = vadd.f32 %v1144, %v1156
        %v1158 = vpop.f32.mrf.mxu0
        %1159 = vdwg.mxu0
        %1160 = vmatpush.bf16.msra.mxu0 %v910
        %1161 = vmatpush.bf16.msra.mxu0 %v902
        %1162 = vmatpush.bf16.msra.mxu0 %v894
        %1163 = vmatpush.bf16.msra.mxu0 %v886
        %1164 = vmatpush.bf16.msra.mxu0 %v878
        %1165 = vmatpush.bf16.msra.mxu0 %v870
        %1166 = vmatpush.bf16.msra.mxu0 %v862
        %1167 = vmatpush.bf16.msra.mxu0 %v854
        %1168 = vmatmul.bf16.gmra.mxu0 %v320
        %v1169 = vpop.f32.mrf.mxu0
        %v1170 = vadd.f32 %v454, %v1169
        %v1171 = vpop.f32.mrf.mxu0
        %1172 = vdwg.mxu0
        %1173 = vmatpush.bf16.msra.mxu0 %v974
        %1174 = vmatpush.bf16.msra.mxu0 %v966
        %1175 = vmatpush.bf16.msra.mxu0 %v958
        %1176 = vmatpush.bf16.msra.mxu0 %v950
        %1177 = vmatpush.bf16.msra.mxu0 %v942
        %1178 = vmatpush.bf16.msra.mxu0 %v934
        %1179 = vmatpush.bf16.msra.mxu0 %v926
        %1180 = vmatpush.bf16.msra.mxu0 %v918
        %1181 = vmatmul.bf16.gmra.mxu0 %v321
        %v1182 = vpop.f32.mrf.mxu0
        %v1183 = vadd.f32 %v1170, %v1182
        %v1184 = vpop.f32.mrf.mxu0
        %1185 = vdwg.mxu0
        %1186 = vmatpush.bf16.msra.mxu0 %v911
        %1187 = vmatpush.bf16.msra.mxu0 %v903
        %1188 = vmatpush.bf16.msra.mxu0 %v895
        %1189 = vmatpush.bf16.msra.mxu0 %v887
        %1190 = vmatpush.bf16.msra.mxu0 %v879
        %1191 = vmatpush.bf16.msra.mxu0 %v871
        %1192 = vmatpush.bf16.msra.mxu0 %v863
        %1193 = vmatpush.bf16.msra.mxu0 %v855
        %1194 = vmatmul.bf16.gmra.mxu0 %v320
        %v1195 = vpop.f32.mrf.mxu0
        %v1196 = vadd.f32 %v455, %v1195
        %v1197 = vpop.f32.mrf.mxu0
        %1198 = vdwg.mxu0
        %1199 = vmatpush.bf16.msra.mxu0 %v975
        %1200 = vmatpush.bf16.msra.mxu0 %v967
        %1201 = vmatpush.bf16.msra.mxu0 %v959
        %1202 = vmatpush.bf16.msra.mxu0 %v951
        %1203 = vmatpush.bf16.msra.mxu0 %v943
        %1204 = vmatpush.bf16.msra.mxu0 %v935
        %1205 = vmatpush.bf16.msra.mxu0 %v927
        %1206 = vmatpush.bf16.msra.mxu0 %v919
        %1207 = vmatmul.bf16.gmra.mxu0 %v321
        %v1208 = vpop.f32.mrf.mxu0
        %v1209 = vadd.f32 %v1196, %v1208
        %v1210 = vpop.f32.mrf.mxu0
        %1211 = vdwg.mxu0
        %1212 = vmatpush.bf16.msra.mxu0 %v912
        %1213 = vmatpush.bf16.msra.mxu0 %v904
        %1214 = vmatpush.bf16.msra.mxu0 %v896
        %1215 = vmatpush.bf16.msra.mxu0 %v888
        %1216 = vmatpush.bf16.msra.mxu0 %v880
        %1217 = vmatpush.bf16.msra.mxu0 %v872
        %1218 = vmatpush.bf16.msra.mxu0 %v864
        %1219 = vmatpush.bf16.msra.mxu0 %v856
        %1220 = vmatmul.bf16.gmra.mxu0 %v320
        %v1221 = vpop.f32.mrf.mxu0
        %v1222 = vadd.f32 %v456, %v1221
        %v1223 = vpop.f32.mrf.mxu0
        %1224 = vdwg.mxu0
        %1225 = vmatpush.bf16.msra.mxu0 %v976
        %1226 = vmatpush.bf16.msra.mxu0 %v968
        %1227 = vmatpush.bf16.msra.mxu0 %v960
        %1228 = vmatpush.bf16.msra.mxu0 %v952
        %1229 = vmatpush.bf16.msra.mxu0 %v944
        %1230 = vmatpush.bf16.msra.mxu0 %v936
        %1231 = vmatpush.bf16.msra.mxu0 %v928
        %1232 = vmatpush.bf16.msra.mxu0 %v920
        %1233 = vmatmul.bf16.gmra.mxu0 %v321
        %v1234 = vpop.f32.mrf.mxu0
        %v1235 = vadd.f32 %v1222, %v1234
        %v1236 = vpop.f32.mrf.mxu0
        %1237 = vdwg.mxu0
        %1238 = vmatpush.bf16.msra.mxu0 %v913
        %1239 = vmatpush.bf16.msra.mxu0 %v905
        %1240 = vmatpush.bf16.msra.mxu0 %v897
        %1241 = vmatpush.bf16.msra.mxu0 %v889
        %1242 = vmatpush.bf16.msra.mxu0 %v881
        %1243 = vmatpush.bf16.msra.mxu0 %v873
        %1244 = vmatpush.bf16.msra.mxu0 %v865
        %1245 = vmatpush.bf16.msra.mxu0 %v857
        %1246 = vmatmul.bf16.gmra.mxu0 %v320
        %v1247 = vpop.f32.mrf.mxu0
        %v1248 = vadd.f32 %v457, %v1247
        %v1249 = vpop.f32.mrf.mxu0
        %1250 = vdwg.mxu0
        %1251 = vmatpush.bf16.msra.mxu0 %v977
        %1252 = vmatpush.bf16.msra.mxu0 %v969
        %1253 = vmatpush.bf16.msra.mxu0 %v961
        %1254 = vmatpush.bf16.msra.mxu0 %v953
        %1255 = vmatpush.bf16.msra.mxu0 %v945
        %1256 = vmatpush.bf16.msra.mxu0 %v937
        %1257 = vmatpush.bf16.msra.mxu0 %v929
        %1258 = vmatpush.bf16.msra.mxu0 %v921
        %1259 = vmatmul.bf16.gmra.mxu0 %v321
        %v1260 = vpop.f32.mrf.mxu0
        %v1261 = vadd.f32 %v1248, %v1260
        %v1262 = vpop.f32.mrf.mxu0
        %1263 = vdwg.mxu0
        %1264 = vmatpush.bf16.msra.mxu0 %v914
        %1265 = vmatpush.bf16.msra.mxu0 %v906
        %1266 = vmatpush.bf16.msra.mxu0 %v898
        %1267 = vmatpush.bf16.msra.mxu0 %v890
        %1268 = vmatpush.bf16.msra.mxu0 %v882
        %1269 = vmatpush.bf16.msra.mxu0 %v874
        %1270 = vmatpush.bf16.msra.mxu0 %v866
        %1271 = vmatpush.bf16.msra.mxu0 %v858
        %1272 = vmatmul.bf16.gmra.mxu0 %v320
        %v1273 = vpop.f32.mrf.mxu0
        %v1274 = vadd.f32 %v458, %v1273
        %v1275 = vpop.f32.mrf.mxu0
        %1276 = vdwg.mxu0
        %1277 = vmatpush.bf16.msra.mxu0 %v978
        %1278 = vmatpush.bf16.msra.mxu0 %v970
        %1279 = vmatpush.bf16.msra.mxu0 %v962
        %1280 = vmatpush.bf16.msra.mxu0 %v954
        %1281 = vmatpush.bf16.msra.mxu0 %v946
        %1282 = vmatpush.bf16.msra.mxu0 %v938
        %1283 = vmatpush.bf16.msra.mxu0 %v930
        %1284 = vmatpush.bf16.msra.mxu0 %v922
        %1285 = vmatmul.bf16.gmra.mxu0 %v321
        %v1286 = vpop.f32.mrf.mxu0
        %v1287 = vadd.f32 %v1274, %v1286
        %v1288 = vpop.f32.mrf.mxu0
        %1289 = vdwg.mxu0
        %1290 = vmatpush.bf16.msra.mxu0 %v915
        %1291 = vmatpush.bf16.msra.mxu0 %v907
        %1292 = vmatpush.bf16.msra.mxu0 %v899
        %1293 = vmatpush.bf16.msra.mxu0 %v891
        %1294 = vmatpush.bf16.msra.mxu0 %v883
        %1295 = vmatpush.bf16.msra.mxu0 %v875
        %1296 = vmatpush.bf16.msra.mxu0 %v867
        %1297 = vmatpush.bf16.msra.mxu0 %v859
        %1298 = vmatmul.bf16.gmra.mxu0 %v320
        %v1299 = vpop.f32.mrf.mxu0
        %v1300 = vadd.f32 %v459, %v1299
        %v1301 = vpop.f32.mrf.mxu0
        %1302 = vdwg.mxu0
        %1303 = vmatpush.bf16.msra.mxu0 %v979
        %1304 = vmatpush.bf16.msra.mxu0 %v971
        %1305 = vmatpush.bf16.msra.mxu0 %v963
        %1306 = vmatpush.bf16.msra.mxu0 %v955
        %1307 = vmatpush.bf16.msra.mxu0 %v947
        %1308 = vmatpush.bf16.msra.mxu0 %v939
        %1309 = vmatpush.bf16.msra.mxu0 %v931
        %1310 = vmatpush.bf16.msra.mxu0 %v923
        %1311 = vmatmul.bf16.gmra.mxu0 %v321
        %v1312 = vpop.f32.mrf.mxu0
        %v1313 = vadd.f32 %v1300, %v1312
        %v1314 = vpop.f32.mrf.mxu0
        %1315 = vdwg.mxu0
        %v1316 = vmax.f32 %v1131, 0.0
        %v1317 = vmax.f32 %v1157, 0.0
        %v1318 = vmax.f32 %v1183, 0.0
        %v1319 = vmax.f32 %v1209, 0.0
        %v1320 = vmax.f32 %v1235, 0.0
        %v1321 = vmax.f32 %v1261, 0.0
        %v1322 = vmax.f32 %v1287, 0.0
        %v1323 = vmax.f32 %v1313, 0.0
        %v1324 = vpack.c.bf16 %v1316, %v1316
        %v1325 = vpack.c.bf16 %v1317, %v1317
        %v1326 = vpack.c.bf16 %v1318, %v1318
        %v1327 = vpack.c.bf16 %v1319, %v1319
        %v1328 = vpack.c.bf16 %v1320, %v1320
        %v1329 = vpack.c.bf16 %v1321, %v1321
        %v1330 = vpack.c.bf16 %v1322, %v1322
        %v1331 = vpack.c.bf16 %v1323, %v1323
        %v1332 = vld [vmem:[#allocation4] sm:$0xff]
        %v1333 = vld [vmem:[#allocation4 + $0x8] sm:$0xff]
        %v1334 = vld [vmem:[#allocation4 + $0x10] sm:$0xff]
        %v1335 = vld [vmem:[#allocation4 + $0x18] sm:$0xff]
        %v1336 = vld [vmem:[#allocation4 + $0x20] sm:$0xff]
        %v1337 = vld [vmem:[#allocation4 + $0x28] sm:$0xff]
        %v1338 = vld [vmem:[#allocation4 + $0x30] sm:$0xff]
        %v1339 = vld [vmem:[#allocation4 + $0x38] sm:$0xff]
        %v1340 = vld [vmem:[#allocation4 + $0x40] sm:$0xff]
        %v1341 = vld [vmem:[#allocation4 + $0x48] sm:$0xff]
        %v1342 = vld [vmem:[#allocation4 + $0x50] sm:$0xff]
        %v1343 = vld [vmem:[#allocation4 + $0x58] sm:$0xff]
        %v1344 = vld [vmem:[#allocation4 + $0x60] sm:$0xff]
        %v1345 = vld [vmem:[#allocation4 + $0x68] sm:$0xff]
        %v1346 = vld [vmem:[#allocation4 + $0x70] sm:$0xff]
        %v1347 = vld [vmem:[#allocation4 + $0x78] sm:$0xff]
        %v1348 = vld [vmem:[#allocation4 + $0x80] sm:$0xff]
        %v1349 = vld [vmem:[#allocation4 + $0x88] sm:$0xff]
        %v1350 = vld [vmem:[#allocation4 + $0x90] sm:$0xff]
        %v1351 = vld [vmem:[#allocation4 + $0x98] sm:$0xff]
        %v1352 = vld [vmem:[#allocation4 + $0xa0] sm:$0xff]
        %v1353 = vld [vmem:[#allocation4 + $0xa8] sm:$0xff]
        %v1354 = vld [vmem:[#allocation4 + $0xb0] sm:$0xff]
        %v1355 = vld [vmem:[#allocation4 + $0xb8] sm:$0xff]
        %v1356 = vld [vmem:[#allocation4 + $0xc0] sm:$0xff]
        %v1357 = vld [vmem:[#allocation4 + $0xc8] sm:$0xff]
        %v1358 = vld [vmem:[#allocation4 + $0xd0] sm:$0xff]
        %v1359 = vld [vmem:[#allocation4 + $0xd8] sm:$0xff]
        %v1360 = vld [vmem:[#allocation4 + $0xe0] sm:$0xff]
        %v1361 = vld [vmem:[#allocation4 + $0xe8] sm:$0xff]
        %v1362 = vld [vmem:[#allocation4 + $0xf0] sm:$0xff]
        %v1363 = vld [vmem:[#allocation4 + $0xf8] sm:$0xff]
        %v1364 = vld [vmem:[#allocation4 + $0x100] sm:$0xff]
        %v1365 = vld [vmem:[#allocation4 + $0x108] sm:$0xff]
        %v1366 = vld [vmem:[#allocation4 + $0x110] sm:$0xff]
        %v1367 = vld [vmem:[#allocation4 + $0x118] sm:$0xff]
        %v1368 = vld [vmem:[#allocation4 + $0x120] sm:$0xff]
        %v1369 = vld [vmem:[#allocation4 + $0x128] sm:$0xff]
        %v1370 = vld [vmem:[#allocation4 + $0x130] sm:$0xff]
        %v1371 = vld [vmem:[#allocation4 + $0x138] sm:$0xff]
        %v1372 = vld [vmem:[#allocation4 + $0x140] sm:$0xff]
        %v1373 = vld [vmem:[#allocation4 + $0x148] sm:$0xff]
        %v1374 = vld [vmem:[#allocation4 + $0x150] sm:$0xff]
        %v1375 = vld [vmem:[#allocation4 + $0x158] sm:$0xff]
        %v1376 = vld [vmem:[#allocation4 + $0x160] sm:$0xff]
        %v1377 = vld [vmem:[#allocation4 + $0x168] sm:$0xff]
        %v1378 = vld [vmem:[#allocation4 + $0x170] sm:$0xff]
        %v1379 = vld [vmem:[#allocation4 + $0x178] sm:$0xff]
        %v1380 = vld [vmem:[#allocation4 + $0x180] sm:$0xff]
        %v1381 = vld [vmem:[#allocation4 + $0x188] sm:$0xff]
        %v1382 = vld [vmem:[#allocation4 + $0x190] sm:$0xff]
        %v1383 = vld [vmem:[#allocation4 + $0x198] sm:$0xff]
        %v1384 = vld [vmem:[#allocation4 + $0x1a0] sm:$0xff]
        %v1385 = vld [vmem:[#allocation4 + $0x1a8] sm:$0xff]
        %v1386 = vld [vmem:[#allocation4 + $0x1b0] sm:$0xff]
        %v1387 = vld [vmem:[#allocation4 + $0x1b8] sm:$0xff]
        %v1388 = vld [vmem:[#allocation4 + $0x1c0] sm:$0xff]
        %v1389 = vld [vmem:[#allocation4 + $0x1c8] sm:$0xff]
        %v1390 = vld [vmem:[#allocation4 + $0x1d0] sm:$0xff]
        %v1391 = vld [vmem:[#allocation4 + $0x1d8] sm:$0xff]
        %v1392 = vld [vmem:[#allocation4 + $0x1e0] sm:$0xff]
        %v1393 = vld [vmem:[#allocation4 + $0x1e8] sm:$0xff]
        %v1394 = vld [vmem:[#allocation4 + $0x1f0] sm:$0xff]
        %v1395 = vld [vmem:[#allocation4 + $0x1f8] sm:$0xff]
        %v1396 = vld [vmem:[#allocation4 + $0x200] sm:$0xff]
        %v1397 = vld [vmem:[#allocation4 + $0x208] sm:$0xff]
        %v1398 = vld [vmem:[#allocation4 + $0x210] sm:$0xff]
        %v1399 = vld [vmem:[#allocation4 + $0x218] sm:$0xff]
        %v1400 = vld [vmem:[#allocation4 + $0x220] sm:$0xff]
        %v1401 = vld [vmem:[#allocation4 + $0x228] sm:$0xff]
        %v1402 = vld [vmem:[#allocation4 + $0x230] sm:$0xff]
        %v1403 = vld [vmem:[#allocation4 + $0x238] sm:$0xff]
        %v1404 = vld [vmem:[#allocation4 + $0x240] sm:$0xff]
        %v1405 = vld [vmem:[#allocation4 + $0x248] sm:$0xff]
        %v1406 = vld [vmem:[#allocation4 + $0x250] sm:$0xff]
        %v1407 = vld [vmem:[#allocation4 + $0x258] sm:$0xff]
        %v1408 = vld [vmem:[#allocation4 + $0x260] sm:$0xff]
        %v1409 = vld [vmem:[#allocation4 + $0x268] sm:$0xff]
        %v1410 = vld [vmem:[#allocation4 + $0x270] sm:$0xff]
        %v1411 = vld [vmem:[#allocation4 + $0x278] sm:$0xff]
        %v1412 = vld [vmem:[#allocation4 + $0x280] sm:$0xff]
        %v1413 = vld [vmem:[#allocation4 + $0x288] sm:$0xff]
        %v1414 = vld [vmem:[#allocation4 + $0x290] sm:$0xff]
        %v1415 = vld [vmem:[#allocation4 + $0x298] sm:$0xff]
        %v1416 = vld [vmem:[#allocation4 + $0x2a0] sm:$0xff]
        %v1417 = vld [vmem:[#allocation4 + $0x2a8] sm:$0xff]
        %v1418 = vld [vmem:[#allocation4 + $0x2b0] sm:$0xff]
        %v1419 = vld [vmem:[#allocation4 + $0x2b8] sm:$0xff]
        %v1420 = vld [vmem:[#allocation4 + $0x2c0] sm:$0xff]
        %v1421 = vld [vmem:[#allocation4 + $0x2c8] sm:$0xff]
        %v1422 = vld [vmem:[#allocation4 + $0x2d0] sm:$0xff]
        %v1423 = vld [vmem:[#allocation4 + $0x2d8] sm:$0xff]
        %v1424 = vld [vmem:[#allocation4 + $0x2e0] sm:$0xff]
        %v1425 = vld [vmem:[#allocation4 + $0x2e8] sm:$0xff]
        %v1426 = vld [vmem:[#allocation4 + $0x2f0] sm:$0xff]
        %v1427 = vld [vmem:[#allocation4 + $0x2f8] sm:$0xff]
        %v1428 = vld [vmem:[#allocation4 + $0x300] sm:$0xff]
        %v1429 = vld [vmem:[#allocation4 + $0x308] sm:$0xff]
        %v1430 = vld [vmem:[#allocation4 + $0x310] sm:$0xff]
        %v1431 = vld [vmem:[#allocation4 + $0x318] sm:$0xff]
        %v1432 = vld [vmem:[#allocation4 + $0x320] sm:$0xff]
        %v1433 = vld [vmem:[#allocation4 + $0x328] sm:$0xff]
        %v1434 = vld [vmem:[#allocation4 + $0x330] sm:$0xff]
        %v1435 = vld [vmem:[#allocation4 + $0x338] sm:$0xff]
        %v1436 = vld [vmem:[#allocation4 + $0x340] sm:$0xff]
        %v1437 = vld [vmem:[#allocation4 + $0x348] sm:$0xff]
        %v1438 = vld [vmem:[#allocation4 + $0x350] sm:$0xff]
        %v1439 = vld [vmem:[#allocation4 + $0x358] sm:$0xff]
        %v1440 = vld [vmem:[#allocation4 + $0x360] sm:$0xff]
        %v1441 = vld [vmem:[#allocation4 + $0x368] sm:$0xff]
        %v1442 = vld [vmem:[#allocation4 + $0x370] sm:$0xff]
        %v1443 = vld [vmem:[#allocation4 + $0x378] sm:$0xff]
        %v1444 = vld [vmem:[#allocation4 + $0x380] sm:$0xff]
        %v1445 = vld [vmem:[#allocation4 + $0x388] sm:$0xff]
        %v1446 = vld [vmem:[#allocation4 + $0x390] sm:$0xff]
        %v1447 = vld [vmem:[#allocation4 + $0x398] sm:$0xff]
        %v1448 = vld [vmem:[#allocation4 + $0x3a0] sm:$0xff]
        %v1449 = vld [vmem:[#allocation4 + $0x3a8] sm:$0xff]
        %v1450 = vld [vmem:[#allocation4 + $0x3b0] sm:$0xff]
        %v1451 = vld [vmem:[#allocation4 + $0x3b8] sm:$0xff]
        %v1452 = vld [vmem:[#allocation4 + $0x3c0] sm:$0xff]
        %v1453 = vld [vmem:[#allocation4 + $0x3c8] sm:$0xff]
        %v1454 = vld [vmem:[#allocation4 + $0x3d0] sm:$0xff]
        %v1455 = vld [vmem:[#allocation4 + $0x3d8] sm:$0xff]
        %v1456 = vld [vmem:[#allocation4 + $0x3e0] sm:$0xff]
        %v1457 = vld [vmem:[#allocation4 + $0x3e8] sm:$0xff]
        %v1458 = vld [vmem:[#allocation4 + $0x3f0] sm:$0xff]
        %v1459 = vld [vmem:[#allocation4 + $0x3f8] sm:$0xff]
        %v1460 = vld [vmem:[%s4] sm:$0x3]
        %v1462 = vperm.slane %v1460, 0
        %v1463 = vperm.slane %v1460, 1
        %v1594 = vunpack.c.l.b16 %v1332
        %v1595 = vunpack.c.h.b16 %v1332
        %v1596 = vunpack.c.l.b16 %v1333
        %v1597 = vunpack.c.h.b16 %v1333
        %v1598 = vunpack.c.l.b16 %v1334
        %v1599 = vunpack.c.h.b16 %v1334
        %v1600 = vunpack.c.l.b16 %v1335
        %v1601 = vunpack.c.h.b16 %v1335
        %v1602 = vunpack.c.l.b16 %v1336
        %v1603 = vunpack.c.h.b16 %v1336
        %v1604 = vunpack.c.l.b16 %v1337
        %v1605 = vunpack.c.h.b16 %v1337
        %v1606 = vunpack.c.l.b16 %v1338
        %v1607 = vunpack.c.h.b16 %v1338
        %v1608 = vunpack.c.l.b16 %v1339
        %v1609 = vunpack.c.h.b16 %v1339
        %v1610 = vunpack.c.l.b16 %v1340
        %v1611 = vunpack.c.h.b16 %v1340
        %v1612 = vunpack.c.l.b16 %v1341
        %v1613 = vunpack.c.h.b16 %v1341
        %v1614 = vunpack.c.l.b16 %v1342
        %v1615 = vunpack.c.h.b16 %v1342
        %v1616 = vunpack.c.l.b16 %v1343
        %v1617 = vunpack.c.h.b16 %v1343
        %v1618 = vunpack.c.l.b16 %v1344
        %v1619 = vunpack.c.h.b16 %v1344
        %v1620 = vunpack.c.l.b16 %v1345
        %v1621 = vunpack.c.h.b16 %v1345
        %v1622 = vunpack.c.l.b16 %v1346
        %v1623 = vunpack.c.h.b16 %v1346
        %v1624 = vunpack.c.l.b16 %v1347
        %v1625 = vunpack.c.h.b16 %v1347
        %v1626 = vunpack.c.l.b16 %v1348
        %v1627 = vunpack.c.h.b16 %v1348
        %v1628 = vunpack.c.l.b16 %v1349
        %v1629 = vunpack.c.h.b16 %v1349
        %v1630 = vunpack.c.l.b16 %v1350
        %v1631 = vunpack.c.h.b16 %v1350
        %v1632 = vunpack.c.l.b16 %v1351
        %v1633 = vunpack.c.h.b16 %v1351
        %v1634 = vunpack.c.l.b16 %v1352
        %v1635 = vunpack.c.h.b16 %v1352
        %v1636 = vunpack.c.l.b16 %v1353
        %v1637 = vunpack.c.h.b16 %v1353
        %v1638 = vunpack.c.l.b16 %v1354
        %v1639 = vunpack.c.h.b16 %v1354
        %v1640 = vunpack.c.l.b16 %v1355
        %v1641 = vunpack.c.h.b16 %v1355
        %v1642 = vunpack.c.l.b16 %v1356
        %v1643 = vunpack.c.h.b16 %v1356
        %v1644 = vunpack.c.l.b16 %v1357
        %v1645 = vunpack.c.h.b16 %v1357
        %v1646 = vunpack.c.l.b16 %v1358
        %v1647 = vunpack.c.h.b16 %v1358
        %v1648 = vunpack.c.l.b16 %v1359
        %v1649 = vunpack.c.h.b16 %v1359
        %v1650 = vunpack.c.l.b16 %v1360
        %v1651 = vunpack.c.h.b16 %v1360
        %v1652 = vunpack.c.l.b16 %v1361
        %v1653 = vunpack.c.h.b16 %v1361
        %v1654 = vunpack.c.l.b16 %v1362
        %v1655 = vunpack.c.h.b16 %v1362
        %v1656 = vunpack.c.l.b16 %v1363
        %v1657 = vunpack.c.h.b16 %v1363
        %v1658 = vunpack.c.l.b16 %v1364
        %v1659 = vunpack.c.h.b16 %v1364
        %v1660 = vunpack.c.l.b16 %v1365
        %v1661 = vunpack.c.h.b16 %v1365
        %v1662 = vunpack.c.l.b16 %v1366
        %v1663 = vunpack.c.h.b16 %v1366
        %v1664 = vunpack.c.l.b16 %v1367
        %v1665 = vunpack.c.h.b16 %v1367
        %v1666 = vunpack.c.l.b16 %v1368
        %v1667 = vunpack.c.h.b16 %v1368
        %v1668 = vunpack.c.l.b16 %v1369
        %v1669 = vunpack.c.h.b16 %v1369
        %v1670 = vunpack.c.l.b16 %v1370
        %v1671 = vunpack.c.h.b16 %v1370
        %v1672 = vunpack.c.l.b16 %v1371
        %v1673 = vunpack.c.h.b16 %v1371
        %v1674 = vunpack.c.l.b16 %v1372
        %v1675 = vunpack.c.h.b16 %v1372
        %v1676 = vunpack.c.l.b16 %v1373
        %v1677 = vunpack.c.h.b16 %v1373
        %v1678 = vunpack.c.l.b16 %v1374
        %v1679 = vunpack.c.h.b16 %v1374
        %v1680 = vunpack.c.l.b16 %v1375
        %v1681 = vunpack.c.h.b16 %v1375
        %v1682 = vunpack.c.l.b16 %v1376
        %v1683 = vunpack.c.h.b16 %v1376
        %v1684 = vunpack.c.l.b16 %v1377
        %v1685 = vunpack.c.h.b16 %v1377
        %v1686 = vunpack.c.l.b16 %v1378
        %v1687 = vunpack.c.h.b16 %v1378
        %v1688 = vunpack.c.l.b16 %v1379
        %v1689 = vunpack.c.h.b16 %v1379
        %v1690 = vunpack.c.l.b16 %v1380
        %v1691 = vunpack.c.h.b16 %v1380
        %v1692 = vunpack.c.l.b16 %v1381
        %v1693 = vunpack.c.h.b16 %v1381
        %v1694 = vunpack.c.l.b16 %v1382
        %v1695 = vunpack.c.h.b16 %v1382
        %v1696 = vunpack.c.l.b16 %v1383
        %v1697 = vunpack.c.h.b16 %v1383
        %v1698 = vunpack.c.l.b16 %v1384
        %v1699 = vunpack.c.h.b16 %v1384
        %v1700 = vunpack.c.l.b16 %v1385
        %v1701 = vunpack.c.h.b16 %v1385
        %v1702 = vunpack.c.l.b16 %v1386
        %v1703 = vunpack.c.h.b16 %v1386
        %v1704 = vunpack.c.l.b16 %v1387
        %v1705 = vunpack.c.h.b16 %v1387
        %v1706 = vunpack.c.l.b16 %v1388
        %v1707 = vunpack.c.h.b16 %v1388
        %v1708 = vunpack.c.l.b16 %v1389
        %v1709 = vunpack.c.h.b16 %v1389
        %v1710 = vunpack.c.l.b16 %v1390
        %v1711 = vunpack.c.h.b16 %v1390
        %v1712 = vunpack.c.l.b16 %v1391
        %v1713 = vunpack.c.h.b16 %v1391
        %v1714 = vunpack.c.l.b16 %v1392
        %v1715 = vunpack.c.h.b16 %v1392
        %v1716 = vunpack.c.l.b16 %v1393
        %v1717 = vunpack.c.h.b16 %v1393
        %v1718 = vunpack.c.l.b16 %v1394
        %v1719 = vunpack.c.h.b16 %v1394
        %v1720 = vunpack.c.l.b16 %v1395
        %v1721 = vunpack.c.h.b16 %v1395
        %v1722 = vunpack.c.l.b16 %v1396
        %v1723 = vunpack.c.h.b16 %v1396
        %v1724 = vunpack.c.l.b16 %v1397
        %v1725 = vunpack.c.h.b16 %v1397
        %v1726 = vunpack.c.l.b16 %v1398
        %v1727 = vunpack.c.h.b16 %v1398
        %v1728 = vunpack.c.l.b16 %v1399
        %v1729 = vunpack.c.h.b16 %v1399
        %v1730 = vunpack.c.l.b16 %v1400
        %v1731 = vunpack.c.h.b16 %v1400
        %v1732 = vunpack.c.l.b16 %v1401
        %v1733 = vunpack.c.h.b16 %v1401
        %v1734 = vunpack.c.l.b16 %v1402
        %v1735 = vunpack.c.h.b16 %v1402
        %v1736 = vunpack.c.l.b16 %v1403
        %v1737 = vunpack.c.h.b16 %v1403
        %v1738 = vunpack.c.l.b16 %v1404
        %v1739 = vunpack.c.h.b16 %v1404
        %v1740 = vunpack.c.l.b16 %v1405
        %v1741 = vunpack.c.h.b16 %v1405
        %v1742 = vunpack.c.l.b16 %v1406
        %v1743 = vunpack.c.h.b16 %v1406
        %v1744 = vunpack.c.l.b16 %v1407
        %v1745 = vunpack.c.h.b16 %v1407
        %v1746 = vunpack.c.l.b16 %v1408
        %v1747 = vunpack.c.h.b16 %v1408
        %v1748 = vunpack.c.l.b16 %v1409
        %v1749 = vunpack.c.h.b16 %v1409
        %v1750 = vunpack.c.l.b16 %v1410
        %v1751 = vunpack.c.h.b16 %v1410
        %v1752 = vunpack.c.l.b16 %v1411
        %v1753 = vunpack.c.h.b16 %v1411
        %v1754 = vunpack.c.l.b16 %v1412
        %v1755 = vunpack.c.h.b16 %v1412
        %v1756 = vunpack.c.l.b16 %v1413
        %v1757 = vunpack.c.h.b16 %v1413
        %v1758 = vunpack.c.l.b16 %v1414
        %v1759 = vunpack.c.h.b16 %v1414
        %v1760 = vunpack.c.l.b16 %v1415
        %v1761 = vunpack.c.h.b16 %v1415
        %v1762 = vunpack.c.l.b16 %v1416
        %v1763 = vunpack.c.h.b16 %v1416
        %v1764 = vunpack.c.l.b16 %v1417
        %v1765 = vunpack.c.h.b16 %v1417
        %v1766 = vunpack.c.l.b16 %v1418
        %v1767 = vunpack.c.h.b16 %v1418
        %v1768 = vunpack.c.l.b16 %v1419
        %v1769 = vunpack.c.h.b16 %v1419
        %v1770 = vunpack.c.l.b16 %v1420
        %v1771 = vunpack.c.h.b16 %v1420
        %v1772 = vunpack.c.l.b16 %v1421
        %v1773 = vunpack.c.h.b16 %v1421
        %v1774 = vunpack.c.l.b16 %v1422
        %v1775 = vunpack.c.h.b16 %v1422
        %v1776 = vunpack.c.l.b16 %v1423
        %v1777 = vunpack.c.h.b16 %v1423
        %v1778 = vunpack.c.l.b16 %v1424
        %v1779 = vunpack.c.h.b16 %v1424
        %v1780 = vunpack.c.l.b16 %v1425
        %v1781 = vunpack.c.h.b16 %v1425
        %v1782 = vunpack.c.l.b16 %v1426
        %v1783 = vunpack.c.h.b16 %v1426
        %v1784 = vunpack.c.l.b16 %v1427
        %v1785 = vunpack.c.h.b16 %v1427
        %v1786 = vunpack.c.l.b16 %v1428
        %v1787 = vunpack.c.h.b16 %v1428
        %v1788 = vunpack.c.l.b16 %v1429
        %v1789 = vunpack.c.h.b16 %v1429
        %v1790 = vunpack.c.l.b16 %v1430
        %v1791 = vunpack.c.h.b16 %v1430
        %v1792 = vunpack.c.l.b16 %v1431
        %v1793 = vunpack.c.h.b16 %v1431
        %v1794 = vunpack.c.l.b16 %v1432
        %v1795 = vunpack.c.h.b16 %v1432
        %v1796 = vunpack.c.l.b16 %v1433
        %v1797 = vunpack.c.h.b16 %v1433
        %v1798 = vunpack.c.l.b16 %v1434
        %v1799 = vunpack.c.h.b16 %v1434
        %v1800 = vunpack.c.l.b16 %v1435
        %v1801 = vunpack.c.h.b16 %v1435
        %v1802 = vunpack.c.l.b16 %v1436
        %v1803 = vunpack.c.h.b16 %v1436
        %v1804 = vunpack.c.l.b16 %v1437
        %v1805 = vunpack.c.h.b16 %v1437
        %v1806 = vunpack.c.l.b16 %v1438
        %v1807 = vunpack.c.h.b16 %v1438
        %v1808 = vunpack.c.l.b16 %v1439
        %v1809 = vunpack.c.h.b16 %v1439
        %v1810 = vunpack.c.l.b16 %v1440
        %v1811 = vunpack.c.h.b16 %v1440
        %v1812 = vunpack.c.l.b16 %v1441
        %v1813 = vunpack.c.h.b16 %v1441
        %v1814 = vunpack.c.l.b16 %v1442
        %v1815 = vunpack.c.h.b16 %v1442
        %v1816 = vunpack.c.l.b16 %v1443
        %v1817 = vunpack.c.h.b16 %v1443
        %v1818 = vunpack.c.l.b16 %v1444
        %v1819 = vunpack.c.h.b16 %v1444
        %v1820 = vunpack.c.l.b16 %v1445
        %v1821 = vunpack.c.h.b16 %v1445
        %v1822 = vunpack.c.l.b16 %v1446
        %v1823 = vunpack.c.h.b16 %v1446
        %v1824 = vunpack.c.l.b16 %v1447
        %v1825 = vunpack.c.h.b16 %v1447
        %v1826 = vunpack.c.l.b16 %v1448
        %v1827 = vunpack.c.h.b16 %v1448
        %v1828 = vunpack.c.l.b16 %v1449
        %v1829 = vunpack.c.h.b16 %v1449
        %v1830 = vunpack.c.l.b16 %v1450
        %v1831 = vunpack.c.h.b16 %v1450
        %v1832 = vunpack.c.l.b16 %v1451
        %v1833 = vunpack.c.h.b16 %v1451
        %v1834 = vunpack.c.l.b16 %v1452
        %v1835 = vunpack.c.h.b16 %v1452
        %v1836 = vunpack.c.l.b16 %v1453
        %v1837 = vunpack.c.h.b16 %v1453
        %v1838 = vunpack.c.l.b16 %v1454
        %v1839 = vunpack.c.h.b16 %v1454
        %v1840 = vunpack.c.l.b16 %v1455
        %v1841 = vunpack.c.h.b16 %v1455
        %v1842 = vunpack.c.l.b16 %v1456
        %v1843 = vunpack.c.h.b16 %v1456
        %v1844 = vunpack.c.l.b16 %v1457
        %v1845 = vunpack.c.h.b16 %v1457
        %v1846 = vunpack.c.l.b16 %v1458
        %v1847 = vunpack.c.h.b16 %v1458
        %v1848 = vunpack.c.l.b16 %v1459
        %v1849 = vunpack.c.h.b16 %v1459
        %v1850 = vpack.c.b16 %v1596, %v1594
        %v1851 = vpack.c.b16 %v1597, %v1595
        %v1852 = vpack.c.b16 %v1600, %v1598
        %v1853 = vpack.c.b16 %v1601, %v1599
        %v1854 = vpack.c.b16 %v1604, %v1602
        %v1855 = vpack.c.b16 %v1605, %v1603
        %v1856 = vpack.c.b16 %v1608, %v1606
        %v1857 = vpack.c.b16 %v1609, %v1607
        %v1858 = vpack.c.b16 %v1612, %v1610
        %v1859 = vpack.c.b16 %v1613, %v1611
        %v1860 = vpack.c.b16 %v1616, %v1614
        %v1861 = vpack.c.b16 %v1617, %v1615
        %v1862 = vpack.c.b16 %v1620, %v1618
        %v1863 = vpack.c.b16 %v1621, %v1619
        %v1864 = vpack.c.b16 %v1624, %v1622
        %v1865 = vpack.c.b16 %v1625, %v1623
        %v1866 = vpack.c.b16 %v1628, %v1626
        %v1867 = vpack.c.b16 %v1629, %v1627
        %v1868 = vpack.c.b16 %v1632, %v1630
        %v1869 = vpack.c.b16 %v1633, %v1631
        %v1870 = vpack.c.b16 %v1636, %v1634
        %v1871 = vpack.c.b16 %v1637, %v1635
        %v1872 = vpack.c.b16 %v1640, %v1638
        %v1873 = vpack.c.b16 %v1641, %v1639
        %v1874 = vpack.c.b16 %v1644, %v1642
        %v1875 = vpack.c.b16 %v1645, %v1643
        %v1876 = vpack.c.b16 %v1648, %v1646
        %v1877 = vpack.c.b16 %v1649, %v1647
        %v1878 = vpack.c.b16 %v1652, %v1650
        %v1879 = vpack.c.b16 %v1653, %v1651
        %v1880 = vpack.c.b16 %v1656, %v1654
        %v1881 = vpack.c.b16 %v1657, %v1655
        %v1882 = vpack.c.b16 %v1660, %v1658
        %v1883 = vpack.c.b16 %v1661, %v1659
        %v1884 = vpack.c.b16 %v1664, %v1662
        %v1885 = vpack.c.b16 %v1665, %v1663
        %v1886 = vpack.c.b16 %v1668, %v1666
        %v1887 = vpack.c.b16 %v1669, %v1667
        %v1888 = vpack.c.b16 %v1672, %v1670
        %v1889 = vpack.c.b16 %v1673, %v1671
        %v1890 = vpack.c.b16 %v1676, %v1674
        %v1891 = vpack.c.b16 %v1677, %v1675
        %v1892 = vpack.c.b16 %v1680, %v1678
        %v1893 = vpack.c.b16 %v1681, %v1679
        %v1894 = vpack.c.b16 %v1684, %v1682
        %v1895 = vpack.c.b16 %v1685, %v1683
        %v1896 = vpack.c.b16 %v1688, %v1686
        %v1897 = vpack.c.b16 %v1689, %v1687
        %v1898 = vpack.c.b16 %v1692, %v1690
        %v1899 = vpack.c.b16 %v1693, %v1691
        %v1900 = vpack.c.b16 %v1696, %v1694
        %v1901 = vpack.c.b16 %v1697, %v1695
        %v1902 = vpack.c.b16 %v1700, %v1698
        %v1903 = vpack.c.b16 %v1701, %v1699
        %v1904 = vpack.c.b16 %v1704, %v1702
        %v1905 = vpack.c.b16 %v1705, %v1703
        %v1906 = vpack.c.b16 %v1708, %v1706
        %v1907 = vpack.c.b16 %v1709, %v1707
        %v1908 = vpack.c.b16 %v1712, %v1710
        %v1909 = vpack.c.b16 %v1713, %v1711
        %v1910 = vpack.c.b16 %v1716, %v1714
        %v1911 = vpack.c.b16 %v1717, %v1715
        %v1912 = vpack.c.b16 %v1720, %v1718
        %v1913 = vpack.c.b16 %v1721, %v1719
        %v1914 = vpack.c.b16 %v1724, %v1722
        %v1915 = vpack.c.b16 %v1725, %v1723
        %v1916 = vpack.c.b16 %v1728, %v1726
        %v1917 = vpack.c.b16 %v1729, %v1727
        %v1918 = vpack.c.b16 %v1732, %v1730
        %v1919 = vpack.c.b16 %v1733, %v1731
        %v1920 = vpack.c.b16 %v1736, %v1734
        %v1921 = vpack.c.b16 %v1737, %v1735
        %v1922 = vpack.c.b16 %v1740, %v1738
        %v1923 = vpack.c.b16 %v1741, %v1739
        %v1924 = vpack.c.b16 %v1744, %v1742
        %v1925 = vpack.c.b16 %v1745, %v1743
        %v1926 = vpack.c.b16 %v1748, %v1746
        %v1927 = vpack.c.b16 %v1749, %v1747
        %v1928 = vpack.c.b16 %v1752, %v1750
        %v1929 = vpack.c.b16 %v1753, %v1751
        %v1930 = vpack.c.b16 %v1756, %v1754
        %v1931 = vpack.c.b16 %v1757, %v1755
        %v1932 = vpack.c.b16 %v1760, %v1758
        %v1933 = vpack.c.b16 %v1761, %v1759
        %v1934 = vpack.c.b16 %v1764, %v1762
        %v1935 = vpack.c.b16 %v1765, %v1763
        %v1936 = vpack.c.b16 %v1768, %v1766
        %v1937 = vpack.c.b16 %v1769, %v1767
        %v1938 = vpack.c.b16 %v1772, %v1770
        %v1939 = vpack.c.b16 %v1773, %v1771
        %v1940 = vpack.c.b16 %v1776, %v1774
        %v1941 = vpack.c.b16 %v1777, %v1775
        %v1942 = vpack.c.b16 %v1780, %v1778
        %v1943 = vpack.c.b16 %v1781, %v1779
        %v1944 = vpack.c.b16 %v1784, %v1782
        %v1945 = vpack.c.b16 %v1785, %v1783
        %v1946 = vpack.c.b16 %v1788, %v1786
        %v1947 = vpack.c.b16 %v1789, %v1787
        %v1948 = vpack.c.b16 %v1792, %v1790
        %v1949 = vpack.c.b16 %v1793, %v1791
        %v1950 = vpack.c.b16 %v1796, %v1794
        %v1951 = vpack.c.b16 %v1797, %v1795
        %v1952 = vpack.c.b16 %v1800, %v1798
        %v1953 = vpack.c.b16 %v1801, %v1799
        %v1954 = vpack.c.b16 %v1804, %v1802
        %v1955 = vpack.c.b16 %v1805, %v1803
        %v1956 = vpack.c.b16 %v1808, %v1806
        %v1957 = vpack.c.b16 %v1809, %v1807
        %v1958 = vpack.c.b16 %v1812, %v1810
        %v1959 = vpack.c.b16 %v1813, %v1811
        %v1960 = vpack.c.b16 %v1816, %v1814
        %v1961 = vpack.c.b16 %v1817, %v1815
        %v1962 = vpack.c.b16 %v1820, %v1818
        %v1963 = vpack.c.b16 %v1821, %v1819
        %v1964 = vpack.c.b16 %v1824, %v1822
        %v1965 = vpack.c.b16 %v1825, %v1823
        %v1966 = vpack.c.b16 %v1828, %v1826
        %v1967 = vpack.c.b16 %v1829, %v1827
        %v1968 = vpack.c.b16 %v1832, %v1830
        %v1969 = vpack.c.b16 %v1833, %v1831
        %v1970 = vpack.c.b16 %v1836, %v1834
        %v1971 = vpack.c.b16 %v1837, %v1835
        %v1972 = vpack.c.b16 %v1840, %v1838
        %v1973 = vpack.c.b16 %v1841, %v1839
        %v1974 = vpack.c.b16 %v1844, %v1842
        %v1975 = vpack.c.b16 %v1845, %v1843
        %v1976 = vpack.c.b16 %v1848, %v1846
        %v1977 = vpack.c.b16 %v1849, %v1847
        %2106 = vmatpush.bf16.msra.mxu0 %v1864
        %2107 = vmatpush.bf16.msra.mxu0 %v1862
        %2108 = vmatpush.bf16.msra.mxu0 %v1860
        %2109 = vmatpush.bf16.msra.mxu0 %v1858
        %2110 = vmatpush.bf16.msra.mxu0 %v1856
        %2111 = vmatpush.bf16.msra.mxu0 %v1854
        %2112 = vmatpush.bf16.msra.mxu0 %v1852
        %2113 = vmatpush.bf16.msra.mxu0 %v1850
        %2114 = vmatmul.bf16.gmra.mxu0 %v1324
        %v2115 = vpop.f32.mrf.mxu0
        %v2116 = vadd.f32 %v1462, %v2115
        %v2117 = vpop.f32.mrf.mxu0
        %2118 = vdwg.mxu0
        %2119 = vmatpush.bf16.msra.mxu0 %v1880
        %2120 = vmatpush.bf16.msra.mxu0 %v1878
        %2121 = vmatpush.bf16.msra.mxu0 %v1876
        %2122 = vmatpush.bf16.msra.mxu0 %v1874
        %2123 = vmatpush.bf16.msra.mxu0 %v1872
        %2124 = vmatpush.bf16.msra.mxu0 %v1870
        %2125 = vmatpush.bf16.msra.mxu0 %v1868
        %2126 = vmatpush.bf16.msra.mxu0 %v1866
        %2127 = vmatmul.bf16.gmra.mxu0 %v1325
        %v2128 = vpop.f32.mrf.mxu0
        %v2129 = vadd.f32 %v2116, %v2128
        %v2130 = vpop.f32.mrf.mxu0
        %2131 = vdwg.mxu0
        %2132 = vmatpush.bf16.msra.mxu0 %v1896
        %2133 = vmatpush.bf16.msra.mxu0 %v1894
        %2134 = vmatpush.bf16.msra.mxu0 %v1892
        %2135 = vmatpush.bf16.msra.mxu0 %v1890
        %2136 = vmatpush.bf16.msra.mxu0 %v1888
        %2137 = vmatpush.bf16.msra.mxu0 %v1886
        %2138 = vmatpush.bf16.msra.mxu0 %v1884
        %2139 = vmatpush.bf16.msra.mxu0 %v1882
        %2140 = vmatmul.bf16.gmra.mxu0 %v1326
        %v2141 = vpop.f32.mrf.mxu0
        %v2142 = vadd.f32 %v2129, %v2141
        %v2143 = vpop.f32.mrf.mxu0
        %2144 = vdwg.mxu0
        %2145 = vmatpush.bf16.msra.mxu0 %v1912
        %2146 = vmatpush.bf16.msra.mxu0 %v1910
        %2147 = vmatpush.bf16.msra.mxu0 %v1908
        %2148 = vmatpush.bf16.msra.mxu0 %v1906
        %2149 = vmatpush.bf16.msra.mxu0 %v1904
        %2150 = vmatpush.bf16.msra.mxu0 %v1902
        %2151 = vmatpush.bf16.msra.mxu0 %v1900
        %2152 = vmatpush.bf16.msra.mxu0 %v1898
        %2153 = vmatmul.bf16.gmra.mxu0 %v1327
        %v2154 = vpop.f32.mrf.mxu0
        %v2155 = vadd.f32 %v2142, %v2154
        %v2156 = vpop.f32.mrf.mxu0
        %2157 = vdwg.mxu0
        %2158 = vmatpush.bf16.msra.mxu0 %v1928
        %2159 = vmatpush.bf16.msra.mxu0 %v1926
        %2160 = vmatpush.bf16.msra.mxu0 %v1924
        %2161 = vmatpush.bf16.msra.mxu0 %v1922
        %2162 = vmatpush.bf16.msra.mxu0 %v1920
        %2163 = vmatpush.bf16.msra.mxu0 %v1918
        %2164 = vmatpush.bf16.msra.mxu0 %v1916
        %2165 = vmatpush.bf16.msra.mxu0 %v1914
        %2166 = vmatmul.bf16.gmra.mxu0 %v1328
        %v2167 = vpop.f32.mrf.mxu0
        %v2168 = vadd.f32 %v2155, %v2167
        %v2169 = vpop.f32.mrf.mxu0
        %2170 = vdwg.mxu0
        %2171 = vmatpush.bf16.msra.mxu0 %v1944
        %2172 = vmatpush.bf16.msra.mxu0 %v1942
        %2173 = vmatpush.bf16.msra.mxu0 %v1940
        %2174 = vmatpush.bf16.msra.mxu0 %v1938
        %2175 = vmatpush.bf16.msra.mxu0 %v1936
        %2176 = vmatpush.bf16.msra.mxu0 %v1934
        %2177 = vmatpush.bf16.msra.mxu0 %v1932
        %2178 = vmatpush.bf16.msra.mxu0 %v1930
        %2179 = vmatmul.bf16.gmra.mxu0 %v1329
        %v2180 = vpop.f32.mrf.mxu0
        %v2181 = vadd.f32 %v2168, %v2180
        %v2182 = vpop.f32.mrf.mxu0
        %2183 = vdwg.mxu0
        %2184 = vmatpush.bf16.msra.mxu0 %v1960
        %2185 = vmatpush.bf16.msra.mxu0 %v1958
        %2186 = vmatpush.bf16.msra.mxu0 %v1956
        %2187 = vmatpush.bf16.msra.mxu0 %v1954
        %2188 = vmatpush.bf16.msra.mxu0 %v1952
        %2189 = vmatpush.bf16.msra.mxu0 %v1950
        %2190 = vmatpush.bf16.msra.mxu0 %v1948
        %2191 = vmatpush.bf16.msra.mxu0 %v1946
        %2192 = vmatmul.bf16.gmra.mxu0 %v1330
        %v2193 = vpop.f32.mrf.mxu0
        %v2194 = vadd.f32 %v2181, %v2193
        %v2195 = vpop.f32.mrf.mxu0
        %2196 = vdwg.mxu0
        %2197 = vmatpush.bf16.msra.mxu0 %v1976
        %2198 = vmatpush.bf16.msra.mxu0 %v1974
        %2199 = vmatpush.bf16.msra.mxu0 %v1972
        %2200 = vmatpush.bf16.msra.mxu0 %v1970
        %2201 = vmatpush.bf16.msra.mxu0 %v1968
        %2202 = vmatpush.bf16.msra.mxu0 %v1966
        %2203 = vmatpush.bf16.msra.mxu0 %v1964
        %2204 = vmatpush.bf16.msra.mxu0 %v1962
        %2205 = vmatmul.bf16.gmra.mxu0 %v1331
        %v2206 = vpop.f32.mrf.mxu0
        %v2207 = vadd.f32 %v2194, %v2206
        %v2208 = vpop.f32.mrf.mxu0
        %2209 = vdwg.mxu0
        %2210 = vmatpush.bf16.msra.mxu0 %v1865
        %2211 = vmatpush.bf16.msra.mxu0 %v1863
        %2212 = vmatpush.bf16.msra.mxu0 %v1861
        %2213 = vmatpush.bf16.msra.mxu0 %v1859
        %2214 = vmatpush.bf16.msra.mxu0 %v1857
        %2215 = vmatpush.bf16.msra.mxu0 %v1855
        %2216 = vmatpush.bf16.msra.mxu0 %v1853
        %2217 = vmatpush.bf16.msra.mxu0 %v1851
        %2218 = vmatmul.bf16.gmra.mxu0 %v1324
        %v2219 = vpop.f32.mrf.mxu0
        %v2220 = vadd.f32 %v1463, %v2219
        %v2221 = vpop.f32.mrf.mxu0
        %2222 = vdwg.mxu0
        %2223 = vmatpush.bf16.msra.mxu0 %v1881
        %2224 = vmatpush.bf16.msra.mxu0 %v1879
        %2225 = vmatpush.bf16.msra.mxu0 %v1877
        %2226 = vmatpush.bf16.msra.mxu0 %v1875
        %2227 = vmatpush.bf16.msra.mxu0 %v1873
        %2228 = vmatpush.bf16.msra.mxu0 %v1871
        %2229 = vmatpush.bf16.msra.mxu0 %v1869
        %2230 = vmatpush.bf16.msra.mxu0 %v1867
        %2231 = vmatmul.bf16.gmra.mxu0 %v1325
        %v2232 = vpop.f32.mrf.mxu0
        %v2233 = vadd.f32 %v2220, %v2232
        %v2234 = vpop.f32.mrf.mxu0
        %2235 = vdwg.mxu0
        %2236 = vmatpush.bf16.msra.mxu0 %v1897
        %2237 = vmatpush.bf16.msra.mxu0 %v1895
        %2238 = vmatpush.bf16.msra.mxu0 %v1893
        %2239 = vmatpush.bf16.msra.mxu0 %v1891
        %2240 = vmatpush.bf16.msra.mxu0 %v1889
        %2241 = vmatpush.bf16.msra.mxu0 %v1887
        %2242 = vmatpush.bf16.msra.mxu0 %v1885
        %2243 = vmatpush.bf16.msra.mxu0 %v1883
        %2244 = vmatmul.bf16.gmra.mxu0 %v1326
        %v2245 = vpop.f32.mrf.mxu0
        %v2246 = vadd.f32 %v2233, %v2245
        %v2247 = vpop.f32.mrf.mxu0
        %2248 = vdwg.mxu0
        %2249 = vmatpush.bf16.msra.mxu0 %v1913
        %2250 = vmatpush.bf16.msra.mxu0 %v1911
        %2251 = vmatpush.bf16.msra.mxu0 %v1909
        %2252 = vmatpush.bf16.msra.mxu0 %v1907
        %2253 = vmatpush.bf16.msra.mxu0 %v1905
        %2254 = vmatpush.bf16.msra.mxu0 %v1903
        %2255 = vmatpush.bf16.msra.mxu0 %v1901
        %2256 = vmatpush.bf16.msra.mxu0 %v1899
        %2257 = vmatmul.bf16.gmra.mxu0 %v1327
        %v2258 = vpop.f32.mrf.mxu0
        %v2259 = vadd.f32 %v2246, %v2258
        %v2260 = vpop.f32.mrf.mxu0
        %2261 = vdwg.mxu0
        %2262 = vmatpush.bf16.msra.mxu0 %v1929
        %2263 = vmatpush.bf16.msra.mxu0 %v1927
        %2264 = vmatpush.bf16.msra.mxu0 %v1925
        %2265 = vmatpush.bf16.msra.mxu0 %v1923
        %2266 = vmatpush.bf16.msra.mxu0 %v1921
        %2267 = vmatpush.bf16.msra.mxu0 %v1919
        %2268 = vmatpush.bf16.msra.mxu0 %v1917
        %2269 = vmatpush.bf16.msra.mxu0 %v1915
        %2270 = vmatmul.bf16.gmra.mxu0 %v1328
        %v2271 = vpop.f32.mrf.mxu0
        %v2272 = vadd.f32 %v2259, %v2271
        %v2273 = vpop.f32.mrf.mxu0
        %2274 = vdwg.mxu0
        %2275 = vmatpush.bf16.msra.mxu0 %v1945
        %2276 = vmatpush.bf16.msra.mxu0 %v1943
        %2277 = vmatpush.bf16.msra.mxu0 %v1941
        %2278 = vmatpush.bf16.msra.mxu0 %v1939
        %2279 = vmatpush.bf16.msra.mxu0 %v1937
        %2280 = vmatpush.bf16.msra.mxu0 %v1935
        %2281 = vmatpush.bf16.msra.mxu0 %v1933
        %2282 = vmatpush.bf16.msra.mxu0 %v1931
        %2283 = vmatmul.bf16.gmra.mxu0 %v1329
        %v2284 = vpop.f32.mrf.mxu0
        %v2285 = vadd.f32 %v2272, %v2284
        %v2286 = vpop.f32.mrf.mxu0
        %2287 = vdwg.mxu0
        %2288 = vmatpush.bf16.msra.mxu0 %v1961
        %2289 = vmatpush.bf16.msra.mxu0 %v1959
        %2290 = vmatpush.bf16.msra.mxu0 %v1957
        %2291 = vmatpush.bf16.msra.mxu0 %v1955
        %2292 = vmatpush.bf16.msra.mxu0 %v1953
        %2293 = vmatpush.bf16.msra.mxu0 %v1951
        %2294 = vmatpush.bf16.msra.mxu0 %v1949
        %2295 = vmatpush.bf16.msra.mxu0 %v1947
        %2296 = vmatmul.bf16.gmra.mxu0 %v1330
        %v2297 = vpop.f32.mrf.mxu0
        %v2298 = vadd.f32 %v2285, %v2297
        %v2299 = vpop.f32.mrf.mxu0
        %2300 = vdwg.mxu0
        %2301 = vmatpush.bf16.msra.mxu0 %v1977
        %2302 = vmatpush.bf16.msra.mxu0 %v1975
        %2303 = vmatpush.bf16.msra.mxu0 %v1973
        %2304 = vmatpush.bf16.msra.mxu0 %v1971
        %2305 = vmatpush.bf16.msra.mxu0 %v1969
        %2306 = vmatpush.bf16.msra.mxu0 %v1967
        %2307 = vmatpush.bf16.msra.mxu0 %v1965
        %2308 = vmatpush.bf16.msra.mxu0 %v1963
        %2309 = vmatmul.bf16.gmra.mxu0 %v1331
        %v2310 = vpop.f32.mrf.mxu0
        %v2311 = vadd.f32 %v2298, %v2310
        %v2312 = vpop.f32.mrf.mxu0
        %2313 = vdwg.mxu0
        %v2316 = vrot.slane %v2311, 4
        %vm2317 = vcmask 1043456
        %v2318 = vsel %vm2317, %v2207, %v2316
        %v2320 = vadd.f32 %v313, %v2318
        %v2321 = vld [vmem:[%s5] sm:$0x3]
        %v2322 = vld [vmem:[%s6] sm:$0x3]
        %2324 = vst [vmem:[#allocation1] ss:$2 sm:$0xff] %v2320
        %v2325 = vld.sshfl [vmem:[#allocation1] sm:$0xff pattern:$0x75316420]
        %v2326 = vld.sshfl [vmem:[#allocation1 + $0x8] sm:$0xff pattern:$0x75316420]
        %v2329 = vsel %vm2317, %v2325, 0.0
        %v2330 = vsel %vm2317, %v2326, 0.0
        %v2331 = vadd.f32 %v2329, %v2330
        %2332 = vadd.xlane.f32.xlu0 %v2331
        %v2333 = vpop.xlane.xlu0 %2332
        %v2334 = vrcp.pop 256.0
        %v2335 = vmul.f32 256.0, %v2334
        %v2336 = vsub.f32 1.0, %v2335
        %v2337 = vmul.f32 %v2334, %v2336
        %v2338 = vadd.f32 %v2334, %v2337
        %vm2339 = vweird.f32 %v2334
        %v2340 = vsel %vm2339, %v2334, %v2338
        %v2341 = vmul.f32 %v2333, %v2340
        %v2344 = vunpack.c.l.s4 839922192
        %v2345 = vunpack.c.0.s8 %v2344
        %v2346 = vperm.slane %v2341, %v2345
        %v2348 = vsub.f32 %v2320, %v2346
        %v2349 = vmul.f32 %v2348, %v2348
        %2351 = vst [vmem:[#allocation1] ss:$2 sm:$0xff] %v2349
        %v2352 = vld.sshfl [vmem:[#allocation1] sm:$0xff pattern:$0x75316420]
        %v2353 = vld.sshfl [vmem:[#allocation1 + $0x8] sm:$0xff pattern:$0x75316420]
        %v2356 = vsel %vm2317, %v2352, 0.0
        %v2357 = vsel %vm2317, %v2353, 0.0
        %v2358 = vadd.f32 %v2356, %v2357
        %2359 = vadd.xlane.f32.xlu0 %v2358
        %v2360 = vpop.xlane.xlu0 %2359
        %v2361 = vmul.f32 %v2360, %v2340
        %v2362 = vadd.f32 %v2361, 1e-05
        %v2363 = vrsqrt.pop %v2362
        %v2364 = vmul.f32 %v2363, %v2362
        %v2365 = vmul.f32 %v2364, %v2363
        %v2366 = vmul.f32 0.5, %v2365
        %v2367 = vsub.f32 1.5, %v2366
        %v2368 = vmul.f32 %v2363, %v2367
        %vm2369 = vweird.f32 %v2362
        %vm2370 = vweird.f32 %v2363
        %vm2371 = vmor %vm2369, %vm2370
        %v2372 = vsel %vm2371, %v2363, %v2368
        %v2375 = vunpack.c.l.s4 839922192
        %v2376 = vunpack.c.0.s8 %v2375
        %v2377 = vperm.slane %v2372, %v2376
        %v2379 = vmul.f32 %v2348, %v2377
        %v2381 = vperm.slane %v2321, 0
        %v2382 = vperm.slane %v2321, 1
        %v2383 = vrot.slane %v2382, 4
        %v2384 = vsel %vm2317, %v2381, %v2383
        %v2386 = vmul.f32 %v2379, %v2384
        %v2388 = vperm.slane %v2322, 0
        %v2389 = vperm.slane %v2322, 1
        %v2390 = vrot.slane %v2389, 4
        %v2391 = vsel %vm2317, %v2388, %v2390
        %v2393 = vadd.f32 %v2386, %v2391
        %2394 = vst [vmem:[%s312] sm:$0xff] %v2393
        %p2395 = scmp.lt.s32.totalorder %s20, 1
        %s2396 = scalar_select %p2395, %s20, 1
        %s2397 = smul.addr %s2396, 2
        %s2398 = smul.addr %s2397, 4
        %s2399 = scalar_lea.vmem %s7, %s2398
        // Predicated region
        $region57: #{policy_transformer_forward.16} parent=47 // pred_check
          %p2400 = pneg %p190
        $region58: #{policy_transformer_forward.16} parent=47 // pred_check_branch
          %2402 = sbr.rel (%p2400) target = $region60
        $region59: #{policy_transformer_forward.16} parent=47 // pred_region
          _
        $region60: #{policy_transformer_forward.16} parent=47 // pred_fallthru
          _
      $region48: #{policy_transformer_forward.16} parent=5 // pred_fallthru
        _
      %p2403 = scmp.le.s32.totalorder 2, %s15
      // Predicated region
      $region61: #{policy_transformer_forward.16} parent=5 // pred_check
        %p2404 = pneg %p2403
      $region62: #{policy_transformer_forward.16} parent=5 // pred_check_branch
        %2406 = sbr.rel (%p2404) target = $region64
      $region63: #{policy_transformer_forward.16} parent=5 // pred_region
        %s2407 = ssub.s32 %s15, 2
        // Predicated region
        $region65: #{policy_transformer_forward.16} parent=63 // pred_check
          %p2408 = pneg %p196
        $region66: #{policy_transformer_forward.16} parent=63 // pred_check_branch
          %2410 = sbr.rel (%p2408) target = $region68
        $region67: #{policy_transformer_forward.16} parent=63 // pred_region
          %p2411 = scmp.lt.s32.totalorder %s21, 1
          %s2412 = scalar_select %p2411, %s21, 1
          %s2413 = smul.addr %s2412, 2
          %s2414 = smul.addr %s2413, 4
          %s2415 = scalar_lea.vmem %s7, %s2414
        $region68: #{policy_transformer_forward.16} parent=63 // pred_fallthru
          _
      $region64: #{policy_transformer_forward.16} parent=5 // pred_fallthru
        _
    $region6: #{policy_transformer_forward.16} parent=1 // loop_footer
      %s19 = sadd.s32 1, %s15
    $region7: #{policy_transformer_forward.16} parent=1 // loop_footer_branch
      %14 = sbr.rel target = $region3
    $region8: #{policy_transformer_forward.16} parent=1 // loop_exit
      _
    %2416 = vsyncpa [#allocation3], 1
    %s2417 = scalar_lea.sflag [#allocation3], 1
    %2418 = vsyncpa %s2417, 1
    %2419 = vsyncpa [#allocation5], 1

</llo_original>
